<compile_context>
chip_gen: v7x
topology: tpu7x:2x2x1
jax: 0.10.0
libtpu: 0.0.40
codegen_flags: <defaults>
</compile_context>

<pallas_src>
import math

import jax
import jax.numpy as jnp
from jax import lax
from jax.experimental import pallas as pl
from jax.experimental.pallas import tpu as pltpu

H = 32          # GRU hidden size
G = 3 * H       # stacked gates (r | z | n), PyTorch ordering

# Row indices inside the packed bias/row buffer Brow (16, 32).
_WX_R, _WX_Z, _WX_N = 0, 1, 2
_BX_R, _BX_Z, _BX_N = 3, 4, 5
_BH1_R, _BH1_Z, _BH1_N = 6, 7, 8
_BI2_R, _BI2_Z, _BI2_N = 9, 10, 11
_BH2_R, _BH2_Z, _BH2_N = 12, 13, 14

# Slab indices inside the packed recurrent-weight buffer Wrec (9, 32, 32).
_WHH1, _WIH2, _WHH2 = 0, 3, 6

# Row offsets inside the packed head buffer Whead (136, 64).
_FW1_LOC, _FW1_GLO, _FW2, _FB1, _FB2, _FW3 = 0, 32, 64, 128, 129, 130


# ----------------------------- Pallas kernel --------------------------------

def _sigmoid(x):
    # sigmoid(x) == 0.5*tanh(0.5*x) + 0.5 : one EUP op + two VPU ops,
    # and numerically safe (no exp overflow for large |x|).
    return 0.5 * jnp.tanh(0.5 * x) + 0.5


def _dot(a, b):
    return lax.dot_general(a, b, (((1,), (0,)), ((), ())),
                           preferred_element_type=jnp.float32)


def _meta_gru_kernel(x_ref, wrec_ref, brow_ref, whead_ref, o_ref):
    n = x_ref.shape[0]                      # batch == sequence length
    x = x_ref[...]                          # (n, n)   [batch, time]

    # -------- unpack the three packed parameter buffers (one-time) ----------
    brow = brow_ref[...]                    # (16, 32) stacked row vectors
    wx_r, wx_z, wx_n = (brow[_WX_R:_WX_R + 1], brow[_WX_Z:_WX_Z + 1],
                        brow[_WX_N:_WX_N + 1])
    bx_r, bx_z, bx_n = (brow[_BX_R:_BX_R + 1], brow[_BX_Z:_BX_Z + 1],
                        brow[_BX_N:_BX_N + 1])
    bhh1_r, bhh1_z, bhh1_n = (brow[_BH1_R:_BH1_R + 1], brow[_BH1_Z:_BH1_Z + 1],
                              brow[_BH1_N:_BH1_N + 1])
    bih2_r, bih2_z, bih2_n = (brow[_BI2_R:_BI2_R + 1], brow[_BI2_Z:_BI2_Z + 1],
                              brow[_BI2_N:_BI2_N + 1])
    bhh2_r, bhh2_z, bhh2_n = (brow[_BH2_R:_BH2_R + 1], brow[_BH2_Z:_BH2_Z + 1],
                              brow[_BH2_N:_BH2_N + 1])

    whh1_r, whh1_z, whh1_n = (wrec_ref[_WHH1], wrec_ref[_WHH1 + 1],
                              wrec_ref[_WHH1 + 2])
    wih2_r, wih2_z, wih2_n = (wrec_ref[_WIH2], wrec_ref[_WIH2 + 1],
                              wrec_ref[_WIH2 + 2])
    whh2_r, whh2_z, whh2_n = (wrec_ref[_WHH2], wrec_ref[_WHH2 + 1],
                              wrec_ref[_WHH2 + 2])

    # -------- GRU1 input gates precomputed up-front (off the h chain) -------
    # Linear(1->32) + W_ih1 are folded into (wx, bx) in prepare_params, so the
    # x-side projection is a pure broadcast FMA.
    xg1_r, xg1_z, xg1_n = [], [], []
    for t in range(n):
        xc = x[:, t:t + 1]                  # (n, 1) column of x (time step t)
        xg1_r.append(xc * wx_r + bx_r)      # (n, 32)
        xg1_z.append(xc * wx_z + bx_z)
        xg1_n.append(xc * wx_n + bx_n)

    # -------- GRU1: batch = n rows of x, time = n columns (static unroll) ---
    # Step 0: h == 0, so the hidden projection reduces to the hidden biases.
    r = _sigmoid(xg1_r[0] + bhh1_r)
    z = _sigmoid(xg1_z[0] + bhh1_z)
    ng = jnp.tanh(xg1_n[0] + r * bhh1_n)
    h1 = (1.0 - z) * ng                                        # (n, 32)
    for t in range(1, n):
        hg_r = _dot(h1, whh1_r) + bhh1_r                       # aligned (n,32)
        hg_z = _dot(h1, whh1_z) + bhh1_z
        hg_n = _dot(h1, whh1_n) + bhh1_n
        r = _sigmoid(xg1_r[t] + hg_r)
        z = _sigmoid(xg1_z[t] + hg_z)
        ng = jnp.tanh(xg1_n[t] + r * hg_n)
        h1 = ng + z * (h1 - ng)             # == (1-z)*ng + z*h1

    # -------- GRU2 input gates: three (n,32)@(32,32) matmuls, then rows -----
    xg2_r = _dot(h1, wih2_r) + bih2_r
    xg2_z = _dot(h1, wih2_z) + bih2_z
    xg2_n = _dot(h1, wih2_n) + bih2_n
    xg2_r_rows = [xg2_r[t:t + 1, :] for t in range(n)]
    xg2_z_rows = [xg2_z[t:t + 1, :] for t in range(n)]
    xg2_n_rows = [xg2_n[t:t + 1, :] for t in range(n)]

    # -------- GRU2: batch = 1, time = n (static unroll) ---------------------
    r = _sigmoid(xg2_r_rows[0] + bhh2_r)
    z = _sigmoid(xg2_z_rows[0] + bhh2_z)
    ng = jnp.tanh(xg2_n_rows[0] + r * bhh2_n)
    h2 = (1.0 - z) * ng                                        # (1, 32)
    for t in range(1, n):
        hg_r = _dot(h2, whh2_r) + bhh2_r
        hg_z = _dot(h2, whh2_z) + bhh2_z
        hg_n = _dot(h2, whh2_n) + bhh2_n
        r = _sigmoid(xg2_r_rows[t] + hg_r)
        z = _sigmoid(xg2_z_rows[t] + hg_z)
        ng = jnp.tanh(xg2_n_rows[t] + r * hg_n)
        h2 = ng + z * (h2 - ng)

    # -------- head: fw1 split local/global -> no concat, no h2 broadcast ----
    fw1_loc = whead_ref[_FW1_LOC:_FW1_LOC + H, :]              # (32, 64)
    fw1_glo = whead_ref[_FW1_GLO:_FW1_GLO + H, :]              # (32, 64)
    fw2 = whead_ref[_FW2:_FW2 + 64, :]                         # (64, 64)
    fb1 = whead_ref[_FB1:_FB1 + 1, :]                          # (1, 64)
    fb2 = whead_ref[_FB2:_FB2 + 1, :]                          # (1, 64)
    fw3 = whead_ref[_FW3:_FW3 + 1, :]                          # (1, 64)

    a = jnp.maximum(_dot(h1, fw1_loc) + _dot(h2, fw1_glo) + fb1, 0.0)  # (n,64)
    a = jnp.maximum(_dot(a, fw2) + fb2, 0.0)                           # (n,64)

    # Linear(64->1): contract the last dims -> lane-dense (1, n) logits row.
    # The final bias is a constant shift of every logit -> softmax-invariant,
    # so it is dropped (output identical to the reference).
    logits = lax.dot_general(fw3, a, (((1,), (1,)), ((), ())),
                             preferred_element_type=jnp.float32)       # (1, n)
    m = jnp.max(logits, axis=-1, keepdims=True)
    e = jnp.exp(logits - m)
    o_ref[...] = e / jnp.sum(e, axis=-1, keepdims=True)


# ------------------------------ wrapper --------------------------------------

def meta_solver_gru_forward(x, kp):
    """x: (1, 1, n, n) float32 -> (1, n) softmax distribution."""
    xmat = x[0, 0]                                             # (n, n)
    n = xmat.shape[0]
    # TODO(synk): if the call site evaluates many independent (n,n) instances,
    # batch them behind a leading "parallel" grid axis (needed to use both
    # TensorCores on v7x); the module's forward is single-instance, so the
    # call stays gridless here.
    return pl.pallas_call(
        _meta_gru_kernel,
        out_shape=jax.ShapeDtypeStruct((1, n), jnp.float32),
        in_specs=[pl.BlockSpec(memory_space=pltpu.MemorySpace.VMEM)] * 4,
        out_specs=pl.BlockSpec(memory_space=pltpu.MemorySpace.VMEM),
    )(xmat, kp['wrec'], kp['brow'], kp['whead'])


# -------------------- parameters (torch layout) + kernel packing -------------

def init_params(key):
    def uni(k, shape, fan_in):
        b = 1.0 / math.sqrt(fan_in)
        return jax.random.uniform(k, shape, jnp.float32, -b, b)

    ks = jax.random.split(key, 16)
    return {
        'l1_w': uni(ks[0], (H, 1), 1), 'l1_b': uni(ks[1], (H,), 1),
        'gru1_w_ih': uni(ks[2], (G, H), H), 'gru1_w_hh': uni(ks[3], (G, H), H),
        'gru1_b_ih': uni(ks[4], (G,), H), 'gru1_b_hh': uni(ks[5], (G,), H),
        'gru2_w_ih': uni(ks[6], (G, H), H), 'gru2_w_hh': uni(ks[7], (G, H), H),
        'gru2_b_ih': uni(ks[8], (G,), H), 'gru2_b_hh': uni(ks[9], (G,), H),
        'f1_w': uni(ks[10], (64, 2 * H), 2 * H), 'f1_b': uni(ks[11], (64,), 2 * H),
        'f2_w': uni(ks[12], (64, 64), 64), 'f2_b': uni(ks[13], (64,), 64),
        'f3_w': uni(ks[14], (1, 64), 64), 'f3_b': uni(ks[15], (1,), 64),
    }


def prepare_params(p):
    """One-time fold/split/pack of PyTorch-layout weights into kernel layout."""
    f32 = jnp.float32
    hi = jax.lax.Precision.HIGHEST

    def row(v):
        return jnp.asarray(v, f32).reshape(1, -1)

    def gate_w(w, g):                       # (3H, K) -> (K, H) for gate g
        return jnp.asarray(w, f32)[g * H:(g + 1) * H, :].T

    def gate_b(b, g):
        return row(jnp.asarray(b, f32)[g * H:(g + 1) * H])

    l1w = jnp.asarray(p['l1_w'], f32)[:, 0]                    # (32,)
    l1b = jnp.asarray(p['l1_b'], f32)                          # (32,)

    wih1 = [gate_w(p['gru1_w_ih'], g) for g in range(3)]       # each (32, 32)
    whh1 = [gate_w(p['gru1_w_hh'], g) for g in range(3)]
    wih2 = [gate_w(p['gru2_w_ih'], g) for g in range(3)]
    whh2 = [gate_w(p['gru2_w_hh'], g) for g in range(3)]

    # Fold Linear(1->32) into GRU1's input projection (weight-only algebra):
    #   xg_g(x) = x * wx_g + bx_g
    wx = [row(jnp.matmul(l1w, wih1[g], precision=hi)) for g in range(3)]
    bx = [row(jnp.matmul(l1b, wih1[g], precision=hi)) + gate_b(p['gru1_b_ih'], g)
          for g in range(3)]
    bhh1 = [gate_b(p['gru1_b_hh'], g) for g in range(3)]
    bih2 = [gate_b(p['gru2_b_ih'], g) for g in range(3)]
    bhh2 = [gate_b(p['gru2_b_hh'], g) for g in range(3)]

    wrec = jnp.stack(whh1 + wih2 + whh2, axis=0)               # (9, 32, 32)
    brow = jnp.concatenate(wx + bx + bhh1 + bih2 + bhh2
                           + [jnp.zeros((1, H), f32)], axis=0)  # (16, 32)

    f1w = jnp.asarray(p['f1_w'], f32)                          # (64, 2H)
    fw1_loc = f1w[:, :H].T                                     # (32, 64)
    fw1_glo = f1w[:, H:].T                                     # (32, 64)
    fw2 = jnp.asarray(p['f2_w'], f32).T                        # (64, 64)
    fb1 = row(p['f1_b'])
    fb2 = row(p['f2_b'])
    fw3 = jnp.asarray(p['f3_w'], f32)                          # (1, 64)
    # f3_b dropped: softmax is invariant to a constant logit shift.
    whead = jnp.concatenate(
        [fw1_loc, fw1_glo, fw2, fb1, fb2, fw3, jnp.zeros((5, 64), f32)],
        axis=0)                                                # (136, 64)

    return dict(wrec=wrec, brow=brow, whead=whead)


# ------------------------------ pure-JAX reference ---------------------------

_HI = jax.lax.Precision.HIGHEST


def _ref_gru(x_seq, w_ih, w_hh, b_ih, b_hh):
    B, T, _ = x_seq.shape
    h = jnp.zeros((B, H), jnp.float32)
    for t in range(T):
        xg = jnp.dot(x_seq[:, t, :], w_ih.T, precision=_HI) + b_ih
        hg = jnp.dot(h, w_hh.T, precision=_HI) + b_hh
        r = jax.nn.sigmoid(xg[:, :H] + hg[:, :H])
        z = jax.nn.sigmoid(xg[:, H:2 * H] + hg[:, H:2 * H])
        ng = jnp.tanh(xg[:, 2 * H:] + r * hg[:, 2 * H:])
        h = (1.0 - z) * ng + z * h
    return h


def ref_forward(x, p):
    x0 = x[0]                                            # (1, n, n)
    n = x0.shape[-1]
    x1 = x0[..., None] * p['l1_w'][:, 0] + p['l1_b']     # (1, n, n, 32)
    x1 = x1[0]                                           # (n, n, 32)
    h1 = _ref_gru(x1, p['gru1_w_ih'], p['gru1_w_hh'],
                  p['gru1_b_ih'], p['gru1_b_hh'])        # (n, 32)  == x_local
    h2 = _ref_gru(h1[None], p['gru2_w_ih'], p['gru2_w_hh'],
                  p['gru2_b_ih'], p['gru2_b_hh'])        # (1, 32)
    x_final = jnp.concatenate([h1, jnp.broadcast_to(h2, (n, H))], axis=-1)
    a = jax.nn.relu(jnp.dot(x_final, p['f1_w'].T, precision=_HI) + p['f1_b'])
    a = jax.nn.relu(jnp.dot(a, p['f2_w'].T, precision=_HI) + p['f2_b'])
    logits = jnp.dot(a, p['f3_w'].T, precision=_HI)[:, 0] + p['f3_b'][0]
    return jax.nn.softmax(logits)[None, :]               # (1, n)


# ----------------------------------- main ------------------------------------

if __name__ == "__main__":
    key = jax.random.PRNGKey(0)
    pkey, xkey = jax.random.split(key)
    params = init_params(pkey)
    kparams = prepare_params(params)        # all folds/packing hoisted here

    n = 16
    x = jax.random.normal(xkey, (1, 1, n, n), jnp.float32)

    fwd = jax.jit(lambda inp: meta_solver_gru_forward(inp, kparams))
    out = jax.block_until_ready(fwd(x))

    ref = ref_forward(x, params)
    assert out.shape == (1, n), out.shape
    assert bool(jnp.allclose(jnp.sum(out), 1.0, atol=1e-5))
    assert bool(jnp.allclose(out, ref, rtol=1e-3, atol=2e-5)), (
        jnp.max(jnp.abs(out - ref)))

    print("KERNEL_OK")
</pallas_src>

<mosaic_0001>
module attributes {stable_mosaic.version = 11 : i64} {
  func.func @_meta_gru_kernel(%arg0: memref<16x16xf32, #tpu.memory_space<vmem>>, %arg1: memref<9x32x32xf32, #tpu.memory_space<vmem>>, %arg2: memref<16x32xf32, #tpu.memory_space<vmem>>, %arg3: memref<136x64xf32, #tpu.memory_space<vmem>>, %arg4: memref<1x16xf32, #tpu.memory_space<vmem>>) attributes {dimension_semantics = [], scalar_prefetch = 0 : i64, scratch_operands = 0 : i64, tpu.core_type = #tpu.core_type<tc>} {
    %c0 = arith.constant 0 : index
    %c0_0 = arith.constant 0 : index
    %0 = vector.load %arg0[%c0, %c0_0] : memref<16x16xf32, #tpu.memory_space<vmem>>, vector<16x16xf32>
    %c0_1 = arith.constant 0 : index
    %c0_2 = arith.constant 0 : index
    %1 = vector.load %arg2[%c0_1, %c0_2] : memref<16x32xf32, #tpu.memory_space<vmem>>, vector<16x32xf32>
    %2 = vector.extract_strided_slice %1 {offsets = [0, 0], sizes = [1, 32], strides = [1, 1]} : vector<16x32xf32> to vector<1x32xf32>
    %3 = vector.extract_strided_slice %1 {offsets = [1, 0], sizes = [1, 32], strides = [1, 1]} : vector<16x32xf32> to vector<1x32xf32>
    %4 = vector.extract_strided_slice %1 {offsets = [2, 0], sizes = [1, 32], strides = [1, 1]} : vector<16x32xf32> to vector<1x32xf32>
    %5 = vector.extract_strided_slice %1 {offsets = [3, 0], sizes = [1, 32], strides = [1, 1]} : vector<16x32xf32> to vector<1x32xf32>
    %6 = vector.extract_strided_slice %1 {offsets = [4, 0], sizes = [1, 32], strides = [1, 1]} : vector<16x32xf32> to vector<1x32xf32>
    %7 = vector.extract_strided_slice %1 {offsets = [5, 0], sizes = [1, 32], strides = [1, 1]} : vector<16x32xf32> to vector<1x32xf32>
    %8 = vector.extract_strided_slice %1 {offsets = [6, 0], sizes = [1, 32], strides = [1, 1]} : vector<16x32xf32> to vector<1x32xf32>
    %9 = vector.extract_strided_slice %1 {offsets = [7, 0], sizes = [1, 32], strides = [1, 1]} : vector<16x32xf32> to vector<1x32xf32>
    %10 = vector.extract_strided_slice %1 {offsets = [8, 0], sizes = [1, 32], strides = [1, 1]} : vector<16x32xf32> to vector<1x32xf32>
    %11 = vector.extract_strided_slice %1 {offsets = [9, 0], sizes = [1, 32], strides = [1, 1]} : vector<16x32xf32> to vector<1x32xf32>
    %12 = vector.extract_strided_slice %1 {offsets = [10, 0], sizes = [1, 32], strides = [1, 1]} : vector<16x32xf32> to vector<1x32xf32>
    %13 = vector.extract_strided_slice %1 {offsets = [11, 0], sizes = [1, 32], strides = [1, 1]} : vector<16x32xf32> to vector<1x32xf32>
    %14 = vector.extract_strided_slice %1 {offsets = [12, 0], sizes = [1, 32], strides = [1, 1]} : vector<16x32xf32> to vector<1x32xf32>
    %15 = vector.extract_strided_slice %1 {offsets = [13, 0], sizes = [1, 32], strides = [1, 1]} : vector<16x32xf32> to vector<1x32xf32>
    %16 = vector.extract_strided_slice %1 {offsets = [14, 0], sizes = [1, 32], strides = [1, 1]} : vector<16x32xf32> to vector<1x32xf32>
    %c0_3 = arith.constant 0 : index
    %c0_4 = arith.constant 0 : index
    %c0_5 = arith.constant 0 : index
    %17 = vector.load %arg1[%c0_3, %c0_4, %c0_5] : memref<9x32x32xf32, #tpu.memory_space<vmem>>, vector<1x32x32xf32>
    %18 = vector.shape_cast %17 : vector<1x32x32xf32> to vector<32x32xf32>
    %c1 = arith.constant 1 : index
    %c0_6 = arith.constant 0 : index
    %c0_7 = arith.constant 0 : index
    %19 = vector.load %arg1[%c1, %c0_6, %c0_7] : memref<9x32x32xf32, #tpu.memory_space<vmem>>, vector<1x32x32xf32>
    %20 = vector.shape_cast %19 : vector<1x32x32xf32> to vector<32x32xf32>
    %c2 = arith.constant 2 : index
    %c0_8 = arith.constant 0 : index
    %c0_9 = arith.constant 0 : index
    %21 = vector.load %arg1[%c2, %c0_8, %c0_9] : memref<9x32x32xf32, #tpu.memory_space<vmem>>, vector<1x32x32xf32>
    %22 = vector.shape_cast %21 : vector<1x32x32xf32> to vector<32x32xf32>
    %c3 = arith.constant 3 : index
    %c0_10 = arith.constant 0 : index
    %c0_11 = arith.constant 0 : index
    %23 = vector.load %arg1[%c3, %c0_10, %c0_11] : memref<9x32x32xf32, #tpu.memory_space<vmem>>, vector<1x32x32xf32>
    %24 = vector.shape_cast %23 : vector<1x32x32xf32> to vector<32x32xf32>
    %c4 = arith.constant 4 : index
    %c0_12 = arith.constant 0 : index
    %c0_13 = arith.constant 0 : index
    %25 = vector.load %arg1[%c4, %c0_12, %c0_13] : memref<9x32x32xf32, #tpu.memory_space<vmem>>, vector<1x32x32xf32>
    %26 = vector.shape_cast %25 : vector<1x32x32xf32> to vector<32x32xf32>
    %c5 = arith.constant 5 : index
    %c0_14 = arith.constant 0 : index
    %c0_15 = arith.constant 0 : index
    %27 = vector.load %arg1[%c5, %c0_14, %c0_15] : memref<9x32x32xf32, #tpu.memory_space<vmem>>, vector<1x32x32xf32>
    %28 = vector.shape_cast %27 : vector<1x32x32xf32> to vector<32x32xf32>
    %c6 = arith.constant 6 : index
    %c0_16 = arith.constant 0 : index
    %c0_17 = arith.constant 0 : index
    %29 = vector.load %arg1[%c6, %c0_16, %c0_17] : memref<9x32x32xf32, #tpu.memory_space<vmem>>, vector<1x32x32xf32>
    %30 = vector.shape_cast %29 : vector<1x32x32xf32> to vector<32x32xf32>
    %c7 = arith.constant 7 : index
    %c0_18 = arith.constant 0 : index
    %c0_19 = arith.constant 0 : index
    %31 = vector.load %arg1[%c7, %c0_18, %c0_19] : memref<9x32x32xf32, #tpu.memory_space<vmem>>, vector<1x32x32xf32>
    %32 = vector.shape_cast %31 : vector<1x32x32xf32> to vector<32x32xf32>
    %c8 = arith.constant 8 : index
    %c0_20 = arith.constant 0 : index
    %c0_21 = arith.constant 0 : index
    %33 = vector.load %arg1[%c8, %c0_20, %c0_21] : memref<9x32x32xf32, #tpu.memory_space<vmem>>, vector<1x32x32xf32>
    %34 = vector.shape_cast %33 : vector<1x32x32xf32> to vector<32x32xf32>
    %35 = vector.extract_strided_slice %0 {offsets = [0, 0], sizes = [16, 1], strides = [1, 1]} : vector<16x16xf32> to vector<16x1xf32>
    %36 = vector.broadcast %35 : vector<16x1xf32> to vector<16x32xf32>
    %37 = vector.broadcast %2 : vector<1x32xf32> to vector<16x32xf32>
    %38 = arith.mulf %36, %37 : vector<16x32xf32>
    %39 = vector.broadcast %5 : vector<1x32xf32> to vector<16x32xf32>
    %40 = arith.addf %38, %39 : vector<16x32xf32>
    %41 = vector.broadcast %35 : vector<16x1xf32> to vector<16x32xf32>
    %42 = vector.broadcast %3 : vector<1x32xf32> to vector<16x32xf32>
    %43 = arith.mulf %41, %42 : vector<16x32xf32>
    %44 = vector.broadcast %6 : vector<1x32xf32> to vector<16x32xf32>
    %45 = arith.addf %43, %44 : vector<16x32xf32>
    %46 = vector.broadcast %35 : vector<16x1xf32> to vector<16x32xf32>
    %47 = vector.broadcast %4 : vector<1x32xf32> to vector<16x32xf32>
    %48 = arith.mulf %46, %47 : vector<16x32xf32>
    %49 = vector.broadcast %7 : vector<1x32xf32> to vector<16x32xf32>
    %50 = arith.addf %48, %49 : vector<16x32xf32>
    %51 = vector.extract_strided_slice %0 {offsets = [0, 1], sizes = [16, 1], strides = [1, 1]} : vector<16x16xf32> to vector<16x1xf32>
    %52 = vector.broadcast %51 : vector<16x1xf32> to vector<16x32xf32>
    %53 = vector.broadcast %2 : vector<1x32xf32> to vector<16x32xf32>
    %54 = arith.mulf %52, %53 : vector<16x32xf32>
    %55 = vector.broadcast %5 : vector<1x32xf32> to vector<16x32xf32>
    %56 = arith.addf %54, %55 : vector<16x32xf32>
    %57 = vector.broadcast %51 : vector<16x1xf32> to vector<16x32xf32>
    %58 = vector.broadcast %3 : vector<1x32xf32> to vector<16x32xf32>
    %59 = arith.mulf %57, %58 : vector<16x32xf32>
    %60 = vector.broadcast %6 : vector<1x32xf32> to vector<16x32xf32>
    %61 = arith.addf %59, %60 : vector<16x32xf32>
    %62 = vector.broadcast %51 : vector<16x1xf32> to vector<16x32xf32>
    %63 = vector.broadcast %4 : vector<1x32xf32> to vector<16x32xf32>
    %64 = arith.mulf %62, %63 : vector<16x32xf32>
    %65 = vector.broadcast %7 : vector<1x32xf32> to vector<16x32xf32>
    %66 = arith.addf %64, %65 : vector<16x32xf32>
    %67 = vector.extract_strided_slice %0 {offsets = [0, 2], sizes = [16, 1], strides = [1, 1]} : vector<16x16xf32> to vector<16x1xf32>
    %68 = vector.broadcast %67 : vector<16x1xf32> to vector<16x32xf32>
    %69 = vector.broadcast %2 : vector<1x32xf32> to vector<16x32xf32>
    %70 = arith.mulf %68, %69 : vector<16x32xf32>
    %71 = vector.broadcast %5 : vector<1x32xf32> to vector<16x32xf32>
    %72 = arith.addf %70, %71 : vector<16x32xf32>
    %73 = vector.broadcast %67 : vector<16x1xf32> to vector<16x32xf32>
    %74 = vector.broadcast %3 : vector<1x32xf32> to vector<16x32xf32>
    %75 = arith.mulf %73, %74 : vector<16x32xf32>
    %76 = vector.broadcast %6 : vector<1x32xf32> to vector<16x32xf32>
    %77 = arith.addf %75, %76 : vector<16x32xf32>
    %78 = vector.broadcast %67 : vector<16x1xf32> to vector<16x32xf32>
    %79 = vector.broadcast %4 : vector<1x32xf32> to vector<16x32xf32>
    %80 = arith.mulf %78, %79 : vector<16x32xf32>
    %81 = vector.broadcast %7 : vector<1x32xf32> to vector<16x32xf32>
    %82 = arith.addf %80, %81 : vector<16x32xf32>
    %83 = vector.extract_strided_slice %0 {offsets = [0, 3], sizes = [16, 1], strides = [1, 1]} : vector<16x16xf32> to vector<16x1xf32>
    %84 = vector.broadcast %83 : vector<16x1xf32> to vector<16x32xf32>
    %85 = vector.broadcast %2 : vector<1x32xf32> to vector<16x32xf32>
    %86 = arith.mulf %84, %85 : vector<16x32xf32>
    %87 = vector.broadcast %5 : vector<1x32xf32> to vector<16x32xf32>
    %88 = arith.addf %86, %87 : vector<16x32xf32>
    %89 = vector.broadcast %83 : vector<16x1xf32> to vector<16x32xf32>
    %90 = vector.broadcast %3 : vector<1x32xf32> to vector<16x32xf32>
    %91 = arith.mulf %89, %90 : vector<16x32xf32>
    %92 = vector.broadcast %6 : vector<1x32xf32> to vector<16x32xf32>
    %93 = arith.addf %91, %92 : vector<16x32xf32>
    %94 = vector.broadcast %83 : vector<16x1xf32> to vector<16x32xf32>
    %95 = vector.broadcast %4 : vector<1x32xf32> to vector<16x32xf32>
    %96 = arith.mulf %94, %95 : vector<16x32xf32>
    %97 = vector.broadcast %7 : vector<1x32xf32> to vector<16x32xf32>
    %98 = arith.addf %96, %97 : vector<16x32xf32>
    %99 = vector.extract_strided_slice %0 {offsets = [0, 4], sizes = [16, 1], strides = [1, 1]} : vector<16x16xf32> to vector<16x1xf32>
    %100 = vector.broadcast %99 : vector<16x1xf32> to vector<16x32xf32>
    %101 = vector.broadcast %2 : vector<1x32xf32> to vector<16x32xf32>
    %102 = arith.mulf %100, %101 : vector<16x32xf32>
    %103 = vector.broadcast %5 : vector<1x32xf32> to vector<16x32xf32>
    %104 = arith.addf %102, %103 : vector<16x32xf32>
    %105 = vector.broadcast %99 : vector<16x1xf32> to vector<16x32xf32>
    %106 = vector.broadcast %3 : vector<1x32xf32> to vector<16x32xf32>
    %107 = arith.mulf %105, %106 : vector<16x32xf32>
    %108 = vector.broadcast %6 : vector<1x32xf32> to vector<16x32xf32>
    %109 = arith.addf %107, %108 : vector<16x32xf32>
    %110 = vector.broadcast %99 : vector<16x1xf32> to vector<16x32xf32>
    %111 = vector.broadcast %4 : vector<1x32xf32> to vector<16x32xf32>
    %112 = arith.mulf %110, %111 : vector<16x32xf32>
    %113 = vector.broadcast %7 : vector<1x32xf32> to vector<16x32xf32>
    %114 = arith.addf %112, %113 : vector<16x32xf32>
    %115 = vector.extract_strided_slice %0 {offsets = [0, 5], sizes = [16, 1], strides = [1, 1]} : vector<16x16xf32> to vector<16x1xf32>
    %116 = vector.broadcast %115 : vector<16x1xf32> to vector<16x32xf32>
    %117 = vector.broadcast %2 : vector<1x32xf32> to vector<16x32xf32>
    %118 = arith.mulf %116, %117 : vector<16x32xf32>
    %119 = vector.broadcast %5 : vector<1x32xf32> to vector<16x32xf32>
    %120 = arith.addf %118, %119 : vector<16x32xf32>
    %121 = vector.broadcast %115 : vector<16x1xf32> to vector<16x32xf32>
    %122 = vector.broadcast %3 : vector<1x32xf32> to vector<16x32xf32>
    %123 = arith.mulf %121, %122 : vector<16x32xf32>
    %124 = vector.broadcast %6 : vector<1x32xf32> to vector<16x32xf32>
    %125 = arith.addf %123, %124 : vector<16x32xf32>
    %126 = vector.broadcast %115 : vector<16x1xf32> to vector<16x32xf32>
    %127 = vector.broadcast %4 : vector<1x32xf32> to vector<16x32xf32>
    %128 = arith.mulf %126, %127 : vector<16x32xf32>
    %129 = vector.broadcast %7 : vector<1x32xf32> to vector<16x32xf32>
    %130 = arith.addf %128, %129 : vector<16x32xf32>
    %131 = vector.extract_strided_slice %0 {offsets = [0, 6], sizes = [16, 1], strides = [1, 1]} : vector<16x16xf32> to vector<16x1xf32>
    %132 = vector.broadcast %131 : vector<16x1xf32> to vector<16x32xf32>
    %133 = vector.broadcast %2 : vector<1x32xf32> to vector<16x32xf32>
    %134 = arith.mulf %132, %133 : vector<16x32xf32>
    %135 = vector.broadcast %5 : vector<1x32xf32> to vector<16x32xf32>
    %136 = arith.addf %134, %135 : vector<16x32xf32>
    %137 = vector.broadcast %131 : vector<16x1xf32> to vector<16x32xf32>
    %138 = vector.broadcast %3 : vector<1x32xf32> to vector<16x32xf32>
    %139 = arith.mulf %137, %138 : vector<16x32xf32>
    %140 = vector.broadcast %6 : vector<1x32xf32> to vector<16x32xf32>
    %141 = arith.addf %139, %140 : vector<16x32xf32>
    %142 = vector.broadcast %131 : vector<16x1xf32> to vector<16x32xf32>
    %143 = vector.broadcast %4 : vector<1x32xf32> to vector<16x32xf32>
    %144 = arith.mulf %142, %143 : vector<16x32xf32>
    %145 = vector.broadcast %7 : vector<1x32xf32> to vector<16x32xf32>
    %146 = arith.addf %144, %145 : vector<16x32xf32>
    %147 = vector.extract_strided_slice %0 {offsets = [0, 7], sizes = [16, 1], strides = [1, 1]} : vector<16x16xf32> to vector<16x1xf32>
    %148 = vector.broadcast %147 : vector<16x1xf32> to vector<16x32xf32>
    %149 = vector.broadcast %2 : vector<1x32xf32> to vector<16x32xf32>
    %150 = arith.mulf %148, %149 : vector<16x32xf32>
    %151 = vector.broadcast %5 : vector<1x32xf32> to vector<16x32xf32>
    %152 = arith.addf %150, %151 : vector<16x32xf32>
    %153 = vector.broadcast %147 : vector<16x1xf32> to vector<16x32xf32>
    %154 = vector.broadcast %3 : vector<1x32xf32> to vector<16x32xf32>
    %155 = arith.mulf %153, %154 : vector<16x32xf32>
    %156 = vector.broadcast %6 : vector<1x32xf32> to vector<16x32xf32>
    %157 = arith.addf %155, %156 : vector<16x32xf32>
    %158 = vector.broadcast %147 : vector<16x1xf32> to vector<16x32xf32>
    %159 = vector.broadcast %4 : vector<1x32xf32> to vector<16x32xf32>
    %160 = arith.mulf %158, %159 : vector<16x32xf32>
    %161 = vector.broadcast %7 : vector<1x32xf32> to vector<16x32xf32>
    %162 = arith.addf %160, %161 : vector<16x32xf32>
    %163 = vector.extract_strided_slice %0 {offsets = [0, 8], sizes = [16, 1], strides = [1, 1]} : vector<16x16xf32> to vector<16x1xf32>
    %164 = vector.broadcast %163 : vector<16x1xf32> to vector<16x32xf32>
    %165 = vector.broadcast %2 : vector<1x32xf32> to vector<16x32xf32>
    %166 = arith.mulf %164, %165 : vector<16x32xf32>
    %167 = vector.broadcast %5 : vector<1x32xf32> to vector<16x32xf32>
    %168 = arith.addf %166, %167 : vector<16x32xf32>
    %169 = vector.broadcast %163 : vector<16x1xf32> to vector<16x32xf32>
    %170 = vector.broadcast %3 : vector<1x32xf32> to vector<16x32xf32>
    %171 = arith.mulf %169, %170 : vector<16x32xf32>
    %172 = vector.broadcast %6 : vector<1x32xf32> to vector<16x32xf32>
    %173 = arith.addf %171, %172 : vector<16x32xf32>
    %174 = vector.broadcast %163 : vector<16x1xf32> to vector<16x32xf32>
    %175 = vector.broadcast %4 : vector<1x32xf32> to vector<16x32xf32>
    %176 = arith.mulf %174, %175 : vector<16x32xf32>
    %177 = vector.broadcast %7 : vector<1x32xf32> to vector<16x32xf32>
    %178 = arith.addf %176, %177 : vector<16x32xf32>
    %179 = vector.extract_strided_slice %0 {offsets = [0, 9], sizes = [16, 1], strides = [1, 1]} : vector<16x16xf32> to vector<16x1xf32>
    %180 = vector.broadcast %179 : vector<16x1xf32> to vector<16x32xf32>
    %181 = vector.broadcast %2 : vector<1x32xf32> to vector<16x32xf32>
    %182 = arith.mulf %180, %181 : vector<16x32xf32>
    %183 = vector.broadcast %5 : vector<1x32xf32> to vector<16x32xf32>
    %184 = arith.addf %182, %183 : vector<16x32xf32>
    %185 = vector.broadcast %179 : vector<16x1xf32> to vector<16x32xf32>
    %186 = vector.broadcast %3 : vector<1x32xf32> to vector<16x32xf32>
    %187 = arith.mulf %185, %186 : vector<16x32xf32>
    %188 = vector.broadcast %6 : vector<1x32xf32> to vector<16x32xf32>
    %189 = arith.addf %187, %188 : vector<16x32xf32>
    %190 = vector.broadcast %179 : vector<16x1xf32> to vector<16x32xf32>
    %191 = vector.broadcast %4 : vector<1x32xf32> to vector<16x32xf32>
    %192 = arith.mulf %190, %191 : vector<16x32xf32>
    %193 = vector.broadcast %7 : vector<1x32xf32> to vector<16x32xf32>
    %194 = arith.addf %192, %193 : vector<16x32xf32>
    %195 = vector.extract_strided_slice %0 {offsets = [0, 10], sizes = [16, 1], strides = [1, 1]} : vector<16x16xf32> to vector<16x1xf32>
    %196 = vector.broadcast %195 : vector<16x1xf32> to vector<16x32xf32>
    %197 = vector.broadcast %2 : vector<1x32xf32> to vector<16x32xf32>
    %198 = arith.mulf %196, %197 : vector<16x32xf32>
    %199 = vector.broadcast %5 : vector<1x32xf32> to vector<16x32xf32>
    %200 = arith.addf %198, %199 : vector<16x32xf32>
    %201 = vector.broadcast %195 : vector<16x1xf32> to vector<16x32xf32>
    %202 = vector.broadcast %3 : vector<1x32xf32> to vector<16x32xf32>
    %203 = arith.mulf %201, %202 : vector<16x32xf32>
    %204 = vector.broadcast %6 : vector<1x32xf32> to vector<16x32xf32>
    %205 = arith.addf %203, %204 : vector<16x32xf32>
    %206 = vector.broadcast %195 : vector<16x1xf32> to vector<16x32xf32>
    %207 = vector.broadcast %4 : vector<1x32xf32> to vector<16x32xf32>
    %208 = arith.mulf %206, %207 : vector<16x32xf32>
    %209 = vector.broadcast %7 : vector<1x32xf32> to vector<16x32xf32>
    %210 = arith.addf %208, %209 : vector<16x32xf32>
    %211 = vector.extract_strided_slice %0 {offsets = [0, 11], sizes = [16, 1], strides = [1, 1]} : vector<16x16xf32> to vector<16x1xf32>
    %212 = vector.broadcast %211 : vector<16x1xf32> to vector<16x32xf32>
    %213 = vector.broadcast %2 : vector<1x32xf32> to vector<16x32xf32>
    %214 = arith.mulf %212, %213 : vector<16x32xf32>
    %215 = vector.broadcast %5 : vector<1x32xf32> to vector<16x32xf32>
    %216 = arith.addf %214, %215 : vector<16x32xf32>
    %217 = vector.broadcast %211 : vector<16x1xf32> to vector<16x32xf32>
    %218 = vector.broadcast %3 : vector<1x32xf32> to vector<16x32xf32>
    %219 = arith.mulf %217, %218 : vector<16x32xf32>
    %220 = vector.broadcast %6 : vector<1x32xf32> to vector<16x32xf32>
    %221 = arith.addf %219, %220 : vector<16x32xf32>
    %222 = vector.broadcast %211 : vector<16x1xf32> to vector<16x32xf32>
    %223 = vector.broadcast %4 : vector<1x32xf32> to vector<16x32xf32>
    %224 = arith.mulf %222, %223 : vector<16x32xf32>
    %225 = vector.broadcast %7 : vector<1x32xf32> to vector<16x32xf32>
    %226 = arith.addf %224, %225 : vector<16x32xf32>
    %227 = vector.extract_strided_slice %0 {offsets = [0, 12], sizes = [16, 1], strides = [1, 1]} : vector<16x16xf32> to vector<16x1xf32>
    %228 = vector.broadcast %227 : vector<16x1xf32> to vector<16x32xf32>
    %229 = vector.broadcast %2 : vector<1x32xf32> to vector<16x32xf32>
    %230 = arith.mulf %228, %229 : vector<16x32xf32>
    %231 = vector.broadcast %5 : vector<1x32xf32> to vector<16x32xf32>
    %232 = arith.addf %230, %231 : vector<16x32xf32>
    %233 = vector.broadcast %227 : vector<16x1xf32> to vector<16x32xf32>
    %234 = vector.broadcast %3 : vector<1x32xf32> to vector<16x32xf32>
    %235 = arith.mulf %233, %234 : vector<16x32xf32>
    %236 = vector.broadcast %6 : vector<1x32xf32> to vector<16x32xf32>
    %237 = arith.addf %235, %236 : vector<16x32xf32>
    %238 = vector.broadcast %227 : vector<16x1xf32> to vector<16x32xf32>
    %239 = vector.broadcast %4 : vector<1x32xf32> to vector<16x32xf32>
    %240 = arith.mulf %238, %239 : vector<16x32xf32>
    %241 = vector.broadcast %7 : vector<1x32xf32> to vector<16x32xf32>
    %242 = arith.addf %240, %241 : vector<16x32xf32>
    %243 = vector.extract_strided_slice %0 {offsets = [0, 13], sizes = [16, 1], strides = [1, 1]} : vector<16x16xf32> to vector<16x1xf32>
    %244 = vector.broadcast %243 : vector<16x1xf32> to vector<16x32xf32>
    %245 = vector.broadcast %2 : vector<1x32xf32> to vector<16x32xf32>
    %246 = arith.mulf %244, %245 : vector<16x32xf32>
    %247 = vector.broadcast %5 : vector<1x32xf32> to vector<16x32xf32>
    %248 = arith.addf %246, %247 : vector<16x32xf32>
    %249 = vector.broadcast %243 : vector<16x1xf32> to vector<16x32xf32>
    %250 = vector.broadcast %3 : vector<1x32xf32> to vector<16x32xf32>
    %251 = arith.mulf %249, %250 : vector<16x32xf32>
    %252 = vector.broadcast %6 : vector<1x32xf32> to vector<16x32xf32>
    %253 = arith.addf %251, %252 : vector<16x32xf32>
    %254 = vector.broadcast %243 : vector<16x1xf32> to vector<16x32xf32>
    %255 = vector.broadcast %4 : vector<1x32xf32> to vector<16x32xf32>
    %256 = arith.mulf %254, %255 : vector<16x32xf32>
    %257 = vector.broadcast %7 : vector<1x32xf32> to vector<16x32xf32>
    %258 = arith.addf %256, %257 : vector<16x32xf32>
    %259 = vector.extract_strided_slice %0 {offsets = [0, 14], sizes = [16, 1], strides = [1, 1]} : vector<16x16xf32> to vector<16x1xf32>
    %260 = vector.broadcast %259 : vector<16x1xf32> to vector<16x32xf32>
    %261 = vector.broadcast %2 : vector<1x32xf32> to vector<16x32xf32>
    %262 = arith.mulf %260, %261 : vector<16x32xf32>
    %263 = vector.broadcast %5 : vector<1x32xf32> to vector<16x32xf32>
    %264 = arith.addf %262, %263 : vector<16x32xf32>
    %265 = vector.broadcast %259 : vector<16x1xf32> to vector<16x32xf32>
    %266 = vector.broadcast %3 : vector<1x32xf32> to vector<16x32xf32>
    %267 = arith.mulf %265, %266 : vector<16x32xf32>
    %268 = vector.broadcast %6 : vector<1x32xf32> to vector<16x32xf32>
    %269 = arith.addf %267, %268 : vector<16x32xf32>
    %270 = vector.broadcast %259 : vector<16x1xf32> to vector<16x32xf32>
    %271 = vector.broadcast %4 : vector<1x32xf32> to vector<16x32xf32>
    %272 = arith.mulf %270, %271 : vector<16x32xf32>
    %273 = vector.broadcast %7 : vector<1x32xf32> to vector<16x32xf32>
    %274 = arith.addf %272, %273 : vector<16x32xf32>
    %275 = vector.extract_strided_slice %0 {offsets = [0, 15], sizes = [16, 1], strides = [1, 1]} : vector<16x16xf32> to vector<16x1xf32>
    %276 = vector.broadcast %275 : vector<16x1xf32> to vector<16x32xf32>
    %277 = vector.broadcast %2 : vector<1x32xf32> to vector<16x32xf32>
    %278 = arith.mulf %276, %277 : vector<16x32xf32>
    %279 = vector.broadcast %5 : vector<1x32xf32> to vector<16x32xf32>
    %280 = arith.addf %278, %279 : vector<16x32xf32>
    %281 = vector.broadcast %275 : vector<16x1xf32> to vector<16x32xf32>
    %282 = vector.broadcast %3 : vector<1x32xf32> to vector<16x32xf32>
    %283 = arith.mulf %281, %282 : vector<16x32xf32>
    %284 = vector.broadcast %6 : vector<1x32xf32> to vector<16x32xf32>
    %285 = arith.addf %283, %284 : vector<16x32xf32>
    %286 = vector.broadcast %275 : vector<16x1xf32> to vector<16x32xf32>
    %287 = vector.broadcast %4 : vector<1x32xf32> to vector<16x32xf32>
    %288 = arith.mulf %286, %287 : vector<16x32xf32>
    %289 = vector.broadcast %7 : vector<1x32xf32> to vector<16x32xf32>
    %290 = arith.addf %288, %289 : vector<16x32xf32>
    %291 = vector.broadcast %8 : vector<1x32xf32> to vector<16x32xf32>
    %292 = arith.addf %40, %291 : vector<16x32xf32>
    %cst = arith.constant 5.000000e-01 : f32
    %293 = vector.broadcast %cst : f32 to vector<16x32xf32>
    %294 = arith.mulf %293, %292 : vector<16x32xf32>
    %295 = math.tanh %294 : vector<16x32xf32>
    %cst_22 = arith.constant 5.000000e-01 : f32
    %296 = vector.broadcast %cst_22 : f32 to vector<16x32xf32>
    %297 = arith.mulf %296, %295 : vector<16x32xf32>
    %cst_23 = arith.constant 5.000000e-01 : f32
    %298 = vector.broadcast %cst_23 : f32 to vector<16x32xf32>
    %299 = arith.addf %297, %298 : vector<16x32xf32>
    %300 = vector.broadcast %9 : vector<1x32xf32> to vector<16x32xf32>
    %301 = arith.addf %45, %300 : vector<16x32xf32>
    %cst_24 = arith.constant 5.000000e-01 : f32
    %302 = vector.broadcast %cst_24 : f32 to vector<16x32xf32>
    %303 = arith.mulf %302, %301 : vector<16x32xf32>
    %304 = math.tanh %303 : vector<16x32xf32>
    %cst_25 = arith.constant 5.000000e-01 : f32
    %305 = vector.broadcast %cst_25 : f32 to vector<16x32xf32>
    %306 = arith.mulf %305, %304 : vector<16x32xf32>
    %cst_26 = arith.constant 5.000000e-01 : f32
    %307 = vector.broadcast %cst_26 : f32 to vector<16x32xf32>
    %308 = arith.addf %306, %307 : vector<16x32xf32>
    %309 = vector.broadcast %10 : vector<1x32xf32> to vector<16x32xf32>
    %310 = arith.mulf %299, %309 : vector<16x32xf32>
    %311 = arith.addf %50, %310 : vector<16x32xf32>
    %312 = math.tanh %311 : vector<16x32xf32>
    %cst_27 = arith.constant 1.000000e+00 : f32
    %313 = vector.broadcast %cst_27 : f32 to vector<16x32xf32>
    %314 = arith.subf %313, %308 : vector<16x32xf32>
    %315 = arith.mulf %314, %312 : vector<16x32xf32>
    %cst_28 = arith.constant dense<0.000000e+00> : vector<16x32xf32>
    %316 = tpu.matmul %315, %18, %cst_28 {dimension_numbers = #tpu.dot_dimension_numbers<[1], [0], [0], [1], [0, 0, 1, 1], [], []>} : vector<16x32xf32>, vector<32x32xf32>, vector<16x32xf32> -> vector<16x32xf32>
    %317 = vector.broadcast %8 : vector<1x32xf32> to vector<16x32xf32>
    %318 = arith.addf %316, %317 : vector<16x32xf32>
    %cst_29 = arith.constant dense<0.000000e+00> : vector<16x32xf32>
    %319 = tpu.matmul %315, %20, %cst_29 {dimension_numbers = #tpu.dot_dimension_numbers<[1], [0], [0], [1], [0, 0, 1, 1], [], []>} : vector<16x32xf32>, vector<32x32xf32>, vector<16x32xf32> -> vector<16x32xf32>
    %320 = vector.broadcast %9 : vector<1x32xf32> to vector<16x32xf32>
    %321 = arith.addf %319, %320 : vector<16x32xf32>
    %cst_30 = arith.constant dense<0.000000e+00> : vector<16x32xf32>
    %322 = tpu.matmul %315, %22, %cst_30 {dimension_numbers = #tpu.dot_dimension_numbers<[1], [0], [0], [1], [0, 0, 1, 1], [], []>} : vector<16x32xf32>, vector<32x32xf32>, vector<16x32xf32> -> vector<16x32xf32>
    %323 = vector.broadcast %10 : vector<1x32xf32> to vector<16x32xf32>
    %324 = arith.addf %322, %323 : vector<16x32xf32>
    %325 = arith.addf %56, %318 : vector<16x32xf32>
    %cst_31 = arith.constant 5.000000e-01 : f32
    %326 = vector.broadcast %cst_31 : f32 to vector<16x32xf32>
    %327 = arith.mulf %326, %325 : vector<16x32xf32>
    %328 = math.tanh %327 : vector<16x32xf32>
    %cst_32 = arith.constant 5.000000e-01 : f32
    %329 = vector.broadcast %cst_32 : f32 to vector<16x32xf32>
    %330 = arith.mulf %329, %328 : vector<16x32xf32>
    %cst_33 = arith.constant 5.000000e-01 : f32
    %331 = vector.broadcast %cst_33 : f32 to vector<16x32xf32>
    %332 = arith.addf %330, %331 : vector<16x32xf32>
    %333 = arith.addf %61, %321 : vector<16x32xf32>
    %cst_34 = arith.constant 5.000000e-01 : f32
    %334 = vector.broadcast %cst_34 : f32 to vector<16x32xf32>
    %335 = arith.mulf %334, %333 : vector<16x32xf32>
    %336 = math.tanh %335 : vector<16x32xf32>
    %cst_35 = arith.constant 5.000000e-01 : f32
    %337 = vector.broadcast %cst_35 : f32 to vector<16x32xf32>
    %338 = arith.mulf %337, %336 : vector<16x32xf32>
    %cst_36 = arith.constant 5.000000e-01 : f32
    %339 = vector.broadcast %cst_36 : f32 to vector<16x32xf32>
    %340 = arith.addf %338, %339 : vector<16x32xf32>
    %341 = arith.mulf %332, %324 : vector<16x32xf32>
    %342 = arith.addf %66, %341 : vector<16x32xf32>
    %343 = math.tanh %342 : vector<16x32xf32>
    %344 = arith.subf %315, %343 : vector<16x32xf32>
    %345 = arith.mulf %340, %344 : vector<16x32xf32>
    %346 = arith.addf %343, %345 : vector<16x32xf32>
    %cst_37 = arith.constant dense<0.000000e+00> : vector<16x32xf32>
    %347 = tpu.matmul %346, %18, %cst_37 {dimension_numbers = #tpu.dot_dimension_numbers<[1], [0], [0], [1], [0, 0, 1, 1], [], []>} : vector<16x32xf32>, vector<32x32xf32>, vector<16x32xf32> -> vector<16x32xf32>
    %348 = vector.broadcast %8 : vector<1x32xf32> to vector<16x32xf32>
    %349 = arith.addf %347, %348 : vector<16x32xf32>
    %cst_38 = arith.constant dense<0.000000e+00> : vector<16x32xf32>
    %350 = tpu.matmul %346, %20, %cst_38 {dimension_numbers = #tpu.dot_dimension_numbers<[1], [0], [0], [1], [0, 0, 1, 1], [], []>} : vector<16x32xf32>, vector<32x32xf32>, vector<16x32xf32> -> vector<16x32xf32>
    %351 = vector.broadcast %9 : vector<1x32xf32> to vector<16x32xf32>
    %352 = arith.addf %350, %351 : vector<16x32xf32>
    %cst_39 = arith.constant dense<0.000000e+00> : vector<16x32xf32>
    %353 = tpu.matmul %346, %22, %cst_39 {dimension_numbers = #tpu.dot_dimension_numbers<[1], [0], [0], [1], [0, 0, 1, 1], [], []>} : vector<16x32xf32>, vector<32x32xf32>, vector<16x32xf32> -> vector<16x32xf32>
    %354 = vector.broadcast %10 : vector<1x32xf32> to vector<16x32xf32>
    %355 = arith.addf %353, %354 : vector<16x32xf32>
    %356 = arith.addf %72, %349 : vector<16x32xf32>
    %cst_40 = arith.constant 5.000000e-01 : f32
    %357 = vector.broadcast %cst_40 : f32 to vector<16x32xf32>
    %358 = arith.mulf %357, %356 : vector<16x32xf32>
    %359 = math.tanh %358 : vector<16x32xf32>
    %cst_41 = arith.constant 5.000000e-01 : f32
    %360 = vector.broadcast %cst_41 : f32 to vector<16x32xf32>
    %361 = arith.mulf %360, %359 : vector<16x32xf32>
    %cst_42 = arith.constant 5.000000e-01 : f32
    %362 = vector.broadcast %cst_42 : f32 to vector<16x32xf32>
    %363 = arith.addf %361, %362 : vector<16x32xf32>
    %364 = arith.addf %77, %352 : vector<16x32xf32>
    %cst_43 = arith.constant 5.000000e-01 : f32
    %365 = vector.broadcast %cst_43 : f32 to vector<16x32xf32>
    %366 = arith.mulf %365, %364 : vector<16x32xf32>
    %367 = math.tanh %366 : vector<16x32xf32>
    %cst_44 = arith.constant 5.000000e-01 : f32
    %368 = vector.broadcast %cst_44 : f32 to vector<16x32xf32>
    %369 = arith.mulf %368, %367 : vector<16x32xf32>
    %cst_45 = arith.constant 5.000000e-01 : f32
    %370 = vector.broadcast %cst_45 : f32 to vector<16x32xf32>
    %371 = arith.addf %369, %370 : vector<16x32xf32>
    %372 = arith.mulf %363, %355 : vector<16x32xf32>
    %373 = arith.addf %82, %372 : vector<16x32xf32>
    %374 = math.tanh %373 : vector<16x32xf32>
    %375 = arith.subf %346, %374 : vector<16x32xf32>
    %376 = arith.mulf %371, %375 : vector<16x32xf32>
    %377 = arith.addf %374, %376 : vector<16x32xf32>
    %cst_46 = arith.constant dense<0.000000e+00> : vector<16x32xf32>
    %378 = tpu.matmul %377, %18, %cst_46 {dimension_numbers = #tpu.dot_dimension_numbers<[1], [0], [0], [1], [0, 0, 1, 1], [], []>} : vector<16x32xf32>, vector<32x32xf32>, vector<16x32xf32> -> vector<16x32xf32>
    %379 = vector.broadcast %8 : vector<1x32xf32> to vector<16x32xf32>
    %380 = arith.addf %378, %379 : vector<16x32xf32>
    %cst_47 = arith.constant dense<0.000000e+00> : vector<16x32xf32>
    %381 = tpu.matmul %377, %20, %cst_47 {dimension_numbers = #tpu.dot_dimension_numbers<[1], [0], [0], [1], [0, 0, 1, 1], [], []>} : vector<16x32xf32>, vector<32x32xf32>, vector<16x32xf32> -> vector<16x32xf32>
    %382 = vector.broadcast %9 : vector<1x32xf32> to vector<16x32xf32>
    %383 = arith.addf %381, %382 : vector<16x32xf32>
    %cst_48 = arith.constant dense<0.000000e+00> : vector<16x32xf32>
    %384 = tpu.matmul %377, %22, %cst_48 {dimension_numbers = #tpu.dot_dimension_numbers<[1], [0], [0], [1], [0, 0, 1, 1], [], []>} : vector<16x32xf32>, vector<32x32xf32>, vector<16x32xf32> -> vector<16x32xf32>
    %385 = vector.broadcast %10 : vector<1x32xf32> to vector<16x32xf32>
    %386 = arith.addf %384, %385 : vector<16x32xf32>
    %387 = arith.addf %88, %380 : vector<16x32xf32>
    %cst_49 = arith.constant 5.000000e-01 : f32
    %388 = vector.broadcast %cst_49 : f32 to vector<16x32xf32>
    %389 = arith.mulf %388, %387 : vector<16x32xf32>
    %390 = math.tanh %389 : vector<16x32xf32>
    %cst_50 = arith.constant 5.000000e-01 : f32
    %391 = vector.broadcast %cst_50 : f32 to vector<16x32xf32>
    %392 = arith.mulf %391, %390 : vector<16x32xf32>
    %cst_51 = arith.constant 5.000000e-01 : f32
    %393 = vector.broadcast %cst_51 : f32 to vector<16x32xf32>
    %394 = arith.addf %392, %393 : vector<16x32xf32>
    %395 = arith.addf %93, %383 : vector<16x32xf32>
    %cst_52 = arith.constant 5.000000e-01 : f32
    %396 = vector.broadcast %cst_52 : f32 to vector<16x32xf32>
    %397 = arith.mulf %396, %395 : vector<16x32xf32>
    %398 = math.tanh %397 : vector<16x32xf32>
    %cst_53 = arith.constant 5.000000e-01 : f32
    %399 = vector.broadcast %cst_53 : f32 to vector<16x32xf32>
    %400 = arith.mulf %399, %398 : vector<16x32xf32>
    %cst_54 = arith.constant 5.000000e-01 : f32
    %401 = vector.broadcast %cst_54 : f32 to vector<16x32xf32>
    %402 = arith.addf %400, %401 : vector<16x32xf32>
    %403 = arith.mulf %394, %386 : vector<16x32xf32>
    %404 = arith.addf %98, %403 : vector<16x32xf32>
    %405 = math.tanh %404 : vector<16x32xf32>
    %406 = arith.subf %377, %405 : vector<16x32xf32>
    %407 = arith.mulf %402, %406 : vector<16x32xf32>
    %408 = arith.addf %405, %407 : vector<16x32xf32>
    %cst_55 = arith.constant dense<0.000000e+00> : vector<16x32xf32>
    %409 = tpu.matmul %408, %18, %cst_55 {dimension_numbers = #tpu.dot_dimension_numbers<[1], [0], [0], [1], [0, 0, 1, 1], [], []>} : vector<16x32xf32>, vector<32x32xf32>, vector<16x32xf32> -> vector<16x32xf32>
    %410 = vector.broadcast %8 : vector<1x32xf32> to vector<16x32xf32>
    %411 = arith.addf %409, %410 : vector<16x32xf32>
    %cst_56 = arith.constant dense<0.000000e+00> : vector<16x32xf32>
    %412 = tpu.matmul %408, %20, %cst_56 {dimension_numbers = #tpu.dot_dimension_numbers<[1], [0], [0], [1], [0, 0, 1, 1], [], []>} : vector<16x32xf32>, vector<32x32xf32>, vector<16x32xf32> -> vector<16x32xf32>
    %413 = vector.broadcast %9 : vector<1x32xf32> to vector<16x32xf32>
    %414 = arith.addf %412, %413 : vector<16x32xf32>
    %cst_57 = arith.constant dense<0.000000e+00> : vector<16x32xf32>
    %415 = tpu.matmul %408, %22, %cst_57 {dimension_numbers = #tpu.dot_dimension_numbers<[1], [0], [0], [1], [0, 0, 1, 1], [], []>} : vector<16x32xf32>, vector<32x32xf32>, vector<16x32xf32> -> vector<16x32xf32>
    %416 = vector.broadcast %10 : vector<1x32xf32> to vector<16x32xf32>
    %417 = arith.addf %415, %416 : vector<16x32xf32>
    %418 = arith.addf %104, %411 : vector<16x32xf32>
    %cst_58 = arith.constant 5.000000e-01 : f32
    %419 = vector.broadcast %cst_58 : f32 to vector<16x32xf32>
    %420 = arith.mulf %419, %418 : vector<16x32xf32>
    %421 = math.tanh %420 : vector<16x32xf32>
    %cst_59 = arith.constant 5.000000e-01 : f32
    %422 = vector.broadcast %cst_59 : f32 to vector<16x32xf32>
    %423 = arith.mulf %422, %421 : vector<16x32xf32>
    %cst_60 = arith.constant 5.000000e-01 : f32
    %424 = vector.broadcast %cst_60 : f32 to vector<16x32xf32>
    %425 = arith.addf %423, %424 : vector<16x32xf32>
    %426 = arith.addf %109, %414 : vector<16x32xf32>
    %cst_61 = arith.constant 5.000000e-01 : f32
    %427 = vector.broadcast %cst_61 : f32 to vector<16x32xf32>
    %428 = arith.mulf %427, %426 : vector<16x32xf32>
    %429 = math.tanh %428 : vector<16x32xf32>
    %cst_62 = arith.constant 5.000000e-01 : f32
    %430 = vector.broadcast %cst_62 : f32 to vector<16x32xf32>
    %431 = arith.mulf %430, %429 : vector<16x32xf32>
    %cst_63 = arith.constant 5.000000e-01 : f32
    %432 = vector.broadcast %cst_63 : f32 to vector<16x32xf32>
    %433 = arith.addf %431, %432 : vector<16x32xf32>
    %434 = arith.mulf %425, %417 : vector<16x32xf32>
    %435 = arith.addf %114, %434 : vector<16x32xf32>
    %436 = math.tanh %435 : vector<16x32xf32>
    %437 = arith.subf %408, %436 : vector<16x32xf32>
    %438 = arith.mulf %433, %437 : vector<16x32xf32>
    %439 = arith.addf %436, %438 : vector<16x32xf32>
    %cst_64 = arith.constant dense<0.000000e+00> : vector<16x32xf32>
    %440 = tpu.matmul %439, %18, %cst_64 {dimension_numbers = #tpu.dot_dimension_numbers<[1], [0], [0], [1], [0, 0, 1, 1], [], []>} : vector<16x32xf32>, vector<32x32xf32>, vector<16x32xf32> -> vector<16x32xf32>
    %441 = vector.broadcast %8 : vector<1x32xf32> to vector<16x32xf32>
    %442 = arith.addf %440, %441 : vector<16x32xf32>
    %cst_65 = arith.constant dense<0.000000e+00> : vector<16x32xf32>
    %443 = tpu.matmul %439, %20, %cst_65 {dimension_numbers = #tpu.dot_dimension_numbers<[1], [0], [0], [1], [0, 0, 1, 1], [], []>} : vector<16x32xf32>, vector<32x32xf32>, vector<16x32xf32> -> vector<16x32xf32>
    %444 = vector.broadcast %9 : vector<1x32xf32> to vector<16x32xf32>
    %445 = arith.addf %443, %444 : vector<16x32xf32>
    %cst_66 = arith.constant dense<0.000000e+00> : vector<16x32xf32>
    %446 = tpu.matmul %439, %22, %cst_66 {dimension_numbers = #tpu.dot_dimension_numbers<[1], [0], [0], [1], [0, 0, 1, 1], [], []>} : vector<16x32xf32>, vector<32x32xf32>, vector<16x32xf32> -> vector<16x32xf32>
    %447 = vector.broadcast %10 : vector<1x32xf32> to vector<16x32xf32>
    %448 = arith.addf %446, %447 : vector<16x32xf32>
    %449 = arith.addf %120, %442 : vector<16x32xf32>
    %cst_67 = arith.constant 5.000000e-01 : f32
    %450 = vector.broadcast %cst_67 : f32 to vector<16x32xf32>
    %451 = arith.mulf %450, %449 : vector<16x32xf32>
    %452 = math.tanh %451 : vector<16x32xf32>
    %cst_68 = arith.constant 5.000000e-01 : f32
    %453 = vector.broadcast %cst_68 : f32 to vector<16x32xf32>
    %454 = arith.mulf %453, %452 : vector<16x32xf32>
    %cst_69 = arith.constant 5.000000e-01 : f32
    %455 = vector.broadcast %cst_69 : f32 to vector<16x32xf32>
    %456 = arith.addf %454, %455 : vector<16x32xf32>
    %457 = arith.addf %125, %445 : vector<16x32xf32>
    %cst_70 = arith.constant 5.000000e-01 : f32
    %458 = vector.broadcast %cst_70 : f32 to vector<16x32xf32>
    %459 = arith.mulf %458, %457 : vector<16x32xf32>
    %460 = math.tanh %459 : vector<16x32xf32>
    %cst_71 = arith.constant 5.000000e-01 : f32
    %461 = vector.broadcast %cst_71 : f32 to vector<16x32xf32>
    %462 = arith.mulf %461, %460 : vector<16x32xf32>
    %cst_72 = arith.constant 5.000000e-01 : f32
    %463 = vector.broadcast %cst_72 : f32 to vector<16x32xf32>
    %464 = arith.addf %462, %463 : vector<16x32xf32>
    %465 = arith.mulf %456, %448 : vector<16x32xf32>
    %466 = arith.addf %130, %465 : vector<16x32xf32>
    %467 = math.tanh %466 : vector<16x32xf32>
    %468 = arith.subf %439, %467 : vector<16x32xf32>
    %469 = arith.mulf %464, %468 : vector<16x32xf32>
    %470 = arith.addf %467, %469 : vector<16x32xf32>
    %cst_73 = arith.constant dense<0.000000e+00> : vector<16x32xf32>
    %471 = tpu.matmul %470, %18, %cst_73 {dimension_numbers = #tpu.dot_dimension_numbers<[1], [0], [0], [1], [0, 0, 1, 1], [], []>} : vector<16x32xf32>, vector<32x32xf32>, vector<16x32xf32> -> vector<16x32xf32>
    %472 = vector.broadcast %8 : vector<1x32xf32> to vector<16x32xf32>
    %473 = arith.addf %471, %472 : vector<16x32xf32>
    %cst_74 = arith.constant dense<0.000000e+00> : vector<16x32xf32>
    %474 = tpu.matmul %470, %20, %cst_74 {dimension_numbers = #tpu.dot_dimension_numbers<[1], [0], [0], [1], [0, 0, 1, 1], [], []>} : vector<16x32xf32>, vector<32x32xf32>, vector<16x32xf32> -> vector<16x32xf32>
    %475 = vector.broadcast %9 : vector<1x32xf32> to vector<16x32xf32>
    %476 = arith.addf %474, %475 : vector<16x32xf32>
    %cst_75 = arith.constant dense<0.000000e+00> : vector<16x32xf32>
    %477 = tpu.matmul %470, %22, %cst_75 {dimension_numbers = #tpu.dot_dimension_numbers<[1], [0], [0], [1], [0, 0, 1, 1], [], []>} : vector<16x32xf32>, vector<32x32xf32>, vector<16x32xf32> -> vector<16x32xf32>
    %478 = vector.broadcast %10 : vector<1x32xf32> to vector<16x32xf32>
    %479 = arith.addf %477, %478 : vector<16x32xf32>
    %480 = arith.addf %136, %473 : vector<16x32xf32>
    %cst_76 = arith.constant 5.000000e-01 : f32
    %481 = vector.broadcast %cst_76 : f32 to vector<16x32xf32>
    %482 = arith.mulf %481, %480 : vector<16x32xf32>
    %483 = math.tanh %482 : vector<16x32xf32>
    %cst_77 = arith.constant 5.000000e-01 : f32
    %484 = vector.broadcast %cst_77 : f32 to vector<16x32xf32>
    %485 = arith.mulf %484, %483 : vector<16x32xf32>
    %cst_78 = arith.constant 5.000000e-01 : f32
    %486 = vector.broadcast %cst_78 : f32 to vector<16x32xf32>
    %487 = arith.addf %485, %486 : vector<16x32xf32>
    %488 = arith.addf %141, %476 : vector<16x32xf32>
    %cst_79 = arith.constant 5.000000e-01 : f32
    %489 = vector.broadcast %cst_79 : f32 to vector<16x32xf32>
    %490 = arith.mulf %489, %488 : vector<16x32xf32>
    %491 = math.tanh %490 : vector<16x32xf32>
    %cst_80 = arith.constant 5.000000e-01 : f32
    %492 = vector.broadcast %cst_80 : f32 to vector<16x32xf32>
    %493 = arith.mulf %492, %491 : vector<16x32xf32>
    %cst_81 = arith.constant 5.000000e-01 : f32
    %494 = vector.broadcast %cst_81 : f32 to vector<16x32xf32>
    %495 = arith.addf %493, %494 : vector<16x32xf32>
    %496 = arith.mulf %487, %479 : vector<16x32xf32>
    %497 = arith.addf %146, %496 : vector<16x32xf32>
    %498 = math.tanh %497 : vector<16x32xf32>
    %499 = arith.subf %470, %498 : vector<16x32xf32>
    %500 = arith.mulf %495, %499 : vector<16x32xf32>
    %501 = arith.addf %498, %500 : vector<16x32xf32>
    %cst_82 = arith.constant dense<0.000000e+00> : vector<16x32xf32>
    %502 = tpu.matmul %501, %18, %cst_82 {dimension_numbers = #tpu.dot_dimension_numbers<[1], [0], [0], [1], [0, 0, 1, 1], [], []>} : vector<16x32xf32>, vector<32x32xf32>, vector<16x32xf32> -> vector<16x32xf32>
    %503 = vector.broadcast %8 : vector<1x32xf32> to vector<16x32xf32>
    %504 = arith.addf %502, %503 : vector<16x32xf32>
    %cst_83 = arith.constant dense<0.000000e+00> : vector<16x32xf32>
    %505 = tpu.matmul %501, %20, %cst_83 {dimension_numbers = #tpu.dot_dimension_numbers<[1], [0], [0], [1], [0, 0, 1, 1], [], []>} : vector<16x32xf32>, vector<32x32xf32>, vector<16x32xf32> -> vector<16x32xf32>
    %506 = vector.broadcast %9 : vector<1x32xf32> to vector<16x32xf32>
    %507 = arith.addf %505, %506 : vector<16x32xf32>
    %cst_84 = arith.constant dense<0.000000e+00> : vector<16x32xf32>
    %508 = tpu.matmul %501, %22, %cst_84 {dimension_numbers = #tpu.dot_dimension_numbers<[1], [0], [0], [1], [0, 0, 1, 1], [], []>} : vector<16x32xf32>, vector<32x32xf32>, vector<16x32xf32> -> vector<16x32xf32>
    %509 = vector.broadcast %10 : vector<1x32xf32> to vector<16x32xf32>
    %510 = arith.addf %508, %509 : vector<16x32xf32>
    %511 = arith.addf %152, %504 : vector<16x32xf32>
    %cst_85 = arith.constant 5.000000e-01 : f32
    %512 = vector.broadcast %cst_85 : f32 to vector<16x32xf32>
    %513 = arith.mulf %512, %511 : vector<16x32xf32>
    %514 = math.tanh %513 : vector<16x32xf32>
    %cst_86 = arith.constant 5.000000e-01 : f32
    %515 = vector.broadcast %cst_86 : f32 to vector<16x32xf32>
    %516 = arith.mulf %515, %514 : vector<16x32xf32>
    %cst_87 = arith.constant 5.000000e-01 : f32
    %517 = vector.broadcast %cst_87 : f32 to vector<16x32xf32>
    %518 = arith.addf %516, %517 : vector<16x32xf32>
    %519 = arith.addf %157, %507 : vector<16x32xf32>
    %cst_88 = arith.constant 5.000000e-01 : f32
    %520 = vector.broadcast %cst_88 : f32 to vector<16x32xf32>
    %521 = arith.mulf %520, %519 : vector<16x32xf32>
    %522 = math.tanh %521 : vector<16x32xf32>
    %cst_89 = arith.constant 5.000000e-01 : f32
    %523 = vector.broadcast %cst_89 : f32 to vector<16x32xf32>
    %524 = arith.mulf %523, %522 : vector<16x32xf32>
    %cst_90 = arith.constant 5.000000e-01 : f32
    %525 = vector.broadcast %cst_90 : f32 to vector<16x32xf32>
    %526 = arith.addf %524, %525 : vector<16x32xf32>
    %527 = arith.mulf %518, %510 : vector<16x32xf32>
    %528 = arith.addf %162, %527 : vector<16x32xf32>
    %529 = math.tanh %528 : vector<16x32xf32>
    %530 = arith.subf %501, %529 : vector<16x32xf32>
    %531 = arith.mulf %526, %530 : vector<16x32xf32>
    %532 = arith.addf %529, %531 : vector<16x32xf32>
    %cst_91 = arith.constant dense<0.000000e+00> : vector<16x32xf32>
    %533 = tpu.matmul %532, %18, %cst_91 {dimension_numbers = #tpu.dot_dimension_numbers<[1], [0], [0], [1], [0, 0, 1, 1], [], []>} : vector<16x32xf32>, vector<32x32xf32>, vector<16x32xf32> -> vector<16x32xf32>
    %534 = vector.broadcast %8 : vector<1x32xf32> to vector<16x32xf32>
    %535 = arith.addf %533, %534 : vector<16x32xf32>
    %cst_92 = arith.constant dense<0.000000e+00> : vector<16x32xf32>
    %536 = tpu.matmul %532, %20, %cst_92 {dimension_numbers = #tpu.dot_dimension_numbers<[1], [0], [0], [1], [0, 0, 1, 1], [], []>} : vector<16x32xf32>, vector<32x32xf32>, vector<16x32xf32> -> vector<16x32xf32>
    %537 = vector.broadcast %9 : vector<1x32xf32> to vector<16x32xf32>
    %538 = arith.addf %536, %537 : vector<16x32xf32>
    %cst_93 = arith.constant dense<0.000000e+00> : vector<16x32xf32>
    %539 = tpu.matmul %532, %22, %cst_93 {dimension_numbers = #tpu.dot_dimension_numbers<[1], [0], [0], [1], [0, 0, 1, 1], [], []>} : vector<16x32xf32>, vector<32x32xf32>, vector<16x32xf32> -> vector<16x32xf32>
    %540 = vector.broadcast %10 : vector<1x32xf32> to vector<16x32xf32>
    %541 = arith.addf %539, %540 : vector<16x32xf32>
    %542 = arith.addf %168, %535 : vector<16x32xf32>
    %cst_94 = arith.constant 5.000000e-01 : f32
    %543 = vector.broadcast %cst_94 : f32 to vector<16x32xf32>
    %544 = arith.mulf %543, %542 : vector<16x32xf32>
    %545 = math.tanh %544 : vector<16x32xf32>
    %cst_95 = arith.constant 5.000000e-01 : f32
    %546 = vector.broadcast %cst_95 : f32 to vector<16x32xf32>
    %547 = arith.mulf %546, %545 : vector<16x32xf32>
    %cst_96 = arith.constant 5.000000e-01 : f32
    %548 = vector.broadcast %cst_96 : f32 to vector<16x32xf32>
    %549 = arith.addf %547, %548 : vector<16x32xf32>
    %550 = arith.addf %173, %538 : vector<16x32xf32>
    %cst_97 = arith.constant 5.000000e-01 : f32
    %551 = vector.broadcast %cst_97 : f32 to vector<16x32xf32>
    %552 = arith.mulf %551, %550 : vector<16x32xf32>
    %553 = math.tanh %552 : vector<16x32xf32>
    %cst_98 = arith.constant 5.000000e-01 : f32
    %554 = vector.broadcast %cst_98 : f32 to vector<16x32xf32>
    %555 = arith.mulf %554, %553 : vector<16x32xf32>
    %cst_99 = arith.constant 5.000000e-01 : f32
    %556 = vector.broadcast %cst_99 : f32 to vector<16x32xf32>
    %557 = arith.addf %555, %556 : vector<16x32xf32>
    %558 = arith.mulf %549, %541 : vector<16x32xf32>
    %559 = arith.addf %178, %558 : vector<16x32xf32>
    %560 = math.tanh %559 : vector<16x32xf32>
    %561 = arith.subf %532, %560 : vector<16x32xf32>
    %562 = arith.mulf %557, %561 : vector<16x32xf32>
    %563 = arith.addf %560, %562 : vector<16x32xf32>
    %cst_100 = arith.constant dense<0.000000e+00> : vector<16x32xf32>
    %564 = tpu.matmul %563, %18, %cst_100 {dimension_numbers = #tpu.dot_dimension_numbers<[1], [0], [0], [1], [0, 0, 1, 1], [], []>} : vector<16x32xf32>, vector<32x32xf32>, vector<16x32xf32> -> vector<16x32xf32>
    %565 = vector.broadcast %8 : vector<1x32xf32> to vector<16x32xf32>
    %566 = arith.addf %564, %565 : vector<16x32xf32>
    %cst_101 = arith.constant dense<0.000000e+00> : vector<16x32xf32>
    %567 = tpu.matmul %563, %20, %cst_101 {dimension_numbers = #tpu.dot_dimension_numbers<[1], [0], [0], [1], [0, 0, 1, 1], [], []>} : vector<16x32xf32>, vector<32x32xf32>, vector<16x32xf32> -> vector<16x32xf32>
    %568 = vector.broadcast %9 : vector<1x32xf32> to vector<16x32xf32>
    %569 = arith.addf %567, %568 : vector<16x32xf32>
    %cst_102 = arith.constant dense<0.000000e+00> : vector<16x32xf32>
    %570 = tpu.matmul %563, %22, %cst_102 {dimension_numbers = #tpu.dot_dimension_numbers<[1], [0], [0], [1], [0, 0, 1, 1], [], []>} : vector<16x32xf32>, vector<32x32xf32>, vector<16x32xf32> -> vector<16x32xf32>
    %571 = vector.broadcast %10 : vector<1x32xf32> to vector<16x32xf32>
    %572 = arith.addf %570, %571 : vector<16x32xf32>
    %573 = arith.addf %184, %566 : vector<16x32xf32>
    %cst_103 = arith.constant 5.000000e-01 : f32
    %574 = vector.broadcast %cst_103 : f32 to vector<16x32xf32>
    %575 = arith.mulf %574, %573 : vector<16x32xf32>
    %576 = math.tanh %575 : vector<16x32xf32>
    %cst_104 = arith.constant 5.000000e-01 : f32
    %577 = vector.broadcast %cst_104 : f32 to vector<16x32xf32>
    %578 = arith.mulf %577, %576 : vector<16x32xf32>
    %cst_105 = arith.constant 5.000000e-01 : f32
    %579 = vector.broadcast %cst_105 : f32 to vector<16x32xf32>
    %580 = arith.addf %578, %579 : vector<16x32xf32>
    %581 = arith.addf %189, %569 : vector<16x32xf32>
    %cst_106 = arith.constant 5.000000e-01 : f32
    %582 = vector.broadcast %cst_106 : f32 to vector<16x32xf32>
    %583 = arith.mulf %582, %581 : vector<16x32xf32>
    %584 = math.tanh %583 : vector<16x32xf32>
    %cst_107 = arith.constant 5.000000e-01 : f32
    %585 = vector.broadcast %cst_107 : f32 to vector<16x32xf32>
    %586 = arith.mulf %585, %584 : vector<16x32xf32>
    %cst_108 = arith.constant 5.000000e-01 : f32
    %587 = vector.broadcast %cst_108 : f32 to vector<16x32xf32>
    %588 = arith.addf %586, %587 : vector<16x32xf32>
    %589 = arith.mulf %580, %572 : vector<16x32xf32>
    %590 = arith.addf %194, %589 : vector<16x32xf32>
    %591 = math.tanh %590 : vector<16x32xf32>
    %592 = arith.subf %563, %591 : vector<16x32xf32>
    %593 = arith.mulf %588, %592 : vector<16x32xf32>
    %594 = arith.addf %591, %593 : vector<16x32xf32>
    %cst_109 = arith.constant dense<0.000000e+00> : vector<16x32xf32>
    %595 = tpu.matmul %594, %18, %cst_109 {dimension_numbers = #tpu.dot_dimension_numbers<[1], [0], [0], [1], [0, 0, 1, 1], [], []>} : vector<16x32xf32>, vector<32x32xf32>, vector<16x32xf32> -> vector<16x32xf32>
    %596 = vector.broadcast %8 : vector<1x32xf32> to vector<16x32xf32>
    %597 = arith.addf %595, %596 : vector<16x32xf32>
    %cst_110 = arith.constant dense<0.000000e+00> : vector<16x32xf32>
    %598 = tpu.matmul %594, %20, %cst_110 {dimension_numbers = #tpu.dot_dimension_numbers<[1], [0], [0], [1], [0, 0, 1, 1], [], []>} : vector<16x32xf32>, vector<32x32xf32>, vector<16x32xf32> -> vector<16x32xf32>
    %599 = vector.broadcast %9 : vector<1x32xf32> to vector<16x32xf32>
    %600 = arith.addf %598, %599 : vector<16x32xf32>
    %cst_111 = arith.constant dense<0.000000e+00> : vector<16x32xf32>
    %601 = tpu.matmul %594, %22, %cst_111 {dimension_numbers = #tpu.dot_dimension_numbers<[1], [0], [0], [1], [0, 0, 1, 1], [], []>} : vector<16x32xf32>, vector<32x32xf32>, vector<16x32xf32> -> vector<16x32xf32>
    %602 = vector.broadcast %10 : vector<1x32xf32> to vector<16x32xf32>
    %603 = arith.addf %601, %602 : vector<16x32xf32>
    %604 = arith.addf %200, %597 : vector<16x32xf32>
    %cst_112 = arith.constant 5.000000e-01 : f32
    %605 = vector.broadcast %cst_112 : f32 to vector<16x32xf32>
    %606 = arith.mulf %605, %604 : vector<16x32xf32>
    %607 = math.tanh %606 : vector<16x32xf32>
    %cst_113 = arith.constant 5.000000e-01 : f32
    %608 = vector.broadcast %cst_113 : f32 to vector<16x32xf32>
    %609 = arith.mulf %608, %607 : vector<16x32xf32>
    %cst_114 = arith.constant 5.000000e-01 : f32
    %610 = vector.broadcast %cst_114 : f32 to vector<16x32xf32>
    %611 = arith.addf %609, %610 : vector<16x32xf32>
    %612 = arith.addf %205, %600 : vector<16x32xf32>
    %cst_115 = arith.constant 5.000000e-01 : f32
    %613 = vector.broadcast %cst_115 : f32 to vector<16x32xf32>
    %614 = arith.mulf %613, %612 : vector<16x32xf32>
    %615 = math.tanh %614 : vector<16x32xf32>
    %cst_116 = arith.constant 5.000000e-01 : f32
    %616 = vector.broadcast %cst_116 : f32 to vector<16x32xf32>
    %617 = arith.mulf %616, %615 : vector<16x32xf32>
    %cst_117 = arith.constant 5.000000e-01 : f32
    %618 = vector.broadcast %cst_117 : f32 to vector<16x32xf32>
    %619 = arith.addf %617, %618 : vector<16x32xf32>
    %620 = arith.mulf %611, %603 : vector<16x32xf32>
    %621 = arith.addf %210, %620 : vector<16x32xf32>
    %622 = math.tanh %621 : vector<16x32xf32>
    %623 = arith.subf %594, %622 : vector<16x32xf32>
    %624 = arith.mulf %619, %623 : vector<16x32xf32>
    %625 = arith.addf %622, %624 : vector<16x32xf32>
    %cst_118 = arith.constant dense<0.000000e+00> : vector<16x32xf32>
    %626 = tpu.matmul %625, %18, %cst_118 {dimension_numbers = #tpu.dot_dimension_numbers<[1], [0], [0], [1], [0, 0, 1, 1], [], []>} : vector<16x32xf32>, vector<32x32xf32>, vector<16x32xf32> -> vector<16x32xf32>
    %627 = vector.broadcast %8 : vector<1x32xf32> to vector<16x32xf32>
    %628 = arith.addf %626, %627 : vector<16x32xf32>
    %cst_119 = arith.constant dense<0.000000e+00> : vector<16x32xf32>
    %629 = tpu.matmul %625, %20, %cst_119 {dimension_numbers = #tpu.dot_dimension_numbers<[1], [0], [0], [1], [0, 0, 1, 1], [], []>} : vector<16x32xf32>, vector<32x32xf32>, vector<16x32xf32> -> vector<16x32xf32>
    %630 = vector.broadcast %9 : vector<1x32xf32> to vector<16x32xf32>
    %631 = arith.addf %629, %630 : vector<16x32xf32>
    %cst_120 = arith.constant dense<0.000000e+00> : vector<16x32xf32>
    %632 = tpu.matmul %625, %22, %cst_120 {dimension_numbers = #tpu.dot_dimension_numbers<[1], [0], [0], [1], [0, 0, 1, 1], [], []>} : vector<16x32xf32>, vector<32x32xf32>, vector<16x32xf32> -> vector<16x32xf32>
    %633 = vector.broadcast %10 : vector<1x32xf32> to vector<16x32xf32>
    %634 = arith.addf %632, %633 : vector<16x32xf32>
    %635 = arith.addf %216, %628 : vector<16x32xf32>
    %cst_121 = arith.constant 5.000000e-01 : f32
    %636 = vector.broadcast %cst_121 : f32 to vector<16x32xf32>
    %637 = arith.mulf %636, %635 : vector<16x32xf32>
    %638 = math.tanh %637 : vector<16x32xf32>
    %cst_122 = arith.constant 5.000000e-01 : f32
    %639 = vector.broadcast %cst_122 : f32 to vector<16x32xf32>
    %640 = arith.mulf %639, %638 : vector<16x32xf32>
    %cst_123 = arith.constant 5.000000e-01 : f32
    %641 = vector.broadcast %cst_123 : f32 to vector<16x32xf32>
    %642 = arith.addf %640, %641 : vector<16x32xf32>
    %643 = arith.addf %221, %631 : vector<16x32xf32>
    %cst_124 = arith.constant 5.000000e-01 : f32
    %644 = vector.broadcast %cst_124 : f32 to vector<16x32xf32>
    %645 = arith.mulf %644, %643 : vector<16x32xf32>
    %646 = math.tanh %645 : vector<16x32xf32>
    %cst_125 = arith.constant 5.000000e-01 : f32
    %647 = vector.broadcast %cst_125 : f32 to vector<16x32xf32>
    %648 = arith.mulf %647, %646 : vector<16x32xf32>
    %cst_126 = arith.constant 5.000000e-01 : f32
    %649 = vector.broadcast %cst_126 : f32 to vector<16x32xf32>
    %650 = arith.addf %648, %649 : vector<16x32xf32>
    %651 = arith.mulf %642, %634 : vector<16x32xf32>
    %652 = arith.addf %226, %651 : vector<16x32xf32>
    %653 = math.tanh %652 : vector<16x32xf32>
    %654 = arith.subf %625, %653 : vector<16x32xf32>
    %655 = arith.mulf %650, %654 : vector<16x32xf32>
    %656 = arith.addf %653, %655 : vector<16x32xf32>
    %cst_127 = arith.constant dense<0.000000e+00> : vector<16x32xf32>
    %657 = tpu.matmul %656, %18, %cst_127 {dimension_numbers = #tpu.dot_dimension_numbers<[1], [0], [0], [1], [0, 0, 1, 1], [], []>} : vector<16x32xf32>, vector<32x32xf32>, vector<16x32xf32> -> vector<16x32xf32>
    %658 = vector.broadcast %8 : vector<1x32xf32> to vector<16x32xf32>
    %659 = arith.addf %657, %658 : vector<16x32xf32>
    %cst_128 = arith.constant dense<0.000000e+00> : vector<16x32xf32>
    %660 = tpu.matmul %656, %20, %cst_128 {dimension_numbers = #tpu.dot_dimension_numbers<[1], [0], [0], [1], [0, 0, 1, 1], [], []>} : vector<16x32xf32>, vector<32x32xf32>, vector<16x32xf32> -> vector<16x32xf32>
    %661 = vector.broadcast %9 : vector<1x32xf32> to vector<16x32xf32>
    %662 = arith.addf %660, %661 : vector<16x32xf32>
    %cst_129 = arith.constant dense<0.000000e+00> : vector<16x32xf32>
    %663 = tpu.matmul %656, %22, %cst_129 {dimension_numbers = #tpu.dot_dimension_numbers<[1], [0], [0], [1], [0, 0, 1, 1], [], []>} : vector<16x32xf32>, vector<32x32xf32>, vector<16x32xf32> -> vector<16x32xf32>
    %664 = vector.broadcast %10 : vector<1x32xf32> to vector<16x32xf32>
    %665 = arith.addf %663, %664 : vector<16x32xf32>
    %666 = arith.addf %232, %659 : vector<16x32xf32>
    %cst_130 = arith.constant 5.000000e-01 : f32
    %667 = vector.broadcast %cst_130 : f32 to vector<16x32xf32>
    %668 = arith.mulf %667, %666 : vector<16x32xf32>
    %669 = math.tanh %668 : vector<16x32xf32>
    %cst_131 = arith.constant 5.000000e-01 : f32
    %670 = vector.broadcast %cst_131 : f32 to vector<16x32xf32>
    %671 = arith.mulf %670, %669 : vector<16x32xf32>
    %cst_132 = arith.constant 5.000000e-01 : f32
    %672 = vector.broadcast %cst_132 : f32 to vector<16x32xf32>
    %673 = arith.addf %671, %672 : vector<16x32xf32>
    %674 = arith.addf %237, %662 : vector<16x32xf32>
    %cst_133 = arith.constant 5.000000e-01 : f32
    %675 = vector.broadcast %cst_133 : f32 to vector<16x32xf32>
    %676 = arith.mulf %675, %674 : vector<16x32xf32>
    %677 = math.tanh %676 : vector<16x32xf32>
    %cst_134 = arith.constant 5.000000e-01 : f32
    %678 = vector.broadcast %cst_134 : f32 to vector<16x32xf32>
    %679 = arith.mulf %678, %677 : vector<16x32xf32>
    %cst_135 = arith.constant 5.000000e-01 : f32
    %680 = vector.broadcast %cst_135 : f32 to vector<16x32xf32>
    %681 = arith.addf %679, %680 : vector<16x32xf32>
    %682 = arith.mulf %673, %665 : vector<16x32xf32>
    %683 = arith.addf %242, %682 : vector<16x32xf32>
    %684 = math.tanh %683 : vector<16x32xf32>
    %685 = arith.subf %656, %684 : vector<16x32xf32>
    %686 = arith.mulf %681, %685 : vector<16x32xf32>
    %687 = arith.addf %684, %686 : vector<16x32xf32>
    %cst_136 = arith.constant dense<0.000000e+00> : vector<16x32xf32>
    %688 = tpu.matmul %687, %18, %cst_136 {dimension_numbers = #tpu.dot_dimension_numbers<[1], [0], [0], [1], [0, 0, 1, 1], [], []>} : vector<16x32xf32>, vector<32x32xf32>, vector<16x32xf32> -> vector<16x32xf32>
    %689 = vector.broadcast %8 : vector<1x32xf32> to vector<16x32xf32>
    %690 = arith.addf %688, %689 : vector<16x32xf32>
    %cst_137 = arith.constant dense<0.000000e+00> : vector<16x32xf32>
    %691 = tpu.matmul %687, %20, %cst_137 {dimension_numbers = #tpu.dot_dimension_numbers<[1], [0], [0], [1], [0, 0, 1, 1], [], []>} : vector<16x32xf32>, vector<32x32xf32>, vector<16x32xf32> -> vector<16x32xf32>
    %692 = vector.broadcast %9 : vector<1x32xf32> to vector<16x32xf32>
    %693 = arith.addf %691, %692 : vector<16x32xf32>
    %cst_138 = arith.constant dense<0.000000e+00> : vector<16x32xf32>
    %694 = tpu.matmul %687, %22, %cst_138 {dimension_numbers = #tpu.dot_dimension_numbers<[1], [0], [0], [1], [0, 0, 1, 1], [], []>} : vector<16x32xf32>, vector<32x32xf32>, vector<16x32xf32> -> vector<16x32xf32>
    %695 = vector.broadcast %10 : vector<1x32xf32> to vector<16x32xf32>
    %696 = arith.addf %694, %695 : vector<16x32xf32>
    %697 = arith.addf %248, %690 : vector<16x32xf32>
    %cst_139 = arith.constant 5.000000e-01 : f32
    %698 = vector.broadcast %cst_139 : f32 to vector<16x32xf32>
    %699 = arith.mulf %698, %697 : vector<16x32xf32>
    %700 = math.tanh %699 : vector<16x32xf32>
    %cst_140 = arith.constant 5.000000e-01 : f32
    %701 = vector.broadcast %cst_140 : f32 to vector<16x32xf32>
    %702 = arith.mulf %701, %700 : vector<16x32xf32>
    %cst_141 = arith.constant 5.000000e-01 : f32
    %703 = vector.broadcast %cst_141 : f32 to vector<16x32xf32>
    %704 = arith.addf %702, %703 : vector<16x32xf32>
    %705 = arith.addf %253, %693 : vector<16x32xf32>
    %cst_142 = arith.constant 5.000000e-01 : f32
    %706 = vector.broadcast %cst_142 : f32 to vector<16x32xf32>
    %707 = arith.mulf %706, %705 : vector<16x32xf32>
    %708 = math.tanh %707 : vector<16x32xf32>
    %cst_143 = arith.constant 5.000000e-01 : f32
    %709 = vector.broadcast %cst_143 : f32 to vector<16x32xf32>
    %710 = arith.mulf %709, %708 : vector<16x32xf32>
    %cst_144 = arith.constant 5.000000e-01 : f32
    %711 = vector.broadcast %cst_144 : f32 to vector<16x32xf32>
    %712 = arith.addf %710, %711 : vector<16x32xf32>
    %713 = arith.mulf %704, %696 : vector<16x32xf32>
    %714 = arith.addf %258, %713 : vector<16x32xf32>
    %715 = math.tanh %714 : vector<16x32xf32>
    %716 = arith.subf %687, %715 : vector<16x32xf32>
    %717 = arith.mulf %712, %716 : vector<16x32xf32>
    %718 = arith.addf %715, %717 : vector<16x32xf32>
    %cst_145 = arith.constant dense<0.000000e+00> : vector<16x32xf32>
    %719 = tpu.matmul %718, %18, %cst_145 {dimension_numbers = #tpu.dot_dimension_numbers<[1], [0], [0], [1], [0, 0, 1, 1], [], []>} : vector<16x32xf32>, vector<32x32xf32>, vector<16x32xf32> -> vector<16x32xf32>
    %720 = vector.broadcast %8 : vector<1x32xf32> to vector<16x32xf32>
    %721 = arith.addf %719, %720 : vector<16x32xf32>
    %cst_146 = arith.constant dense<0.000000e+00> : vector<16x32xf32>
    %722 = tpu.matmul %718, %20, %cst_146 {dimension_numbers = #tpu.dot_dimension_numbers<[1], [0], [0], [1], [0, 0, 1, 1], [], []>} : vector<16x32xf32>, vector<32x32xf32>, vector<16x32xf32> -> vector<16x32xf32>
    %723 = vector.broadcast %9 : vector<1x32xf32> to vector<16x32xf32>
    %724 = arith.addf %722, %723 : vector<16x32xf32>
    %cst_147 = arith.constant dense<0.000000e+00> : vector<16x32xf32>
    %725 = tpu.matmul %718, %22, %cst_147 {dimension_numbers = #tpu.dot_dimension_numbers<[1], [0], [0], [1], [0, 0, 1, 1], [], []>} : vector<16x32xf32>, vector<32x32xf32>, vector<16x32xf32> -> vector<16x32xf32>
    %726 = vector.broadcast %10 : vector<1x32xf32> to vector<16x32xf32>
    %727 = arith.addf %725, %726 : vector<16x32xf32>
    %728 = arith.addf %264, %721 : vector<16x32xf32>
    %cst_148 = arith.constant 5.000000e-01 : f32
    %729 = vector.broadcast %cst_148 : f32 to vector<16x32xf32>
    %730 = arith.mulf %729, %728 : vector<16x32xf32>
    %731 = math.tanh %730 : vector<16x32xf32>
    %cst_149 = arith.constant 5.000000e-01 : f32
    %732 = vector.broadcast %cst_149 : f32 to vector<16x32xf32>
    %733 = arith.mulf %732, %731 : vector<16x32xf32>
    %cst_150 = arith.constant 5.000000e-01 : f32
    %734 = vector.broadcast %cst_150 : f32 to vector<16x32xf32>
    %735 = arith.addf %733, %734 : vector<16x32xf32>
    %736 = arith.addf %269, %724 : vector<16x32xf32>
    %cst_151 = arith.constant 5.000000e-01 : f32
    %737 = vector.broadcast %cst_151 : f32 to vector<16x32xf32>
    %738 = arith.mulf %737, %736 : vector<16x32xf32>
    %739 = math.tanh %738 : vector<16x32xf32>
    %cst_152 = arith.constant 5.000000e-01 : f32
    %740 = vector.broadcast %cst_152 : f32 to vector<16x32xf32>
    %741 = arith.mulf %740, %739 : vector<16x32xf32>
    %cst_153 = arith.constant 5.000000e-01 : f32
    %742 = vector.broadcast %cst_153 : f32 to vector<16x32xf32>
    %743 = arith.addf %741, %742 : vector<16x32xf32>
    %744 = arith.mulf %735, %727 : vector<16x32xf32>
    %745 = arith.addf %274, %744 : vector<16x32xf32>
    %746 = math.tanh %745 : vector<16x32xf32>
    %747 = arith.subf %718, %746 : vector<16x32xf32>
    %748 = arith.mulf %743, %747 : vector<16x32xf32>
    %749 = arith.addf %746, %748 : vector<16x32xf32>
    %cst_154 = arith.constant dense<0.000000e+00> : vector<16x32xf32>
    %750 = tpu.matmul %749, %18, %cst_154 {dimension_numbers = #tpu.dot_dimension_numbers<[1], [0], [0], [1], [0, 0, 1, 1], [], []>} : vector<16x32xf32>, vector<32x32xf32>, vector<16x32xf32> -> vector<16x32xf32>
    %751 = vector.broadcast %8 : vector<1x32xf32> to vector<16x32xf32>
    %752 = arith.addf %750, %751 : vector<16x32xf32>
    %cst_155 = arith.constant dense<0.000000e+00> : vector<16x32xf32>
    %753 = tpu.matmul %749, %20, %cst_155 {dimension_numbers = #tpu.dot_dimension_numbers<[1], [0], [0], [1], [0, 0, 1, 1], [], []>} : vector<16x32xf32>, vector<32x32xf32>, vector<16x32xf32> -> vector<16x32xf32>
    %754 = vector.broadcast %9 : vector<1x32xf32> to vector<16x32xf32>
    %755 = arith.addf %753, %754 : vector<16x32xf32>
    %cst_156 = arith.constant dense<0.000000e+00> : vector<16x32xf32>
    %756 = tpu.matmul %749, %22, %cst_156 {dimension_numbers = #tpu.dot_dimension_numbers<[1], [0], [0], [1], [0, 0, 1, 1], [], []>} : vector<16x32xf32>, vector<32x32xf32>, vector<16x32xf32> -> vector<16x32xf32>
    %757 = vector.broadcast %10 : vector<1x32xf32> to vector<16x32xf32>
    %758 = arith.addf %756, %757 : vector<16x32xf32>
    %759 = arith.addf %280, %752 : vector<16x32xf32>
    %cst_157 = arith.constant 5.000000e-01 : f32
    %760 = vector.broadcast %cst_157 : f32 to vector<16x32xf32>
    %761 = arith.mulf %760, %759 : vector<16x32xf32>
    %762 = math.tanh %761 : vector<16x32xf32>
    %cst_158 = arith.constant 5.000000e-01 : f32
    %763 = vector.broadcast %cst_158 : f32 to vector<16x32xf32>
    %764 = arith.mulf %763, %762 : vector<16x32xf32>
    %cst_159 = arith.constant 5.000000e-01 : f32
    %765 = vector.broadcast %cst_159 : f32 to vector<16x32xf32>
    %766 = arith.addf %764, %765 : vector<16x32xf32>
    %767 = arith.addf %285, %755 : vector<16x32xf32>
    %cst_160 = arith.constant 5.000000e-01 : f32
    %768 = vector.broadcast %cst_160 : f32 to vector<16x32xf32>
    %769 = arith.mulf %768, %767 : vector<16x32xf32>
    %770 = math.tanh %769 : vector<16x32xf32>
    %cst_161 = arith.constant 5.000000e-01 : f32
    %771 = vector.broadcast %cst_161 : f32 to vector<16x32xf32>
    %772 = arith.mulf %771, %770 : vector<16x32xf32>
    %cst_162 = arith.constant 5.000000e-01 : f32
    %773 = vector.broadcast %cst_162 : f32 to vector<16x32xf32>
    %774 = arith.addf %772, %773 : vector<16x32xf32>
    %775 = arith.mulf %766, %758 : vector<16x32xf32>
    %776 = arith.addf %290, %775 : vector<16x32xf32>
    %777 = math.tanh %776 : vector<16x32xf32>
    %778 = arith.subf %749, %777 : vector<16x32xf32>
    %779 = arith.mulf %774, %778 : vector<16x32xf32>
    %780 = arith.addf %777, %779 : vector<16x32xf32>
    %cst_163 = arith.constant dense<0.000000e+00> : vector<16x32xf32>
    %781 = tpu.matmul %780, %24, %cst_163 {dimension_numbers = #tpu.dot_dimension_numbers<[1], [0], [0], [1], [0, 0, 1, 1], [], []>} : vector<16x32xf32>, vector<32x32xf32>, vector<16x32xf32> -> vector<16x32xf32>
    %782 = vector.broadcast %11 : vector<1x32xf32> to vector<16x32xf32>
    %783 = arith.addf %781, %782 : vector<16x32xf32>
    %cst_164 = arith.constant dense<0.000000e+00> : vector<16x32xf32>
    %784 = tpu.matmul %780, %26, %cst_164 {dimension_numbers = #tpu.dot_dimension_numbers<[1], [0], [0], [1], [0, 0, 1, 1], [], []>} : vector<16x32xf32>, vector<32x32xf32>, vector<16x32xf32> -> vector<16x32xf32>
    %785 = vector.broadcast %12 : vector<1x32xf32> to vector<16x32xf32>
    %786 = arith.addf %784, %785 : vector<16x32xf32>
    %cst_165 = arith.constant dense<0.000000e+00> : vector<16x32xf32>
    %787 = tpu.matmul %780, %28, %cst_165 {dimension_numbers = #tpu.dot_dimension_numbers<[1], [0], [0], [1], [0, 0, 1, 1], [], []>} : vector<16x32xf32>, vector<32x32xf32>, vector<16x32xf32> -> vector<16x32xf32>
    %788 = vector.broadcast %13 : vector<1x32xf32> to vector<16x32xf32>
    %789 = arith.addf %787, %788 : vector<16x32xf32>
    %790 = vector.extract_strided_slice %783 {offsets = [0, 0], sizes = [1, 32], strides = [1, 1]} : vector<16x32xf32> to vector<1x32xf32>
    %791 = vector.extract_strided_slice %783 {offsets = [1, 0], sizes = [1, 32], strides = [1, 1]} : vector<16x32xf32> to vector<1x32xf32>
    %792 = vector.extract_strided_slice %783 {offsets = [2, 0], sizes = [1, 32], strides = [1, 1]} : vector<16x32xf32> to vector<1x32xf32>
    %793 = vector.extract_strided_slice %783 {offsets = [3, 0], sizes = [1, 32], strides = [1, 1]} : vector<16x32xf32> to vector<1x32xf32>
    %794 = vector.extract_strided_slice %783 {offsets = [4, 0], sizes = [1, 32], strides = [1, 1]} : vector<16x32xf32> to vector<1x32xf32>
    %795 = vector.extract_strided_slice %783 {offsets = [5, 0], sizes = [1, 32], strides = [1, 1]} : vector<16x32xf32> to vector<1x32xf32>
    %796 = vector.extract_strided_slice %783 {offsets = [6, 0], sizes = [1, 32], strides = [1, 1]} : vector<16x32xf32> to vector<1x32xf32>
    %797 = vector.extract_strided_slice %783 {offsets = [7, 0], sizes = [1, 32], strides = [1, 1]} : vector<16x32xf32> to vector<1x32xf32>
    %798 = vector.extract_strided_slice %783 {offsets = [8, 0], sizes = [1, 32], strides = [1, 1]} : vector<16x32xf32> to vector<1x32xf32>
    %799 = vector.extract_strided_slice %783 {offsets = [9, 0], sizes = [1, 32], strides = [1, 1]} : vector<16x32xf32> to vector<1x32xf32>
    %800 = vector.extract_strided_slice %783 {offsets = [10, 0], sizes = [1, 32], strides = [1, 1]} : vector<16x32xf32> to vector<1x32xf32>
    %801 = vector.extract_strided_slice %783 {offsets = [11, 0], sizes = [1, 32], strides = [1, 1]} : vector<16x32xf32> to vector<1x32xf32>
    %802 = vector.extract_strided_slice %783 {offsets = [12, 0], sizes = [1, 32], strides = [1, 1]} : vector<16x32xf32> to vector<1x32xf32>
    %803 = vector.extract_strided_slice %783 {offsets = [13, 0], sizes = [1, 32], strides = [1, 1]} : vector<16x32xf32> to vector<1x32xf32>
    %804 = vector.extract_strided_slice %783 {offsets = [14, 0], sizes = [1, 32], strides = [1, 1]} : vector<16x32xf32> to vector<1x32xf32>
    %805 = vector.extract_strided_slice %783 {offsets = [15, 0], sizes = [1, 32], strides = [1, 1]} : vector<16x32xf32> to vector<1x32xf32>
    %806 = vector.extract_strided_slice %786 {offsets = [0, 0], sizes = [1, 32], strides = [1, 1]} : vector<16x32xf32> to vector<1x32xf32>
    %807 = vector.extract_strided_slice %786 {offsets = [1, 0], sizes = [1, 32], strides = [1, 1]} : vector<16x32xf32> to vector<1x32xf32>
    %808 = vector.extract_strided_slice %786 {offsets = [2, 0], sizes = [1, 32], strides = [1, 1]} : vector<16x32xf32> to vector<1x32xf32>
    %809 = vector.extract_strided_slice %786 {offsets = [3, 0], sizes = [1, 32], strides = [1, 1]} : vector<16x32xf32> to vector<1x32xf32>
    %810 = vector.extract_strided_slice %786 {offsets = [4, 0], sizes = [1, 32], strides = [1, 1]} : vector<16x32xf32> to vector<1x32xf32>
    %811 = vector.extract_strided_slice %786 {offsets = [5, 0], sizes = [1, 32], strides = [1, 1]} : vector<16x32xf32> to vector<1x32xf32>
    %812 = vector.extract_strided_slice %786 {offsets = [6, 0], sizes = [1, 32], strides = [1, 1]} : vector<16x32xf32> to vector<1x32xf32>
    %813 = vector.extract_strided_slice %786 {offsets = [7, 0], sizes = [1, 32], strides = [1, 1]} : vector<16x32xf32> to vector<1x32xf32>
    %814 = vector.extract_strided_slice %786 {offsets = [8, 0], sizes = [1, 32], strides = [1, 1]} : vector<16x32xf32> to vector<1x32xf32>
    %815 = vector.extract_strided_slice %786 {offsets = [9, 0], sizes = [1, 32], strides = [1, 1]} : vector<16x32xf32> to vector<1x32xf32>
    %816 = vector.extract_strided_slice %786 {offsets = [10, 0], sizes = [1, 32], strides = [1, 1]} : vector<16x32xf32> to vector<1x32xf32>
    %817 = vector.extract_strided_slice %786 {offsets = [11, 0], sizes = [1, 32], strides = [1, 1]} : vector<16x32xf32> to vector<1x32xf32>
    %818 = vector.extract_strided_slice %786 {offsets = [12, 0], sizes = [1, 32], strides = [1, 1]} : vector<16x32xf32> to vector<1x32xf32>
    %819 = vector.extract_strided_slice %786 {offsets = [13, 0], sizes = [1, 32], strides = [1, 1]} : vector<16x32xf32> to vector<1x32xf32>
    %820 = vector.extract_strided_slice %786 {offsets = [14, 0], sizes = [1, 32], strides = [1, 1]} : vector<16x32xf32> to vector<1x32xf32>
    %821 = vector.extract_strided_slice %786 {offsets = [15, 0], sizes = [1, 32], strides = [1, 1]} : vector<16x32xf32> to vector<1x32xf32>
    %822 = vector.extract_strided_slice %789 {offsets = [0, 0], sizes = [1, 32], strides = [1, 1]} : vector<16x32xf32> to vector<1x32xf32>
    %823 = vector.extract_strided_slice %789 {offsets = [1, 0], sizes = [1, 32], strides = [1, 1]} : vector<16x32xf32> to vector<1x32xf32>
    %824 = vector.extract_strided_slice %789 {offsets = [2, 0], sizes = [1, 32], strides = [1, 1]} : vector<16x32xf32> to vector<1x32xf32>
    %825 = vector.extract_strided_slice %789 {offsets = [3, 0], sizes = [1, 32], strides = [1, 1]} : vector<16x32xf32> to vector<1x32xf32>
    %826 = vector.extract_strided_slice %789 {offsets = [4, 0], sizes = [1, 32], strides = [1, 1]} : vector<16x32xf32> to vector<1x32xf32>
    %827 = vector.extract_strided_slice %789 {offsets = [5, 0], sizes = [1, 32], strides = [1, 1]} : vector<16x32xf32> to vector<1x32xf32>
    %828 = vector.extract_strided_slice %789 {offsets = [6, 0], sizes = [1, 32], strides = [1, 1]} : vector<16x32xf32> to vector<1x32xf32>
    %829 = vector.extract_strided_slice %789 {offsets = [7, 0], sizes = [1, 32], strides = [1, 1]} : vector<16x32xf32> to vector<1x32xf32>
    %830 = vector.extract_strided_slice %789 {offsets = [8, 0], sizes = [1, 32], strides = [1, 1]} : vector<16x32xf32> to vector<1x32xf32>
    %831 = vector.extract_strided_slice %789 {offsets = [9, 0], sizes = [1, 32], strides = [1, 1]} : vector<16x32xf32> to vector<1x32xf32>
    %832 = vector.extract_strided_slice %789 {offsets = [10, 0], sizes = [1, 32], strides = [1, 1]} : vector<16x32xf32> to vector<1x32xf32>
    %833 = vector.extract_strided_slice %789 {offsets = [11, 0], sizes = [1, 32], strides = [1, 1]} : vector<16x32xf32> to vector<1x32xf32>
    %834 = vector.extract_strided_slice %789 {offsets = [12, 0], sizes = [1, 32], strides = [1, 1]} : vector<16x32xf32> to vector<1x32xf32>
    %835 = vector.extract_strided_slice %789 {offsets = [13, 0], sizes = [1, 32], strides = [1, 1]} : vector<16x32xf32> to vector<1x32xf32>
    %836 = vector.extract_strided_slice %789 {offsets = [14, 0], sizes = [1, 32], strides = [1, 1]} : vector<16x32xf32> to vector<1x32xf32>
    %837 = vector.extract_strided_slice %789 {offsets = [15, 0], sizes = [1, 32], strides = [1, 1]} : vector<16x32xf32> to vector<1x32xf32>
    %838 = arith.addf %790, %14 : vector<1x32xf32>
    %cst_166 = arith.constant 5.000000e-01 : f32
    %839 = vector.broadcast %cst_166 : f32 to vector<1x32xf32>
    %840 = arith.mulf %839, %838 : vector<1x32xf32>
    %841 = math.tanh %840 : vector<1x32xf32>
    %cst_167 = arith.constant 5.000000e-01 : f32
    %842 = vector.broadcast %cst_167 : f32 to vector<1x32xf32>
    %843 = arith.mulf %842, %841 : vector<1x32xf32>
    %cst_168 = arith.constant 5.000000e-01 : f32
    %844 = vector.broadcast %cst_168 : f32 to vector<1x32xf32>
    %845 = arith.addf %843, %844 : vector<1x32xf32>
    %846 = arith.addf %806, %15 : vector<1x32xf32>
    %cst_169 = arith.constant 5.000000e-01 : f32
    %847 = vector.broadcast %cst_169 : f32 to vector<1x32xf32>
    %848 = arith.mulf %847, %846 : vector<1x32xf32>
    %849 = math.tanh %848 : vector<1x32xf32>
    %cst_170 = arith.constant 5.000000e-01 : f32
    %850 = vector.broadcast %cst_170 : f32 to vector<1x32xf32>
    %851 = arith.mulf %850, %849 : vector<1x32xf32>
    %cst_171 = arith.constant 5.000000e-01 : f32
    %852 = vector.broadcast %cst_171 : f32 to vector<1x32xf32>
    %853 = arith.addf %851, %852 : vector<1x32xf32>
    %854 = arith.mulf %845, %16 : vector<1x32xf32>
    %855 = arith.addf %822, %854 : vector<1x32xf32>
    %856 = math.tanh %855 : vector<1x32xf32>
    %cst_172 = arith.constant 1.000000e+00 : f32
    %857 = vector.broadcast %cst_172 : f32 to vector<1x32xf32>
    %858 = arith.subf %857, %853 : vector<1x32xf32>
    %859 = arith.mulf %858, %856 : vector<1x32xf32>
    %cst_173 = arith.constant dense<0.000000e+00> : vector<1x32xf32>
    %860 = tpu.matmul %859, %30, %cst_173 {dimension_numbers = #tpu.dot_dimension_numbers<[1], [0], [0], [1], [0, 0, 1, 1], [], []>} : vector<1x32xf32>, vector<32x32xf32>, vector<1x32xf32> -> vector<1x32xf32>
    %861 = arith.addf %860, %14 : vector<1x32xf32>
    %cst_174 = arith.constant dense<0.000000e+00> : vector<1x32xf32>
    %862 = tpu.matmul %859, %32, %cst_174 {dimension_numbers = #tpu.dot_dimension_numbers<[1], [0], [0], [1], [0, 0, 1, 1], [], []>} : vector<1x32xf32>, vector<32x32xf32>, vector<1x32xf32> -> vector<1x32xf32>
    %863 = arith.addf %862, %15 : vector<1x32xf32>
    %cst_175 = arith.constant dense<0.000000e+00> : vector<1x32xf32>
    %864 = tpu.matmul %859, %34, %cst_175 {dimension_numbers = #tpu.dot_dimension_numbers<[1], [0], [0], [1], [0, 0, 1, 1], [], []>} : vector<1x32xf32>, vector<32x32xf32>, vector<1x32xf32> -> vector<1x32xf32>
    %865 = arith.addf %864, %16 : vector<1x32xf32>
    %866 = arith.addf %791, %861 : vector<1x32xf32>
    %cst_176 = arith.constant 5.000000e-01 : f32
    %867 = vector.broadcast %cst_176 : f32 to vector<1x32xf32>
    %868 = arith.mulf %867, %866 : vector<1x32xf32>
    %869 = math.tanh %868 : vector<1x32xf32>
    %cst_177 = arith.constant 5.000000e-01 : f32
    %870 = vector.broadcast %cst_177 : f32 to vector<1x32xf32>
    %871 = arith.mulf %870, %869 : vector<1x32xf32>
    %cst_178 = arith.constant 5.000000e-01 : f32
    %872 = vector.broadcast %cst_178 : f32 to vector<1x32xf32>
    %873 = arith.addf %871, %872 : vector<1x32xf32>
    %874 = arith.addf %807, %863 : vector<1x32xf32>
    %cst_179 = arith.constant 5.000000e-01 : f32
    %875 = vector.broadcast %cst_179 : f32 to vector<1x32xf32>
    %876 = arith.mulf %875, %874 : vector<1x32xf32>
    %877 = math.tanh %876 : vector<1x32xf32>
    %cst_180 = arith.constant 5.000000e-01 : f32
    %878 = vector.broadcast %cst_180 : f32 to vector<1x32xf32>
    %879 = arith.mulf %878, %877 : vector<1x32xf32>
    %cst_181 = arith.constant 5.000000e-01 : f32
    %880 = vector.broadcast %cst_181 : f32 to vector<1x32xf32>
    %881 = arith.addf %879, %880 : vector<1x32xf32>
    %882 = arith.mulf %873, %865 : vector<1x32xf32>
    %883 = arith.addf %823, %882 : vector<1x32xf32>
    %884 = math.tanh %883 : vector<1x32xf32>
    %885 = arith.subf %859, %884 : vector<1x32xf32>
    %886 = arith.mulf %881, %885 : vector<1x32xf32>
    %887 = arith.addf %884, %886 : vector<1x32xf32>
    %cst_182 = arith.constant dense<0.000000e+00> : vector<1x32xf32>
    %888 = tpu.matmul %887, %30, %cst_182 {dimension_numbers = #tpu.dot_dimension_numbers<[1], [0], [0], [1], [0, 0, 1, 1], [], []>} : vector<1x32xf32>, vector<32x32xf32>, vector<1x32xf32> -> vector<1x32xf32>
    %889 = arith.addf %888, %14 : vector<1x32xf32>
    %cst_183 = arith.constant dense<0.000000e+00> : vector<1x32xf32>
    %890 = tpu.matmul %887, %32, %cst_183 {dimension_numbers = #tpu.dot_dimension_numbers<[1], [0], [0], [1], [0, 0, 1, 1], [], []>} : vector<1x32xf32>, vector<32x32xf32>, vector<1x32xf32> -> vector<1x32xf32>
    %891 = arith.addf %890, %15 : vector<1x32xf32>
    %cst_184 = arith.constant dense<0.000000e+00> : vector<1x32xf32>
    %892 = tpu.matmul %887, %34, %cst_184 {dimension_numbers = #tpu.dot_dimension_numbers<[1], [0], [0], [1], [0, 0, 1, 1], [], []>} : vector<1x32xf32>, vector<32x32xf32>, vector<1x32xf32> -> vector<1x32xf32>
    %893 = arith.addf %892, %16 : vector<1x32xf32>
    %894 = arith.addf %792, %889 : vector<1x32xf32>
    %cst_185 = arith.constant 5.000000e-01 : f32
    %895 = vector.broadcast %cst_185 : f32 to vector<1x32xf32>
    %896 = arith.mulf %895, %894 : vector<1x32xf32>
    %897 = math.tanh %896 : vector<1x32xf32>
    %cst_186 = arith.constant 5.000000e-01 : f32
    %898 = vector.broadcast %cst_186 : f32 to vector<1x32xf32>
    %899 = arith.mulf %898, %897 : vector<1x32xf32>
    %cst_187 = arith.constant 5.000000e-01 : f32
    %900 = vector.broadcast %cst_187 : f32 to vector<1x32xf32>
    %901 = arith.addf %899, %900 : vector<1x32xf32>
    %902 = arith.addf %808, %891 : vector<1x32xf32>
    %cst_188 = arith.constant 5.000000e-01 : f32
    %903 = vector.broadcast %cst_188 : f32 to vector<1x32xf32>
    %904 = arith.mulf %903, %902 : vector<1x32xf32>
    %905 = math.tanh %904 : vector<1x32xf32>
    %cst_189 = arith.constant 5.000000e-01 : f32
    %906 = vector.broadcast %cst_189 : f32 to vector<1x32xf32>
    %907 = arith.mulf %906, %905 : vector<1x32xf32>
    %cst_190 = arith.constant 5.000000e-01 : f32
    %908 = vector.broadcast %cst_190 : f32 to vector<1x32xf32>
    %909 = arith.addf %907, %908 : vector<1x32xf32>
    %910 = arith.mulf %901, %893 : vector<1x32xf32>
    %911 = arith.addf %824, %910 : vector<1x32xf32>
    %912 = math.tanh %911 : vector<1x32xf32>
    %913 = arith.subf %887, %912 : vector<1x32xf32>
    %914 = arith.mulf %909, %913 : vector<1x32xf32>
    %915 = arith.addf %912, %914 : vector<1x32xf32>
    %cst_191 = arith.constant dense<0.000000e+00> : vector<1x32xf32>
    %916 = tpu.matmul %915, %30, %cst_191 {dimension_numbers = #tpu.dot_dimension_numbers<[1], [0], [0], [1], [0, 0, 1, 1], [], []>} : vector<1x32xf32>, vector<32x32xf32>, vector<1x32xf32> -> vector<1x32xf32>
    %917 = arith.addf %916, %14 : vector<1x32xf32>
    %cst_192 = arith.constant dense<0.000000e+00> : vector<1x32xf32>
    %918 = tpu.matmul %915, %32, %cst_192 {dimension_numbers = #tpu.dot_dimension_numbers<[1], [0], [0], [1], [0, 0, 1, 1], [], []>} : vector<1x32xf32>, vector<32x32xf32>, vector<1x32xf32> -> vector<1x32xf32>
    %919 = arith.addf %918, %15 : vector<1x32xf32>
    %cst_193 = arith.constant dense<0.000000e+00> : vector<1x32xf32>
    %920 = tpu.matmul %915, %34, %cst_193 {dimension_numbers = #tpu.dot_dimension_numbers<[1], [0], [0], [1], [0, 0, 1, 1], [], []>} : vector<1x32xf32>, vector<32x32xf32>, vector<1x32xf32> -> vector<1x32xf32>
    %921 = arith.addf %920, %16 : vector<1x32xf32>
    %922 = arith.addf %793, %917 : vector<1x32xf32>
    %cst_194 = arith.constant 5.000000e-01 : f32
    %923 = vector.broadcast %cst_194 : f32 to vector<1x32xf32>
    %924 = arith.mulf %923, %922 : vector<1x32xf32>
    %925 = math.tanh %924 : vector<1x32xf32>
    %cst_195 = arith.constant 5.000000e-01 : f32
    %926 = vector.broadcast %cst_195 : f32 to vector<1x32xf32>
    %927 = arith.mulf %926, %925 : vector<1x32xf32>
    %cst_196 = arith.constant 5.000000e-01 : f32
    %928 = vector.broadcast %cst_196 : f32 to vector<1x32xf32>
    %929 = arith.addf %927, %928 : vector<1x32xf32>
    %930 = arith.addf %809, %919 : vector<1x32xf32>
    %cst_197 = arith.constant 5.000000e-01 : f32
    %931 = vector.broadcast %cst_197 : f32 to vector<1x32xf32>
    %932 = arith.mulf %931, %930 : vector<1x32xf32>
    %933 = math.tanh %932 : vector<1x32xf32>
    %cst_198 = arith.constant 5.000000e-01 : f32
    %934 = vector.broadcast %cst_198 : f32 to vector<1x32xf32>
    %935 = arith.mulf %934, %933 : vector<1x32xf32>
    %cst_199 = arith.constant 5.000000e-01 : f32
    %936 = vector.broadcast %cst_199 : f32 to vector<1x32xf32>
    %937 = arith.addf %935, %936 : vector<1x32xf32>
    %938 = arith.mulf %929, %921 : vector<1x32xf32>
    %939 = arith.addf %825, %938 : vector<1x32xf32>
    %940 = math.tanh %939 : vector<1x32xf32>
    %941 = arith.subf %915, %940 : vector<1x32xf32>
    %942 = arith.mulf %937, %941 : vector<1x32xf32>
    %943 = arith.addf %940, %942 : vector<1x32xf32>
    %cst_200 = arith.constant dense<0.000000e+00> : vector<1x32xf32>
    %944 = tpu.matmul %943, %30, %cst_200 {dimension_numbers = #tpu.dot_dimension_numbers<[1], [0], [0], [1], [0, 0, 1, 1], [], []>} : vector<1x32xf32>, vector<32x32xf32>, vector<1x32xf32> -> vector<1x32xf32>
    %945 = arith.addf %944, %14 : vector<1x32xf32>
    %cst_201 = arith.constant dense<0.000000e+00> : vector<1x32xf32>
    %946 = tpu.matmul %943, %32, %cst_201 {dimension_numbers = #tpu.dot_dimension_numbers<[1], [0], [0], [1], [0, 0, 1, 1], [], []>} : vector<1x32xf32>, vector<32x32xf32>, vector<1x32xf32> -> vector<1x32xf32>
    %947 = arith.addf %946, %15 : vector<1x32xf32>
    %cst_202 = arith.constant dense<0.000000e+00> : vector<1x32xf32>
    %948 = tpu.matmul %943, %34, %cst_202 {dimension_numbers = #tpu.dot_dimension_numbers<[1], [0], [0], [1], [0, 0, 1, 1], [], []>} : vector<1x32xf32>, vector<32x32xf32>, vector<1x32xf32> -> vector<1x32xf32>
    %949 = arith.addf %948, %16 : vector<1x32xf32>
    %950 = arith.addf %794, %945 : vector<1x32xf32>
    %cst_203 = arith.constant 5.000000e-01 : f32
    %951 = vector.broadcast %cst_203 : f32 to vector<1x32xf32>
    %952 = arith.mulf %951, %950 : vector<1x32xf32>
    %953 = math.tanh %952 : vector<1x32xf32>
    %cst_204 = arith.constant 5.000000e-01 : f32
    %954 = vector.broadcast %cst_204 : f32 to vector<1x32xf32>
    %955 = arith.mulf %954, %953 : vector<1x32xf32>
    %cst_205 = arith.constant 5.000000e-01 : f32
    %956 = vector.broadcast %cst_205 : f32 to vector<1x32xf32>
    %957 = arith.addf %955, %956 : vector<1x32xf32>
    %958 = arith.addf %810, %947 : vector<1x32xf32>
    %cst_206 = arith.constant 5.000000e-01 : f32
    %959 = vector.broadcast %cst_206 : f32 to vector<1x32xf32>
    %960 = arith.mulf %959, %958 : vector<1x32xf32>
    %961 = math.tanh %960 : vector<1x32xf32>
    %cst_207 = arith.constant 5.000000e-01 : f32
    %962 = vector.broadcast %cst_207 : f32 to vector<1x32xf32>
    %963 = arith.mulf %962, %961 : vector<1x32xf32>
    %cst_208 = arith.constant 5.000000e-01 : f32
    %964 = vector.broadcast %cst_208 : f32 to vector<1x32xf32>
    %965 = arith.addf %963, %964 : vector<1x32xf32>
    %966 = arith.mulf %957, %949 : vector<1x32xf32>
    %967 = arith.addf %826, %966 : vector<1x32xf32>
    %968 = math.tanh %967 : vector<1x32xf32>
    %969 = arith.subf %943, %968 : vector<1x32xf32>
    %970 = arith.mulf %965, %969 : vector<1x32xf32>
    %971 = arith.addf %968, %970 : vector<1x32xf32>
    %cst_209 = arith.constant dense<0.000000e+00> : vector<1x32xf32>
    %972 = tpu.matmul %971, %30, %cst_209 {dimension_numbers = #tpu.dot_dimension_numbers<[1], [0], [0], [1], [0, 0, 1, 1], [], []>} : vector<1x32xf32>, vector<32x32xf32>, vector<1x32xf32> -> vector<1x32xf32>
    %973 = arith.addf %972, %14 : vector<1x32xf32>
    %cst_210 = arith.constant dense<0.000000e+00> : vector<1x32xf32>
    %974 = tpu.matmul %971, %32, %cst_210 {dimension_numbers = #tpu.dot_dimension_numbers<[1], [0], [0], [1], [0, 0, 1, 1], [], []>} : vector<1x32xf32>, vector<32x32xf32>, vector<1x32xf32> -> vector<1x32xf32>
    %975 = arith.addf %974, %15 : vector<1x32xf32>
    %cst_211 = arith.constant dense<0.000000e+00> : vector<1x32xf32>
    %976 = tpu.matmul %971, %34, %cst_211 {dimension_numbers = #tpu.dot_dimension_numbers<[1], [0], [0], [1], [0, 0, 1, 1], [], []>} : vector<1x32xf32>, vector<32x32xf32>, vector<1x32xf32> -> vector<1x32xf32>
    %977 = arith.addf %976, %16 : vector<1x32xf32>
    %978 = arith.addf %795, %973 : vector<1x32xf32>
    %cst_212 = arith.constant 5.000000e-01 : f32
    %979 = vector.broadcast %cst_212 : f32 to vector<1x32xf32>
    %980 = arith.mulf %979, %978 : vector<1x32xf32>
    %981 = math.tanh %980 : vector<1x32xf32>
    %cst_213 = arith.constant 5.000000e-01 : f32
    %982 = vector.broadcast %cst_213 : f32 to vector<1x32xf32>
    %983 = arith.mulf %982, %981 : vector<1x32xf32>
    %cst_214 = arith.constant 5.000000e-01 : f32
    %984 = vector.broadcast %cst_214 : f32 to vector<1x32xf32>
    %985 = arith.addf %983, %984 : vector<1x32xf32>
    %986 = arith.addf %811, %975 : vector<1x32xf32>
    %cst_215 = arith.constant 5.000000e-01 : f32
    %987 = vector.broadcast %cst_215 : f32 to vector<1x32xf32>
    %988 = arith.mulf %987, %986 : vector<1x32xf32>
    %989 = math.tanh %988 : vector<1x32xf32>
    %cst_216 = arith.constant 5.000000e-01 : f32
    %990 = vector.broadcast %cst_216 : f32 to vector<1x32xf32>
    %991 = arith.mulf %990, %989 : vector<1x32xf32>
    %cst_217 = arith.constant 5.000000e-01 : f32
    %992 = vector.broadcast %cst_217 : f32 to vector<1x32xf32>
    %993 = arith.addf %991, %992 : vector<1x32xf32>
    %994 = arith.mulf %985, %977 : vector<1x32xf32>
    %995 = arith.addf %827, %994 : vector<1x32xf32>
    %996 = math.tanh %995 : vector<1x32xf32>
    %997 = arith.subf %971, %996 : vector<1x32xf32>
    %998 = arith.mulf %993, %997 : vector<1x32xf32>
    %999 = arith.addf %996, %998 : vector<1x32xf32>
    %cst_218 = arith.constant dense<0.000000e+00> : vector<1x32xf32>
    %1000 = tpu.matmul %999, %30, %cst_218 {dimension_numbers = #tpu.dot_dimension_numbers<[1], [0], [0], [1], [0, 0, 1, 1], [], []>} : vector<1x32xf32>, vector<32x32xf32>, vector<1x32xf32> -> vector<1x32xf32>
    %1001 = arith.addf %1000, %14 : vector<1x32xf32>
    %cst_219 = arith.constant dense<0.000000e+00> : vector<1x32xf32>
    %1002 = tpu.matmul %999, %32, %cst_219 {dimension_numbers = #tpu.dot_dimension_numbers<[1], [0], [0], [1], [0, 0, 1, 1], [], []>} : vector<1x32xf32>, vector<32x32xf32>, vector<1x32xf32> -> vector<1x32xf32>
    %1003 = arith.addf %1002, %15 : vector<1x32xf32>
    %cst_220 = arith.constant dense<0.000000e+00> : vector<1x32xf32>
    %1004 = tpu.matmul %999, %34, %cst_220 {dimension_numbers = #tpu.dot_dimension_numbers<[1], [0], [0], [1], [0, 0, 1, 1], [], []>} : vector<1x32xf32>, vector<32x32xf32>, vector<1x32xf32> -> vector<1x32xf32>
    %1005 = arith.addf %1004, %16 : vector<1x32xf32>
    %1006 = arith.addf %796, %1001 : vector<1x32xf32>
    %cst_221 = arith.constant 5.000000e-01 : f32
    %1007 = vector.broadcast %cst_221 : f32 to vector<1x32xf32>
    %1008 = arith.mulf %1007, %1006 : vector<1x32xf32>
    %1009 = math.tanh %1008 : vector<1x32xf32>
    %cst_222 = arith.constant 5.000000e-01 : f32
    %1010 = vector.broadcast %cst_222 : f32 to vector<1x32xf32>
    %1011 = arith.mulf %1010, %1009 : vector<1x32xf32>
    %cst_223 = arith.constant 5.000000e-01 : f32
    %1012 = vector.broadcast %cst_223 : f32 to vector<1x32xf32>
    %1013 = arith.addf %1011, %1012 : vector<1x32xf32>
    %1014 = arith.addf %812, %1003 : vector<1x32xf32>
    %cst_224 = arith.constant 5.000000e-01 : f32
    %1015 = vector.broadcast %cst_224 : f32 to vector<1x32xf32>
    %1016 = arith.mulf %1015, %1014 : vector<1x32xf32>
    %1017 = math.tanh %1016 : vector<1x32xf32>
    %cst_225 = arith.constant 5.000000e-01 : f32
    %1018 = vector.broadcast %cst_225 : f32 to vector<1x32xf32>
    %1019 = arith.mulf %1018, %1017 : vector<1x32xf32>
    %cst_226 = arith.constant 5.000000e-01 : f32
    %1020 = vector.broadcast %cst_226 : f32 to vector<1x32xf32>
    %1021 = arith.addf %1019, %1020 : vector<1x32xf32>
    %1022 = arith.mulf %1013, %1005 : vector<1x32xf32>
    %1023 = arith.addf %828, %1022 : vector<1x32xf32>
    %1024 = math.tanh %1023 : vector<1x32xf32>
    %1025 = arith.subf %999, %1024 : vector<1x32xf32>
    %1026 = arith.mulf %1021, %1025 : vector<1x32xf32>
    %1027 = arith.addf %1024, %1026 : vector<1x32xf32>
    %cst_227 = arith.constant dense<0.000000e+00> : vector<1x32xf32>
    %1028 = tpu.matmul %1027, %30, %cst_227 {dimension_numbers = #tpu.dot_dimension_numbers<[1], [0], [0], [1], [0, 0, 1, 1], [], []>} : vector<1x32xf32>, vector<32x32xf32>, vector<1x32xf32> -> vector<1x32xf32>
    %1029 = arith.addf %1028, %14 : vector<1x32xf32>
    %cst_228 = arith.constant dense<0.000000e+00> : vector<1x32xf32>
    %1030 = tpu.matmul %1027, %32, %cst_228 {dimension_numbers = #tpu.dot_dimension_numbers<[1], [0], [0], [1], [0, 0, 1, 1], [], []>} : vector<1x32xf32>, vector<32x32xf32>, vector<1x32xf32> -> vector<1x32xf32>
    %1031 = arith.addf %1030, %15 : vector<1x32xf32>
    %cst_229 = arith.constant dense<0.000000e+00> : vector<1x32xf32>
    %1032 = tpu.matmul %1027, %34, %cst_229 {dimension_numbers = #tpu.dot_dimension_numbers<[1], [0], [0], [1], [0, 0, 1, 1], [], []>} : vector<1x32xf32>, vector<32x32xf32>, vector<1x32xf32> -> vector<1x32xf32>
    %1033 = arith.addf %1032, %16 : vector<1x32xf32>
    %1034 = arith.addf %797, %1029 : vector<1x32xf32>
    %cst_230 = arith.constant 5.000000e-01 : f32
    %1035 = vector.broadcast %cst_230 : f32 to vector<1x32xf32>
    %1036 = arith.mulf %1035, %1034 : vector<1x32xf32>
    %1037 = math.tanh %1036 : vector<1x32xf32>
    %cst_231 = arith.constant 5.000000e-01 : f32
    %1038 = vector.broadcast %cst_231 : f32 to vector<1x32xf32>
    %1039 = arith.mulf %1038, %1037 : vector<1x32xf32>
    %cst_232 = arith.constant 5.000000e-01 : f32
    %1040 = vector.broadcast %cst_232 : f32 to vector<1x32xf32>
    %1041 = arith.addf %1039, %1040 : vector<1x32xf32>
    %1042 = arith.addf %813, %1031 : vector<1x32xf32>
    %cst_233 = arith.constant 5.000000e-01 : f32
    %1043 = vector.broadcast %cst_233 : f32 to vector<1x32xf32>
    %1044 = arith.mulf %1043, %1042 : vector<1x32xf32>
    %1045 = math.tanh %1044 : vector<1x32xf32>
    %cst_234 = arith.constant 5.000000e-01 : f32
    %1046 = vector.broadcast %cst_234 : f32 to vector<1x32xf32>
    %1047 = arith.mulf %1046, %1045 : vector<1x32xf32>
    %cst_235 = arith.constant 5.000000e-01 : f32
    %1048 = vector.broadcast %cst_235 : f32 to vector<1x32xf32>
    %1049 = arith.addf %1047, %1048 : vector<1x32xf32>
    %1050 = arith.mulf %1041, %1033 : vector<1x32xf32>
    %1051 = arith.addf %829, %1050 : vector<1x32xf32>
    %1052 = math.tanh %1051 : vector<1x32xf32>
    %1053 = arith.subf %1027, %1052 : vector<1x32xf32>
    %1054 = arith.mulf %1049, %1053 : vector<1x32xf32>
    %1055 = arith.addf %1052, %1054 : vector<1x32xf32>
    %cst_236 = arith.constant dense<0.000000e+00> : vector<1x32xf32>
    %1056 = tpu.matmul %1055, %30, %cst_236 {dimension_numbers = #tpu.dot_dimension_numbers<[1], [0], [0], [1], [0, 0, 1, 1], [], []>} : vector<1x32xf32>, vector<32x32xf32>, vector<1x32xf32> -> vector<1x32xf32>
    %1057 = arith.addf %1056, %14 : vector<1x32xf32>
    %cst_237 = arith.constant dense<0.000000e+00> : vector<1x32xf32>
    %1058 = tpu.matmul %1055, %32, %cst_237 {dimension_numbers = #tpu.dot_dimension_numbers<[1], [0], [0], [1], [0, 0, 1, 1], [], []>} : vector<1x32xf32>, vector<32x32xf32>, vector<1x32xf32> -> vector<1x32xf32>
    %1059 = arith.addf %1058, %15 : vector<1x32xf32>
    %cst_238 = arith.constant dense<0.000000e+00> : vector<1x32xf32>
    %1060 = tpu.matmul %1055, %34, %cst_238 {dimension_numbers = #tpu.dot_dimension_numbers<[1], [0], [0], [1], [0, 0, 1, 1], [], []>} : vector<1x32xf32>, vector<32x32xf32>, vector<1x32xf32> -> vector<1x32xf32>
    %1061 = arith.addf %1060, %16 : vector<1x32xf32>
    %1062 = arith.addf %798, %1057 : vector<1x32xf32>
    %cst_239 = arith.constant 5.000000e-01 : f32
    %1063 = vector.broadcast %cst_239 : f32 to vector<1x32xf32>
    %1064 = arith.mulf %1063, %1062 : vector<1x32xf32>
    %1065 = math.tanh %1064 : vector<1x32xf32>
    %cst_240 = arith.constant 5.000000e-01 : f32
    %1066 = vector.broadcast %cst_240 : f32 to vector<1x32xf32>
    %1067 = arith.mulf %1066, %1065 : vector<1x32xf32>
    %cst_241 = arith.constant 5.000000e-01 : f32
    %1068 = vector.broadcast %cst_241 : f32 to vector<1x32xf32>
    %1069 = arith.addf %1067, %1068 : vector<1x32xf32>
    %1070 = arith.addf %814, %1059 : vector<1x32xf32>
    %cst_242 = arith.constant 5.000000e-01 : f32
    %1071 = vector.broadcast %cst_242 : f32 to vector<1x32xf32>
    %1072 = arith.mulf %1071, %1070 : vector<1x32xf32>
    %1073 = math.tanh %1072 : vector<1x32xf32>
    %cst_243 = arith.constant 5.000000e-01 : f32
    %1074 = vector.broadcast %cst_243 : f32 to vector<1x32xf32>
    %1075 = arith.mulf %1074, %1073 : vector<1x32xf32>
    %cst_244 = arith.constant 5.000000e-01 : f32
    %1076 = vector.broadcast %cst_244 : f32 to vector<1x32xf32>
    %1077 = arith.addf %1075, %1076 : vector<1x32xf32>
    %1078 = arith.mulf %1069, %1061 : vector<1x32xf32>
    %1079 = arith.addf %830, %1078 : vector<1x32xf32>
    %1080 = math.tanh %1079 : vector<1x32xf32>
    %1081 = arith.subf %1055, %1080 : vector<1x32xf32>
    %1082 = arith.mulf %1077, %1081 : vector<1x32xf32>
    %1083 = arith.addf %1080, %1082 : vector<1x32xf32>
    %cst_245 = arith.constant dense<0.000000e+00> : vector<1x32xf32>
    %1084 = tpu.matmul %1083, %30, %cst_245 {dimension_numbers = #tpu.dot_dimension_numbers<[1], [0], [0], [1], [0, 0, 1, 1], [], []>} : vector<1x32xf32>, vector<32x32xf32>, vector<1x32xf32> -> vector<1x32xf32>
    %1085 = arith.addf %1084, %14 : vector<1x32xf32>
    %cst_246 = arith.constant dense<0.000000e+00> : vector<1x32xf32>
    %1086 = tpu.matmul %1083, %32, %cst_246 {dimension_numbers = #tpu.dot_dimension_numbers<[1], [0], [0], [1], [0, 0, 1, 1], [], []>} : vector<1x32xf32>, vector<32x32xf32>, vector<1x32xf32> -> vector<1x32xf32>
    %1087 = arith.addf %1086, %15 : vector<1x32xf32>
    %cst_247 = arith.constant dense<0.000000e+00> : vector<1x32xf32>
    %1088 = tpu.matmul %1083, %34, %cst_247 {dimension_numbers = #tpu.dot_dimension_numbers<[1], [0], [0], [1], [0, 0, 1, 1], [], []>} : vector<1x32xf32>, vector<32x32xf32>, vector<1x32xf32> -> vector<1x32xf32>
    %1089 = arith.addf %1088, %16 : vector<1x32xf32>
    %1090 = arith.addf %799, %1085 : vector<1x32xf32>
    %cst_248 = arith.constant 5.000000e-01 : f32
    %1091 = vector.broadcast %cst_248 : f32 to vector<1x32xf32>
    %1092 = arith.mulf %1091, %1090 : vector<1x32xf32>
    %1093 = math.tanh %1092 : vector<1x32xf32>
    %cst_249 = arith.constant 5.000000e-01 : f32
    %1094 = vector.broadcast %cst_249 : f32 to vector<1x32xf32>
    %1095 = arith.mulf %1094, %1093 : vector<1x32xf32>
    %cst_250 = arith.constant 5.000000e-01 : f32
    %1096 = vector.broadcast %cst_250 : f32 to vector<1x32xf32>
    %1097 = arith.addf %1095, %1096 : vector<1x32xf32>
    %1098 = arith.addf %815, %1087 : vector<1x32xf32>
    %cst_251 = arith.constant 5.000000e-01 : f32
    %1099 = vector.broadcast %cst_251 : f32 to vector<1x32xf32>
    %1100 = arith.mulf %1099, %1098 : vector<1x32xf32>
    %1101 = math.tanh %1100 : vector<1x32xf32>
    %cst_252 = arith.constant 5.000000e-01 : f32
    %1102 = vector.broadcast %cst_252 : f32 to vector<1x32xf32>
    %1103 = arith.mulf %1102, %1101 : vector<1x32xf32>
    %cst_253 = arith.constant 5.000000e-01 : f32
    %1104 = vector.broadcast %cst_253 : f32 to vector<1x32xf32>
    %1105 = arith.addf %1103, %1104 : vector<1x32xf32>
    %1106 = arith.mulf %1097, %1089 : vector<1x32xf32>
    %1107 = arith.addf %831, %1106 : vector<1x32xf32>
    %1108 = math.tanh %1107 : vector<1x32xf32>
    %1109 = arith.subf %1083, %1108 : vector<1x32xf32>
    %1110 = arith.mulf %1105, %1109 : vector<1x32xf32>
    %1111 = arith.addf %1108, %1110 : vector<1x32xf32>
    %cst_254 = arith.constant dense<0.000000e+00> : vector<1x32xf32>
    %1112 = tpu.matmul %1111, %30, %cst_254 {dimension_numbers = #tpu.dot_dimension_numbers<[1], [0], [0], [1], [0, 0, 1, 1], [], []>} : vector<1x32xf32>, vector<32x32xf32>, vector<1x32xf32> -> vector<1x32xf32>
    %1113 = arith.addf %1112, %14 : vector<1x32xf32>
    %cst_255 = arith.constant dense<0.000000e+00> : vector<1x32xf32>
    %1114 = tpu.matmul %1111, %32, %cst_255 {dimension_numbers = #tpu.dot_dimension_numbers<[1], [0], [0], [1], [0, 0, 1, 1], [], []>} : vector<1x32xf32>, vector<32x32xf32>, vector<1x32xf32> -> vector<1x32xf32>
    %1115 = arith.addf %1114, %15 : vector<1x32xf32>
    %cst_256 = arith.constant dense<0.000000e+00> : vector<1x32xf32>
    %1116 = tpu.matmul %1111, %34, %cst_256 {dimension_numbers = #tpu.dot_dimension_numbers<[1], [0], [0], [1], [0, 0, 1, 1], [], []>} : vector<1x32xf32>, vector<32x32xf32>, vector<1x32xf32> -> vector<1x32xf32>
    %1117 = arith.addf %1116, %16 : vector<1x32xf32>
    %1118 = arith.addf %800, %1113 : vector<1x32xf32>
    %cst_257 = arith.constant 5.000000e-01 : f32
    %1119 = vector.broadcast %cst_257 : f32 to vector<1x32xf32>
    %1120 = arith.mulf %1119, %1118 : vector<1x32xf32>
    %1121 = math.tanh %1120 : vector<1x32xf32>
    %cst_258 = arith.constant 5.000000e-01 : f32
    %1122 = vector.broadcast %cst_258 : f32 to vector<1x32xf32>
    %1123 = arith.mulf %1122, %1121 : vector<1x32xf32>
    %cst_259 = arith.constant 5.000000e-01 : f32
    %1124 = vector.broadcast %cst_259 : f32 to vector<1x32xf32>
    %1125 = arith.addf %1123, %1124 : vector<1x32xf32>
    %1126 = arith.addf %816, %1115 : vector<1x32xf32>
    %cst_260 = arith.constant 5.000000e-01 : f32
    %1127 = vector.broadcast %cst_260 : f32 to vector<1x32xf32>
    %1128 = arith.mulf %1127, %1126 : vector<1x32xf32>
    %1129 = math.tanh %1128 : vector<1x32xf32>
    %cst_261 = arith.constant 5.000000e-01 : f32
    %1130 = vector.broadcast %cst_261 : f32 to vector<1x32xf32>
    %1131 = arith.mulf %1130, %1129 : vector<1x32xf32>
    %cst_262 = arith.constant 5.000000e-01 : f32
    %1132 = vector.broadcast %cst_262 : f32 to vector<1x32xf32>
    %1133 = arith.addf %1131, %1132 : vector<1x32xf32>
    %1134 = arith.mulf %1125, %1117 : vector<1x32xf32>
    %1135 = arith.addf %832, %1134 : vector<1x32xf32>
    %1136 = math.tanh %1135 : vector<1x32xf32>
    %1137 = arith.subf %1111, %1136 : vector<1x32xf32>
    %1138 = arith.mulf %1133, %1137 : vector<1x32xf32>
    %1139 = arith.addf %1136, %1138 : vector<1x32xf32>
    %cst_263 = arith.constant dense<0.000000e+00> : vector<1x32xf32>
    %1140 = tpu.matmul %1139, %30, %cst_263 {dimension_numbers = #tpu.dot_dimension_numbers<[1], [0], [0], [1], [0, 0, 1, 1], [], []>} : vector<1x32xf32>, vector<32x32xf32>, vector<1x32xf32> -> vector<1x32xf32>
    %1141 = arith.addf %1140, %14 : vector<1x32xf32>
    %cst_264 = arith.constant dense<0.000000e+00> : vector<1x32xf32>
    %1142 = tpu.matmul %1139, %32, %cst_264 {dimension_numbers = #tpu.dot_dimension_numbers<[1], [0], [0], [1], [0, 0, 1, 1], [], []>} : vector<1x32xf32>, vector<32x32xf32>, vector<1x32xf32> -> vector<1x32xf32>
    %1143 = arith.addf %1142, %15 : vector<1x32xf32>
    %cst_265 = arith.constant dense<0.000000e+00> : vector<1x32xf32>
    %1144 = tpu.matmul %1139, %34, %cst_265 {dimension_numbers = #tpu.dot_dimension_numbers<[1], [0], [0], [1], [0, 0, 1, 1], [], []>} : vector<1x32xf32>, vector<32x32xf32>, vector<1x32xf32> -> vector<1x32xf32>
    %1145 = arith.addf %1144, %16 : vector<1x32xf32>
    %1146 = arith.addf %801, %1141 : vector<1x32xf32>
    %cst_266 = arith.constant 5.000000e-01 : f32
    %1147 = vector.broadcast %cst_266 : f32 to vector<1x32xf32>
    %1148 = arith.mulf %1147, %1146 : vector<1x32xf32>
    %1149 = math.tanh %1148 : vector<1x32xf32>
    %cst_267 = arith.constant 5.000000e-01 : f32
    %1150 = vector.broadcast %cst_267 : f32 to vector<1x32xf32>
    %1151 = arith.mulf %1150, %1149 : vector<1x32xf32>
    %cst_268 = arith.constant 5.000000e-01 : f32
    %1152 = vector.broadcast %cst_268 : f32 to vector<1x32xf32>
    %1153 = arith.addf %1151, %1152 : vector<1x32xf32>
    %1154 = arith.addf %817, %1143 : vector<1x32xf32>
    %cst_269 = arith.constant 5.000000e-01 : f32
    %1155 = vector.broadcast %cst_269 : f32 to vector<1x32xf32>
    %1156 = arith.mulf %1155, %1154 : vector<1x32xf32>
    %1157 = math.tanh %1156 : vector<1x32xf32>
    %cst_270 = arith.constant 5.000000e-01 : f32
    %1158 = vector.broadcast %cst_270 : f32 to vector<1x32xf32>
    %1159 = arith.mulf %1158, %1157 : vector<1x32xf32>
    %cst_271 = arith.constant 5.000000e-01 : f32
    %1160 = vector.broadcast %cst_271 : f32 to vector<1x32xf32>
    %1161 = arith.addf %1159, %1160 : vector<1x32xf32>
    %1162 = arith.mulf %1153, %1145 : vector<1x32xf32>
    %1163 = arith.addf %833, %1162 : vector<1x32xf32>
    %1164 = math.tanh %1163 : vector<1x32xf32>
    %1165 = arith.subf %1139, %1164 : vector<1x32xf32>
    %1166 = arith.mulf %1161, %1165 : vector<1x32xf32>
    %1167 = arith.addf %1164, %1166 : vector<1x32xf32>
    %cst_272 = arith.constant dense<0.000000e+00> : vector<1x32xf32>
    %1168 = tpu.matmul %1167, %30, %cst_272 {dimension_numbers = #tpu.dot_dimension_numbers<[1], [0], [0], [1], [0, 0, 1, 1], [], []>} : vector<1x32xf32>, vector<32x32xf32>, vector<1x32xf32> -> vector<1x32xf32>
    %1169 = arith.addf %1168, %14 : vector<1x32xf32>
    %cst_273 = arith.constant dense<0.000000e+00> : vector<1x32xf32>
    %1170 = tpu.matmul %1167, %32, %cst_273 {dimension_numbers = #tpu.dot_dimension_numbers<[1], [0], [0], [1], [0, 0, 1, 1], [], []>} : vector<1x32xf32>, vector<32x32xf32>, vector<1x32xf32> -> vector<1x32xf32>
    %1171 = arith.addf %1170, %15 : vector<1x32xf32>
    %cst_274 = arith.constant dense<0.000000e+00> : vector<1x32xf32>
    %1172 = tpu.matmul %1167, %34, %cst_274 {dimension_numbers = #tpu.dot_dimension_numbers<[1], [0], [0], [1], [0, 0, 1, 1], [], []>} : vector<1x32xf32>, vector<32x32xf32>, vector<1x32xf32> -> vector<1x32xf32>
    %1173 = arith.addf %1172, %16 : vector<1x32xf32>
    %1174 = arith.addf %802, %1169 : vector<1x32xf32>
    %cst_275 = arith.constant 5.000000e-01 : f32
    %1175 = vector.broadcast %cst_275 : f32 to vector<1x32xf32>
    %1176 = arith.mulf %1175, %1174 : vector<1x32xf32>
    %1177 = math.tanh %1176 : vector<1x32xf32>
    %cst_276 = arith.constant 5.000000e-01 : f32
    %1178 = vector.broadcast %cst_276 : f32 to vector<1x32xf32>
    %1179 = arith.mulf %1178, %1177 : vector<1x32xf32>
    %cst_277 = arith.constant 5.000000e-01 : f32
    %1180 = vector.broadcast %cst_277 : f32 to vector<1x32xf32>
    %1181 = arith.addf %1179, %1180 : vector<1x32xf32>
    %1182 = arith.addf %818, %1171 : vector<1x32xf32>
    %cst_278 = arith.constant 5.000000e-01 : f32
    %1183 = vector.broadcast %cst_278 : f32 to vector<1x32xf32>
    %1184 = arith.mulf %1183, %1182 : vector<1x32xf32>
    %1185 = math.tanh %1184 : vector<1x32xf32>
    %cst_279 = arith.constant 5.000000e-01 : f32
    %1186 = vector.broadcast %cst_279 : f32 to vector<1x32xf32>
    %1187 = arith.mulf %1186, %1185 : vector<1x32xf32>
    %cst_280 = arith.constant 5.000000e-01 : f32
    %1188 = vector.broadcast %cst_280 : f32 to vector<1x32xf32>
    %1189 = arith.addf %1187, %1188 : vector<1x32xf32>
    %1190 = arith.mulf %1181, %1173 : vector<1x32xf32>
    %1191 = arith.addf %834, %1190 : vector<1x32xf32>
    %1192 = math.tanh %1191 : vector<1x32xf32>
    %1193 = arith.subf %1167, %1192 : vector<1x32xf32>
    %1194 = arith.mulf %1189, %1193 : vector<1x32xf32>
    %1195 = arith.addf %1192, %1194 : vector<1x32xf32>
    %cst_281 = arith.constant dense<0.000000e+00> : vector<1x32xf32>
    %1196 = tpu.matmul %1195, %30, %cst_281 {dimension_numbers = #tpu.dot_dimension_numbers<[1], [0], [0], [1], [0, 0, 1, 1], [], []>} : vector<1x32xf32>, vector<32x32xf32>, vector<1x32xf32> -> vector<1x32xf32>
    %1197 = arith.addf %1196, %14 : vector<1x32xf32>
    %cst_282 = arith.constant dense<0.000000e+00> : vector<1x32xf32>
    %1198 = tpu.matmul %1195, %32, %cst_282 {dimension_numbers = #tpu.dot_dimension_numbers<[1], [0], [0], [1], [0, 0, 1, 1], [], []>} : vector<1x32xf32>, vector<32x32xf32>, vector<1x32xf32> -> vector<1x32xf32>
    %1199 = arith.addf %1198, %15 : vector<1x32xf32>
    %cst_283 = arith.constant dense<0.000000e+00> : vector<1x32xf32>
    %1200 = tpu.matmul %1195, %34, %cst_283 {dimension_numbers = #tpu.dot_dimension_numbers<[1], [0], [0], [1], [0, 0, 1, 1], [], []>} : vector<1x32xf32>, vector<32x32xf32>, vector<1x32xf32> -> vector<1x32xf32>
    %1201 = arith.addf %1200, %16 : vector<1x32xf32>
    %1202 = arith.addf %803, %1197 : vector<1x32xf32>
    %cst_284 = arith.constant 5.000000e-01 : f32
    %1203 = vector.broadcast %cst_284 : f32 to vector<1x32xf32>
    %1204 = arith.mulf %1203, %1202 : vector<1x32xf32>
    %1205 = math.tanh %1204 : vector<1x32xf32>
    %cst_285 = arith.constant 5.000000e-01 : f32
    %1206 = vector.broadcast %cst_285 : f32 to vector<1x32xf32>
    %1207 = arith.mulf %1206, %1205 : vector<1x32xf32>
    %cst_286 = arith.constant 5.000000e-01 : f32
    %1208 = vector.broadcast %cst_286 : f32 to vector<1x32xf32>
    %1209 = arith.addf %1207, %1208 : vector<1x32xf32>
    %1210 = arith.addf %819, %1199 : vector<1x32xf32>
    %cst_287 = arith.constant 5.000000e-01 : f32
    %1211 = vector.broadcast %cst_287 : f32 to vector<1x32xf32>
    %1212 = arith.mulf %1211, %1210 : vector<1x32xf32>
    %1213 = math.tanh %1212 : vector<1x32xf32>
    %cst_288 = arith.constant 5.000000e-01 : f32
    %1214 = vector.broadcast %cst_288 : f32 to vector<1x32xf32>
    %1215 = arith.mulf %1214, %1213 : vector<1x32xf32>
    %cst_289 = arith.constant 5.000000e-01 : f32
    %1216 = vector.broadcast %cst_289 : f32 to vector<1x32xf32>
    %1217 = arith.addf %1215, %1216 : vector<1x32xf32>
    %1218 = arith.mulf %1209, %1201 : vector<1x32xf32>
    %1219 = arith.addf %835, %1218 : vector<1x32xf32>
    %1220 = math.tanh %1219 : vector<1x32xf32>
    %1221 = arith.subf %1195, %1220 : vector<1x32xf32>
    %1222 = arith.mulf %1217, %1221 : vector<1x32xf32>
    %1223 = arith.addf %1220, %1222 : vector<1x32xf32>
    %cst_290 = arith.constant dense<0.000000e+00> : vector<1x32xf32>
    %1224 = tpu.matmul %1223, %30, %cst_290 {dimension_numbers = #tpu.dot_dimension_numbers<[1], [0], [0], [1], [0, 0, 1, 1], [], []>} : vector<1x32xf32>, vector<32x32xf32>, vector<1x32xf32> -> vector<1x32xf32>
    %1225 = arith.addf %1224, %14 : vector<1x32xf32>
    %cst_291 = arith.constant dense<0.000000e+00> : vector<1x32xf32>
    %1226 = tpu.matmul %1223, %32, %cst_291 {dimension_numbers = #tpu.dot_dimension_numbers<[1], [0], [0], [1], [0, 0, 1, 1], [], []>} : vector<1x32xf32>, vector<32x32xf32>, vector<1x32xf32> -> vector<1x32xf32>
    %1227 = arith.addf %1226, %15 : vector<1x32xf32>
    %cst_292 = arith.constant dense<0.000000e+00> : vector<1x32xf32>
    %1228 = tpu.matmul %1223, %34, %cst_292 {dimension_numbers = #tpu.dot_dimension_numbers<[1], [0], [0], [1], [0, 0, 1, 1], [], []>} : vector<1x32xf32>, vector<32x32xf32>, vector<1x32xf32> -> vector<1x32xf32>
    %1229 = arith.addf %1228, %16 : vector<1x32xf32>
    %1230 = arith.addf %804, %1225 : vector<1x32xf32>
    %cst_293 = arith.constant 5.000000e-01 : f32
    %1231 = vector.broadcast %cst_293 : f32 to vector<1x32xf32>
    %1232 = arith.mulf %1231, %1230 : vector<1x32xf32>
    %1233 = math.tanh %1232 : vector<1x32xf32>
    %cst_294 = arith.constant 5.000000e-01 : f32
    %1234 = vector.broadcast %cst_294 : f32 to vector<1x32xf32>
    %1235 = arith.mulf %1234, %1233 : vector<1x32xf32>
    %cst_295 = arith.constant 5.000000e-01 : f32
    %1236 = vector.broadcast %cst_295 : f32 to vector<1x32xf32>
    %1237 = arith.addf %1235, %1236 : vector<1x32xf32>
    %1238 = arith.addf %820, %1227 : vector<1x32xf32>
    %cst_296 = arith.constant 5.000000e-01 : f32
    %1239 = vector.broadcast %cst_296 : f32 to vector<1x32xf32>
    %1240 = arith.mulf %1239, %1238 : vector<1x32xf32>
    %1241 = math.tanh %1240 : vector<1x32xf32>
    %cst_297 = arith.constant 5.000000e-01 : f32
    %1242 = vector.broadcast %cst_297 : f32 to vector<1x32xf32>
    %1243 = arith.mulf %1242, %1241 : vector<1x32xf32>
    %cst_298 = arith.constant 5.000000e-01 : f32
    %1244 = vector.broadcast %cst_298 : f32 to vector<1x32xf32>
    %1245 = arith.addf %1243, %1244 : vector<1x32xf32>
    %1246 = arith.mulf %1237, %1229 : vector<1x32xf32>
    %1247 = arith.addf %836, %1246 : vector<1x32xf32>
    %1248 = math.tanh %1247 : vector<1x32xf32>
    %1249 = arith.subf %1223, %1248 : vector<1x32xf32>
    %1250 = arith.mulf %1245, %1249 : vector<1x32xf32>
    %1251 = arith.addf %1248, %1250 : vector<1x32xf32>
    %cst_299 = arith.constant dense<0.000000e+00> : vector<1x32xf32>
    %1252 = tpu.matmul %1251, %30, %cst_299 {dimension_numbers = #tpu.dot_dimension_numbers<[1], [0], [0], [1], [0, 0, 1, 1], [], []>} : vector<1x32xf32>, vector<32x32xf32>, vector<1x32xf32> -> vector<1x32xf32>
    %1253 = arith.addf %1252, %14 : vector<1x32xf32>
    %cst_300 = arith.constant dense<0.000000e+00> : vector<1x32xf32>
    %1254 = tpu.matmul %1251, %32, %cst_300 {dimension_numbers = #tpu.dot_dimension_numbers<[1], [0], [0], [1], [0, 0, 1, 1], [], []>} : vector<1x32xf32>, vector<32x32xf32>, vector<1x32xf32> -> vector<1x32xf32>
    %1255 = arith.addf %1254, %15 : vector<1x32xf32>
    %cst_301 = arith.constant dense<0.000000e+00> : vector<1x32xf32>
    %1256 = tpu.matmul %1251, %34, %cst_301 {dimension_numbers = #tpu.dot_dimension_numbers<[1], [0], [0], [1], [0, 0, 1, 1], [], []>} : vector<1x32xf32>, vector<32x32xf32>, vector<1x32xf32> -> vector<1x32xf32>
    %1257 = arith.addf %1256, %16 : vector<1x32xf32>
    %1258 = arith.addf %805, %1253 : vector<1x32xf32>
    %cst_302 = arith.constant 5.000000e-01 : f32
    %1259 = vector.broadcast %cst_302 : f32 to vector<1x32xf32>
    %1260 = arith.mulf %1259, %1258 : vector<1x32xf32>
    %1261 = math.tanh %1260 : vector<1x32xf32>
    %cst_303 = arith.constant 5.000000e-01 : f32
    %1262 = vector.broadcast %cst_303 : f32 to vector<1x32xf32>
    %1263 = arith.mulf %1262, %1261 : vector<1x32xf32>
    %cst_304 = arith.constant 5.000000e-01 : f32
    %1264 = vector.broadcast %cst_304 : f32 to vector<1x32xf32>
    %1265 = arith.addf %1263, %1264 : vector<1x32xf32>
    %1266 = arith.addf %821, %1255 : vector<1x32xf32>
    %cst_305 = arith.constant 5.000000e-01 : f32
    %1267 = vector.broadcast %cst_305 : f32 to vector<1x32xf32>
    %1268 = arith.mulf %1267, %1266 : vector<1x32xf32>
    %1269 = math.tanh %1268 : vector<1x32xf32>
    %cst_306 = arith.constant 5.000000e-01 : f32
    %1270 = vector.broadcast %cst_306 : f32 to vector<1x32xf32>
    %1271 = arith.mulf %1270, %1269 : vector<1x32xf32>
    %cst_307 = arith.constant 5.000000e-01 : f32
    %1272 = vector.broadcast %cst_307 : f32 to vector<1x32xf32>
    %1273 = arith.addf %1271, %1272 : vector<1x32xf32>
    %1274 = arith.mulf %1265, %1257 : vector<1x32xf32>
    %1275 = arith.addf %837, %1274 : vector<1x32xf32>
    %1276 = math.tanh %1275 : vector<1x32xf32>
    %1277 = arith.subf %1251, %1276 : vector<1x32xf32>
    %1278 = arith.mulf %1273, %1277 : vector<1x32xf32>
    %1279 = arith.addf %1276, %1278 : vector<1x32xf32>
    %c0_308 = arith.constant 0 : index
    %c0_309 = arith.constant 0 : index
    %1280 = vector.load %arg3[%c0_308, %c0_309] : memref<136x64xf32, #tpu.memory_space<vmem>>, vector<32x64xf32>
    %c32 = arith.constant 32 : index
    %c0_310 = arith.constant 0 : index
    %1281 = vector.load %arg3[%c32, %c0_310] : memref<136x64xf32, #tpu.memory_space<vmem>>, vector<32x64xf32>
    %c64 = arith.constant 64 : index
    %c0_311 = arith.constant 0 : index
    %1282 = vector.load %arg3[%c64, %c0_311] : memref<136x64xf32, #tpu.memory_space<vmem>>, vector<64x64xf32>
    %c128 = arith.constant 128 : index
    %c0_312 = arith.constant 0 : index
    %1283 = vector.load %arg3[%c128, %c0_312] : memref<136x64xf32, #tpu.memory_space<vmem>>, vector<1x64xf32>
    %c129 = arith.constant 129 : index
    %c0_313 = arith.constant 0 : index
    %1284 = vector.load %arg3[%c129, %c0_313] : memref<136x64xf32, #tpu.memory_space<vmem>>, vector<1x64xf32>
    %c130 = arith.constant 130 : index
    %c0_314 = arith.constant 0 : index
    %1285 = vector.load %arg3[%c130, %c0_314] : memref<136x64xf32, #tpu.memory_space<vmem>>, vector<1x64xf32>
    %cst_315 = arith.constant dense<0.000000e+00> : vector<16x64xf32>
    %1286 = tpu.matmul %780, %1280, %cst_315 {dimension_numbers = #tpu.dot_dimension_numbers<[1], [0], [0], [1], [0, 0, 1, 1], [], []>} : vector<16x32xf32>, vector<32x64xf32>, vector<16x64xf32> -> vector<16x64xf32>
    %cst_316 = arith.constant dense<0.000000e+00> : vector<1x64xf32>
    %1287 = tpu.matmul %1279, %1281, %cst_316 {dimension_numbers = #tpu.dot_dimension_numbers<[1], [0], [0], [1], [0, 0, 1, 1], [], []>} : vector<1x32xf32>, vector<32x64xf32>, vector<1x64xf32> -> vector<1x64xf32>
    %1288 = vector.broadcast %1287 : vector<1x64xf32> to vector<16x64xf32>
    %1289 = arith.addf %1286, %1288 : vector<16x64xf32>
    %1290 = vector.broadcast %1283 : vector<1x64xf32> to vector<16x64xf32>
    %1291 = arith.addf %1289, %1290 : vector<16x64xf32>
    %cst_317 = arith.constant 0.000000e+00 : f32
    %1292 = vector.broadcast %cst_317 : f32 to vector<16x64xf32>
    %1293 = arith.maximumf %1291, %1292 : vector<16x64xf32>
    %cst_318 = arith.constant dense<0.000000e+00> : vector<16x64xf32>
    %1294 = tpu.matmul %1293, %1282, %cst_318 {dimension_numbers = #tpu.dot_dimension_numbers<[1], [0], [0], [1], [0, 0, 1, 1], [], []>} : vector<16x64xf32>, vector<64x64xf32>, vector<16x64xf32> -> vector<16x64xf32>
    %1295 = vector.broadcast %1284 : vector<1x64xf32> to vector<16x64xf32>
    %1296 = arith.addf %1294, %1295 : vector<16x64xf32>
    %cst_319 = arith.constant 0.000000e+00 : f32
    %1297 = vector.broadcast %cst_319 : f32 to vector<16x64xf32>
    %1298 = arith.maximumf %1296, %1297 : vector<16x64xf32>
    %cst_320 = arith.constant dense<0.000000e+00> : vector<1x16xf32>
    %1299 = tpu.matmul %1285, %1298, %cst_320 {dimension_numbers = #tpu.dot_dimension_numbers<[1], [1], [0], [0], [0, 0, 1, 0], [], []>} : vector<1x64xf32>, vector<16x64xf32>, vector<1x16xf32> -> vector<1x16xf32>
    %cst_321 = arith.constant dense<0xFF800000> : vector<1xf32>
    %1300 = vector.multi_reduction <maximumf>, %1299, %cst_321 [1] : vector<1x16xf32> to vector<1xf32>
    %1301 = vector.shape_cast %1300 : vector<1xf32> to vector<1x1xf32>
    %1302 = vector.broadcast %1301 : vector<1x1xf32> to vector<1x16xf32>
    %1303 = arith.subf %1299, %1302 : vector<1x16xf32>
    %1304 = math.exp %1303 : vector<1x16xf32>
    %cst_322 = arith.constant dense<0.000000e+00> : vector<1xf32>
    %1305 = vector.multi_reduction <add>, %1304, %cst_322 [1] : vector<1x16xf32> to vector<1xf32>
    %1306 = vector.shape_cast %1305 : vector<1xf32> to vector<1x1xf32>
    %1307 = vector.broadcast %1306 : vector<1x1xf32> to vector<1x16xf32>
    %1308 = arith.divf %1304, %1307 : vector<1x16xf32>
    %c0_323 = arith.constant 0 : index
    %c0_324 = arith.constant 0 : index
    %1309 = vector.load %arg4[%c0_323, %c0_324] : memref<1x16xf32, #tpu.memory_space<vmem>>, vector<1x16xf32>
    tpu.vector_store %arg4[%c0_323, %c0_324], %1308 {strides = array<i32>} : memref<1x16xf32, #tpu.memory_space<vmem>>, vector<1x16xf32>,
    return
  }
}

</mosaic_0001>

<llo_original>
// kernel: _lambda_.1
$region0: #{_lambda_.1}
  #allocation0 [shape = 'u32[]', space=smem, size = 0x4, offset = 0x4, fixed_abs, tag = 'smem constant byte address 0x4 - core index']
  #allocation1 [shape = 'u32[144,128]{1,0:T(1,128)}', space=vmem, size = 0x12000, scoped, tag = 'internal scratch']
  %s0 = inlined_call_operand.hbm [shape: f32[16,16], index: 0, kind: input, shape index: {}]
  %s1 = inlined_call_operand.hbm [shape: f32[9,32,32], index: 1, kind: input, shape index: {}]
  %s2 = inlined_call_operand.hbm [shape: f32[16,32], index: 2, kind: input, shape index: {}]
  %s3 = inlined_call_operand.hbm [shape: f32[136,64], index: 3, kind: input, shape index: {}]
  %s4 = inlined_call_operand.hbm [shape: f32[1,16], index: 4, kind: output, shape index: {}]
  %s5 = sld [smem:[#allocation0]]
  $region42: #{_lambda_.1} parent=0
    _
  %s7 = ssub.s32 1, %s5
  %s8 = scalar_select 0, %s7, %s5
  $region1: #{_lambda_.1} parent=0
    #allocation2 [shape = 'u8[8192]{0}', space=vmem, size = 0x2000, scoped, tag = 'input window, operand 0, single buffered']
    #allocation3 [shape = 's32[1]{0}', space=sflag, size = 0x4, scoped, tag = 'scoped memory for _lambda_.1']
    #allocation4 [shape = 's32[1]{0}', space=sflag, size = 0x4, scoped, tag = 'scoped memory for _lambda_.1']
    #allocation5 [shape = 'u8[147456]{0}', space=vmem, size = 0x24000, scoped, tag = 'input window, operand 1, single buffered']
    #allocation6 [shape = 's32[1]{0}', space=sflag, size = 0x4, scoped, tag = 'scoped memory for _lambda_.1']
    #allocation7 [shape = 'u8[8192]{0}', space=vmem, size = 0x2000, scoped, tag = 'input window, operand 2, single buffered']
    #allocation8 [shape = 'u8[69632]{0}', space=vmem, size = 0x11000, scoped, tag = 'input window, operand 3, single buffered']
    #allocation9 [shape = 's32[1]{0}', space=sflag, size = 0x4, scoped, tag = 'scoped memory for _lambda_.1']
    #allocation10 [shape = 'u8[512]{0}', space=vmem, size = 0x400, scoped, tag = 'output window, operand 0, single buffered']
    %9 = vsyncpa [#allocation3], 0
    %10 = vsyncpa [#allocation6], 0
    %11 = vsyncpa [#allocation9], 0
    %12 = vsyncpa [#allocation4], 0
    // Predicated region
    $region2: #{_lambda_.1} parent=1 // pred_check
      _
    $region3: #{_lambda_.1} parent=1 // pred_check_branch
      %14 = sbr.rel (0) target = $region5
    $region4: #{_lambda_.1} parent=1 // pred_region
      %s16 = ssub.s32 256, 256
      %17 = vsyncadd [#allocation3], %s16
      %s18 = sshll.u32 [#allocation2], 4
      %s19 = int_to_ptr.vmem [resolvable:$true] %s18
      %24 = dma.hbm_to_vmem [thread:$0]  %s0, 256, %s19, [#allocation3], 128, 128, 8
    $region5: #{_lambda_.1} parent=1 // pred_fallthru
      _
    // Predicated region
    $region6: #{_lambda_.1} parent=1 // pred_check
      _
    $region7: #{_lambda_.1} parent=1 // pred_check_branch
      %26 = sbr.rel (0) target = $region9
    $region8: #{_lambda_.1} parent=1 // pred_region
      %s28 = ssub.s32 4608, 4608
      %29 = vsyncadd [#allocation6], %s28
      %s30 = sshll.u32 [#allocation5], 4
      %s31 = int_to_ptr.vmem [resolvable:$true] %s30
      %36 = dma.hbm_to_vmem [thread:$0]  %s1, 4608, %s31, [#allocation6], 128, 128, 8
    $region9: #{_lambda_.1} parent=1 // pred_fallthru
      _
    // Predicated region
    $region10: #{_lambda_.1} parent=1 // pred_check
      _
    $region11: #{_lambda_.1} parent=1 // pred_check_branch
      %38 = sbr.rel (0) target = $region13
    $region12: #{_lambda_.1} parent=1 // pred_region
      %s40 = ssub.s32 256, 256
      %41 = vsyncadd [#allocation6], %s40
      %s42 = sshll.u32 [#allocation7], 4
      %s43 = int_to_ptr.vmem [resolvable:$true] %s42
      %48 = dma.hbm_to_vmem [thread:$0]  %s2, 256, %s43, [#allocation6], 128, 128, 8
    $region13: #{_lambda_.1} parent=1 // pred_fallthru
      _
    // Predicated region
    $region14: #{_lambda_.1} parent=1 // pred_check
      _
    $region15: #{_lambda_.1} parent=1 // pred_check_branch
      %50 = sbr.rel (0) target = $region17
    $region16: #{_lambda_.1} parent=1 // pred_region
      %s52 = ssub.s32 2176, 2176
      %53 = vsyncadd [#allocation9], %s52
      %s54 = sshll.u32 [#allocation8], 4
      %s55 = int_to_ptr.vmem [resolvable:$true] %s54
      %60 = dma.hbm_to_vmem [thread:$0]  %s3, 2176, %s55, [#allocation9], 128, 128, 8
    $region17: #{_lambda_.1} parent=1 // pred_fallthru
      _
    // Predicated region
    $region18: #{_lambda_.1} parent=1 // pred_check
      _
    $region19: #{_lambda_.1} parent=1 // pred_check_branch
      %62 = sbr.rel (0) target = $region21
    $region20: #{_lambda_.1} parent=1 // pred_region
      %63 = dma.done [#allocation3], 256
    $region21: #{_lambda_.1} parent=1 // pred_fallthru
      _
    // Predicated region
    $region22: #{_lambda_.1} parent=1 // pred_check
      _
    $region23: #{_lambda_.1} parent=1 // pred_check_branch
      %65 = sbr.rel (0) target = $region25
    $region24: #{_lambda_.1} parent=1 // pred_region
      %66 = dma.done [#allocation6], 4608
    $region25: #{_lambda_.1} parent=1 // pred_fallthru
      _
    // Predicated region
    $region26: #{_lambda_.1} parent=1 // pred_check
      _
    $region27: #{_lambda_.1} parent=1 // pred_check_branch
      %68 = sbr.rel (0) target = $region29
    $region28: #{_lambda_.1} parent=1 // pred_region
      %69 = dma.done [#allocation6], 256
    $region29: #{_lambda_.1} parent=1 // pred_fallthru
      _
    // Predicated region
    $region30: #{_lambda_.1} parent=1 // pred_check
      _
    $region31: #{_lambda_.1} parent=1 // pred_check_branch
      %71 = sbr.rel (0) target = $region33
    $region32: #{_lambda_.1} parent=1 // pred_region
      %72 = dma.done [#allocation9], 2176
    $region33: #{_lambda_.1} parent=1 // pred_fallthru
      _
    %v73 = vld [vmem:[#allocation2] sm:$0xff]
    %v74 = vld [vmem:[#allocation2 + $0x8] sm:$0xff]
    %v75 = vld [vmem:[#allocation7] sm:$0xff]
    %v76 = vld [vmem:[#allocation7 + $0x8] sm:$0xff]
    %v77 = vld [vmem:[#allocation5] sm:$0xff]
    %v78 = vld [vmem:[#allocation5 + $0x8] sm:$0xff]
    %v79 = vld [vmem:[#allocation5 + $0x10] sm:$0xff]
    %v80 = vld [vmem:[#allocation5 + $0x18] sm:$0xff]
    %s81 = scalar_lea.vmem [#allocation5], 32
    %v82 = vld [vmem:[%s81] sm:$0xff]
    %v83 = vld [vmem:[%s81 + $0x8] sm:$0xff]
    %v84 = vld [vmem:[%s81 + $0x10] sm:$0xff]
    %v85 = vld [vmem:[%s81 + $0x18] sm:$0xff]
    %s86 = scalar_lea.vmem [#allocation5], 64
    %v87 = vld [vmem:[%s86] sm:$0xff]
    %v88 = vld [vmem:[%s86 + $0x8] sm:$0xff]
    %v89 = vld [vmem:[%s86 + $0x10] sm:$0xff]
    %v90 = vld [vmem:[%s86 + $0x18] sm:$0xff]
    %s91 = scalar_lea.vmem [#allocation5], 96
    %v92 = vld [vmem:[%s91] sm:$0xff]
    %v93 = vld [vmem:[%s91 + $0x8] sm:$0xff]
    %v94 = vld [vmem:[%s91 + $0x10] sm:$0xff]
    %v95 = vld [vmem:[%s91 + $0x18] sm:$0xff]
    %s96 = scalar_lea.vmem [#allocation5], 128
    %v97 = vld [vmem:[%s96] sm:$0xff]
    %v98 = vld [vmem:[%s96 + $0x8] sm:$0xff]
    %v99 = vld [vmem:[%s96 + $0x10] sm:$0xff]
    %v100 = vld [vmem:[%s96 + $0x18] sm:$0xff]
    %s101 = scalar_lea.vmem [#allocation5], 160
    %v102 = vld [vmem:[%s101] sm:$0xff]
    %v103 = vld [vmem:[%s101 + $0x8] sm:$0xff]
    %v104 = vld [vmem:[%s101 + $0x10] sm:$0xff]
    %v105 = vld [vmem:[%s101 + $0x18] sm:$0xff]
    %s106 = scalar_lea.vmem [#allocation5], 192
    %v107 = vld [vmem:[%s106] sm:$0xff]
    %v108 = vld [vmem:[%s106 + $0x8] sm:$0xff]
    %v109 = vld [vmem:[%s106 + $0x10] sm:$0xff]
    %v110 = vld [vmem:[%s106 + $0x18] sm:$0xff]
    %s111 = scalar_lea.vmem [#allocation5], 224
    %v112 = vld [vmem:[%s111] sm:$0xff]
    %v113 = vld [vmem:[%s111 + $0x8] sm:$0xff]
    %v114 = vld [vmem:[%s111 + $0x10] sm:$0xff]
    %v115 = vld [vmem:[%s111 + $0x18] sm:$0xff]
    %s116 = scalar_lea.vmem [#allocation5], 256
    %v117 = vld [vmem:[%s116] sm:$0xff]
    %v118 = vld [vmem:[%s116 + $0x8] sm:$0xff]
    %v119 = vld [vmem:[%s116 + $0x10] sm:$0xff]
    %v120 = vld [vmem:[%s116 + $0x18] sm:$0xff]
    %122 = vset.pattern.permute.xlu0 0
    %123 = vperm.xlu0 %122, %v73
    %v124 = vpop.permute.xlu0 %123
    %127 = vset.pattern.permute.xlu0 0
    %128 = vperm.xlu0 %127, %v74
    %v129 = vpop.permute.xlu0 %128
    %v131 = vlaneseq
    %v132 = vshrl.u32 %v131, 7
    %v133 = vsub.s32 0, %v132
    %v134 = vrot.slane %v75, %v133
    %v135 = vmul.f32 %v124, %v134
    %v136 = vmul.f32 %v129, %v134
    %v137 = vlaneseq
    %v138 = vshrl.u32 %v137, 7
    %v139 = vsub.s32 3, %v138
    %v140 = vrot.slane %v75, %v139
    %v141 = vadd.f32 %v135, %v140
    %v142 = vadd.f32 %v136, %v140
    %v143 = vlaneseq
    %v144 = vshrl.u32 %v143, 7
    %v145 = vsub.s32 1, %v144
    %v146 = vrot.slane %v75, %v145
    %v147 = vmul.f32 %v124, %v146
    %v148 = vmul.f32 %v129, %v146
    %v149 = vlaneseq
    %v150 = vshrl.u32 %v149, 7
    %v151 = vsub.s32 4, %v150
    %v152 = vrot.slane %v75, %v151
    %v153 = vadd.f32 %v147, %v152
    %v154 = vadd.f32 %v148, %v152
    %v155 = vlaneseq
    %v156 = vshrl.u32 %v155, 7
    %v157 = vsub.s32 2, %v156
    %v158 = vrot.slane %v75, %v157
    %v159 = vmul.f32 %v124, %v158
    %v160 = vmul.f32 %v129, %v158
    %v161 = vlaneseq
    %v162 = vshrl.u32 %v161, 7
    %v163 = vsub.s32 5, %v162
    %v164 = vrot.slane %v75, %v163
    %v165 = vadd.f32 %v159, %v164
    %v166 = vadd.f32 %v160, %v164
    %167 = vset.pattern.permute.xlu0 1
    %168 = vperm.xlu0 %167, %v73
    %v169 = vpop.permute.xlu0 %168
    %171 = vset.pattern.permute.xlu0 1
    %172 = vperm.xlu0 %171, %v74
    %v173 = vpop.permute.xlu0 %172
    %v175 = vmul.f32 %v169, %v134
    %v176 = vmul.f32 %v173, %v134
    %v177 = vadd.f32 %v175, %v140
    %v178 = vadd.f32 %v176, %v140
    %v179 = vmul.f32 %v169, %v146
    %v180 = vmul.f32 %v173, %v146
    %v181 = vadd.f32 %v179, %v152
    %v182 = vadd.f32 %v180, %v152
    %v183 = vmul.f32 %v169, %v158
    %v184 = vmul.f32 %v173, %v158
    %v185 = vadd.f32 %v183, %v164
    %v186 = vadd.f32 %v184, %v164
    %187 = vset.pattern.permute.xlu0 2
    %188 = vperm.xlu0 %187, %v73
    %v189 = vpop.permute.xlu0 %188
    %191 = vset.pattern.permute.xlu0 2
    %192 = vperm.xlu0 %191, %v74
    %v193 = vpop.permute.xlu0 %192
    %v195 = vmul.f32 %v189, %v134
    %v196 = vmul.f32 %v193, %v134
    %v197 = vadd.f32 %v195, %v140
    %v198 = vadd.f32 %v196, %v140
    %v199 = vmul.f32 %v189, %v146
    %v200 = vmul.f32 %v193, %v146
    %v201 = vadd.f32 %v199, %v152
    %v202 = vadd.f32 %v200, %v152
    %v203 = vmul.f32 %v189, %v158
    %v204 = vmul.f32 %v193, %v158
    %v205 = vadd.f32 %v203, %v164
    %v206 = vadd.f32 %v204, %v164
    %207 = vset.pattern.permute.xlu0 3
    %208 = vperm.xlu0 %207, %v73
    %v209 = vpop.permute.xlu0 %208
    %211 = vset.pattern.permute.xlu0 3
    %212 = vperm.xlu0 %211, %v74
    %v213 = vpop.permute.xlu0 %212
    %v215 = vmul.f32 %v209, %v134
    %v216 = vmul.f32 %v213, %v134
    %v217 = vadd.f32 %v215, %v140
    %v218 = vadd.f32 %v216, %v140
    %v219 = vmul.f32 %v209, %v146
    %v220 = vmul.f32 %v213, %v146
    %v221 = vadd.f32 %v219, %v152
    %v222 = vadd.f32 %v220, %v152
    %v223 = vmul.f32 %v209, %v158
    %v224 = vmul.f32 %v213, %v158
    %v225 = vadd.f32 %v223, %v164
    %v226 = vadd.f32 %v224, %v164
    %227 = vset.pattern.permute.xlu0 4
    %228 = vperm.xlu0 %227, %v73
    %v229 = vpop.permute.xlu0 %228
    %231 = vset.pattern.permute.xlu0 4
    %232 = vperm.xlu0 %231, %v74
    %v233 = vpop.permute.xlu0 %232
    %v235 = vmul.f32 %v229, %v134
    %v236 = vmul.f32 %v233, %v134
    %v237 = vadd.f32 %v235, %v140
    %v238 = vadd.f32 %v236, %v140
    %v239 = vmul.f32 %v229, %v146
    %v240 = vmul.f32 %v233, %v146
    %v241 = vadd.f32 %v239, %v152
    %v242 = vadd.f32 %v240, %v152
    %v243 = vmul.f32 %v229, %v158
    %v244 = vmul.f32 %v233, %v158
    %v245 = vadd.f32 %v243, %v164
    %v246 = vadd.f32 %v244, %v164
    %247 = vset.pattern.permute.xlu0 5
    %248 = vperm.xlu0 %247, %v73
    %v249 = vpop.permute.xlu0 %248
    %251 = vset.pattern.permute.xlu0 5
    %252 = vperm.xlu0 %251, %v74
    %v253 = vpop.permute.xlu0 %252
    %v255 = vmul.f32 %v249, %v134
    %v256 = vmul.f32 %v253, %v134
    %v257 = vadd.f32 %v255, %v140
    %v258 = vadd.f32 %v256, %v140
    %v259 = vmul.f32 %v249, %v146
    %v260 = vmul.f32 %v253, %v146
    %v261 = vadd.f32 %v259, %v152
    %v262 = vadd.f32 %v260, %v152
    %v263 = vmul.f32 %v249, %v158
    %v264 = vmul.f32 %v253, %v158
    %v265 = vadd.f32 %v263, %v164
    %v266 = vadd.f32 %v264, %v164
    %267 = vset.pattern.permute.xlu0 6
    %268 = vperm.xlu0 %267, %v73
    %v269 = vpop.permute.xlu0 %268
    %271 = vset.pattern.permute.xlu0 6
    %272 = vperm.xlu0 %271, %v74
    %v273 = vpop.permute.xlu0 %272
    %v275 = vmul.f32 %v269, %v134
    %v276 = vmul.f32 %v273, %v134
    %v277 = vadd.f32 %v275, %v140
    %v278 = vadd.f32 %v276, %v140
    %v279 = vmul.f32 %v269, %v146
    %v280 = vmul.f32 %v273, %v146
    %v281 = vadd.f32 %v279, %v152
    %v282 = vadd.f32 %v280, %v152
    %v283 = vmul.f32 %v269, %v158
    %v284 = vmul.f32 %v273, %v158
    %v285 = vadd.f32 %v283, %v164
    %v286 = vadd.f32 %v284, %v164
    %287 = vset.pattern.permute.xlu0 7
    %288 = vperm.xlu0 %287, %v73
    %v289 = vpop.permute.xlu0 %288
    %291 = vset.pattern.permute.xlu0 7
    %292 = vperm.xlu0 %291, %v74
    %v293 = vpop.permute.xlu0 %292
    %v295 = vmul.f32 %v289, %v134
    %v296 = vmul.f32 %v293, %v134
    %v297 = vadd.f32 %v295, %v140
    %v298 = vadd.f32 %v296, %v140
    %v299 = vmul.f32 %v289, %v146
    %v300 = vmul.f32 %v293, %v146
    %v301 = vadd.f32 %v299, %v152
    %v302 = vadd.f32 %v300, %v152
    %v303 = vmul.f32 %v289, %v158
    %v304 = vmul.f32 %v293, %v158
    %v305 = vadd.f32 %v303, %v164
    %v306 = vadd.f32 %v304, %v164
    %307 = vset.pattern.permute.xlu0 8
    %308 = vperm.xlu0 %307, %v73
    %v309 = vpop.permute.xlu0 %308
    %311 = vset.pattern.permute.xlu0 8
    %312 = vperm.xlu0 %311, %v74
    %v313 = vpop.permute.xlu0 %312
    %v315 = vmul.f32 %v309, %v134
    %v316 = vmul.f32 %v313, %v134
    %v317 = vadd.f32 %v315, %v140
    %v318 = vadd.f32 %v316, %v140
    %v319 = vmul.f32 %v309, %v146
    %v320 = vmul.f32 %v313, %v146
    %v321 = vadd.f32 %v319, %v152
    %v322 = vadd.f32 %v320, %v152
    %v323 = vmul.f32 %v309, %v158
    %v324 = vmul.f32 %v313, %v158
    %v325 = vadd.f32 %v323, %v164
    %v326 = vadd.f32 %v324, %v164
    %327 = vset.pattern.permute.xlu0 9
    %328 = vperm.xlu0 %327, %v73
    %v329 = vpop.permute.xlu0 %328
    %331 = vset.pattern.permute.xlu0 9
    %332 = vperm.xlu0 %331, %v74
    %v333 = vpop.permute.xlu0 %332
    %v335 = vmul.f32 %v329, %v134
    %v336 = vmul.f32 %v333, %v134
    %v337 = vadd.f32 %v335, %v140
    %v338 = vadd.f32 %v336, %v140
    %v339 = vmul.f32 %v329, %v146
    %v340 = vmul.f32 %v333, %v146
    %v341 = vadd.f32 %v339, %v152
    %v342 = vadd.f32 %v340, %v152
    %v343 = vmul.f32 %v329, %v158
    %v344 = vmul.f32 %v333, %v158
    %v345 = vadd.f32 %v343, %v164
    %v346 = vadd.f32 %v344, %v164
    %347 = vset.pattern.permute.xlu0 10
    %348 = vperm.xlu0 %347, %v73
    %v349 = vpop.permute.xlu0 %348
    %351 = vset.pattern.permute.xlu0 10
    %352 = vperm.xlu0 %351, %v74
    %v353 = vpop.permute.xlu0 %352
    %v355 = vmul.f32 %v349, %v134
    %v356 = vmul.f32 %v353, %v134
    %v357 = vadd.f32 %v355, %v140
    %v358 = vadd.f32 %v356, %v140
    %v359 = vmul.f32 %v349, %v146
    %v360 = vmul.f32 %v353, %v146
    %v361 = vadd.f32 %v359, %v152
    %v362 = vadd.f32 %v360, %v152
    %v363 = vmul.f32 %v349, %v158
    %v364 = vmul.f32 %v353, %v158
    %v365 = vadd.f32 %v363, %v164
    %v366 = vadd.f32 %v364, %v164
    %367 = vset.pattern.permute.xlu0 11
    %368 = vperm.xlu0 %367, %v73
    %v369 = vpop.permute.xlu0 %368
    %371 = vset.pattern.permute.xlu0 11
    %372 = vperm.xlu0 %371, %v74
    %v373 = vpop.permute.xlu0 %372
    %v375 = vmul.f32 %v369, %v134
    %v376 = vmul.f32 %v373, %v134
    %v377 = vadd.f32 %v375, %v140
    %v378 = vadd.f32 %v376, %v140
    %v379 = vmul.f32 %v369, %v146
    %v380 = vmul.f32 %v373, %v146
    %v381 = vadd.f32 %v379, %v152
    %v382 = vadd.f32 %v380, %v152
    %v383 = vmul.f32 %v369, %v158
    %v384 = vmul.f32 %v373, %v158
    %v385 = vadd.f32 %v383, %v164
    %v386 = vadd.f32 %v384, %v164
    %387 = vset.pattern.permute.xlu0 12
    %388 = vperm.xlu0 %387, %v73
    %v389 = vpop.permute.xlu0 %388
    %391 = vset.pattern.permute.xlu0 12
    %392 = vperm.xlu0 %391, %v74
    %v393 = vpop.permute.xlu0 %392
    %v395 = vmul.f32 %v389, %v134
    %v396 = vmul.f32 %v393, %v134
    %v397 = vadd.f32 %v395, %v140
    %v398 = vadd.f32 %v396, %v140
    %v399 = vmul.f32 %v389, %v146
    %v400 = vmul.f32 %v393, %v146
    %v401 = vadd.f32 %v399, %v152
    %v402 = vadd.f32 %v400, %v152
    %v403 = vmul.f32 %v389, %v158
    %v404 = vmul.f32 %v393, %v158
    %v405 = vadd.f32 %v403, %v164
    %v406 = vadd.f32 %v404, %v164
    %407 = vset.pattern.permute.xlu0 13
    %408 = vperm.xlu0 %407, %v73
    %v409 = vpop.permute.xlu0 %408
    %411 = vset.pattern.permute.xlu0 13
    %412 = vperm.xlu0 %411, %v74
    %v413 = vpop.permute.xlu0 %412
    %v415 = vmul.f32 %v409, %v134
    %v416 = vmul.f32 %v413, %v134
    %v417 = vadd.f32 %v415, %v140
    %v418 = vadd.f32 %v416, %v140
    %v419 = vmul.f32 %v409, %v146
    %v420 = vmul.f32 %v413, %v146
    %v421 = vadd.f32 %v419, %v152
    %v422 = vadd.f32 %v420, %v152
    %v423 = vmul.f32 %v409, %v158
    %v424 = vmul.f32 %v413, %v158
    %v425 = vadd.f32 %v423, %v164
    %v426 = vadd.f32 %v424, %v164
    %427 = vset.pattern.permute.xlu0 14
    %428 = vperm.xlu0 %427, %v73
    %v429 = vpop.permute.xlu0 %428
    %431 = vset.pattern.permute.xlu0 14
    %432 = vperm.xlu0 %431, %v74
    %v433 = vpop.permute.xlu0 %432
    %v435 = vmul.f32 %v429, %v134
    %v436 = vmul.f32 %v433, %v134
    %v437 = vadd.f32 %v435, %v140
    %v438 = vadd.f32 %v436, %v140
    %v439 = vmul.f32 %v429, %v146
    %v440 = vmul.f32 %v433, %v146
    %v441 = vadd.f32 %v439, %v152
    %v442 = vadd.f32 %v440, %v152
    %v443 = vmul.f32 %v429, %v158
    %v444 = vmul.f32 %v433, %v158
    %v445 = vadd.f32 %v443, %v164
    %v446 = vadd.f32 %v444, %v164
    %447 = vset.pattern.permute.xlu0 15
    %448 = vperm.xlu0 %447, %v73
    %v449 = vpop.permute.xlu0 %448
    %451 = vset.pattern.permute.xlu0 15
    %452 = vperm.xlu0 %451, %v74
    %v453 = vpop.permute.xlu0 %452
    %v455 = vmul.f32 %v449, %v134
    %v456 = vmul.f32 %v453, %v134
    %v457 = vadd.f32 %v455, %v140
    %v458 = vadd.f32 %v456, %v140
    %v459 = vmul.f32 %v449, %v146
    %v460 = vmul.f32 %v453, %v146
    %v461 = vadd.f32 %v459, %v152
    %v462 = vadd.f32 %v460, %v152
    %v463 = vmul.f32 %v449, %v158
    %v464 = vmul.f32 %v453, %v158
    %v465 = vadd.f32 %v463, %v164
    %v466 = vadd.f32 %v464, %v164
    %v467 = vlaneseq
    %v468 = vshrl.u32 %v467, 7
    %v469 = vsub.s32 6, %v468
    %v470 = vrot.slane %v75, %v469
    %v471 = vadd.f32 %v141, %v470
    %v472 = vadd.f32 %v142, %v470
    %v473 = vmul.f32 %v471, 0.5
    %v474 = vmul.f32 %v472, 0.5
    %v475 = vtanh.pop %v473
    %v476 = vtanh.pop %v474
    %v477 = vmul.f32 %v475, 0.5
    %v478 = vmul.f32 %v476, 0.5
    %v479 = vadd.f32 %v477, 0.5
    %v480 = vadd.f32 %v478, 0.5
    %v481 = vlaneseq
    %v482 = vshrl.u32 %v481, 7
    %v483 = vsub.s32 7, %v482
    %v484 = vrot.slane %v75, %v483
    %v485 = vadd.f32 %v153, %v484
    %v486 = vadd.f32 %v154, %v484
    %v487 = vmul.f32 %v485, 0.5
    %v488 = vmul.f32 %v486, 0.5
    %v489 = vtanh.pop %v487
    %v490 = vtanh.pop %v488
    %v491 = vmul.f32 %v489, 0.5
    %v492 = vmul.f32 %v490, 0.5
    %v493 = vadd.f32 %v491, 0.5
    %v494 = vadd.f32 %v492, 0.5
    %v495 = vlaneseq
    %v496 = vshrl.u32 %v495, 7
    %v497 = vsub.s32 0, %v496
    %v498 = vrot.slane %v76, %v497
    %v499 = vmul.f32 %v479, %v498
    %v500 = vmul.f32 %v480, %v498
    %v501 = vadd.f32 %v165, %v499
    %v502 = vadd.f32 %v166, %v500
    %v503 = vtanh.pop %v501
    %v504 = vtanh.pop %v502
    %v505 = vsub.f32 1.0, %v493
    %v506 = vsub.f32 1.0, %v494
    %v507 = vmul.f32 %v505, %v503
    %v508 = vmul.f32 %v506, %v504
    %vm509 = vcmask 261120
    %v511 = vsel %vm509, %v507, 0
    %v514 = vsel %vm509, %v508, 0
    %516 = vmatprep.subr.mxu0 0.0
    %517 = vmatpush1.msra.mxu0 %v77
    %518 = vmatprep.subr.mxu0 0.0
    %519 = vmatpush1.msra.mxu0 %v78
    %520 = vmatprep.subr.mxu0 0.0
    %521 = vmatpush1.msra.mxu0 %v79
    %522 = vmatprep.subr.mxu0 0.0
    %523 = vmatpush1.msra.mxu0 %v80
    %524 = vmatprep.subr.mxu0 0.0
    %525 = vmatpush1.msra.mxu0 0.0
    %526 = vmatprep.subr.mxu0 0.0
    %527 = vmatpush1.msra.mxu0 0.0
    %528 = vmatprep.subr.mxu0 0.0
    %529 = vmatpush1.msra.mxu0 0.0
    %530 = vmatprep.subr.mxu0 0.0
    %531 = vmatpush1.msra.mxu0 0.0
    %532 = vmatprep.subr.mxu0 0.0
    %533 = vmatpush1.msra.mxu0 0.0
    %534 = vmatprep.subr.mxu0 0.0
    %535 = vmatpush1.msra.mxu0 0.0
    %536 = vmatprep.subr.mxu0 0.0
    %537 = vmatpush1.msra.mxu0 0.0
    %538 = vmatprep.subr.mxu0 0.0
    %539 = vmatpush1.msra.mxu0 0.0
    %540 = vmatprep.subr.mxu0 0.0
    %541 = vmatpush1.msra.mxu0 0.0
    %542 = vmatprep.subr.mxu0 0.0
    %543 = vmatpush1.msra.mxu0 0.0
    %544 = vmatprep.subr.mxu0 0.0
    %545 = vmatpush1.msra.mxu0 0.0
    %546 = vmatprep.subr.mxu0 0.0
    %547 = vmatpush1.msra.mxu0 0.0
    %548 = vmatprep.subr.mxu0 0.0
    %549 = vmatpush1.msra.mxu0 0.0
    %550 = vmatprep.subr.mxu0 0.0
    %551 = vmatpush1.msra.mxu0 0.0
    %552 = vmatprep.subr.mxu0 0.0
    %553 = vmatpush1.msra.mxu0 0.0
    %554 = vmatprep.subr.mxu0 0.0
    %555 = vmatpush1.msra.mxu0 0.0
    %556 = vmatprep.subr.mxu0 0.0
    %557 = vmatpush1.msra.mxu0 0.0
    %558 = vmatprep.subr.mxu0 0.0
    %559 = vmatpush1.msra.mxu0 0.0
    %560 = vmatprep.subr.mxu0 0.0
    %561 = vmatpush1.msra.mxu0 0.0
    %562 = vmatprep.subr.mxu0 0.0
    %563 = vmatpush1.msra.mxu0 0.0
    %564 = vmatprep.subr.mxu0 0.0
    %565 = vmatpush1.msra.mxu0 0.0
    %566 = vmatprep.subr.mxu0 0.0
    %567 = vmatpush1.msra.mxu0 0.0
    %568 = vmatprep.subr.mxu0 0.0
    %569 = vmatpush1.msra.mxu0 0.0
    %570 = vmatprep.subr.mxu0 0.0
    %571 = vmatpush1.msra.mxu0 0.0
    %572 = vmatprep.subr.mxu0 0.0
    %573 = vmatpush1.msra.mxu0 0.0
    %574 = vmatprep.subr.mxu0 0.0
    %575 = vmatpush1.msra.mxu0 0.0
    %576 = vmatprep.subr.mxu0 0.0
    %577 = vmatpush1.msra.mxu0 0.0
    %578 = vmatprep.subr.mxu0 0.0
    %579 = vmatpush1.msra.mxu0 0.0
    %580 = vmatprep.mubr.f32.mxu0 0.0
    %581 = vmatmul.mubr.f32.gmra.mrb[0].mxu0 %v511
    %v582 = vpop.f32.mrb[0].mxu0
    %v583 = vadd.f32 %v470, %v582
    %v584 = vpop.f32.mrb[0].mxu0
    %585 = vmatprep.mubr.f32.mxu0 0.0
    %586 = vmatmul.mubr.f32.gmra.mrb[0].mxu0 %v514
    %v587 = vpop.f32.mrb[0].mxu0
    %v588 = vadd.f32 %v470, %v587
    %v589 = vpop.f32.mrb[0].mxu0
    %590 = vdwg.mxu0
    %591 = vmatprep.subr.mxu0 0.0
    %592 = vmatpush1.msra.mxu0 %v82
    %593 = vmatprep.subr.mxu0 0.0
    %594 = vmatpush1.msra.mxu0 %v83
    %595 = vmatprep.subr.mxu0 0.0
    %596 = vmatpush1.msra.mxu0 %v84
    %597 = vmatprep.subr.mxu0 0.0
    %598 = vmatpush1.msra.mxu0 %v85
    %599 = vmatprep.subr.mxu0 0.0
    %600 = vmatpush1.msra.mxu0 0.0
    %601 = vmatprep.subr.mxu0 0.0
    %602 = vmatpush1.msra.mxu0 0.0
    %603 = vmatprep.subr.mxu0 0.0
    %604 = vmatpush1.msra.mxu0 0.0
    %605 = vmatprep.subr.mxu0 0.0
    %606 = vmatpush1.msra.mxu0 0.0
    %607 = vmatprep.subr.mxu0 0.0
    %608 = vmatpush1.msra.mxu0 0.0
    %609 = vmatprep.subr.mxu0 0.0
    %610 = vmatpush1.msra.mxu0 0.0
    %611 = vmatprep.subr.mxu0 0.0
    %612 = vmatpush1.msra.mxu0 0.0
    %613 = vmatprep.subr.mxu0 0.0
    %614 = vmatpush1.msra.mxu0 0.0
    %615 = vmatprep.subr.mxu0 0.0
    %616 = vmatpush1.msra.mxu0 0.0
    %617 = vmatprep.subr.mxu0 0.0
    %618 = vmatpush1.msra.mxu0 0.0
    %619 = vmatprep.subr.mxu0 0.0
    %620 = vmatpush1.msra.mxu0 0.0
    %621 = vmatprep.subr.mxu0 0.0
    %622 = vmatpush1.msra.mxu0 0.0
    %623 = vmatprep.subr.mxu0 0.0
    %624 = vmatpush1.msra.mxu0 0.0
    %625 = vmatprep.subr.mxu0 0.0
    %626 = vmatpush1.msra.mxu0 0.0
    %627 = vmatprep.subr.mxu0 0.0
    %628 = vmatpush1.msra.mxu0 0.0
    %629 = vmatprep.subr.mxu0 0.0
    %630 = vmatpush1.msra.mxu0 0.0
    %631 = vmatprep.subr.mxu0 0.0
    %632 = vmatpush1.msra.mxu0 0.0
    %633 = vmatprep.subr.mxu0 0.0
    %634 = vmatpush1.msra.mxu0 0.0
    %635 = vmatprep.subr.mxu0 0.0
    %636 = vmatpush1.msra.mxu0 0.0
    %637 = vmatprep.subr.mxu0 0.0
    %638 = vmatpush1.msra.mxu0 0.0
    %639 = vmatprep.subr.mxu0 0.0
    %640 = vmatpush1.msra.mxu0 0.0
    %641 = vmatprep.subr.mxu0 0.0
    %642 = vmatpush1.msra.mxu0 0.0
    %643 = vmatprep.subr.mxu0 0.0
    %644 = vmatpush1.msra.mxu0 0.0
    %645 = vmatprep.subr.mxu0 0.0
    %646 = vmatpush1.msra.mxu0 0.0
    %647 = vmatprep.subr.mxu0 0.0
    %648 = vmatpush1.msra.mxu0 0.0
    %649 = vmatprep.subr.mxu0 0.0
    %650 = vmatpush1.msra.mxu0 0.0
    %651 = vmatprep.subr.mxu0 0.0
    %652 = vmatpush1.msra.mxu0 0.0
    %653 = vmatprep.subr.mxu0 0.0
    %654 = vmatpush1.msra.mxu0 0.0
    %655 = vmatprep.mubr.f32.mxu0 0.0
    %656 = vmatmul.mubr.f32.gmra.mrb[0].mxu0 %v511
    %v657 = vpop.f32.mrb[0].mxu0
    %v658 = vadd.f32 %v484, %v657
    %v659 = vpop.f32.mrb[0].mxu0
    %660 = vmatprep.mubr.f32.mxu0 0.0
    %661 = vmatmul.mubr.f32.gmra.mrb[0].mxu0 %v514
    %v662 = vpop.f32.mrb[0].mxu0
    %v663 = vadd.f32 %v484, %v662
    %v664 = vpop.f32.mrb[0].mxu0
    %665 = vdwg.mxu0
    %666 = vmatprep.subr.mxu0 0.0
    %667 = vmatpush1.msra.mxu0 %v87
    %668 = vmatprep.subr.mxu0 0.0
    %669 = vmatpush1.msra.mxu0 %v88
    %670 = vmatprep.subr.mxu0 0.0
    %671 = vmatpush1.msra.mxu0 %v89
    %672 = vmatprep.subr.mxu0 0.0
    %673 = vmatpush1.msra.mxu0 %v90
    %674 = vmatprep.subr.mxu0 0.0
    %675 = vmatpush1.msra.mxu0 0.0
    %676 = vmatprep.subr.mxu0 0.0
    %677 = vmatpush1.msra.mxu0 0.0
    %678 = vmatprep.subr.mxu0 0.0
    %679 = vmatpush1.msra.mxu0 0.0
    %680 = vmatprep.subr.mxu0 0.0
    %681 = vmatpush1.msra.mxu0 0.0
    %682 = vmatprep.subr.mxu0 0.0
    %683 = vmatpush1.msra.mxu0 0.0
    %684 = vmatprep.subr.mxu0 0.0
    %685 = vmatpush1.msra.mxu0 0.0
    %686 = vmatprep.subr.mxu0 0.0
    %687 = vmatpush1.msra.mxu0 0.0
    %688 = vmatprep.subr.mxu0 0.0
    %689 = vmatpush1.msra.mxu0 0.0
    %690 = vmatprep.subr.mxu0 0.0
    %691 = vmatpush1.msra.mxu0 0.0
    %692 = vmatprep.subr.mxu0 0.0
    %693 = vmatpush1.msra.mxu0 0.0
    %694 = vmatprep.subr.mxu0 0.0
    %695 = vmatpush1.msra.mxu0 0.0
    %696 = vmatprep.subr.mxu0 0.0
    %697 = vmatpush1.msra.mxu0 0.0
    %698 = vmatprep.subr.mxu0 0.0
    %699 = vmatpush1.msra.mxu0 0.0
    %700 = vmatprep.subr.mxu0 0.0
    %701 = vmatpush1.msra.mxu0 0.0
    %702 = vmatprep.subr.mxu0 0.0
    %703 = vmatpush1.msra.mxu0 0.0
    %704 = vmatprep.subr.mxu0 0.0
    %705 = vmatpush1.msra.mxu0 0.0
    %706 = vmatprep.subr.mxu0 0.0
    %707 = vmatpush1.msra.mxu0 0.0
    %708 = vmatprep.subr.mxu0 0.0
    %709 = vmatpush1.msra.mxu0 0.0
    %710 = vmatprep.subr.mxu0 0.0
    %711 = vmatpush1.msra.mxu0 0.0
    %712 = vmatprep.subr.mxu0 0.0
    %713 = vmatpush1.msra.mxu0 0.0
    %714 = vmatprep.subr.mxu0 0.0
    %715 = vmatpush1.msra.mxu0 0.0
    %716 = vmatprep.subr.mxu0 0.0
    %717 = vmatpush1.msra.mxu0 0.0
    %718 = vmatprep.subr.mxu0 0.0
    %719 = vmatpush1.msra.mxu0 0.0
    %720 = vmatprep.subr.mxu0 0.0
    %721 = vmatpush1.msra.mxu0 0.0
    %722 = vmatprep.subr.mxu0 0.0
    %723 = vmatpush1.msra.mxu0 0.0
    %724 = vmatprep.subr.mxu0 0.0
    %725 = vmatpush1.msra.mxu0 0.0
    %726 = vmatprep.subr.mxu0 0.0
    %727 = vmatpush1.msra.mxu0 0.0
    %728 = vmatprep.subr.mxu0 0.0
    %729 = vmatpush1.msra.mxu0 0.0
    %730 = vmatprep.mubr.f32.mxu0 0.0
    %731 = vmatmul.mubr.f32.gmra.mrb[0].mxu0 %v511
    %v732 = vpop.f32.mrb[0].mxu0
    %v733 = vadd.f32 %v498, %v732
    %v734 = vpop.f32.mrb[0].mxu0
    %735 = vmatprep.mubr.f32.mxu0 0.0
    %736 = vmatmul.mubr.f32.gmra.mrb[0].mxu0 %v514
    %v737 = vpop.f32.mrb[0].mxu0
    %v738 = vadd.f32 %v498, %v737
    %v739 = vpop.f32.mrb[0].mxu0
    %740 = vdwg.mxu0
    %v741 = vadd.f32 %v177, %v583
    %v742 = vadd.f32 %v178, %v588
    %v743 = vmul.f32 %v741, 0.5
    %v744 = vmul.f32 %v742, 0.5
    %v745 = vtanh.pop %v743
    %v746 = vtanh.pop %v744
    %v747 = vmul.f32 %v745, 0.5
    %v748 = vmul.f32 %v746, 0.5
    %v749 = vadd.f32 %v747, 0.5
    %v750 = vadd.f32 %v748, 0.5
    %v751 = vadd.f32 %v181, %v658
    %v752 = vadd.f32 %v182, %v663
    %v753 = vmul.f32 %v751, 0.5
    %v754 = vmul.f32 %v752, 0.5
    %v755 = vtanh.pop %v753
    %v756 = vtanh.pop %v754
    %v757 = vmul.f32 %v755, 0.5
    %v758 = vmul.f32 %v756, 0.5
    %v759 = vadd.f32 %v757, 0.5
    %v760 = vadd.f32 %v758, 0.5
    %v761 = vmul.f32 %v749, %v733
    %v762 = vmul.f32 %v750, %v738
    %v763 = vadd.f32 %v185, %v761
    %v764 = vadd.f32 %v186, %v762
    %v765 = vtanh.pop %v763
    %v766 = vtanh.pop %v764
    %v767 = vsub.f32 %v507, %v765
    %v768 = vsub.f32 %v508, %v766
    %v769 = vmul.f32 %v759, %v767
    %v770 = vmul.f32 %v760, %v768
    %v771 = vadd.f32 %v765, %v769
    %v772 = vadd.f32 %v766, %v770
    %v774 = vsel %vm509, %v771, 0
    %v777 = vsel %vm509, %v772, 0
    %779 = vmatprep.subr.mxu0 0.0
    %780 = vmatpush1.msra.mxu0 %v77
    %781 = vmatprep.subr.mxu0 0.0
    %782 = vmatpush1.msra.mxu0 %v78
    %783 = vmatprep.subr.mxu0 0.0
    %784 = vmatpush1.msra.mxu0 %v79
    %785 = vmatprep.subr.mxu0 0.0
    %786 = vmatpush1.msra.mxu0 %v80
    %787 = vmatprep.subr.mxu0 0.0
    %788 = vmatpush1.msra.mxu0 0.0
    %789 = vmatprep.subr.mxu0 0.0
    %790 = vmatpush1.msra.mxu0 0.0
    %791 = vmatprep.subr.mxu0 0.0
    %792 = vmatpush1.msra.mxu0 0.0
    %793 = vmatprep.subr.mxu0 0.0
    %794 = vmatpush1.msra.mxu0 0.0
    %795 = vmatprep.subr.mxu0 0.0
    %796 = vmatpush1.msra.mxu0 0.0
    %797 = vmatprep.subr.mxu0 0.0
    %798 = vmatpush1.msra.mxu0 0.0
    %799 = vmatprep.subr.mxu0 0.0
    %800 = vmatpush1.msra.mxu0 0.0
    %801 = vmatprep.subr.mxu0 0.0
    %802 = vmatpush1.msra.mxu0 0.0
    %803 = vmatprep.subr.mxu0 0.0
    %804 = vmatpush1.msra.mxu0 0.0
    %805 = vmatprep.subr.mxu0 0.0
    %806 = vmatpush1.msra.mxu0 0.0
    %807 = vmatprep.subr.mxu0 0.0
    %808 = vmatpush1.msra.mxu0 0.0
    %809 = vmatprep.subr.mxu0 0.0
    %810 = vmatpush1.msra.mxu0 0.0
    %811 = vmatprep.subr.mxu0 0.0
    %812 = vmatpush1.msra.mxu0 0.0
    %813 = vmatprep.subr.mxu0 0.0
    %814 = vmatpush1.msra.mxu0 0.0
    %815 = vmatprep.subr.mxu0 0.0
    %816 = vmatpush1.msra.mxu0 0.0
    %817 = vmatprep.subr.mxu0 0.0
    %818 = vmatpush1.msra.mxu0 0.0
    %819 = vmatprep.subr.mxu0 0.0
    %820 = vmatpush1.msra.mxu0 0.0
    %821 = vmatprep.subr.mxu0 0.0
    %822 = vmatpush1.msra.mxu0 0.0
    %823 = vmatprep.subr.mxu0 0.0
    %824 = vmatpush1.msra.mxu0 0.0
    %825 = vmatprep.subr.mxu0 0.0
    %826 = vmatpush1.msra.mxu0 0.0
    %827 = vmatprep.subr.mxu0 0.0
    %828 = vmatpush1.msra.mxu0 0.0
    %829 = vmatprep.subr.mxu0 0.0
    %830 = vmatpush1.msra.mxu0 0.0
    %831 = vmatprep.subr.mxu0 0.0
    %832 = vmatpush1.msra.mxu0 0.0
    %833 = vmatprep.subr.mxu0 0.0
    %834 = vmatpush1.msra.mxu0 0.0
    %835 = vmatprep.subr.mxu0 0.0
    %836 = vmatpush1.msra.mxu0 0.0
    %837 = vmatprep.subr.mxu0 0.0
    %838 = vmatpush1.msra.mxu0 0.0
    %839 = vmatprep.subr.mxu0 0.0
    %840 = vmatpush1.msra.mxu0 0.0
    %841 = vmatprep.subr.mxu0 0.0
    %842 = vmatpush1.msra.mxu0 0.0
    %843 = vmatprep.mubr.f32.mxu0 0.0
    %844 = vmatmul.mubr.f32.gmra.mrb[0].mxu0 %v774
    %v845 = vpop.f32.mrb[0].mxu0
    %v846 = vadd.f32 %v470, %v845
    %v847 = vpop.f32.mrb[0].mxu0
    %848 = vmatprep.mubr.f32.mxu0 0.0
    %849 = vmatmul.mubr.f32.gmra.mrb[0].mxu0 %v777
    %v850 = vpop.f32.mrb[0].mxu0
    %v851 = vadd.f32 %v470, %v850
    %v852 = vpop.f32.mrb[0].mxu0
    %853 = vdwg.mxu0
    %854 = vmatprep.subr.mxu0 0.0
    %855 = vmatpush1.msra.mxu0 %v82
    %856 = vmatprep.subr.mxu0 0.0
    %857 = vmatpush1.msra.mxu0 %v83
    %858 = vmatprep.subr.mxu0 0.0
    %859 = vmatpush1.msra.mxu0 %v84
    %860 = vmatprep.subr.mxu0 0.0
    %861 = vmatpush1.msra.mxu0 %v85
    %862 = vmatprep.subr.mxu0 0.0
    %863 = vmatpush1.msra.mxu0 0.0
    %864 = vmatprep.subr.mxu0 0.0
    %865 = vmatpush1.msra.mxu0 0.0
    %866 = vmatprep.subr.mxu0 0.0
    %867 = vmatpush1.msra.mxu0 0.0
    %868 = vmatprep.subr.mxu0 0.0
    %869 = vmatpush1.msra.mxu0 0.0
    %870 = vmatprep.subr.mxu0 0.0
    %871 = vmatpush1.msra.mxu0 0.0
    %872 = vmatprep.subr.mxu0 0.0
    %873 = vmatpush1.msra.mxu0 0.0
    %874 = vmatprep.subr.mxu0 0.0
    %875 = vmatpush1.msra.mxu0 0.0
    %876 = vmatprep.subr.mxu0 0.0
    %877 = vmatpush1.msra.mxu0 0.0
    %878 = vmatprep.subr.mxu0 0.0
    %879 = vmatpush1.msra.mxu0 0.0
    %880 = vmatprep.subr.mxu0 0.0
    %881 = vmatpush1.msra.mxu0 0.0
    %882 = vmatprep.subr.mxu0 0.0
    %883 = vmatpush1.msra.mxu0 0.0
    %884 = vmatprep.subr.mxu0 0.0
    %885 = vmatpush1.msra.mxu0 0.0
    %886 = vmatprep.subr.mxu0 0.0
    %887 = vmatpush1.msra.mxu0 0.0
    %888 = vmatprep.subr.mxu0 0.0
    %889 = vmatpush1.msra.mxu0 0.0
    %890 = vmatprep.subr.mxu0 0.0
    %891 = vmatpush1.msra.mxu0 0.0
    %892 = vmatprep.subr.mxu0 0.0
    %893 = vmatpush1.msra.mxu0 0.0
    %894 = vmatprep.subr.mxu0 0.0
    %895 = vmatpush1.msra.mxu0 0.0
    %896 = vmatprep.subr.mxu0 0.0
    %897 = vmatpush1.msra.mxu0 0.0
    %898 = vmatprep.subr.mxu0 0.0
    %899 = vmatpush1.msra.mxu0 0.0
    %900 = vmatprep.subr.mxu0 0.0
    %901 = vmatpush1.msra.mxu0 0.0
    %902 = vmatprep.subr.mxu0 0.0
    %903 = vmatpush1.msra.mxu0 0.0
    %904 = vmatprep.subr.mxu0 0.0
    %905 = vmatpush1.msra.mxu0 0.0
    %906 = vmatprep.subr.mxu0 0.0
    %907 = vmatpush1.msra.mxu0 0.0
    %908 = vmatprep.subr.mxu0 0.0
    %909 = vmatpush1.msra.mxu0 0.0
    %910 = vmatprep.subr.mxu0 0.0
    %911 = vmatpush1.msra.mxu0 0.0
    %912 = vmatprep.subr.mxu0 0.0
    %913 = vmatpush1.msra.mxu0 0.0
    %914 = vmatprep.subr.mxu0 0.0
    %915 = vmatpush1.msra.mxu0 0.0
    %916 = vmatprep.subr.mxu0 0.0
    %917 = vmatpush1.msra.mxu0 0.0
    %918 = vmatprep.mubr.f32.mxu0 0.0
    %919 = vmatmul.mubr.f32.gmra.mrb[0].mxu0 %v774
    %v920 = vpop.f32.mrb[0].mxu0
    %v921 = vadd.f32 %v484, %v920
    %v922 = vpop.f32.mrb[0].mxu0
    %923 = vmatprep.mubr.f32.mxu0 0.0
    %924 = vmatmul.mubr.f32.gmra.mrb[0].mxu0 %v777
    %v925 = vpop.f32.mrb[0].mxu0
    %v926 = vadd.f32 %v484, %v925
    %v927 = vpop.f32.mrb[0].mxu0
    %928 = vdwg.mxu0
    %929 = vmatprep.subr.mxu0 0.0
    %930 = vmatpush1.msra.mxu0 %v87
    %931 = vmatprep.subr.mxu0 0.0
    %932 = vmatpush1.msra.mxu0 %v88
    %933 = vmatprep.subr.mxu0 0.0
    %934 = vmatpush1.msra.mxu0 %v89
    %935 = vmatprep.subr.mxu0 0.0
    %936 = vmatpush1.msra.mxu0 %v90
    %937 = vmatprep.subr.mxu0 0.0
    %938 = vmatpush1.msra.mxu0 0.0
    %939 = vmatprep.subr.mxu0 0.0
    %940 = vmatpush1.msra.mxu0 0.0
    %941 = vmatprep.subr.mxu0 0.0
    %942 = vmatpush1.msra.mxu0 0.0
    %943 = vmatprep.subr.mxu0 0.0
    %944 = vmatpush1.msra.mxu0 0.0
    %945 = vmatprep.subr.mxu0 0.0
    %946 = vmatpush1.msra.mxu0 0.0
    %947 = vmatprep.subr.mxu0 0.0
    %948 = vmatpush1.msra.mxu0 0.0
    %949 = vmatprep.subr.mxu0 0.0
    %950 = vmatpush1.msra.mxu0 0.0
    %951 = vmatprep.subr.mxu0 0.0
    %952 = vmatpush1.msra.mxu0 0.0
    %953 = vmatprep.subr.mxu0 0.0
    %954 = vmatpush1.msra.mxu0 0.0
    %955 = vmatprep.subr.mxu0 0.0
    %956 = vmatpush1.msra.mxu0 0.0
    %957 = vmatprep.subr.mxu0 0.0
    %958 = vmatpush1.msra.mxu0 0.0
    %959 = vmatprep.subr.mxu0 0.0
    %960 = vmatpush1.msra.mxu0 0.0
    %961 = vmatprep.subr.mxu0 0.0
    %962 = vmatpush1.msra.mxu0 0.0
    %963 = vmatprep.subr.mxu0 0.0
    %964 = vmatpush1.msra.mxu0 0.0
    %965 = vmatprep.subr.mxu0 0.0
    %966 = vmatpush1.msra.mxu0 0.0
    %967 = vmatprep.subr.mxu0 0.0
    %968 = vmatpush1.msra.mxu0 0.0
    %969 = vmatprep.subr.mxu0 0.0
    %970 = vmatpush1.msra.mxu0 0.0
    %971 = vmatprep.subr.mxu0 0.0
    %972 = vmatpush1.msra.mxu0 0.0
    %973 = vmatprep.subr.mxu0 0.0
    %974 = vmatpush1.msra.mxu0 0.0
    %975 = vmatprep.subr.mxu0 0.0
    %976 = vmatpush1.msra.mxu0 0.0
    %977 = vmatprep.subr.mxu0 0.0
    %978 = vmatpush1.msra.mxu0 0.0
    %979 = vmatprep.subr.mxu0 0.0
    %980 = vmatpush1.msra.mxu0 0.0
    %981 = vmatprep.subr.mxu0 0.0
    %982 = vmatpush1.msra.mxu0 0.0
    %983 = vmatprep.subr.mxu0 0.0
    %984 = vmatpush1.msra.mxu0 0.0
    %985 = vmatprep.subr.mxu0 0.0
    %986 = vmatpush1.msra.mxu0 0.0
    %987 = vmatprep.subr.mxu0 0.0
    %988 = vmatpush1.msra.mxu0 0.0
    %989 = vmatprep.subr.mxu0 0.0
    %990 = vmatpush1.msra.mxu0 0.0
    %991 = vmatprep.subr.mxu0 0.0
    %992 = vmatpush1.msra.mxu0 0.0
    %993 = vmatprep.mubr.f32.mxu0 0.0
    %994 = vmatmul.mubr.f32.gmra.mrb[0].mxu0 %v774
    %v995 = vpop.f32.mrb[0].mxu0
    %v996 = vadd.f32 %v498, %v995
    %v997 = vpop.f32.mrb[0].mxu0
    %998 = vmatprep.mubr.f32.mxu0 0.0
    %999 = vmatmul.mubr.f32.gmra.mrb[0].mxu0 %v777
    %v1000 = vpop.f32.mrb[0].mxu0
    %v1001 = vadd.f32 %v498, %v1000
    %v1002 = vpop.f32.mrb[0].mxu0
    %1003 = vdwg.mxu0
    %v1004 = vadd.f32 %v197, %v846
    %v1005 = vadd.f32 %v198, %v851
    %v1006 = vmul.f32 %v1004, 0.5
    %v1007 = vmul.f32 %v1005, 0.5
    %v1008 = vtanh.pop %v1006
    %v1009 = vtanh.pop %v1007
    %v1010 = vmul.f32 %v1008, 0.5
    %v1011 = vmul.f32 %v1009, 0.5
    %v1012 = vadd.f32 %v1010, 0.5
    %v1013 = vadd.f32 %v1011, 0.5
    %v1014 = vadd.f32 %v201, %v921
    %v1015 = vadd.f32 %v202, %v926
    %v1016 = vmul.f32 %v1014, 0.5
    %v1017 = vmul.f32 %v1015, 0.5
    %v1018 = vtanh.pop %v1016
    %v1019 = vtanh.pop %v1017
    %v1020 = vmul.f32 %v1018, 0.5
    %v1021 = vmul.f32 %v1019, 0.5
    %v1022 = vadd.f32 %v1020, 0.5
    %v1023 = vadd.f32 %v1021, 0.5
    %v1024 = vmul.f32 %v1012, %v996
    %v1025 = vmul.f32 %v1013, %v1001
    %v1026 = vadd.f32 %v205, %v1024
    %v1027 = vadd.f32 %v206, %v1025
    %v1028 = vtanh.pop %v1026
    %v1029 = vtanh.pop %v1027
    %v1030 = vsub.f32 %v771, %v1028
    %v1031 = vsub.f32 %v772, %v1029
    %v1032 = vmul.f32 %v1022, %v1030
    %v1033 = vmul.f32 %v1023, %v1031
    %v1034 = vadd.f32 %v1028, %v1032
    %v1035 = vadd.f32 %v1029, %v1033
    %v1037 = vsel %vm509, %v1034, 0
    %v1040 = vsel %vm509, %v1035, 0
    %1042 = vmatprep.subr.mxu0 0.0
    %1043 = vmatpush1.msra.mxu0 %v77
    %1044 = vmatprep.subr.mxu0 0.0
    %1045 = vmatpush1.msra.mxu0 %v78
    %1046 = vmatprep.subr.mxu0 0.0
    %1047 = vmatpush1.msra.mxu0 %v79
    %1048 = vmatprep.subr.mxu0 0.0
    %1049 = vmatpush1.msra.mxu0 %v80
    %1050 = vmatprep.subr.mxu0 0.0
    %1051 = vmatpush1.msra.mxu0 0.0
    %1052 = vmatprep.subr.mxu0 0.0
    %1053 = vmatpush1.msra.mxu0 0.0
    %1054 = vmatprep.subr.mxu0 0.0
    %1055 = vmatpush1.msra.mxu0 0.0
    %1056 = vmatprep.subr.mxu0 0.0
    %1057 = vmatpush1.msra.mxu0 0.0
    %1058 = vmatprep.subr.mxu0 0.0
    %1059 = vmatpush1.msra.mxu0 0.0
    %1060 = vmatprep.subr.mxu0 0.0
    %1061 = vmatpush1.msra.mxu0 0.0
    %1062 = vmatprep.subr.mxu0 0.0
    %1063 = vmatpush1.msra.mxu0 0.0
    %1064 = vmatprep.subr.mxu0 0.0
    %1065 = vmatpush1.msra.mxu0 0.0
    %1066 = vmatprep.subr.mxu0 0.0
    %1067 = vmatpush1.msra.mxu0 0.0
    %1068 = vmatprep.subr.mxu0 0.0
    %1069 = vmatpush1.msra.mxu0 0.0
    %1070 = vmatprep.subr.mxu0 0.0
    %1071 = vmatpush1.msra.mxu0 0.0
    %1072 = vmatprep.subr.mxu0 0.0
    %1073 = vmatpush1.msra.mxu0 0.0
    %1074 = vmatprep.subr.mxu0 0.0
    %1075 = vmatpush1.msra.mxu0 0.0
    %1076 = vmatprep.subr.mxu0 0.0
    %1077 = vmatpush1.msra.mxu0 0.0
    %1078 = vmatprep.subr.mxu0 0.0
    %1079 = vmatpush1.msra.mxu0 0.0
    %1080 = vmatprep.subr.mxu0 0.0
    %1081 = vmatpush1.msra.mxu0 0.0
    %1082 = vmatprep.subr.mxu0 0.0
    %1083 = vmatpush1.msra.mxu0 0.0
    %1084 = vmatprep.subr.mxu0 0.0
    %1085 = vmatpush1.msra.mxu0 0.0
    %1086 = vmatprep.subr.mxu0 0.0
    %1087 = vmatpush1.msra.mxu0 0.0
    %1088 = vmatprep.subr.mxu0 0.0
    %1089 = vmatpush1.msra.mxu0 0.0
    %1090 = vmatprep.subr.mxu0 0.0
    %1091 = vmatpush1.msra.mxu0 0.0
    %1092 = vmatprep.subr.mxu0 0.0
    %1093 = vmatpush1.msra.mxu0 0.0
    %1094 = vmatprep.subr.mxu0 0.0
    %1095 = vmatpush1.msra.mxu0 0.0
    %1096 = vmatprep.subr.mxu0 0.0
    %1097 = vmatpush1.msra.mxu0 0.0
    %1098 = vmatprep.subr.mxu0 0.0
    %1099 = vmatpush1.msra.mxu0 0.0
    %1100 = vmatprep.subr.mxu0 0.0
    %1101 = vmatpush1.msra.mxu0 0.0
    %1102 = vmatprep.subr.mxu0 0.0
    %1103 = vmatpush1.msra.mxu0 0.0
    %1104 = vmatprep.subr.mxu0 0.0
    %1105 = vmatpush1.msra.mxu0 0.0
    %1106 = vmatprep.mubr.f32.mxu0 0.0
    %1107 = vmatmul.mubr.f32.gmra.mrb[0].mxu0 %v1037
    %v1108 = vpop.f32.mrb[0].mxu0
    %v1109 = vadd.f32 %v470, %v1108
    %v1110 = vpop.f32.mrb[0].mxu0
    %1111 = vmatprep.mubr.f32.mxu0 0.0
    %1112 = vmatmul.mubr.f32.gmra.mrb[0].mxu0 %v1040
    %v1113 = vpop.f32.mrb[0].mxu0
    %v1114 = vadd.f32 %v470, %v1113
    %v1115 = vpop.f32.mrb[0].mxu0
    %1116 = vdwg.mxu0
    %1117 = vmatprep.subr.mxu0 0.0
    %1118 = vmatpush1.msra.mxu0 %v82
    %1119 = vmatprep.subr.mxu0 0.0
    %1120 = vmatpush1.msra.mxu0 %v83
    %1121 = vmatprep.subr.mxu0 0.0
    %1122 = vmatpush1.msra.mxu0 %v84
    %1123 = vmatprep.subr.mxu0 0.0
    %1124 = vmatpush1.msra.mxu0 %v85
    %1125 = vmatprep.subr.mxu0 0.0
    %1126 = vmatpush1.msra.mxu0 0.0
    %1127 = vmatprep.subr.mxu0 0.0
    %1128 = vmatpush1.msra.mxu0 0.0
    %1129 = vmatprep.subr.mxu0 0.0
    %1130 = vmatpush1.msra.mxu0 0.0
    %1131 = vmatprep.subr.mxu0 0.0
    %1132 = vmatpush1.msra.mxu0 0.0
    %1133 = vmatprep.subr.mxu0 0.0
    %1134 = vmatpush1.msra.mxu0 0.0
    %1135 = vmatprep.subr.mxu0 0.0
    %1136 = vmatpush1.msra.mxu0 0.0
    %1137 = vmatprep.subr.mxu0 0.0
    %1138 = vmatpush1.msra.mxu0 0.0
    %1139 = vmatprep.subr.mxu0 0.0
    %1140 = vmatpush1.msra.mxu0 0.0
    %1141 = vmatprep.subr.mxu0 0.0
    %1142 = vmatpush1.msra.mxu0 0.0
    %1143 = vmatprep.subr.mxu0 0.0
    %1144 = vmatpush1.msra.mxu0 0.0
    %1145 = vmatprep.subr.mxu0 0.0
    %1146 = vmatpush1.msra.mxu0 0.0
    %1147 = vmatprep.subr.mxu0 0.0
    %1148 = vmatpush1.msra.mxu0 0.0
    %1149 = vmatprep.subr.mxu0 0.0
    %1150 = vmatpush1.msra.mxu0 0.0
    %1151 = vmatprep.subr.mxu0 0.0
    %1152 = vmatpush1.msra.mxu0 0.0
    %1153 = vmatprep.subr.mxu0 0.0
    %1154 = vmatpush1.msra.mxu0 0.0
    %1155 = vmatprep.subr.mxu0 0.0
    %1156 = vmatpush1.msra.mxu0 0.0
    %1157 = vmatprep.subr.mxu0 0.0
    %1158 = vmatpush1.msra.mxu0 0.0
    %1159 = vmatprep.subr.mxu0 0.0
    %1160 = vmatpush1.msra.mxu0 0.0
    %1161 = vmatprep.subr.mxu0 0.0
    %1162 = vmatpush1.msra.mxu0 0.0
    %1163 = vmatprep.subr.mxu0 0.0
    %1164 = vmatpush1.msra.mxu0 0.0
    %1165 = vmatprep.subr.mxu0 0.0
    %1166 = vmatpush1.msra.mxu0 0.0
    %1167 = vmatprep.subr.mxu0 0.0
    %1168 = vmatpush1.msra.mxu0 0.0
    %1169 = vmatprep.subr.mxu0 0.0
    %1170 = vmatpush1.msra.mxu0 0.0
    %1171 = vmatprep.subr.mxu0 0.0
    %1172 = vmatpush1.msra.mxu0 0.0
    %1173 = vmatprep.subr.mxu0 0.0
    %1174 = vmatpush1.msra.mxu0 0.0
    %1175 = vmatprep.subr.mxu0 0.0
    %1176 = vmatpush1.msra.mxu0 0.0
    %1177 = vmatprep.subr.mxu0 0.0
    %1178 = vmatpush1.msra.mxu0 0.0
    %1179 = vmatprep.subr.mxu0 0.0
    %1180 = vmatpush1.msra.mxu0 0.0
    %1181 = vmatprep.mubr.f32.mxu0 0.0
    %1182 = vmatmul.mubr.f32.gmra.mrb[0].mxu0 %v1037
    %v1183 = vpop.f32.mrb[0].mxu0
    %v1184 = vadd.f32 %v484, %v1183
    %v1185 = vpop.f32.mrb[0].mxu0
    %1186 = vmatprep.mubr.f32.mxu0 0.0
    %1187 = vmatmul.mubr.f32.gmra.mrb[0].mxu0 %v1040
    %v1188 = vpop.f32.mrb[0].mxu0
    %v1189 = vadd.f32 %v484, %v1188
    %v1190 = vpop.f32.mrb[0].mxu0
    %1191 = vdwg.mxu0
    %1192 = vmatprep.subr.mxu0 0.0
    %1193 = vmatpush1.msra.mxu0 %v87
    %1194 = vmatprep.subr.mxu0 0.0
    %1195 = vmatpush1.msra.mxu0 %v88
    %1196 = vmatprep.subr.mxu0 0.0
    %1197 = vmatpush1.msra.mxu0 %v89
    %1198 = vmatprep.subr.mxu0 0.0
    %1199 = vmatpush1.msra.mxu0 %v90
    %1200 = vmatprep.subr.mxu0 0.0
    %1201 = vmatpush1.msra.mxu0 0.0
    %1202 = vmatprep.subr.mxu0 0.0
    %1203 = vmatpush1.msra.mxu0 0.0
    %1204 = vmatprep.subr.mxu0 0.0
    %1205 = vmatpush1.msra.mxu0 0.0
    %1206 = vmatprep.subr.mxu0 0.0
    %1207 = vmatpush1.msra.mxu0 0.0
    %1208 = vmatprep.subr.mxu0 0.0
    %1209 = vmatpush1.msra.mxu0 0.0
    %1210 = vmatprep.subr.mxu0 0.0
    %1211 = vmatpush1.msra.mxu0 0.0
    %1212 = vmatprep.subr.mxu0 0.0
    %1213 = vmatpush1.msra.mxu0 0.0
    %1214 = vmatprep.subr.mxu0 0.0
    %1215 = vmatpush1.msra.mxu0 0.0
    %1216 = vmatprep.subr.mxu0 0.0
    %1217 = vmatpush1.msra.mxu0 0.0
    %1218 = vmatprep.subr.mxu0 0.0
    %1219 = vmatpush1.msra.mxu0 0.0
    %1220 = vmatprep.subr.mxu0 0.0
    %1221 = vmatpush1.msra.mxu0 0.0
    %1222 = vmatprep.subr.mxu0 0.0
    %1223 = vmatpush1.msra.mxu0 0.0
    %1224 = vmatprep.subr.mxu0 0.0
    %1225 = vmatpush1.msra.mxu0 0.0
    %1226 = vmatprep.subr.mxu0 0.0
    %1227 = vmatpush1.msra.mxu0 0.0
    %1228 = vmatprep.subr.mxu0 0.0
    %1229 = vmatpush1.msra.mxu0 0.0
    %1230 = vmatprep.subr.mxu0 0.0
    %1231 = vmatpush1.msra.mxu0 0.0
    %1232 = vmatprep.subr.mxu0 0.0
    %1233 = vmatpush1.msra.mxu0 0.0
    %1234 = vmatprep.subr.mxu0 0.0
    %1235 = vmatpush1.msra.mxu0 0.0
    %1236 = vmatprep.subr.mxu0 0.0
    %1237 = vmatpush1.msra.mxu0 0.0
    %1238 = vmatprep.subr.mxu0 0.0
    %1239 = vmatpush1.msra.mxu0 0.0
    %1240 = vmatprep.subr.mxu0 0.0
    %1241 = vmatpush1.msra.mxu0 0.0
    %1242 = vmatprep.subr.mxu0 0.0
    %1243 = vmatpush1.msra.mxu0 0.0
    %1244 = vmatprep.subr.mxu0 0.0
    %1245 = vmatpush1.msra.mxu0 0.0
    %1246 = vmatprep.subr.mxu0 0.0
    %1247 = vmatpush1.msra.mxu0 0.0
    %1248 = vmatprep.subr.mxu0 0.0
    %1249 = vmatpush1.msra.mxu0 0.0
    %1250 = vmatprep.subr.mxu0 0.0
    %1251 = vmatpush1.msra.mxu0 0.0
    %1252 = vmatprep.subr.mxu0 0.0
    %1253 = vmatpush1.msra.mxu0 0.0
    %1254 = vmatprep.subr.mxu0 0.0
    %1255 = vmatpush1.msra.mxu0 0.0
    %1256 = vmatprep.mubr.f32.mxu0 0.0
    %1257 = vmatmul.mubr.f32.gmra.mrb[0].mxu0 %v1037
    %v1258 = vpop.f32.mrb[0].mxu0
    %v1259 = vadd.f32 %v498, %v1258
    %v1260 = vpop.f32.mrb[0].mxu0
    %1261 = vmatprep.mubr.f32.mxu0 0.0
    %1262 = vmatmul.mubr.f32.gmra.mrb[0].mxu0 %v1040
    %v1263 = vpop.f32.mrb[0].mxu0
    %v1264 = vadd.f32 %v498, %v1263
    %v1265 = vpop.f32.mrb[0].mxu0
    %1266 = vdwg.mxu0
    %v1267 = vadd.f32 %v217, %v1109
    %v1268 = vadd.f32 %v218, %v1114
    %v1269 = vmul.f32 %v1267, 0.5
    %v1270 = vmul.f32 %v1268, 0.5
    %v1271 = vtanh.pop %v1269
    %v1272 = vtanh.pop %v1270
    %v1273 = vmul.f32 %v1271, 0.5
    %v1274 = vmul.f32 %v1272, 0.5
    %v1275 = vadd.f32 %v1273, 0.5
    %v1276 = vadd.f32 %v1274, 0.5
    %v1277 = vadd.f32 %v221, %v1184
    %v1278 = vadd.f32 %v222, %v1189
    %v1279 = vmul.f32 %v1277, 0.5
    %v1280 = vmul.f32 %v1278, 0.5
    %v1281 = vtanh.pop %v1279
    %v1282 = vtanh.pop %v1280
    %v1283 = vmul.f32 %v1281, 0.5
    %v1284 = vmul.f32 %v1282, 0.5
    %v1285 = vadd.f32 %v1283, 0.5
    %v1286 = vadd.f32 %v1284, 0.5
    %v1287 = vmul.f32 %v1275, %v1259
    %v1288 = vmul.f32 %v1276, %v1264
    %v1289 = vadd.f32 %v225, %v1287
    %v1290 = vadd.f32 %v226, %v1288
    %v1291 = vtanh.pop %v1289
    %v1292 = vtanh.pop %v1290
    %v1293 = vsub.f32 %v1034, %v1291
    %v1294 = vsub.f32 %v1035, %v1292
    %v1295 = vmul.f32 %v1285, %v1293
    %v1296 = vmul.f32 %v1286, %v1294
    %v1297 = vadd.f32 %v1291, %v1295
    %v1298 = vadd.f32 %v1292, %v1296
    %v1300 = vsel %vm509, %v1297, 0
    %v1303 = vsel %vm509, %v1298, 0
    %1305 = vmatprep.subr.mxu0 0.0
    %1306 = vmatpush1.msra.mxu0 %v77
    %1307 = vmatprep.subr.mxu0 0.0
    %1308 = vmatpush1.msra.mxu0 %v78
    %1309 = vmatprep.subr.mxu0 0.0
    %1310 = vmatpush1.msra.mxu0 %v79
    %1311 = vmatprep.subr.mxu0 0.0
    %1312 = vmatpush1.msra.mxu0 %v80
    %1313 = vmatprep.subr.mxu0 0.0
    %1314 = vmatpush1.msra.mxu0 0.0
    %1315 = vmatprep.subr.mxu0 0.0
    %1316 = vmatpush1.msra.mxu0 0.0
    %1317 = vmatprep.subr.mxu0 0.0
    %1318 = vmatpush1.msra.mxu0 0.0
    %1319 = vmatprep.subr.mxu0 0.0
    %1320 = vmatpush1.msra.mxu0 0.0
    %1321 = vmatprep.subr.mxu0 0.0
    %1322 = vmatpush1.msra.mxu0 0.0
    %1323 = vmatprep.subr.mxu0 0.0
    %1324 = vmatpush1.msra.mxu0 0.0
    %1325 = vmatprep.subr.mxu0 0.0
    %1326 = vmatpush1.msra.mxu0 0.0
    %1327 = vmatprep.subr.mxu0 0.0
    %1328 = vmatpush1.msra.mxu0 0.0
    %1329 = vmatprep.subr.mxu0 0.0
    %1330 = vmatpush1.msra.mxu0 0.0
    %1331 = vmatprep.subr.mxu0 0.0
    %1332 = vmatpush1.msra.mxu0 0.0
    %1333 = vmatprep.subr.mxu0 0.0
    %1334 = vmatpush1.msra.mxu0 0.0
    %1335 = vmatprep.subr.mxu0 0.0
    %1336 = vmatpush1.msra.mxu0 0.0
    %1337 = vmatprep.subr.mxu0 0.0
    %1338 = vmatpush1.msra.mxu0 0.0
    %1339 = vmatprep.subr.mxu0 0.0
    %1340 = vmatpush1.msra.mxu0 0.0
    %1341 = vmatprep.subr.mxu0 0.0
    %1342 = vmatpush1.msra.mxu0 0.0
    %1343 = vmatprep.subr.mxu0 0.0
    %1344 = vmatpush1.msra.mxu0 0.0
    %1345 = vmatprep.subr.mxu0 0.0
    %1346 = vmatpush1.msra.mxu0 0.0
    %1347 = vmatprep.subr.mxu0 0.0
    %1348 = vmatpush1.msra.mxu0 0.0
    %1349 = vmatprep.subr.mxu0 0.0
    %1350 = vmatpush1.msra.mxu0 0.0
    %1351 = vmatprep.subr.mxu0 0.0
    %1352 = vmatpush1.msra.mxu0 0.0
    %1353 = vmatprep.subr.mxu0 0.0
    %1354 = vmatpush1.msra.mxu0 0.0
    %1355 = vmatprep.subr.mxu0 0.0
    %1356 = vmatpush1.msra.mxu0 0.0
    %1357 = vmatprep.subr.mxu0 0.0
    %1358 = vmatpush1.msra.mxu0 0.0
    %1359 = vmatprep.subr.mxu0 0.0
    %1360 = vmatpush1.msra.mxu0 0.0
    %1361 = vmatprep.subr.mxu0 0.0
    %1362 = vmatpush1.msra.mxu0 0.0
    %1363 = vmatprep.subr.mxu0 0.0
    %1364 = vmatpush1.msra.mxu0 0.0
    %1365 = vmatprep.subr.mxu0 0.0
    %1366 = vmatpush1.msra.mxu0 0.0
    %1367 = vmatprep.subr.mxu0 0.0
    %1368 = vmatpush1.msra.mxu0 0.0
    %1369 = vmatprep.mubr.f32.mxu0 0.0
    %1370 = vmatmul.mubr.f32.gmra.mrb[0].mxu0 %v1300
    %v1371 = vpop.f32.mrb[0].mxu0
    %v1372 = vadd.f32 %v470, %v1371
    %v1373 = vpop.f32.mrb[0].mxu0
    %1374 = vmatprep.mubr.f32.mxu0 0.0
    %1375 = vmatmul.mubr.f32.gmra.mrb[0].mxu0 %v1303
    %v1376 = vpop.f32.mrb[0].mxu0
    %v1377 = vadd.f32 %v470, %v1376
    %v1378 = vpop.f32.mrb[0].mxu0
    %1379 = vdwg.mxu0
    %1380 = vmatprep.subr.mxu0 0.0
    %1381 = vmatpush1.msra.mxu0 %v82
    %1382 = vmatprep.subr.mxu0 0.0
    %1383 = vmatpush1.msra.mxu0 %v83
    %1384 = vmatprep.subr.mxu0 0.0
    %1385 = vmatpush1.msra.mxu0 %v84
    %1386 = vmatprep.subr.mxu0 0.0
    %1387 = vmatpush1.msra.mxu0 %v85
    %1388 = vmatprep.subr.mxu0 0.0
    %1389 = vmatpush1.msra.mxu0 0.0
    %1390 = vmatprep.subr.mxu0 0.0
    %1391 = vmatpush1.msra.mxu0 0.0
    %1392 = vmatprep.subr.mxu0 0.0
    %1393 = vmatpush1.msra.mxu0 0.0
    %1394 = vmatprep.subr.mxu0 0.0
    %1395 = vmatpush1.msra.mxu0 0.0
    %1396 = vmatprep.subr.mxu0 0.0
    %1397 = vmatpush1.msra.mxu0 0.0
    %1398 = vmatprep.subr.mxu0 0.0
    %1399 = vmatpush1.msra.mxu0 0.0
    %1400 = vmatprep.subr.mxu0 0.0
    %1401 = vmatpush1.msra.mxu0 0.0
    %1402 = vmatprep.subr.mxu0 0.0
    %1403 = vmatpush1.msra.mxu0 0.0
    %1404 = vmatprep.subr.mxu0 0.0
    %1405 = vmatpush1.msra.mxu0 0.0
    %1406 = vmatprep.subr.mxu0 0.0
    %1407 = vmatpush1.msra.mxu0 0.0
    %1408 = vmatprep.subr.mxu0 0.0
    %1409 = vmatpush1.msra.mxu0 0.0
    %1410 = vmatprep.subr.mxu0 0.0
    %1411 = vmatpush1.msra.mxu0 0.0
    %1412 = vmatprep.subr.mxu0 0.0
    %1413 = vmatpush1.msra.mxu0 0.0
    %1414 = vmatprep.subr.mxu0 0.0
    %1415 = vmatpush1.msra.mxu0 0.0
    %1416 = vmatprep.subr.mxu0 0.0
    %1417 = vmatpush1.msra.mxu0 0.0
    %1418 = vmatprep.subr.mxu0 0.0
    %1419 = vmatpush1.msra.mxu0 0.0
    %1420 = vmatprep.subr.mxu0 0.0
    %1421 = vmatpush1.msra.mxu0 0.0
    %1422 = vmatprep.subr.mxu0 0.0
    %1423 = vmatpush1.msra.mxu0 0.0
    %1424 = vmatprep.subr.mxu0 0.0
    %1425 = vmatpush1.msra.mxu0 0.0
    %1426 = vmatprep.subr.mxu0 0.0
    %1427 = vmatpush1.msra.mxu0 0.0
    %1428 = vmatprep.subr.mxu0 0.0
    %1429 = vmatpush1.msra.mxu0 0.0
    %1430 = vmatprep.subr.mxu0 0.0
    %1431 = vmatpush1.msra.mxu0 0.0
    %1432 = vmatprep.subr.mxu0 0.0
    %1433 = vmatpush1.msra.mxu0 0.0
    %1434 = vmatprep.subr.mxu0 0.0
    %1435 = vmatpush1.msra.mxu0 0.0
    %1436 = vmatprep.subr.mxu0 0.0
    %1437 = vmatpush1.msra.mxu0 0.0
    %1438 = vmatprep.subr.mxu0 0.0
    %1439 = vmatpush1.msra.mxu0 0.0
    %1440 = vmatprep.subr.mxu0 0.0
    %1441 = vmatpush1.msra.mxu0 0.0
    %1442 = vmatprep.subr.mxu0 0.0
    %1443 = vmatpush1.msra.mxu0 0.0
    %1444 = vmatprep.mubr.f32.mxu0 0.0
    %1445 = vmatmul.mubr.f32.gmra.mrb[0].mxu0 %v1300
    %v1446 = vpop.f32.mrb[0].mxu0
    %v1447 = vadd.f32 %v484, %v1446
    %v1448 = vpop.f32.mrb[0].mxu0
    %1449 = vmatprep.mubr.f32.mxu0 0.0
    %1450 = vmatmul.mubr.f32.gmra.mrb[0].mxu0 %v1303
    %v1451 = vpop.f32.mrb[0].mxu0
    %v1452 = vadd.f32 %v484, %v1451
    %v1453 = vpop.f32.mrb[0].mxu0
    %1454 = vdwg.mxu0
    %1455 = vmatprep.subr.mxu0 0.0
    %1456 = vmatpush1.msra.mxu0 %v87
    %1457 = vmatprep.subr.mxu0 0.0
    %1458 = vmatpush1.msra.mxu0 %v88
    %1459 = vmatprep.subr.mxu0 0.0
    %1460 = vmatpush1.msra.mxu0 %v89
    %1461 = vmatprep.subr.mxu0 0.0
    %1462 = vmatpush1.msra.mxu0 %v90
    %1463 = vmatprep.subr.mxu0 0.0
    %1464 = vmatpush1.msra.mxu0 0.0
    %1465 = vmatprep.subr.mxu0 0.0
    %1466 = vmatpush1.msra.mxu0 0.0
    %1467 = vmatprep.subr.mxu0 0.0
    %1468 = vmatpush1.msra.mxu0 0.0
    %1469 = vmatprep.subr.mxu0 0.0
    %1470 = vmatpush1.msra.mxu0 0.0
    %1471 = vmatprep.subr.mxu0 0.0
    %1472 = vmatpush1.msra.mxu0 0.0
    %1473 = vmatprep.subr.mxu0 0.0
    %1474 = vmatpush1.msra.mxu0 0.0
    %1475 = vmatprep.subr.mxu0 0.0
    %1476 = vmatpush1.msra.mxu0 0.0
    %1477 = vmatprep.subr.mxu0 0.0
    %1478 = vmatpush1.msra.mxu0 0.0
    %1479 = vmatprep.subr.mxu0 0.0
    %1480 = vmatpush1.msra.mxu0 0.0
    %1481 = vmatprep.subr.mxu0 0.0
    %1482 = vmatpush1.msra.mxu0 0.0
    %1483 = vmatprep.subr.mxu0 0.0
    %1484 = vmatpush1.msra.mxu0 0.0
    %1485 = vmatprep.subr.mxu0 0.0
    %1486 = vmatpush1.msra.mxu0 0.0
    %1487 = vmatprep.subr.mxu0 0.0
    %1488 = vmatpush1.msra.mxu0 0.0
    %1489 = vmatprep.subr.mxu0 0.0
    %1490 = vmatpush1.msra.mxu0 0.0
    %1491 = vmatprep.subr.mxu0 0.0
    %1492 = vmatpush1.msra.mxu0 0.0
    %1493 = vmatprep.subr.mxu0 0.0
    %1494 = vmatpush1.msra.mxu0 0.0
    %1495 = vmatprep.subr.mxu0 0.0
    %1496 = vmatpush1.msra.mxu0 0.0
    %1497 = vmatprep.subr.mxu0 0.0
    %1498 = vmatpush1.msra.mxu0 0.0
    %1499 = vmatprep.subr.mxu0 0.0
    %1500 = vmatpush1.msra.mxu0 0.0
    %1501 = vmatprep.subr.mxu0 0.0
    %1502 = vmatpush1.msra.mxu0 0.0
    %1503 = vmatprep.subr.mxu0 0.0
    %1504 = vmatpush1.msra.mxu0 0.0
    %1505 = vmatprep.subr.mxu0 0.0
    %1506 = vmatpush1.msra.mxu0 0.0
    %1507 = vmatprep.subr.mxu0 0.0
    %1508 = vmatpush1.msra.mxu0 0.0
    %1509 = vmatprep.subr.mxu0 0.0
    %1510 = vmatpush1.msra.mxu0 0.0
    %1511 = vmatprep.subr.mxu0 0.0
    %1512 = vmatpush1.msra.mxu0 0.0
    %1513 = vmatprep.subr.mxu0 0.0
    %1514 = vmatpush1.msra.mxu0 0.0
    %1515 = vmatprep.subr.mxu0 0.0
    %1516 = vmatpush1.msra.mxu0 0.0
    %1517 = vmatprep.subr.mxu0 0.0
    %1518 = vmatpush1.msra.mxu0 0.0
    %1519 = vmatprep.mubr.f32.mxu0 0.0
    %1520 = vmatmul.mubr.f32.gmra.mrb[0].mxu0 %v1300
    %v1521 = vpop.f32.mrb[0].mxu0
    %v1522 = vadd.f32 %v498, %v1521
    %v1523 = vpop.f32.mrb[0].mxu0
    %1524 = vmatprep.mubr.f32.mxu0 0.0
    %1525 = vmatmul.mubr.f32.gmra.mrb[0].mxu0 %v1303
    %v1526 = vpop.f32.mrb[0].mxu0
    %v1527 = vadd.f32 %v498, %v1526
    %v1528 = vpop.f32.mrb[0].mxu0
    %1529 = vdwg.mxu0
    %v1530 = vadd.f32 %v237, %v1372
    %v1531 = vadd.f32 %v238, %v1377
    %v1532 = vmul.f32 %v1530, 0.5
    %v1533 = vmul.f32 %v1531, 0.5
    %v1534 = vtanh.pop %v1532
    %v1535 = vtanh.pop %v1533
    %v1536 = vmul.f32 %v1534, 0.5
    %v1537 = vmul.f32 %v1535, 0.5
    %v1538 = vadd.f32 %v1536, 0.5
    %v1539 = vadd.f32 %v1537, 0.5
    %v1540 = vadd.f32 %v241, %v1447
    %v1541 = vadd.f32 %v242, %v1452
    %v1542 = vmul.f32 %v1540, 0.5
    %v1543 = vmul.f32 %v1541, 0.5
    %v1544 = vtanh.pop %v1542
    %v1545 = vtanh.pop %v1543
    %v1546 = vmul.f32 %v1544, 0.5
    %v1547 = vmul.f32 %v1545, 0.5
    %v1548 = vadd.f32 %v1546, 0.5
    %v1549 = vadd.f32 %v1547, 0.5
    %v1550 = vmul.f32 %v1538, %v1522
    %v1551 = vmul.f32 %v1539, %v1527
    %v1552 = vadd.f32 %v245, %v1550
    %v1553 = vadd.f32 %v246, %v1551
    %v1554 = vtanh.pop %v1552
    %v1555 = vtanh.pop %v1553
    %v1556 = vsub.f32 %v1297, %v1554
    %v1557 = vsub.f32 %v1298, %v1555
    %v1558 = vmul.f32 %v1548, %v1556
    %v1559 = vmul.f32 %v1549, %v1557
    %v1560 = vadd.f32 %v1554, %v1558
    %v1561 = vadd.f32 %v1555, %v1559
    %v1563 = vsel %vm509, %v1560, 0
    %v1566 = vsel %vm509, %v1561, 0
    %1568 = vmatprep.subr.mxu0 0.0
    %1569 = vmatpush1.msra.mxu0 %v77
    %1570 = vmatprep.subr.mxu0 0.0
    %1571 = vmatpush1.msra.mxu0 %v78
    %1572 = vmatprep.subr.mxu0 0.0
    %1573 = vmatpush1.msra.mxu0 %v79
    %1574 = vmatprep.subr.mxu0 0.0
    %1575 = vmatpush1.msra.mxu0 %v80
    %1576 = vmatprep.subr.mxu0 0.0
    %1577 = vmatpush1.msra.mxu0 0.0
    %1578 = vmatprep.subr.mxu0 0.0
    %1579 = vmatpush1.msra.mxu0 0.0
    %1580 = vmatprep.subr.mxu0 0.0
    %1581 = vmatpush1.msra.mxu0 0.0
    %1582 = vmatprep.subr.mxu0 0.0
    %1583 = vmatpush1.msra.mxu0 0.0
    %1584 = vmatprep.subr.mxu0 0.0
    %1585 = vmatpush1.msra.mxu0 0.0
    %1586 = vmatprep.subr.mxu0 0.0
    %1587 = vmatpush1.msra.mxu0 0.0
    %1588 = vmatprep.subr.mxu0 0.0
    %1589 = vmatpush1.msra.mxu0 0.0
    %1590 = vmatprep.subr.mxu0 0.0
    %1591 = vmatpush1.msra.mxu0 0.0
    %1592 = vmatprep.subr.mxu0 0.0
    %1593 = vmatpush1.msra.mxu0 0.0
    %1594 = vmatprep.subr.mxu0 0.0
    %1595 = vmatpush1.msra.mxu0 0.0
    %1596 = vmatprep.subr.mxu0 0.0
    %1597 = vmatpush1.msra.mxu0 0.0
    %1598 = vmatprep.subr.mxu0 0.0
    %1599 = vmatpush1.msra.mxu0 0.0
    %1600 = vmatprep.subr.mxu0 0.0
    %1601 = vmatpush1.msra.mxu0 0.0
    %1602 = vmatprep.subr.mxu0 0.0
    %1603 = vmatpush1.msra.mxu0 0.0
    %1604 = vmatprep.subr.mxu0 0.0
    %1605 = vmatpush1.msra.mxu0 0.0
    %1606 = vmatprep.subr.mxu0 0.0
    %1607 = vmatpush1.msra.mxu0 0.0
    %1608 = vmatprep.subr.mxu0 0.0
    %1609 = vmatpush1.msra.mxu0 0.0
    %1610 = vmatprep.subr.mxu0 0.0
    %1611 = vmatpush1.msra.mxu0 0.0
    %1612 = vmatprep.subr.mxu0 0.0
    %1613 = vmatpush1.msra.mxu0 0.0
    %1614 = vmatprep.subr.mxu0 0.0
    %1615 = vmatpush1.msra.mxu0 0.0
    %1616 = vmatprep.subr.mxu0 0.0
    %1617 = vmatpush1.msra.mxu0 0.0
    %1618 = vmatprep.subr.mxu0 0.0
    %1619 = vmatpush1.msra.mxu0 0.0
    %1620 = vmatprep.subr.mxu0 0.0
    %1621 = vmatpush1.msra.mxu0 0.0
    %1622 = vmatprep.subr.mxu0 0.0
    %1623 = vmatpush1.msra.mxu0 0.0
    %1624 = vmatprep.subr.mxu0 0.0
    %1625 = vmatpush1.msra.mxu0 0.0
    %1626 = vmatprep.subr.mxu0 0.0
    %1627 = vmatpush1.msra.mxu0 0.0
    %1628 = vmatprep.subr.mxu0 0.0
    %1629 = vmatpush1.msra.mxu0 0.0
    %1630 = vmatprep.subr.mxu0 0.0
    %1631 = vmatpush1.msra.mxu0 0.0
    %1632 = vmatprep.mubr.f32.mxu0 0.0
    %1633 = vmatmul.mubr.f32.gmra.mrb[0].mxu0 %v1563
    %v1634 = vpop.f32.mrb[0].mxu0
    %v1635 = vadd.f32 %v470, %v1634
    %v1636 = vpop.f32.mrb[0].mxu0
    %1637 = vmatprep.mubr.f32.mxu0 0.0
    %1638 = vmatmul.mubr.f32.gmra.mrb[0].mxu0 %v1566
    %v1639 = vpop.f32.mrb[0].mxu0
    %v1640 = vadd.f32 %v470, %v1639
    %v1641 = vpop.f32.mrb[0].mxu0
    %1642 = vdwg.mxu0
    %1643 = vmatprep.subr.mxu0 0.0
    %1644 = vmatpush1.msra.mxu0 %v82
    %1645 = vmatprep.subr.mxu0 0.0
    %1646 = vmatpush1.msra.mxu0 %v83
    %1647 = vmatprep.subr.mxu0 0.0
    %1648 = vmatpush1.msra.mxu0 %v84
    %1649 = vmatprep.subr.mxu0 0.0
    %1650 = vmatpush1.msra.mxu0 %v85
    %1651 = vmatprep.subr.mxu0 0.0
    %1652 = vmatpush1.msra.mxu0 0.0
    %1653 = vmatprep.subr.mxu0 0.0
    %1654 = vmatpush1.msra.mxu0 0.0
    %1655 = vmatprep.subr.mxu0 0.0
    %1656 = vmatpush1.msra.mxu0 0.0
    %1657 = vmatprep.subr.mxu0 0.0
    %1658 = vmatpush1.msra.mxu0 0.0
    %1659 = vmatprep.subr.mxu0 0.0
    %1660 = vmatpush1.msra.mxu0 0.0
    %1661 = vmatprep.subr.mxu0 0.0
    %1662 = vmatpush1.msra.mxu0 0.0
    %1663 = vmatprep.subr.mxu0 0.0
    %1664 = vmatpush1.msra.mxu0 0.0
    %1665 = vmatprep.subr.mxu0 0.0
    %1666 = vmatpush1.msra.mxu0 0.0
    %1667 = vmatprep.subr.mxu0 0.0
    %1668 = vmatpush1.msra.mxu0 0.0
    %1669 = vmatprep.subr.mxu0 0.0
    %1670 = vmatpush1.msra.mxu0 0.0
    %1671 = vmatprep.subr.mxu0 0.0
    %1672 = vmatpush1.msra.mxu0 0.0
    %1673 = vmatprep.subr.mxu0 0.0
    %1674 = vmatpush1.msra.mxu0 0.0
    %1675 = vmatprep.subr.mxu0 0.0
    %1676 = vmatpush1.msra.mxu0 0.0
    %1677 = vmatprep.subr.mxu0 0.0
    %1678 = vmatpush1.msra.mxu0 0.0
    %1679 = vmatprep.subr.mxu0 0.0
    %1680 = vmatpush1.msra.mxu0 0.0
    %1681 = vmatprep.subr.mxu0 0.0
    %1682 = vmatpush1.msra.mxu0 0.0
    %1683 = vmatprep.subr.mxu0 0.0
    %1684 = vmatpush1.msra.mxu0 0.0
    %1685 = vmatprep.subr.mxu0 0.0
    %1686 = vmatpush1.msra.mxu0 0.0
    %1687 = vmatprep.subr.mxu0 0.0
    %1688 = vmatpush1.msra.mxu0 0.0
    %1689 = vmatprep.subr.mxu0 0.0
    %1690 = vmatpush1.msra.mxu0 0.0
    %1691 = vmatprep.subr.mxu0 0.0
    %1692 = vmatpush1.msra.mxu0 0.0
    %1693 = vmatprep.subr.mxu0 0.0
    %1694 = vmatpush1.msra.mxu0 0.0
    %1695 = vmatprep.subr.mxu0 0.0
    %1696 = vmatpush1.msra.mxu0 0.0
    %1697 = vmatprep.subr.mxu0 0.0
    %1698 = vmatpush1.msra.mxu0 0.0
    %1699 = vmatprep.subr.mxu0 0.0
    %1700 = vmatpush1.msra.mxu0 0.0
    %1701 = vmatprep.subr.mxu0 0.0
    %1702 = vmatpush1.msra.mxu0 0.0
    %1703 = vmatprep.subr.mxu0 0.0
    %1704 = vmatpush1.msra.mxu0 0.0
    %1705 = vmatprep.subr.mxu0 0.0
    %1706 = vmatpush1.msra.mxu0 0.0
    %1707 = vmatprep.mubr.f32.mxu0 0.0
    %1708 = vmatmul.mubr.f32.gmra.mrb[0].mxu0 %v1563
    %v1709 = vpop.f32.mrb[0].mxu0
    %v1710 = vadd.f32 %v484, %v1709
    %v1711 = vpop.f32.mrb[0].mxu0
    %1712 = vmatprep.mubr.f32.mxu0 0.0
    %1713 = vmatmul.mubr.f32.gmra.mrb[0].mxu0 %v1566
    %v1714 = vpop.f32.mrb[0].mxu0
    %v1715 = vadd.f32 %v484, %v1714
    %v1716 = vpop.f32.mrb[0].mxu0
    %1717 = vdwg.mxu0
    %1718 = vmatprep.subr.mxu0 0.0
    %1719 = vmatpush1.msra.mxu0 %v87
    %1720 = vmatprep.subr.mxu0 0.0
    %1721 = vmatpush1.msra.mxu0 %v88
    %1722 = vmatprep.subr.mxu0 0.0
    %1723 = vmatpush1.msra.mxu0 %v89
    %1724 = vmatprep.subr.mxu0 0.0
    %1725 = vmatpush1.msra.mxu0 %v90
    %1726 = vmatprep.subr.mxu0 0.0
    %1727 = vmatpush1.msra.mxu0 0.0
    %1728 = vmatprep.subr.mxu0 0.0
    %1729 = vmatpush1.msra.mxu0 0.0
    %1730 = vmatprep.subr.mxu0 0.0
    %1731 = vmatpush1.msra.mxu0 0.0
    %1732 = vmatprep.subr.mxu0 0.0
    %1733 = vmatpush1.msra.mxu0 0.0
    %1734 = vmatprep.subr.mxu0 0.0
    %1735 = vmatpush1.msra.mxu0 0.0
    %1736 = vmatprep.subr.mxu0 0.0
    %1737 = vmatpush1.msra.mxu0 0.0
    %1738 = vmatprep.subr.mxu0 0.0
    %1739 = vmatpush1.msra.mxu0 0.0
    %1740 = vmatprep.subr.mxu0 0.0
    %1741 = vmatpush1.msra.mxu0 0.0
    %1742 = vmatprep.subr.mxu0 0.0
    %1743 = vmatpush1.msra.mxu0 0.0
    %1744 = vmatprep.subr.mxu0 0.0
    %1745 = vmatpush1.msra.mxu0 0.0
    %1746 = vmatprep.subr.mxu0 0.0
    %1747 = vmatpush1.msra.mxu0 0.0
    %1748 = vmatprep.subr.mxu0 0.0
    %1749 = vmatpush1.msra.mxu0 0.0
    %1750 = vmatprep.subr.mxu0 0.0
    %1751 = vmatpush1.msra.mxu0 0.0
    %1752 = vmatprep.subr.mxu0 0.0
    %1753 = vmatpush1.msra.mxu0 0.0
    %1754 = vmatprep.subr.mxu0 0.0
    %1755 = vmatpush1.msra.mxu0 0.0
    %1756 = vmatprep.subr.mxu0 0.0
    %1757 = vmatpush1.msra.mxu0 0.0
    %1758 = vmatprep.subr.mxu0 0.0
    %1759 = vmatpush1.msra.mxu0 0.0
    %1760 = vmatprep.subr.mxu0 0.0
    %1761 = vmatpush1.msra.mxu0 0.0
    %1762 = vmatprep.subr.mxu0 0.0
    %1763 = vmatpush1.msra.mxu0 0.0
    %1764 = vmatprep.subr.mxu0 0.0
    %1765 = vmatpush1.msra.mxu0 0.0
    %1766 = vmatprep.subr.mxu0 0.0
    %1767 = vmatpush1.msra.mxu0 0.0
    %1768 = vmatprep.subr.mxu0 0.0
    %1769 = vmatpush1.msra.mxu0 0.0
    %1770 = vmatprep.subr.mxu0 0.0
    %1771 = vmatpush1.msra.mxu0 0.0
    %1772 = vmatprep.subr.mxu0 0.0
    %1773 = vmatpush1.msra.mxu0 0.0
    %1774 = vmatprep.subr.mxu0 0.0
    %1775 = vmatpush1.msra.mxu0 0.0
    %1776 = vmatprep.subr.mxu0 0.0
    %1777 = vmatpush1.msra.mxu0 0.0
    %1778 = vmatprep.subr.mxu0 0.0
    %1779 = vmatpush1.msra.mxu0 0.0
    %1780 = vmatprep.subr.mxu0 0.0
    %1781 = vmatpush1.msra.mxu0 0.0
    %1782 = vmatprep.mubr.f32.mxu0 0.0
    %1783 = vmatmul.mubr.f32.gmra.mrb[0].mxu0 %v1563
    %v1784 = vpop.f32.mrb[0].mxu0
    %v1785 = vadd.f32 %v498, %v1784
    %v1786 = vpop.f32.mrb[0].mxu0
    %1787 = vmatprep.mubr.f32.mxu0 0.0
    %1788 = vmatmul.mubr.f32.gmra.mrb[0].mxu0 %v1566
    %v1789 = vpop.f32.mrb[0].mxu0
    %v1790 = vadd.f32 %v498, %v1789
    %v1791 = vpop.f32.mrb[0].mxu0
    %1792 = vdwg.mxu0
    %v1793 = vadd.f32 %v257, %v1635
    %v1794 = vadd.f32 %v258, %v1640
    %v1795 = vmul.f32 %v1793, 0.5
    %v1796 = vmul.f32 %v1794, 0.5
    %v1797 = vtanh.pop %v1795
    %v1798 = vtanh.pop %v1796
    %v1799 = vmul.f32 %v1797, 0.5
    %v1800 = vmul.f32 %v1798, 0.5
    %v1801 = vadd.f32 %v1799, 0.5
    %v1802 = vadd.f32 %v1800, 0.5
    %v1803 = vadd.f32 %v261, %v1710
    %v1804 = vadd.f32 %v262, %v1715
    %v1805 = vmul.f32 %v1803, 0.5
    %v1806 = vmul.f32 %v1804, 0.5
    %v1807 = vtanh.pop %v1805
    %v1808 = vtanh.pop %v1806
    %v1809 = vmul.f32 %v1807, 0.5
    %v1810 = vmul.f32 %v1808, 0.5
    %v1811 = vadd.f32 %v1809, 0.5
    %v1812 = vadd.f32 %v1810, 0.5
    %v1813 = vmul.f32 %v1801, %v1785
    %v1814 = vmul.f32 %v1802, %v1790
    %v1815 = vadd.f32 %v265, %v1813
    %v1816 = vadd.f32 %v266, %v1814
    %v1817 = vtanh.pop %v1815
    %v1818 = vtanh.pop %v1816
    %v1819 = vsub.f32 %v1560, %v1817
    %v1820 = vsub.f32 %v1561, %v1818
    %v1821 = vmul.f32 %v1811, %v1819
    %v1822 = vmul.f32 %v1812, %v1820
    %v1823 = vadd.f32 %v1817, %v1821
    %v1824 = vadd.f32 %v1818, %v1822
    %v1826 = vsel %vm509, %v1823, 0
    %v1829 = vsel %vm509, %v1824, 0
    %1831 = vmatprep.subr.mxu0 0.0
    %1832 = vmatpush1.msra.mxu0 %v77
    %1833 = vmatprep.subr.mxu0 0.0
    %1834 = vmatpush1.msra.mxu0 %v78
    %1835 = vmatprep.subr.mxu0 0.0
    %1836 = vmatpush1.msra.mxu0 %v79
    %1837 = vmatprep.subr.mxu0 0.0
    %1838 = vmatpush1.msra.mxu0 %v80
    %1839 = vmatprep.subr.mxu0 0.0
    %1840 = vmatpush1.msra.mxu0 0.0
    %1841 = vmatprep.subr.mxu0 0.0
    %1842 = vmatpush1.msra.mxu0 0.0
    %1843 = vmatprep.subr.mxu0 0.0
    %1844 = vmatpush1.msra.mxu0 0.0
    %1845 = vmatprep.subr.mxu0 0.0
    %1846 = vmatpush1.msra.mxu0 0.0
    %1847 = vmatprep.subr.mxu0 0.0
    %1848 = vmatpush1.msra.mxu0 0.0
    %1849 = vmatprep.subr.mxu0 0.0
    %1850 = vmatpush1.msra.mxu0 0.0
    %1851 = vmatprep.subr.mxu0 0.0
    %1852 = vmatpush1.msra.mxu0 0.0
    %1853 = vmatprep.subr.mxu0 0.0
    %1854 = vmatpush1.msra.mxu0 0.0
    %1855 = vmatprep.subr.mxu0 0.0
    %1856 = vmatpush1.msra.mxu0 0.0
    %1857 = vmatprep.subr.mxu0 0.0
    %1858 = vmatpush1.msra.mxu0 0.0
    %1859 = vmatprep.subr.mxu0 0.0
    %1860 = vmatpush1.msra.mxu0 0.0
    %1861 = vmatprep.subr.mxu0 0.0
    %1862 = vmatpush1.msra.mxu0 0.0
    %1863 = vmatprep.subr.mxu0 0.0
    %1864 = vmatpush1.msra.mxu0 0.0
    %1865 = vmatprep.subr.mxu0 0.0
    %1866 = vmatpush1.msra.mxu0 0.0
    %1867 = vmatprep.subr.mxu0 0.0
    %1868 = vmatpush1.msra.mxu0 0.0
    %1869 = vmatprep.subr.mxu0 0.0
    %1870 = vmatpush1.msra.mxu0 0.0
    %1871 = vmatprep.subr.mxu0 0.0
    %1872 = vmatpush1.msra.mxu0 0.0
    %1873 = vmatprep.subr.mxu0 0.0
    %1874 = vmatpush1.msra.mxu0 0.0
    %1875 = vmatprep.subr.mxu0 0.0
    %1876 = vmatpush1.msra.mxu0 0.0
    %1877 = vmatprep.subr.mxu0 0.0
    %1878 = vmatpush1.msra.mxu0 0.0
    %1879 = vmatprep.subr.mxu0 0.0
    %1880 = vmatpush1.msra.mxu0 0.0
    %1881 = vmatprep.subr.mxu0 0.0
    %1882 = vmatpush1.msra.mxu0 0.0
    %1883 = vmatprep.subr.mxu0 0.0
    %1884 = vmatpush1.msra.mxu0 0.0
    %1885 = vmatprep.subr.mxu0 0.0
    %1886 = vmatpush1.msra.mxu0 0.0
    %1887 = vmatprep.subr.mxu0 0.0
    %1888 = vmatpush1.msra.mxu0 0.0
    %1889 = vmatprep.subr.mxu0 0.0
    %1890 = vmatpush1.msra.mxu0 0.0
    %1891 = vmatprep.subr.mxu0 0.0
    %1892 = vmatpush1.msra.mxu0 0.0
    %1893 = vmatprep.subr.mxu0 0.0
    %1894 = vmatpush1.msra.mxu0 0.0
    %1895 = vmatprep.mubr.f32.mxu0 0.0
    %1896 = vmatmul.mubr.f32.gmra.mrb[0].mxu0 %v1826
    %v1897 = vpop.f32.mrb[0].mxu0
    %v1898 = vadd.f32 %v470, %v1897
    %v1899 = vpop.f32.mrb[0].mxu0
    %1900 = vmatprep.mubr.f32.mxu0 0.0
    %1901 = vmatmul.mubr.f32.gmra.mrb[0].mxu0 %v1829
    %v1902 = vpop.f32.mrb[0].mxu0
    %v1903 = vadd.f32 %v470, %v1902
    %v1904 = vpop.f32.mrb[0].mxu0
    %1905 = vdwg.mxu0
    %1906 = vmatprep.subr.mxu0 0.0
    %1907 = vmatpush1.msra.mxu0 %v82
    %1908 = vmatprep.subr.mxu0 0.0
    %1909 = vmatpush1.msra.mxu0 %v83
    %1910 = vmatprep.subr.mxu0 0.0
    %1911 = vmatpush1.msra.mxu0 %v84
    %1912 = vmatprep.subr.mxu0 0.0
    %1913 = vmatpush1.msra.mxu0 %v85
    %1914 = vmatprep.subr.mxu0 0.0
    %1915 = vmatpush1.msra.mxu0 0.0
    %1916 = vmatprep.subr.mxu0 0.0
    %1917 = vmatpush1.msra.mxu0 0.0
    %1918 = vmatprep.subr.mxu0 0.0
    %1919 = vmatpush1.msra.mxu0 0.0
    %1920 = vmatprep.subr.mxu0 0.0
    %1921 = vmatpush1.msra.mxu0 0.0
    %1922 = vmatprep.subr.mxu0 0.0
    %1923 = vmatpush1.msra.mxu0 0.0
    %1924 = vmatprep.subr.mxu0 0.0
    %1925 = vmatpush1.msra.mxu0 0.0
    %1926 = vmatprep.subr.mxu0 0.0
    %1927 = vmatpush1.msra.mxu0 0.0
    %1928 = vmatprep.subr.mxu0 0.0
    %1929 = vmatpush1.msra.mxu0 0.0
    %1930 = vmatprep.subr.mxu0 0.0
    %1931 = vmatpush1.msra.mxu0 0.0
    %1932 = vmatprep.subr.mxu0 0.0
    %1933 = vmatpush1.msra.mxu0 0.0
    %1934 = vmatprep.subr.mxu0 0.0
    %1935 = vmatpush1.msra.mxu0 0.0
    %1936 = vmatprep.subr.mxu0 0.0
    %1937 = vmatpush1.msra.mxu0 0.0
    %1938 = vmatprep.subr.mxu0 0.0
    %1939 = vmatpush1.msra.mxu0 0.0
    %1940 = vmatprep.subr.mxu0 0.0
    %1941 = vmatpush1.msra.mxu0 0.0
    %1942 = vmatprep.subr.mxu0 0.0
    %1943 = vmatpush1.msra.mxu0 0.0
    %1944 = vmatprep.subr.mxu0 0.0
    %1945 = vmatpush1.msra.mxu0 0.0
    %1946 = vmatprep.subr.mxu0 0.0
    %1947 = vmatpush1.msra.mxu0 0.0
    %1948 = vmatprep.subr.mxu0 0.0
    %1949 = vmatpush1.msra.mxu0 0.0
    %1950 = vmatprep.subr.mxu0 0.0
    %1951 = vmatpush1.msra.mxu0 0.0
    %1952 = vmatprep.subr.mxu0 0.0
    %1953 = vmatpush1.msra.mxu0 0.0
    %1954 = vmatprep.subr.mxu0 0.0
    %1955 = vmatpush1.msra.mxu0 0.0
    %1956 = vmatprep.subr.mxu0 0.0
    %1957 = vmatpush1.msra.mxu0 0.0
    %1958 = vmatprep.subr.mxu0 0.0
    %1959 = vmatpush1.msra.mxu0 0.0
    %1960 = vmatprep.subr.mxu0 0.0
    %1961 = vmatpush1.msra.mxu0 0.0
    %1962 = vmatprep.subr.mxu0 0.0
    %1963 = vmatpush1.msra.mxu0 0.0
    %1964 = vmatprep.subr.mxu0 0.0
    %1965 = vmatpush1.msra.mxu0 0.0
    %1966 = vmatprep.subr.mxu0 0.0
    %1967 = vmatpush1.msra.mxu0 0.0
    %1968 = vmatprep.subr.mxu0 0.0
    %1969 = vmatpush1.msra.mxu0 0.0
    %1970 = vmatprep.mubr.f32.mxu0 0.0
    %1971 = vmatmul.mubr.f32.gmra.mrb[0].mxu0 %v1826
    %v1972 = vpop.f32.mrb[0].mxu0
    %v1973 = vadd.f32 %v484, %v1972
    %v1974 = vpop.f32.mrb[0].mxu0
    %1975 = vmatprep.mubr.f32.mxu0 0.0
    %1976 = vmatmul.mubr.f32.gmra.mrb[0].mxu0 %v1829
    %v1977 = vpop.f32.mrb[0].mxu0
    %v1978 = vadd.f32 %v484, %v1977
    %v1979 = vpop.f32.mrb[0].mxu0
    %1980 = vdwg.mxu0
    %1981 = vmatprep.subr.mxu0 0.0
    %1982 = vmatpush1.msra.mxu0 %v87
    %1983 = vmatprep.subr.mxu0 0.0
    %1984 = vmatpush1.msra.mxu0 %v88
    %1985 = vmatprep.subr.mxu0 0.0
    %1986 = vmatpush1.msra.mxu0 %v89
    %1987 = vmatprep.subr.mxu0 0.0
    %1988 = vmatpush1.msra.mxu0 %v90
    %1989 = vmatprep.subr.mxu0 0.0
    %1990 = vmatpush1.msra.mxu0 0.0
    %1991 = vmatprep.subr.mxu0 0.0
    %1992 = vmatpush1.msra.mxu0 0.0
    %1993 = vmatprep.subr.mxu0 0.0
    %1994 = vmatpush1.msra.mxu0 0.0
    %1995 = vmatprep.subr.mxu0 0.0
    %1996 = vmatpush1.msra.mxu0 0.0
    %1997 = vmatprep.subr.mxu0 0.0
    %1998 = vmatpush1.msra.mxu0 0.0
    %1999 = vmatprep.subr.mxu0 0.0
    %2000 = vmatpush1.msra.mxu0 0.0
    %2001 = vmatprep.subr.mxu0 0.0
    %2002 = vmatpush1.msra.mxu0 0.0
    %2003 = vmatprep.subr.mxu0 0.0
    %2004 = vmatpush1.msra.mxu0 0.0
    %2005 = vmatprep.subr.mxu0 0.0
    %2006 = vmatpush1.msra.mxu0 0.0
    %2007 = vmatprep.subr.mxu0 0.0
    %2008 = vmatpush1.msra.mxu0 0.0
    %2009 = vmatprep.subr.mxu0 0.0
    %2010 = vmatpush1.msra.mxu0 0.0
    %2011 = vmatprep.subr.mxu0 0.0
    %2012 = vmatpush1.msra.mxu0 0.0
    %2013 = vmatprep.subr.mxu0 0.0
    %2014 = vmatpush1.msra.mxu0 0.0
    %2015 = vmatprep.subr.mxu0 0.0
    %2016 = vmatpush1.msra.mxu0 0.0
    %2017 = vmatprep.subr.mxu0 0.0
    %2018 = vmatpush1.msra.mxu0 0.0
    %2019 = vmatprep.subr.mxu0 0.0
    %2020 = vmatpush1.msra.mxu0 0.0
    %2021 = vmatprep.subr.mxu0 0.0
    %2022 = vmatpush1.msra.mxu0 0.0
    %2023 = vmatprep.subr.mxu0 0.0
    %2024 = vmatpush1.msra.mxu0 0.0
    %2025 = vmatprep.subr.mxu0 0.0
    %2026 = vmatpush1.msra.mxu0 0.0
    %2027 = vmatprep.subr.mxu0 0.0
    %2028 = vmatpush1.msra.mxu0 0.0
    %2029 = vmatprep.subr.mxu0 0.0
    %2030 = vmatpush1.msra.mxu0 0.0
    %2031 = vmatprep.subr.mxu0 0.0
    %2032 = vmatpush1.msra.mxu0 0.0
    %2033 = vmatprep.subr.mxu0 0.0
    %2034 = vmatpush1.msra.mxu0 0.0
    %2035 = vmatprep.subr.mxu0 0.0
    %2036 = vmatpush1.msra.mxu0 0.0
    %2037 = vmatprep.subr.mxu0 0.0
    %2038 = vmatpush1.msra.mxu0 0.0
    %2039 = vmatprep.subr.mxu0 0.0
    %2040 = vmatpush1.msra.mxu0 0.0
    %2041 = vmatprep.subr.mxu0 0.0
    %2042 = vmatpush1.msra.mxu0 0.0
    %2043 = vmatprep.subr.mxu0 0.0
    %2044 = vmatpush1.msra.mxu0 0.0
    %2045 = vmatprep.mubr.f32.mxu0 0.0
    %2046 = vmatmul.mubr.f32.gmra.mrb[0].mxu0 %v1826
    %v2047 = vpop.f32.mrb[0].mxu0
    %v2048 = vadd.f32 %v498, %v2047
    %v2049 = vpop.f32.mrb[0].mxu0
    %2050 = vmatprep.mubr.f32.mxu0 0.0
    %2051 = vmatmul.mubr.f32.gmra.mrb[0].mxu0 %v1829
    %v2052 = vpop.f32.mrb[0].mxu0
    %v2053 = vadd.f32 %v498, %v2052
    %v2054 = vpop.f32.mrb[0].mxu0
    %2055 = vdwg.mxu0
    %v2056 = vadd.f32 %v277, %v1898
    %v2057 = vadd.f32 %v278, %v1903
    %v2058 = vmul.f32 %v2056, 0.5
    %v2059 = vmul.f32 %v2057, 0.5
    %v2060 = vtanh.pop %v2058
    %v2061 = vtanh.pop %v2059
    %v2062 = vmul.f32 %v2060, 0.5
    %v2063 = vmul.f32 %v2061, 0.5
    %v2064 = vadd.f32 %v2062, 0.5
    %v2065 = vadd.f32 %v2063, 0.5
    %v2066 = vadd.f32 %v281, %v1973
    %v2067 = vadd.f32 %v282, %v1978
    %v2068 = vmul.f32 %v2066, 0.5
    %v2069 = vmul.f32 %v2067, 0.5
    %v2070 = vtanh.pop %v2068
    %v2071 = vtanh.pop %v2069
    %v2072 = vmul.f32 %v2070, 0.5
    %v2073 = vmul.f32 %v2071, 0.5
    %v2074 = vadd.f32 %v2072, 0.5
    %v2075 = vadd.f32 %v2073, 0.5
    %v2076 = vmul.f32 %v2064, %v2048
    %v2077 = vmul.f32 %v2065, %v2053
    %v2078 = vadd.f32 %v285, %v2076
    %v2079 = vadd.f32 %v286, %v2077
    %v2080 = vtanh.pop %v2078
    %v2081 = vtanh.pop %v2079
    %v2082 = vsub.f32 %v1823, %v2080
    %v2083 = vsub.f32 %v1824, %v2081
    %v2084 = vmul.f32 %v2074, %v2082
    %v2085 = vmul.f32 %v2075, %v2083
    %v2086 = vadd.f32 %v2080, %v2084
    %v2087 = vadd.f32 %v2081, %v2085
    %v2089 = vsel %vm509, %v2086, 0
    %v2092 = vsel %vm509, %v2087, 0
    %2094 = vmatprep.subr.mxu0 0.0
    %2095 = vmatpush1.msra.mxu0 %v77
    %2096 = vmatprep.subr.mxu0 0.0
    %2097 = vmatpush1.msra.mxu0 %v78
    %2098 = vmatprep.subr.mxu0 0.0
    %2099 = vmatpush1.msra.mxu0 %v79
    %2100 = vmatprep.subr.mxu0 0.0
    %2101 = vmatpush1.msra.mxu0 %v80
    %2102 = vmatprep.subr.mxu0 0.0
    %2103 = vmatpush1.msra.mxu0 0.0
    %2104 = vmatprep.subr.mxu0 0.0
    %2105 = vmatpush1.msra.mxu0 0.0
    %2106 = vmatprep.subr.mxu0 0.0
    %2107 = vmatpush1.msra.mxu0 0.0
    %2108 = vmatprep.subr.mxu0 0.0
    %2109 = vmatpush1.msra.mxu0 0.0
    %2110 = vmatprep.subr.mxu0 0.0
    %2111 = vmatpush1.msra.mxu0 0.0
    %2112 = vmatprep.subr.mxu0 0.0
    %2113 = vmatpush1.msra.mxu0 0.0
    %2114 = vmatprep.subr.mxu0 0.0
    %2115 = vmatpush1.msra.mxu0 0.0
    %2116 = vmatprep.subr.mxu0 0.0
    %2117 = vmatpush1.msra.mxu0 0.0
    %2118 = vmatprep.subr.mxu0 0.0
    %2119 = vmatpush1.msra.mxu0 0.0
    %2120 = vmatprep.subr.mxu0 0.0
    %2121 = vmatpush1.msra.mxu0 0.0
    %2122 = vmatprep.subr.mxu0 0.0
    %2123 = vmatpush1.msra.mxu0 0.0
    %2124 = vmatprep.subr.mxu0 0.0
    %2125 = vmatpush1.msra.mxu0 0.0
    %2126 = vmatprep.subr.mxu0 0.0
    %2127 = vmatpush1.msra.mxu0 0.0
    %2128 = vmatprep.subr.mxu0 0.0
    %2129 = vmatpush1.msra.mxu0 0.0
    %2130 = vmatprep.subr.mxu0 0.0
    %2131 = vmatpush1.msra.mxu0 0.0
    %2132 = vmatprep.subr.mxu0 0.0
    %2133 = vmatpush1.msra.mxu0 0.0
    %2134 = vmatprep.subr.mxu0 0.0
    %2135 = vmatpush1.msra.mxu0 0.0
    %2136 = vmatprep.subr.mxu0 0.0
    %2137 = vmatpush1.msra.mxu0 0.0
    %2138 = vmatprep.subr.mxu0 0.0
    %2139 = vmatpush1.msra.mxu0 0.0
    %2140 = vmatprep.subr.mxu0 0.0
    %2141 = vmatpush1.msra.mxu0 0.0
    %2142 = vmatprep.subr.mxu0 0.0
    %2143 = vmatpush1.msra.mxu0 0.0
    %2144 = vmatprep.subr.mxu0 0.0
    %2145 = vmatpush1.msra.mxu0 0.0
    %2146 = vmatprep.subr.mxu0 0.0
    %2147 = vmatpush1.msra.mxu0 0.0
    %2148 = vmatprep.subr.mxu0 0.0
    %2149 = vmatpush1.msra.mxu0 0.0
    %2150 = vmatprep.subr.mxu0 0.0
    %2151 = vmatpush1.msra.mxu0 0.0
    %2152 = vmatprep.subr.mxu0 0.0
    %2153 = vmatpush1.msra.mxu0 0.0
    %2154 = vmatprep.subr.mxu0 0.0
    %2155 = vmatpush1.msra.mxu0 0.0
    %2156 = vmatprep.subr.mxu0 0.0
    %2157 = vmatpush1.msra.mxu0 0.0
    %2158 = vmatprep.mubr.f32.mxu0 0.0
    %2159 = vmatmul.mubr.f32.gmra.mrb[0].mxu0 %v2089
    %v2160 = vpop.f32.mrb[0].mxu0
    %v2161 = vadd.f32 %v470, %v2160
    %v2162 = vpop.f32.mrb[0].mxu0
    %2163 = vmatprep.mubr.f32.mxu0 0.0
    %2164 = vmatmul.mubr.f32.gmra.mrb[0].mxu0 %v2092
    %v2165 = vpop.f32.mrb[0].mxu0
    %v2166 = vadd.f32 %v470, %v2165
    %v2167 = vpop.f32.mrb[0].mxu0
    %2168 = vdwg.mxu0
    %2169 = vmatprep.subr.mxu0 0.0
    %2170 = vmatpush1.msra.mxu0 %v82
    %2171 = vmatprep.subr.mxu0 0.0
    %2172 = vmatpush1.msra.mxu0 %v83
    %2173 = vmatprep.subr.mxu0 0.0
    %2174 = vmatpush1.msra.mxu0 %v84
    %2175 = vmatprep.subr.mxu0 0.0
    %2176 = vmatpush1.msra.mxu0 %v85
    %2177 = vmatprep.subr.mxu0 0.0
    %2178 = vmatpush1.msra.mxu0 0.0
    %2179 = vmatprep.subr.mxu0 0.0
    %2180 = vmatpush1.msra.mxu0 0.0
    %2181 = vmatprep.subr.mxu0 0.0
    %2182 = vmatpush1.msra.mxu0 0.0
    %2183 = vmatprep.subr.mxu0 0.0
    %2184 = vmatpush1.msra.mxu0 0.0
    %2185 = vmatprep.subr.mxu0 0.0
    %2186 = vmatpush1.msra.mxu0 0.0
    %2187 = vmatprep.subr.mxu0 0.0
    %2188 = vmatpush1.msra.mxu0 0.0
    %2189 = vmatprep.subr.mxu0 0.0
    %2190 = vmatpush1.msra.mxu0 0.0
    %2191 = vmatprep.subr.mxu0 0.0
    %2192 = vmatpush1.msra.mxu0 0.0
    %2193 = vmatprep.subr.mxu0 0.0
    %2194 = vmatpush1.msra.mxu0 0.0
    %2195 = vmatprep.subr.mxu0 0.0
    %2196 = vmatpush1.msra.mxu0 0.0
    %2197 = vmatprep.subr.mxu0 0.0
    %2198 = vmatpush1.msra.mxu0 0.0
    %2199 = vmatprep.subr.mxu0 0.0
    %2200 = vmatpush1.msra.mxu0 0.0
    %2201 = vmatprep.subr.mxu0 0.0
    %2202 = vmatpush1.msra.mxu0 0.0
    %2203 = vmatprep.subr.mxu0 0.0
    %2204 = vmatpush1.msra.mxu0 0.0
    %2205 = vmatprep.subr.mxu0 0.0
    %2206 = vmatpush1.msra.mxu0 0.0
    %2207 = vmatprep.subr.mxu0 0.0
    %2208 = vmatpush1.msra.mxu0 0.0
    %2209 = vmatprep.subr.mxu0 0.0
    %2210 = vmatpush1.msra.mxu0 0.0
    %2211 = vmatprep.subr.mxu0 0.0
    %2212 = vmatpush1.msra.mxu0 0.0
    %2213 = vmatprep.subr.mxu0 0.0
    %2214 = vmatpush1.msra.mxu0 0.0
    %2215 = vmatprep.subr.mxu0 0.0
    %2216 = vmatpush1.msra.mxu0 0.0
    %2217 = vmatprep.subr.mxu0 0.0
    %2218 = vmatpush1.msra.mxu0 0.0
    %2219 = vmatprep.subr.mxu0 0.0
    %2220 = vmatpush1.msra.mxu0 0.0
    %2221 = vmatprep.subr.mxu0 0.0
    %2222 = vmatpush1.msra.mxu0 0.0
    %2223 = vmatprep.subr.mxu0 0.0
    %2224 = vmatpush1.msra.mxu0 0.0
    %2225 = vmatprep.subr.mxu0 0.0
    %2226 = vmatpush1.msra.mxu0 0.0
    %2227 = vmatprep.subr.mxu0 0.0
    %2228 = vmatpush1.msra.mxu0 0.0
    %2229 = vmatprep.subr.mxu0 0.0
    %2230 = vmatpush1.msra.mxu0 0.0
    %2231 = vmatprep.subr.mxu0 0.0
    %2232 = vmatpush1.msra.mxu0 0.0
    %2233 = vmatprep.mubr.f32.mxu0 0.0
    %2234 = vmatmul.mubr.f32.gmra.mrb[0].mxu0 %v2089
    %v2235 = vpop.f32.mrb[0].mxu0
    %v2236 = vadd.f32 %v484, %v2235
    %v2237 = vpop.f32.mrb[0].mxu0
    %2238 = vmatprep.mubr.f32.mxu0 0.0
    %2239 = vmatmul.mubr.f32.gmra.mrb[0].mxu0 %v2092
    %v2240 = vpop.f32.mrb[0].mxu0
    %v2241 = vadd.f32 %v484, %v2240
    %v2242 = vpop.f32.mrb[0].mxu0
    %2243 = vdwg.mxu0
    %2244 = vmatprep.subr.mxu0 0.0
    %2245 = vmatpush1.msra.mxu0 %v87
    %2246 = vmatprep.subr.mxu0 0.0
    %2247 = vmatpush1.msra.mxu0 %v88
    %2248 = vmatprep.subr.mxu0 0.0
    %2249 = vmatpush1.msra.mxu0 %v89
    %2250 = vmatprep.subr.mxu0 0.0
    %2251 = vmatpush1.msra.mxu0 %v90
    %2252 = vmatprep.subr.mxu0 0.0
    %2253 = vmatpush1.msra.mxu0 0.0
    %2254 = vmatprep.subr.mxu0 0.0
    %2255 = vmatpush1.msra.mxu0 0.0
    %2256 = vmatprep.subr.mxu0 0.0
    %2257 = vmatpush1.msra.mxu0 0.0
    %2258 = vmatprep.subr.mxu0 0.0
    %2259 = vmatpush1.msra.mxu0 0.0
    %2260 = vmatprep.subr.mxu0 0.0
    %2261 = vmatpush1.msra.mxu0 0.0
    %2262 = vmatprep.subr.mxu0 0.0
    %2263 = vmatpush1.msra.mxu0 0.0
    %2264 = vmatprep.subr.mxu0 0.0
    %2265 = vmatpush1.msra.mxu0 0.0
    %2266 = vmatprep.subr.mxu0 0.0
    %2267 = vmatpush1.msra.mxu0 0.0
    %2268 = vmatprep.subr.mxu0 0.0
    %2269 = vmatpush1.msra.mxu0 0.0
    %2270 = vmatprep.subr.mxu0 0.0
    %2271 = vmatpush1.msra.mxu0 0.0
    %2272 = vmatprep.subr.mxu0 0.0
    %2273 = vmatpush1.msra.mxu0 0.0
    %2274 = vmatprep.subr.mxu0 0.0
    %2275 = vmatpush1.msra.mxu0 0.0
    %2276 = vmatprep.subr.mxu0 0.0
    %2277 = vmatpush1.msra.mxu0 0.0
    %2278 = vmatprep.subr.mxu0 0.0
    %2279 = vmatpush1.msra.mxu0 0.0
    %2280 = vmatprep.subr.mxu0 0.0
    %2281 = vmatpush1.msra.mxu0 0.0
    %2282 = vmatprep.subr.mxu0 0.0
    %2283 = vmatpush1.msra.mxu0 0.0
    %2284 = vmatprep.subr.mxu0 0.0
    %2285 = vmatpush1.msra.mxu0 0.0
    %2286 = vmatprep.subr.mxu0 0.0
    %2287 = vmatpush1.msra.mxu0 0.0
    %2288 = vmatprep.subr.mxu0 0.0
    %2289 = vmatpush1.msra.mxu0 0.0
    %2290 = vmatprep.subr.mxu0 0.0
    %2291 = vmatpush1.msra.mxu0 0.0
    %2292 = vmatprep.subr.mxu0 0.0
    %2293 = vmatpush1.msra.mxu0 0.0
    %2294 = vmatprep.subr.mxu0 0.0
    %2295 = vmatpush1.msra.mxu0 0.0
    %2296 = vmatprep.subr.mxu0 0.0
    %2297 = vmatpush1.msra.mxu0 0.0
    %2298 = vmatprep.subr.mxu0 0.0
    %2299 = vmatpush1.msra.mxu0 0.0
    %2300 = vmatprep.subr.mxu0 0.0
    %2301 = vmatpush1.msra.mxu0 0.0
    %2302 = vmatprep.subr.mxu0 0.0
    %2303 = vmatpush1.msra.mxu0 0.0
    %2304 = vmatprep.subr.mxu0 0.0
    %2305 = vmatpush1.msra.mxu0 0.0
    %2306 = vmatprep.subr.mxu0 0.0
    %2307 = vmatpush1.msra.mxu0 0.0
    %2308 = vmatprep.mubr.f32.mxu0 0.0
    %2309 = vmatmul.mubr.f32.gmra.mrb[0].mxu0 %v2089
    %v2310 = vpop.f32.mrb[0].mxu0
    %v2311 = vadd.f32 %v498, %v2310
    %v2312 = vpop.f32.mrb[0].mxu0
    %2313 = vmatprep.mubr.f32.mxu0 0.0
    %2314 = vmatmul.mubr.f32.gmra.mrb[0].mxu0 %v2092
    %v2315 = vpop.f32.mrb[0].mxu0
    %v2316 = vadd.f32 %v498, %v2315
    %v2317 = vpop.f32.mrb[0].mxu0
    %2318 = vdwg.mxu0
    %v2319 = vadd.f32 %v297, %v2161
    %v2320 = vadd.f32 %v298, %v2166
    %v2321 = vmul.f32 %v2319, 0.5
    %v2322 = vmul.f32 %v2320, 0.5
    %v2323 = vtanh.pop %v2321
    %v2324 = vtanh.pop %v2322
    %v2325 = vmul.f32 %v2323, 0.5
    %v2326 = vmul.f32 %v2324, 0.5
    %v2327 = vadd.f32 %v2325, 0.5
    %v2328 = vadd.f32 %v2326, 0.5
    %v2329 = vadd.f32 %v301, %v2236
    %v2330 = vadd.f32 %v302, %v2241
    %v2331 = vmul.f32 %v2329, 0.5
    %v2332 = vmul.f32 %v2330, 0.5
    %v2333 = vtanh.pop %v2331
    %v2334 = vtanh.pop %v2332
    %v2335 = vmul.f32 %v2333, 0.5
    %v2336 = vmul.f32 %v2334, 0.5
    %v2337 = vadd.f32 %v2335, 0.5
    %v2338 = vadd.f32 %v2336, 0.5
    %v2339 = vmul.f32 %v2327, %v2311
    %v2340 = vmul.f32 %v2328, %v2316
    %v2341 = vadd.f32 %v305, %v2339
    %v2342 = vadd.f32 %v306, %v2340
    %v2343 = vtanh.pop %v2341
    %v2344 = vtanh.pop %v2342
    %v2345 = vsub.f32 %v2086, %v2343
    %v2346 = vsub.f32 %v2087, %v2344
    %v2347 = vmul.f32 %v2337, %v2345
    %v2348 = vmul.f32 %v2338, %v2346
    %v2349 = vadd.f32 %v2343, %v2347
    %v2350 = vadd.f32 %v2344, %v2348
    %v2352 = vsel %vm509, %v2349, 0
    %v2355 = vsel %vm509, %v2350, 0
    %2357 = vmatprep.subr.mxu0 0.0
    %2358 = vmatpush1.msra.mxu0 %v77
    %2359 = vmatprep.subr.mxu0 0.0
    %2360 = vmatpush1.msra.mxu0 %v78
    %2361 = vmatprep.subr.mxu0 0.0
    %2362 = vmatpush1.msra.mxu0 %v79
    %2363 = vmatprep.subr.mxu0 0.0
    %2364 = vmatpush1.msra.mxu0 %v80
    %2365 = vmatprep.subr.mxu0 0.0
    %2366 = vmatpush1.msra.mxu0 0.0
    %2367 = vmatprep.subr.mxu0 0.0
    %2368 = vmatpush1.msra.mxu0 0.0
    %2369 = vmatprep.subr.mxu0 0.0
    %2370 = vmatpush1.msra.mxu0 0.0
    %2371 = vmatprep.subr.mxu0 0.0
    %2372 = vmatpush1.msra.mxu0 0.0
    %2373 = vmatprep.subr.mxu0 0.0
    %2374 = vmatpush1.msra.mxu0 0.0
    %2375 = vmatprep.subr.mxu0 0.0
    %2376 = vmatpush1.msra.mxu0 0.0
    %2377 = vmatprep.subr.mxu0 0.0
    %2378 = vmatpush1.msra.mxu0 0.0
    %2379 = vmatprep.subr.mxu0 0.0
    %2380 = vmatpush1.msra.mxu0 0.0
    %2381 = vmatprep.subr.mxu0 0.0
    %2382 = vmatpush1.msra.mxu0 0.0
    %2383 = vmatprep.subr.mxu0 0.0
    %2384 = vmatpush1.msra.mxu0 0.0
    %2385 = vmatprep.subr.mxu0 0.0
    %2386 = vmatpush1.msra.mxu0 0.0
    %2387 = vmatprep.subr.mxu0 0.0
    %2388 = vmatpush1.msra.mxu0 0.0
    %2389 = vmatprep.subr.mxu0 0.0
    %2390 = vmatpush1.msra.mxu0 0.0
    %2391 = vmatprep.subr.mxu0 0.0
    %2392 = vmatpush1.msra.mxu0 0.0
    %2393 = vmatprep.subr.mxu0 0.0
    %2394 = vmatpush1.msra.mxu0 0.0
    %2395 = vmatprep.subr.mxu0 0.0
    %2396 = vmatpush1.msra.mxu0 0.0
    %2397 = vmatprep.subr.mxu0 0.0
    %2398 = vmatpush1.msra.mxu0 0.0
    %2399 = vmatprep.subr.mxu0 0.0
    %2400 = vmatpush1.msra.mxu0 0.0
    %2401 = vmatprep.subr.mxu0 0.0
    %2402 = vmatpush1.msra.mxu0 0.0
    %2403 = vmatprep.subr.mxu0 0.0
    %2404 = vmatpush1.msra.mxu0 0.0
    %2405 = vmatprep.subr.mxu0 0.0
    %2406 = vmatpush1.msra.mxu0 0.0
    %2407 = vmatprep.subr.mxu0 0.0
    %2408 = vmatpush1.msra.mxu0 0.0
    %2409 = vmatprep.subr.mxu0 0.0
    %2410 = vmatpush1.msra.mxu0 0.0
    %2411 = vmatprep.subr.mxu0 0.0
    %2412 = vmatpush1.msra.mxu0 0.0
    %2413 = vmatprep.subr.mxu0 0.0
    %2414 = vmatpush1.msra.mxu0 0.0
    %2415 = vmatprep.subr.mxu0 0.0
    %2416 = vmatpush1.msra.mxu0 0.0
    %2417 = vmatprep.subr.mxu0 0.0
    %2418 = vmatpush1.msra.mxu0 0.0
    %2419 = vmatprep.subr.mxu0 0.0
    %2420 = vmatpush1.msra.mxu0 0.0
    %2421 = vmatprep.mubr.f32.mxu0 0.0
    %2422 = vmatmul.mubr.f32.gmra.mrb[0].mxu0 %v2352
    %v2423 = vpop.f32.mrb[0].mxu0
    %v2424 = vadd.f32 %v470, %v2423
    %v2425 = vpop.f32.mrb[0].mxu0
    %2426 = vmatprep.mubr.f32.mxu0 0.0
    %2427 = vmatmul.mubr.f32.gmra.mrb[0].mxu0 %v2355
    %v2428 = vpop.f32.mrb[0].mxu0
    %v2429 = vadd.f32 %v470, %v2428
    %v2430 = vpop.f32.mrb[0].mxu0
    %2431 = vdwg.mxu0
    %2432 = vmatprep.subr.mxu0 0.0
    %2433 = vmatpush1.msra.mxu0 %v82
    %2434 = vmatprep.subr.mxu0 0.0
    %2435 = vmatpush1.msra.mxu0 %v83
    %2436 = vmatprep.subr.mxu0 0.0
    %2437 = vmatpush1.msra.mxu0 %v84
    %2438 = vmatprep.subr.mxu0 0.0
    %2439 = vmatpush1.msra.mxu0 %v85
    %2440 = vmatprep.subr.mxu0 0.0
    %2441 = vmatpush1.msra.mxu0 0.0
    %2442 = vmatprep.subr.mxu0 0.0
    %2443 = vmatpush1.msra.mxu0 0.0
    %2444 = vmatprep.subr.mxu0 0.0
    %2445 = vmatpush1.msra.mxu0 0.0
    %2446 = vmatprep.subr.mxu0 0.0
    %2447 = vmatpush1.msra.mxu0 0.0
    %2448 = vmatprep.subr.mxu0 0.0
    %2449 = vmatpush1.msra.mxu0 0.0
    %2450 = vmatprep.subr.mxu0 0.0
    %2451 = vmatpush1.msra.mxu0 0.0
    %2452 = vmatprep.subr.mxu0 0.0
    %2453 = vmatpush1.msra.mxu0 0.0
    %2454 = vmatprep.subr.mxu0 0.0
    %2455 = vmatpush1.msra.mxu0 0.0
    %2456 = vmatprep.subr.mxu0 0.0
    %2457 = vmatpush1.msra.mxu0 0.0
    %2458 = vmatprep.subr.mxu0 0.0
    %2459 = vmatpush1.msra.mxu0 0.0
    %2460 = vmatprep.subr.mxu0 0.0
    %2461 = vmatpush1.msra.mxu0 0.0
    %2462 = vmatprep.subr.mxu0 0.0
    %2463 = vmatpush1.msra.mxu0 0.0
    %2464 = vmatprep.subr.mxu0 0.0
    %2465 = vmatpush1.msra.mxu0 0.0
    %2466 = vmatprep.subr.mxu0 0.0
    %2467 = vmatpush1.msra.mxu0 0.0
    %2468 = vmatprep.subr.mxu0 0.0
    %2469 = vmatpush1.msra.mxu0 0.0
    %2470 = vmatprep.subr.mxu0 0.0
    %2471 = vmatpush1.msra.mxu0 0.0
    %2472 = vmatprep.subr.mxu0 0.0
    %2473 = vmatpush1.msra.mxu0 0.0
    %2474 = vmatprep.subr.mxu0 0.0
    %2475 = vmatpush1.msra.mxu0 0.0
    %2476 = vmatprep.subr.mxu0 0.0
    %2477 = vmatpush1.msra.mxu0 0.0
    %2478 = vmatprep.subr.mxu0 0.0
    %2479 = vmatpush1.msra.mxu0 0.0
    %2480 = vmatprep.subr.mxu0 0.0
    %2481 = vmatpush1.msra.mxu0 0.0
    %2482 = vmatprep.subr.mxu0 0.0
    %2483 = vmatpush1.msra.mxu0 0.0
    %2484 = vmatprep.subr.mxu0 0.0
    %2485 = vmatpush1.msra.mxu0 0.0
    %2486 = vmatprep.subr.mxu0 0.0
    %2487 = vmatpush1.msra.mxu0 0.0
    %2488 = vmatprep.subr.mxu0 0.0
    %2489 = vmatpush1.msra.mxu0 0.0
    %2490 = vmatprep.subr.mxu0 0.0
    %2491 = vmatpush1.msra.mxu0 0.0
    %2492 = vmatprep.subr.mxu0 0.0
    %2493 = vmatpush1.msra.mxu0 0.0
    %2494 = vmatprep.subr.mxu0 0.0
    %2495 = vmatpush1.msra.mxu0 0.0
    %2496 = vmatprep.mubr.f32.mxu0 0.0
    %2497 = vmatmul.mubr.f32.gmra.mrb[0].mxu0 %v2352
    %v2498 = vpop.f32.mrb[0].mxu0
    %v2499 = vadd.f32 %v484, %v2498
    %v2500 = vpop.f32.mrb[0].mxu0
    %2501 = vmatprep.mubr.f32.mxu0 0.0
    %2502 = vmatmul.mubr.f32.gmra.mrb[0].mxu0 %v2355
    %v2503 = vpop.f32.mrb[0].mxu0
    %v2504 = vadd.f32 %v484, %v2503
    %v2505 = vpop.f32.mrb[0].mxu0
    %2506 = vdwg.mxu0
    %2507 = vmatprep.subr.mxu0 0.0
    %2508 = vmatpush1.msra.mxu0 %v87
    %2509 = vmatprep.subr.mxu0 0.0
    %2510 = vmatpush1.msra.mxu0 %v88
    %2511 = vmatprep.subr.mxu0 0.0
    %2512 = vmatpush1.msra.mxu0 %v89
    %2513 = vmatprep.subr.mxu0 0.0
    %2514 = vmatpush1.msra.mxu0 %v90
    %2515 = vmatprep.subr.mxu0 0.0
    %2516 = vmatpush1.msra.mxu0 0.0
    %2517 = vmatprep.subr.mxu0 0.0
    %2518 = vmatpush1.msra.mxu0 0.0
    %2519 = vmatprep.subr.mxu0 0.0
    %2520 = vmatpush1.msra.mxu0 0.0
    %2521 = vmatprep.subr.mxu0 0.0
    %2522 = vmatpush1.msra.mxu0 0.0
    %2523 = vmatprep.subr.mxu0 0.0
    %2524 = vmatpush1.msra.mxu0 0.0
    %2525 = vmatprep.subr.mxu0 0.0
    %2526 = vmatpush1.msra.mxu0 0.0
    %2527 = vmatprep.subr.mxu0 0.0
    %2528 = vmatpush1.msra.mxu0 0.0
    %2529 = vmatprep.subr.mxu0 0.0
    %2530 = vmatpush1.msra.mxu0 0.0
    %2531 = vmatprep.subr.mxu0 0.0
    %2532 = vmatpush1.msra.mxu0 0.0
    %2533 = vmatprep.subr.mxu0 0.0
    %2534 = vmatpush1.msra.mxu0 0.0
    %2535 = vmatprep.subr.mxu0 0.0
    %2536 = vmatpush1.msra.mxu0 0.0
    %2537 = vmatprep.subr.mxu0 0.0
    %2538 = vmatpush1.msra.mxu0 0.0
    %2539 = vmatprep.subr.mxu0 0.0
    %2540 = vmatpush1.msra.mxu0 0.0
    %2541 = vmatprep.subr.mxu0 0.0
    %2542 = vmatpush1.msra.mxu0 0.0
    %2543 = vmatprep.subr.mxu0 0.0
    %2544 = vmatpush1.msra.mxu0 0.0
    %2545 = vmatprep.subr.mxu0 0.0
    %2546 = vmatpush1.msra.mxu0 0.0
    %2547 = vmatprep.subr.mxu0 0.0
    %2548 = vmatpush1.msra.mxu0 0.0
    %2549 = vmatprep.subr.mxu0 0.0
    %2550 = vmatpush1.msra.mxu0 0.0
    %2551 = vmatprep.subr.mxu0 0.0
    %2552 = vmatpush1.msra.mxu0 0.0
    %2553 = vmatprep.subr.mxu0 0.0
    %2554 = vmatpush1.msra.mxu0 0.0
    %2555 = vmatprep.subr.mxu0 0.0
    %2556 = vmatpush1.msra.mxu0 0.0
    %2557 = vmatprep.subr.mxu0 0.0
    %2558 = vmatpush1.msra.mxu0 0.0
    %2559 = vmatprep.subr.mxu0 0.0
    %2560 = vmatpush1.msra.mxu0 0.0
    %2561 = vmatprep.subr.mxu0 0.0
    %2562 = vmatpush1.msra.mxu0 0.0
    %2563 = vmatprep.subr.mxu0 0.0
    %2564 = vmatpush1.msra.mxu0 0.0
    %2565 = vmatprep.subr.mxu0 0.0
    %2566 = vmatpush1.msra.mxu0 0.0
    %2567 = vmatprep.subr.mxu0 0.0
    %2568 = vmatpush1.msra.mxu0 0.0
    %2569 = vmatprep.subr.mxu0 0.0
    %2570 = vmatpush1.msra.mxu0 0.0
    %2571 = vmatprep.mubr.f32.mxu0 0.0
    %2572 = vmatmul.mubr.f32.gmra.mrb[0].mxu0 %v2352
    %v2573 = vpop.f32.mrb[0].mxu0
    %v2574 = vadd.f32 %v498, %v2573
    %v2575 = vpop.f32.mrb[0].mxu0
    %2576 = vmatprep.mubr.f32.mxu0 0.0
    %2577 = vmatmul.mubr.f32.gmra.mrb[0].mxu0 %v2355
    %v2578 = vpop.f32.mrb[0].mxu0
    %v2579 = vadd.f32 %v498, %v2578
    %v2580 = vpop.f32.mrb[0].mxu0
    %2581 = vdwg.mxu0
    %v2582 = vadd.f32 %v317, %v2424
    %v2583 = vadd.f32 %v318, %v2429
    %v2584 = vmul.f32 %v2582, 0.5
    %v2585 = vmul.f32 %v2583, 0.5
    %v2586 = vtanh.pop %v2584
    %v2587 = vtanh.pop %v2585
    %v2588 = vmul.f32 %v2586, 0.5
    %v2589 = vmul.f32 %v2587, 0.5
    %v2590 = vadd.f32 %v2588, 0.5
    %v2591 = vadd.f32 %v2589, 0.5
    %v2592 = vadd.f32 %v321, %v2499
    %v2593 = vadd.f32 %v322, %v2504
    %v2594 = vmul.f32 %v2592, 0.5
    %v2595 = vmul.f32 %v2593, 0.5
    %v2596 = vtanh.pop %v2594
    %v2597 = vtanh.pop %v2595
    %v2598 = vmul.f32 %v2596, 0.5
    %v2599 = vmul.f32 %v2597, 0.5
    %v2600 = vadd.f32 %v2598, 0.5
    %v2601 = vadd.f32 %v2599, 0.5
    %v2602 = vmul.f32 %v2590, %v2574
    %v2603 = vmul.f32 %v2591, %v2579
    %v2604 = vadd.f32 %v325, %v2602
    %v2605 = vadd.f32 %v326, %v2603
    %v2606 = vtanh.pop %v2604
    %v2607 = vtanh.pop %v2605
    %v2608 = vsub.f32 %v2349, %v2606
    %v2609 = vsub.f32 %v2350, %v2607
    %v2610 = vmul.f32 %v2600, %v2608
    %v2611 = vmul.f32 %v2601, %v2609
    %v2612 = vadd.f32 %v2606, %v2610
    %v2613 = vadd.f32 %v2607, %v2611
    %v2615 = vsel %vm509, %v2612, 0
    %v2618 = vsel %vm509, %v2613, 0
    %2620 = vmatprep.subr.mxu0 0.0
    %2621 = vmatpush1.msra.mxu0 %v77
    %2622 = vmatprep.subr.mxu0 0.0
    %2623 = vmatpush1.msra.mxu0 %v78
    %2624 = vmatprep.subr.mxu0 0.0
    %2625 = vmatpush1.msra.mxu0 %v79
    %2626 = vmatprep.subr.mxu0 0.0
    %2627 = vmatpush1.msra.mxu0 %v80
    %2628 = vmatprep.subr.mxu0 0.0
    %2629 = vmatpush1.msra.mxu0 0.0
    %2630 = vmatprep.subr.mxu0 0.0
    %2631 = vmatpush1.msra.mxu0 0.0
    %2632 = vmatprep.subr.mxu0 0.0
    %2633 = vmatpush1.msra.mxu0 0.0
    %2634 = vmatprep.subr.mxu0 0.0
    %2635 = vmatpush1.msra.mxu0 0.0
    %2636 = vmatprep.subr.mxu0 0.0
    %2637 = vmatpush1.msra.mxu0 0.0
    %2638 = vmatprep.subr.mxu0 0.0
    %2639 = vmatpush1.msra.mxu0 0.0
    %2640 = vmatprep.subr.mxu0 0.0
    %2641 = vmatpush1.msra.mxu0 0.0
    %2642 = vmatprep.subr.mxu0 0.0
    %2643 = vmatpush1.msra.mxu0 0.0
    %2644 = vmatprep.subr.mxu0 0.0
    %2645 = vmatpush1.msra.mxu0 0.0
    %2646 = vmatprep.subr.mxu0 0.0
    %2647 = vmatpush1.msra.mxu0 0.0
    %2648 = vmatprep.subr.mxu0 0.0
    %2649 = vmatpush1.msra.mxu0 0.0
    %2650 = vmatprep.subr.mxu0 0.0
    %2651 = vmatpush1.msra.mxu0 0.0
    %2652 = vmatprep.subr.mxu0 0.0
    %2653 = vmatpush1.msra.mxu0 0.0
    %2654 = vmatprep.subr.mxu0 0.0
    %2655 = vmatpush1.msra.mxu0 0.0
    %2656 = vmatprep.subr.mxu0 0.0
    %2657 = vmatpush1.msra.mxu0 0.0
    %2658 = vmatprep.subr.mxu0 0.0
    %2659 = vmatpush1.msra.mxu0 0.0
    %2660 = vmatprep.subr.mxu0 0.0
    %2661 = vmatpush1.msra.mxu0 0.0
    %2662 = vmatprep.subr.mxu0 0.0
    %2663 = vmatpush1.msra.mxu0 0.0
    %2664 = vmatprep.subr.mxu0 0.0
    %2665 = vmatpush1.msra.mxu0 0.0
    %2666 = vmatprep.subr.mxu0 0.0
    %2667 = vmatpush1.msra.mxu0 0.0
    %2668 = vmatprep.subr.mxu0 0.0
    %2669 = vmatpush1.msra.mxu0 0.0
    %2670 = vmatprep.subr.mxu0 0.0
    %2671 = vmatpush1.msra.mxu0 0.0
    %2672 = vmatprep.subr.mxu0 0.0
    %2673 = vmatpush1.msra.mxu0 0.0
    %2674 = vmatprep.subr.mxu0 0.0
    %2675 = vmatpush1.msra.mxu0 0.0
    %2676 = vmatprep.subr.mxu0 0.0
    %2677 = vmatpush1.msra.mxu0 0.0
    %2678 = vmatprep.subr.mxu0 0.0
    %2679 = vmatpush1.msra.mxu0 0.0
    %2680 = vmatprep.subr.mxu0 0.0
    %2681 = vmatpush1.msra.mxu0 0.0
    %2682 = vmatprep.subr.mxu0 0.0
    %2683 = vmatpush1.msra.mxu0 0.0
    %2684 = vmatprep.mubr.f32.mxu0 0.0
    %2685 = vmatmul.mubr.f32.gmra.mrb[0].mxu0 %v2615
    %v2686 = vpop.f32.mrb[0].mxu0
    %v2687 = vadd.f32 %v470, %v2686
    %v2688 = vpop.f32.mrb[0].mxu0
    %2689 = vmatprep.mubr.f32.mxu0 0.0
    %2690 = vmatmul.mubr.f32.gmra.mrb[0].mxu0 %v2618
    %v2691 = vpop.f32.mrb[0].mxu0
    %v2692 = vadd.f32 %v470, %v2691
    %v2693 = vpop.f32.mrb[0].mxu0
    %2694 = vdwg.mxu0
    %2695 = vmatprep.subr.mxu0 0.0
    %2696 = vmatpush1.msra.mxu0 %v82
    %2697 = vmatprep.subr.mxu0 0.0
    %2698 = vmatpush1.msra.mxu0 %v83
    %2699 = vmatprep.subr.mxu0 0.0
    %2700 = vmatpush1.msra.mxu0 %v84
    %2701 = vmatprep.subr.mxu0 0.0
    %2702 = vmatpush1.msra.mxu0 %v85
    %2703 = vmatprep.subr.mxu0 0.0
    %2704 = vmatpush1.msra.mxu0 0.0
    %2705 = vmatprep.subr.mxu0 0.0
    %2706 = vmatpush1.msra.mxu0 0.0
    %2707 = vmatprep.subr.mxu0 0.0
    %2708 = vmatpush1.msra.mxu0 0.0
    %2709 = vmatprep.subr.mxu0 0.0
    %2710 = vmatpush1.msra.mxu0 0.0
    %2711 = vmatprep.subr.mxu0 0.0
    %2712 = vmatpush1.msra.mxu0 0.0
    %2713 = vmatprep.subr.mxu0 0.0
    %2714 = vmatpush1.msra.mxu0 0.0
    %2715 = vmatprep.subr.mxu0 0.0
    %2716 = vmatpush1.msra.mxu0 0.0
    %2717 = vmatprep.subr.mxu0 0.0
    %2718 = vmatpush1.msra.mxu0 0.0
    %2719 = vmatprep.subr.mxu0 0.0
    %2720 = vmatpush1.msra.mxu0 0.0
    %2721 = vmatprep.subr.mxu0 0.0
    %2722 = vmatpush1.msra.mxu0 0.0
    %2723 = vmatprep.subr.mxu0 0.0
    %2724 = vmatpush1.msra.mxu0 0.0
    %2725 = vmatprep.subr.mxu0 0.0
    %2726 = vmatpush1.msra.mxu0 0.0
    %2727 = vmatprep.subr.mxu0 0.0
    %2728 = vmatpush1.msra.mxu0 0.0
    %2729 = vmatprep.subr.mxu0 0.0
    %2730 = vmatpush1.msra.mxu0 0.0
    %2731 = vmatprep.subr.mxu0 0.0
    %2732 = vmatpush1.msra.mxu0 0.0
    %2733 = vmatprep.subr.mxu0 0.0
    %2734 = vmatpush1.msra.mxu0 0.0
    %2735 = vmatprep.subr.mxu0 0.0
    %2736 = vmatpush1.msra.mxu0 0.0
    %2737 = vmatprep.subr.mxu0 0.0
    %2738 = vmatpush1.msra.mxu0 0.0
    %2739 = vmatprep.subr.mxu0 0.0
    %2740 = vmatpush1.msra.mxu0 0.0
    %2741 = vmatprep.subr.mxu0 0.0
    %2742 = vmatpush1.msra.mxu0 0.0
    %2743 = vmatprep.subr.mxu0 0.0
    %2744 = vmatpush1.msra.mxu0 0.0
    %2745 = vmatprep.subr.mxu0 0.0
    %2746 = vmatpush1.msra.mxu0 0.0
    %2747 = vmatprep.subr.mxu0 0.0
    %2748 = vmatpush1.msra.mxu0 0.0
    %2749 = vmatprep.subr.mxu0 0.0
    %2750 = vmatpush1.msra.mxu0 0.0
    %2751 = vmatprep.subr.mxu0 0.0
    %2752 = vmatpush1.msra.mxu0 0.0
    %2753 = vmatprep.subr.mxu0 0.0
    %2754 = vmatpush1.msra.mxu0 0.0
    %2755 = vmatprep.subr.mxu0 0.0
    %2756 = vmatpush1.msra.mxu0 0.0
    %2757 = vmatprep.subr.mxu0 0.0
    %2758 = vmatpush1.msra.mxu0 0.0
    %2759 = vmatprep.mubr.f32.mxu0 0.0
    %2760 = vmatmul.mubr.f32.gmra.mrb[0].mxu0 %v2615
    %v2761 = vpop.f32.mrb[0].mxu0
    %v2762 = vadd.f32 %v484, %v2761
    %v2763 = vpop.f32.mrb[0].mxu0
    %2764 = vmatprep.mubr.f32.mxu0 0.0
    %2765 = vmatmul.mubr.f32.gmra.mrb[0].mxu0 %v2618
    %v2766 = vpop.f32.mrb[0].mxu0
    %v2767 = vadd.f32 %v484, %v2766
    %v2768 = vpop.f32.mrb[0].mxu0
    %2769 = vdwg.mxu0
    %2770 = vmatprep.subr.mxu0 0.0
    %2771 = vmatpush1.msra.mxu0 %v87
    %2772 = vmatprep.subr.mxu0 0.0
    %2773 = vmatpush1.msra.mxu0 %v88
    %2774 = vmatprep.subr.mxu0 0.0
    %2775 = vmatpush1.msra.mxu0 %v89
    %2776 = vmatprep.subr.mxu0 0.0
    %2777 = vmatpush1.msra.mxu0 %v90
    %2778 = vmatprep.subr.mxu0 0.0
    %2779 = vmatpush1.msra.mxu0 0.0
    %2780 = vmatprep.subr.mxu0 0.0
    %2781 = vmatpush1.msra.mxu0 0.0
    %2782 = vmatprep.subr.mxu0 0.0
    %2783 = vmatpush1.msra.mxu0 0.0
    %2784 = vmatprep.subr.mxu0 0.0
    %2785 = vmatpush1.msra.mxu0 0.0
    %2786 = vmatprep.subr.mxu0 0.0
    %2787 = vmatpush1.msra.mxu0 0.0
    %2788 = vmatprep.subr.mxu0 0.0
    %2789 = vmatpush1.msra.mxu0 0.0
    %2790 = vmatprep.subr.mxu0 0.0
    %2791 = vmatpush1.msra.mxu0 0.0
    %2792 = vmatprep.subr.mxu0 0.0
    %2793 = vmatpush1.msra.mxu0 0.0
    %2794 = vmatprep.subr.mxu0 0.0
    %2795 = vmatpush1.msra.mxu0 0.0
    %2796 = vmatprep.subr.mxu0 0.0
    %2797 = vmatpush1.msra.mxu0 0.0
    %2798 = vmatprep.subr.mxu0 0.0
    %2799 = vmatpush1.msra.mxu0 0.0
    %2800 = vmatprep.subr.mxu0 0.0
    %2801 = vmatpush1.msra.mxu0 0.0
    %2802 = vmatprep.subr.mxu0 0.0
    %2803 = vmatpush1.msra.mxu0 0.0
    %2804 = vmatprep.subr.mxu0 0.0
    %2805 = vmatpush1.msra.mxu0 0.0
    %2806 = vmatprep.subr.mxu0 0.0
    %2807 = vmatpush1.msra.mxu0 0.0
    %2808 = vmatprep.subr.mxu0 0.0
    %2809 = vmatpush1.msra.mxu0 0.0
    %2810 = vmatprep.subr.mxu0 0.0
    %2811 = vmatpush1.msra.mxu0 0.0
    %2812 = vmatprep.subr.mxu0 0.0
    %2813 = vmatpush1.msra.mxu0 0.0
    %2814 = vmatprep.subr.mxu0 0.0
    %2815 = vmatpush1.msra.mxu0 0.0
    %2816 = vmatprep.subr.mxu0 0.0
    %2817 = vmatpush1.msra.mxu0 0.0
    %2818 = vmatprep.subr.mxu0 0.0
    %2819 = vmatpush1.msra.mxu0 0.0
    %2820 = vmatprep.subr.mxu0 0.0
    %2821 = vmatpush1.msra.mxu0 0.0
    %2822 = vmatprep.subr.mxu0 0.0
    %2823 = vmatpush1.msra.mxu0 0.0
    %2824 = vmatprep.subr.mxu0 0.0
    %2825 = vmatpush1.msra.mxu0 0.0
    %2826 = vmatprep.subr.mxu0 0.0
    %2827 = vmatpush1.msra.mxu0 0.0
    %2828 = vmatprep.subr.mxu0 0.0
    %2829 = vmatpush1.msra.mxu0 0.0
    %2830 = vmatprep.subr.mxu0 0.0
    %2831 = vmatpush1.msra.mxu0 0.0
    %2832 = vmatprep.subr.mxu0 0.0
    %2833 = vmatpush1.msra.mxu0 0.0
    %2834 = vmatprep.mubr.f32.mxu0 0.0
    %2835 = vmatmul.mubr.f32.gmra.mrb[0].mxu0 %v2615
    %v2836 = vpop.f32.mrb[0].mxu0
    %v2837 = vadd.f32 %v498, %v2836
    %v2838 = vpop.f32.mrb[0].mxu0
    %2839 = vmatprep.mubr.f32.mxu0 0.0
    %2840 = vmatmul.mubr.f32.gmra.mrb[0].mxu0 %v2618
    %v2841 = vpop.f32.mrb[0].mxu0
    %v2842 = vadd.f32 %v498, %v2841
    %v2843 = vpop.f32.mrb[0].mxu0
    %2844 = vdwg.mxu0
    %v2845 = vadd.f32 %v337, %v2687
    %v2846 = vadd.f32 %v338, %v2692
    %v2847 = vmul.f32 %v2845, 0.5
    %v2848 = vmul.f32 %v2846, 0.5
    %v2849 = vtanh.pop %v2847
    %v2850 = vtanh.pop %v2848
    %v2851 = vmul.f32 %v2849, 0.5
    %v2852 = vmul.f32 %v2850, 0.5
    %v2853 = vadd.f32 %v2851, 0.5
    %v2854 = vadd.f32 %v2852, 0.5
    %v2855 = vadd.f32 %v341, %v2762
    %v2856 = vadd.f32 %v342, %v2767
    %v2857 = vmul.f32 %v2855, 0.5
    %v2858 = vmul.f32 %v2856, 0.5
    %v2859 = vtanh.pop %v2857
    %v2860 = vtanh.pop %v2858
    %v2861 = vmul.f32 %v2859, 0.5
    %v2862 = vmul.f32 %v2860, 0.5
    %v2863 = vadd.f32 %v2861, 0.5
    %v2864 = vadd.f32 %v2862, 0.5
    %v2865 = vmul.f32 %v2853, %v2837
    %v2866 = vmul.f32 %v2854, %v2842
    %v2867 = vadd.f32 %v345, %v2865
    %v2868 = vadd.f32 %v346, %v2866
    %v2869 = vtanh.pop %v2867
    %v2870 = vtanh.pop %v2868
    %v2871 = vsub.f32 %v2612, %v2869
    %v2872 = vsub.f32 %v2613, %v2870
    %v2873 = vmul.f32 %v2863, %v2871
    %v2874 = vmul.f32 %v2864, %v2872
    %v2875 = vadd.f32 %v2869, %v2873
    %v2876 = vadd.f32 %v2870, %v2874
    %v2878 = vsel %vm509, %v2875, 0
    %v2881 = vsel %vm509, %v2876, 0
    %2883 = vmatprep.subr.mxu0 0.0
    %2884 = vmatpush1.msra.mxu0 %v77
    %2885 = vmatprep.subr.mxu0 0.0
    %2886 = vmatpush1.msra.mxu0 %v78
    %2887 = vmatprep.subr.mxu0 0.0
    %2888 = vmatpush1.msra.mxu0 %v79
    %2889 = vmatprep.subr.mxu0 0.0
    %2890 = vmatpush1.msra.mxu0 %v80
    %2891 = vmatprep.subr.mxu0 0.0
    %2892 = vmatpush1.msra.mxu0 0.0
    %2893 = vmatprep.subr.mxu0 0.0
    %2894 = vmatpush1.msra.mxu0 0.0
    %2895 = vmatprep.subr.mxu0 0.0
    %2896 = vmatpush1.msra.mxu0 0.0
    %2897 = vmatprep.subr.mxu0 0.0
    %2898 = vmatpush1.msra.mxu0 0.0
    %2899 = vmatprep.subr.mxu0 0.0
    %2900 = vmatpush1.msra.mxu0 0.0
    %2901 = vmatprep.subr.mxu0 0.0
    %2902 = vmatpush1.msra.mxu0 0.0
    %2903 = vmatprep.subr.mxu0 0.0
    %2904 = vmatpush1.msra.mxu0 0.0
    %2905 = vmatprep.subr.mxu0 0.0
    %2906 = vmatpush1.msra.mxu0 0.0
    %2907 = vmatprep.subr.mxu0 0.0
    %2908 = vmatpush1.msra.mxu0 0.0
    %2909 = vmatprep.subr.mxu0 0.0
    %2910 = vmatpush1.msra.mxu0 0.0
    %2911 = vmatprep.subr.mxu0 0.0
    %2912 = vmatpush1.msra.mxu0 0.0
    %2913 = vmatprep.subr.mxu0 0.0
    %2914 = vmatpush1.msra.mxu0 0.0
    %2915 = vmatprep.subr.mxu0 0.0
    %2916 = vmatpush1.msra.mxu0 0.0
    %2917 = vmatprep.subr.mxu0 0.0
    %2918 = vmatpush1.msra.mxu0 0.0
    %2919 = vmatprep.subr.mxu0 0.0
    %2920 = vmatpush1.msra.mxu0 0.0
    %2921 = vmatprep.subr.mxu0 0.0
    %2922 = vmatpush1.msra.mxu0 0.0
    %2923 = vmatprep.subr.mxu0 0.0
    %2924 = vmatpush1.msra.mxu0 0.0
    %2925 = vmatprep.subr.mxu0 0.0
    %2926 = vmatpush1.msra.mxu0 0.0
    %2927 = vmatprep.subr.mxu0 0.0
    %2928 = vmatpush1.msra.mxu0 0.0
    %2929 = vmatprep.subr.mxu0 0.0
    %2930 = vmatpush1.msra.mxu0 0.0
    %2931 = vmatprep.subr.mxu0 0.0
    %2932 = vmatpush1.msra.mxu0 0.0
    %2933 = vmatprep.subr.mxu0 0.0
    %2934 = vmatpush1.msra.mxu0 0.0
    %2935 = vmatprep.subr.mxu0 0.0
    %2936 = vmatpush1.msra.mxu0 0.0
    %2937 = vmatprep.subr.mxu0 0.0
    %2938 = vmatpush1.msra.mxu0 0.0
    %2939 = vmatprep.subr.mxu0 0.0
    %2940 = vmatpush1.msra.mxu0 0.0
    %2941 = vmatprep.subr.mxu0 0.0
    %2942 = vmatpush1.msra.mxu0 0.0
    %2943 = vmatprep.subr.mxu0 0.0
    %2944 = vmatpush1.msra.mxu0 0.0
    %2945 = vmatprep.subr.mxu0 0.0
    %2946 = vmatpush1.msra.mxu0 0.0
    %2947 = vmatprep.mubr.f32.mxu0 0.0
    %2948 = vmatmul.mubr.f32.gmra.mrb[0].mxu0 %v2878
    %v2949 = vpop.f32.mrb[0].mxu0
    %v2950 = vadd.f32 %v470, %v2949
    %v2951 = vpop.f32.mrb[0].mxu0
    %2952 = vmatprep.mubr.f32.mxu0 0.0
    %2953 = vmatmul.mubr.f32.gmra.mrb[0].mxu0 %v2881
    %v2954 = vpop.f32.mrb[0].mxu0
    %v2955 = vadd.f32 %v470, %v2954
    %v2956 = vpop.f32.mrb[0].mxu0
    %2957 = vdwg.mxu0
    %2958 = vmatprep.subr.mxu0 0.0
    %2959 = vmatpush1.msra.mxu0 %v82
    %2960 = vmatprep.subr.mxu0 0.0
    %2961 = vmatpush1.msra.mxu0 %v83
    %2962 = vmatprep.subr.mxu0 0.0
    %2963 = vmatpush1.msra.mxu0 %v84
    %2964 = vmatprep.subr.mxu0 0.0
    %2965 = vmatpush1.msra.mxu0 %v85
    %2966 = vmatprep.subr.mxu0 0.0
    %2967 = vmatpush1.msra.mxu0 0.0
    %2968 = vmatprep.subr.mxu0 0.0
    %2969 = vmatpush1.msra.mxu0 0.0
    %2970 = vmatprep.subr.mxu0 0.0
    %2971 = vmatpush1.msra.mxu0 0.0
    %2972 = vmatprep.subr.mxu0 0.0
    %2973 = vmatpush1.msra.mxu0 0.0
    %2974 = vmatprep.subr.mxu0 0.0
    %2975 = vmatpush1.msra.mxu0 0.0
    %2976 = vmatprep.subr.mxu0 0.0
    %2977 = vmatpush1.msra.mxu0 0.0
    %2978 = vmatprep.subr.mxu0 0.0
    %2979 = vmatpush1.msra.mxu0 0.0
    %2980 = vmatprep.subr.mxu0 0.0
    %2981 = vmatpush1.msra.mxu0 0.0
    %2982 = vmatprep.subr.mxu0 0.0
    %2983 = vmatpush1.msra.mxu0 0.0
    %2984 = vmatprep.subr.mxu0 0.0
    %2985 = vmatpush1.msra.mxu0 0.0
    %2986 = vmatprep.subr.mxu0 0.0
    %2987 = vmatpush1.msra.mxu0 0.0
    %2988 = vmatprep.subr.mxu0 0.0
    %2989 = vmatpush1.msra.mxu0 0.0
    %2990 = vmatprep.subr.mxu0 0.0
    %2991 = vmatpush1.msra.mxu0 0.0
    %2992 = vmatprep.subr.mxu0 0.0
    %2993 = vmatpush1.msra.mxu0 0.0
    %2994 = vmatprep.subr.mxu0 0.0
    %2995 = vmatpush1.msra.mxu0 0.0
    %2996 = vmatprep.subr.mxu0 0.0
    %2997 = vmatpush1.msra.mxu0 0.0
    %2998 = vmatprep.subr.mxu0 0.0
    %2999 = vmatpush1.msra.mxu0 0.0
    %3000 = vmatprep.subr.mxu0 0.0
    %3001 = vmatpush1.msra.mxu0 0.0
    %3002 = vmatprep.subr.mxu0 0.0
    %3003 = vmatpush1.msra.mxu0 0.0
    %3004 = vmatprep.subr.mxu0 0.0
    %3005 = vmatpush1.msra.mxu0 0.0
    %3006 = vmatprep.subr.mxu0 0.0
    %3007 = vmatpush1.msra.mxu0 0.0
    %3008 = vmatprep.subr.mxu0 0.0
    %3009 = vmatpush1.msra.mxu0 0.0
    %3010 = vmatprep.subr.mxu0 0.0
    %3011 = vmatpush1.msra.mxu0 0.0
    %3012 = vmatprep.subr.mxu0 0.0
    %3013 = vmatpush1.msra.mxu0 0.0
    %3014 = vmatprep.subr.mxu0 0.0
    %3015 = vmatpush1.msra.mxu0 0.0
    %3016 = vmatprep.subr.mxu0 0.0
    %3017 = vmatpush1.msra.mxu0 0.0
    %3018 = vmatprep.subr.mxu0 0.0
    %3019 = vmatpush1.msra.mxu0 0.0
    %3020 = vmatprep.subr.mxu0 0.0
    %3021 = vmatpush1.msra.mxu0 0.0
    %3022 = vmatprep.mubr.f32.mxu0 0.0
    %3023 = vmatmul.mubr.f32.gmra.mrb[0].mxu0 %v2878
    %v3024 = vpop.f32.mrb[0].mxu0
    %v3025 = vadd.f32 %v484, %v3024
    %v3026 = vpop.f32.mrb[0].mxu0
    %3027 = vmatprep.mubr.f32.mxu0 0.0
    %3028 = vmatmul.mubr.f32.gmra.mrb[0].mxu0 %v2881
    %v3029 = vpop.f32.mrb[0].mxu0
    %v3030 = vadd.f32 %v484, %v3029
    %v3031 = vpop.f32.mrb[0].mxu0
    %3032 = vdwg.mxu0
    %3033 = vmatprep.subr.mxu0 0.0
    %3034 = vmatpush1.msra.mxu0 %v87
    %3035 = vmatprep.subr.mxu0 0.0
    %3036 = vmatpush1.msra.mxu0 %v88
    %3037 = vmatprep.subr.mxu0 0.0
    %3038 = vmatpush1.msra.mxu0 %v89
    %3039 = vmatprep.subr.mxu0 0.0
    %3040 = vmatpush1.msra.mxu0 %v90
    %3041 = vmatprep.subr.mxu0 0.0
    %3042 = vmatpush1.msra.mxu0 0.0
    %3043 = vmatprep.subr.mxu0 0.0
    %3044 = vmatpush1.msra.mxu0 0.0
    %3045 = vmatprep.subr.mxu0 0.0
    %3046 = vmatpush1.msra.mxu0 0.0
    %3047 = vmatprep.subr.mxu0 0.0
    %3048 = vmatpush1.msra.mxu0 0.0
    %3049 = vmatprep.subr.mxu0 0.0
    %3050 = vmatpush1.msra.mxu0 0.0
    %3051 = vmatprep.subr.mxu0 0.0
    %3052 = vmatpush1.msra.mxu0 0.0
    %3053 = vmatprep.subr.mxu0 0.0
    %3054 = vmatpush1.msra.mxu0 0.0
    %3055 = vmatprep.subr.mxu0 0.0
    %3056 = vmatpush1.msra.mxu0 0.0
    %3057 = vmatprep.subr.mxu0 0.0
    %3058 = vmatpush1.msra.mxu0 0.0
    %3059 = vmatprep.subr.mxu0 0.0
    %3060 = vmatpush1.msra.mxu0 0.0
    %3061 = vmatprep.subr.mxu0 0.0
    %3062 = vmatpush1.msra.mxu0 0.0
    %3063 = vmatprep.subr.mxu0 0.0
    %3064 = vmatpush1.msra.mxu0 0.0
    %3065 = vmatprep.subr.mxu0 0.0
    %3066 = vmatpush1.msra.mxu0 0.0
    %3067 = vmatprep.subr.mxu0 0.0
    %3068 = vmatpush1.msra.mxu0 0.0
    %3069 = vmatprep.subr.mxu0 0.0
    %3070 = vmatpush1.msra.mxu0 0.0
    %3071 = vmatprep.subr.mxu0 0.0
    %3072 = vmatpush1.msra.mxu0 0.0
    %3073 = vmatprep.subr.mxu0 0.0
    %3074 = vmatpush1.msra.mxu0 0.0
    %3075 = vmatprep.subr.mxu0 0.0
    %3076 = vmatpush1.msra.mxu0 0.0
    %3077 = vmatprep.subr.mxu0 0.0
    %3078 = vmatpush1.msra.mxu0 0.0
    %3079 = vmatprep.subr.mxu0 0.0
    %3080 = vmatpush1.msra.mxu0 0.0
    %3081 = vmatprep.subr.mxu0 0.0
    %3082 = vmatpush1.msra.mxu0 0.0
    %3083 = vmatprep.subr.mxu0 0.0
    %3084 = vmatpush1.msra.mxu0 0.0
    %3085 = vmatprep.subr.mxu0 0.0
    %3086 = vmatpush1.msra.mxu0 0.0
    %3087 = vmatprep.subr.mxu0 0.0
    %3088 = vmatpush1.msra.mxu0 0.0
    %3089 = vmatprep.subr.mxu0 0.0
    %3090 = vmatpush1.msra.mxu0 0.0
    %3091 = vmatprep.subr.mxu0 0.0
    %3092 = vmatpush1.msra.mxu0 0.0
    %3093 = vmatprep.subr.mxu0 0.0
    %3094 = vmatpush1.msra.mxu0 0.0
    %3095 = vmatprep.subr.mxu0 0.0
    %3096 = vmatpush1.msra.mxu0 0.0
    %3097 = vmatprep.mubr.f32.mxu0 0.0
    %3098 = vmatmul.mubr.f32.gmra.mrb[0].mxu0 %v2878
    %v3099 = vpop.f32.mrb[0].mxu0
    %v3100 = vadd.f32 %v498, %v3099
    %v3101 = vpop.f32.mrb[0].mxu0
    %3102 = vmatprep.mubr.f32.mxu0 0.0
    %3103 = vmatmul.mubr.f32.gmra.mrb[0].mxu0 %v2881
    %v3104 = vpop.f32.mrb[0].mxu0
    %v3105 = vadd.f32 %v498, %v3104
    %v3106 = vpop.f32.mrb[0].mxu0
    %3107 = vdwg.mxu0
    %v3108 = vadd.f32 %v357, %v2950
    %v3109 = vadd.f32 %v358, %v2955
    %v3110 = vmul.f32 %v3108, 0.5
    %v3111 = vmul.f32 %v3109, 0.5
    %v3112 = vtanh.pop %v3110
    %v3113 = vtanh.pop %v3111
    %v3114 = vmul.f32 %v3112, 0.5
    %v3115 = vmul.f32 %v3113, 0.5
    %v3116 = vadd.f32 %v3114, 0.5
    %v3117 = vadd.f32 %v3115, 0.5
    %v3118 = vadd.f32 %v361, %v3025
    %v3119 = vadd.f32 %v362, %v3030
    %v3120 = vmul.f32 %v3118, 0.5
    %v3121 = vmul.f32 %v3119, 0.5
    %v3122 = vtanh.pop %v3120
    %v3123 = vtanh.pop %v3121
    %v3124 = vmul.f32 %v3122, 0.5
    %v3125 = vmul.f32 %v3123, 0.5
    %v3126 = vadd.f32 %v3124, 0.5
    %v3127 = vadd.f32 %v3125, 0.5
    %v3128 = vmul.f32 %v3116, %v3100
    %v3129 = vmul.f32 %v3117, %v3105
    %v3130 = vadd.f32 %v365, %v3128
    %v3131 = vadd.f32 %v366, %v3129
    %v3132 = vtanh.pop %v3130
    %v3133 = vtanh.pop %v3131
    %v3134 = vsub.f32 %v2875, %v3132
    %v3135 = vsub.f32 %v2876, %v3133
    %v3136 = vmul.f32 %v3126, %v3134
    %v3137 = vmul.f32 %v3127, %v3135
    %v3138 = vadd.f32 %v3132, %v3136
    %v3139 = vadd.f32 %v3133, %v3137
    %v3141 = vsel %vm509, %v3138, 0
    %v3144 = vsel %vm509, %v3139, 0
    %3146 = vmatprep.subr.mxu0 0.0
    %3147 = vmatpush1.msra.mxu0 %v77
    %3148 = vmatprep.subr.mxu0 0.0
    %3149 = vmatpush1.msra.mxu0 %v78
    %3150 = vmatprep.subr.mxu0 0.0
    %3151 = vmatpush1.msra.mxu0 %v79
    %3152 = vmatprep.subr.mxu0 0.0
    %3153 = vmatpush1.msra.mxu0 %v80
    %3154 = vmatprep.subr.mxu0 0.0
    %3155 = vmatpush1.msra.mxu0 0.0
    %3156 = vmatprep.subr.mxu0 0.0
    %3157 = vmatpush1.msra.mxu0 0.0
    %3158 = vmatprep.subr.mxu0 0.0
    %3159 = vmatpush1.msra.mxu0 0.0
    %3160 = vmatprep.subr.mxu0 0.0
    %3161 = vmatpush1.msra.mxu0 0.0
    %3162 = vmatprep.subr.mxu0 0.0
    %3163 = vmatpush1.msra.mxu0 0.0
    %3164 = vmatprep.subr.mxu0 0.0
    %3165 = vmatpush1.msra.mxu0 0.0
    %3166 = vmatprep.subr.mxu0 0.0
    %3167 = vmatpush1.msra.mxu0 0.0
    %3168 = vmatprep.subr.mxu0 0.0
    %3169 = vmatpush1.msra.mxu0 0.0
    %3170 = vmatprep.subr.mxu0 0.0
    %3171 = vmatpush1.msra.mxu0 0.0
    %3172 = vmatprep.subr.mxu0 0.0
    %3173 = vmatpush1.msra.mxu0 0.0
    %3174 = vmatprep.subr.mxu0 0.0
    %3175 = vmatpush1.msra.mxu0 0.0
    %3176 = vmatprep.subr.mxu0 0.0
    %3177 = vmatpush1.msra.mxu0 0.0
    %3178 = vmatprep.subr.mxu0 0.0
    %3179 = vmatpush1.msra.mxu0 0.0
    %3180 = vmatprep.subr.mxu0 0.0
    %3181 = vmatpush1.msra.mxu0 0.0
    %3182 = vmatprep.subr.mxu0 0.0
    %3183 = vmatpush1.msra.mxu0 0.0
    %3184 = vmatprep.subr.mxu0 0.0
    %3185 = vmatpush1.msra.mxu0 0.0
    %3186 = vmatprep.subr.mxu0 0.0
    %3187 = vmatpush1.msra.mxu0 0.0
    %3188 = vmatprep.subr.mxu0 0.0
    %3189 = vmatpush1.msra.mxu0 0.0
    %3190 = vmatprep.subr.mxu0 0.0
    %3191 = vmatpush1.msra.mxu0 0.0
    %3192 = vmatprep.subr.mxu0 0.0
    %3193 = vmatpush1.msra.mxu0 0.0
    %3194 = vmatprep.subr.mxu0 0.0
    %3195 = vmatpush1.msra.mxu0 0.0
    %3196 = vmatprep.subr.mxu0 0.0
    %3197 = vmatpush1.msra.mxu0 0.0
    %3198 = vmatprep.subr.mxu0 0.0
    %3199 = vmatpush1.msra.mxu0 0.0
    %3200 = vmatprep.subr.mxu0 0.0
    %3201 = vmatpush1.msra.mxu0 0.0
    %3202 = vmatprep.subr.mxu0 0.0
    %3203 = vmatpush1.msra.mxu0 0.0
    %3204 = vmatprep.subr.mxu0 0.0
    %3205 = vmatpush1.msra.mxu0 0.0
    %3206 = vmatprep.subr.mxu0 0.0
    %3207 = vmatpush1.msra.mxu0 0.0
    %3208 = vmatprep.subr.mxu0 0.0
    %3209 = vmatpush1.msra.mxu0 0.0
    %3210 = vmatprep.mubr.f32.mxu0 0.0
    %3211 = vmatmul.mubr.f32.gmra.mrb[0].mxu0 %v3141
    %v3212 = vpop.f32.mrb[0].mxu0
    %v3213 = vadd.f32 %v470, %v3212
    %v3214 = vpop.f32.mrb[0].mxu0
    %3215 = vmatprep.mubr.f32.mxu0 0.0
    %3216 = vmatmul.mubr.f32.gmra.mrb[0].mxu0 %v3144
    %v3217 = vpop.f32.mrb[0].mxu0
    %v3218 = vadd.f32 %v470, %v3217
    %v3219 = vpop.f32.mrb[0].mxu0
    %3220 = vdwg.mxu0
    %3221 = vmatprep.subr.mxu0 0.0
    %3222 = vmatpush1.msra.mxu0 %v82
    %3223 = vmatprep.subr.mxu0 0.0
    %3224 = vmatpush1.msra.mxu0 %v83
    %3225 = vmatprep.subr.mxu0 0.0
    %3226 = vmatpush1.msra.mxu0 %v84
    %3227 = vmatprep.subr.mxu0 0.0
    %3228 = vmatpush1.msra.mxu0 %v85
    %3229 = vmatprep.subr.mxu0 0.0
    %3230 = vmatpush1.msra.mxu0 0.0
    %3231 = vmatprep.subr.mxu0 0.0
    %3232 = vmatpush1.msra.mxu0 0.0
    %3233 = vmatprep.subr.mxu0 0.0
    %3234 = vmatpush1.msra.mxu0 0.0
    %3235 = vmatprep.subr.mxu0 0.0
    %3236 = vmatpush1.msra.mxu0 0.0
    %3237 = vmatprep.subr.mxu0 0.0
    %3238 = vmatpush1.msra.mxu0 0.0
    %3239 = vmatprep.subr.mxu0 0.0
    %3240 = vmatpush1.msra.mxu0 0.0
    %3241 = vmatprep.subr.mxu0 0.0
    %3242 = vmatpush1.msra.mxu0 0.0
    %3243 = vmatprep.subr.mxu0 0.0
    %3244 = vmatpush1.msra.mxu0 0.0
    %3245 = vmatprep.subr.mxu0 0.0
    %3246 = vmatpush1.msra.mxu0 0.0
    %3247 = vmatprep.subr.mxu0 0.0
    %3248 = vmatpush1.msra.mxu0 0.0
    %3249 = vmatprep.subr.mxu0 0.0
    %3250 = vmatpush1.msra.mxu0 0.0
    %3251 = vmatprep.subr.mxu0 0.0
    %3252 = vmatpush1.msra.mxu0 0.0
    %3253 = vmatprep.subr.mxu0 0.0
    %3254 = vmatpush1.msra.mxu0 0.0
    %3255 = vmatprep.subr.mxu0 0.0
    %3256 = vmatpush1.msra.mxu0 0.0
    %3257 = vmatprep.subr.mxu0 0.0
    %3258 = vmatpush1.msra.mxu0 0.0
    %3259 = vmatprep.subr.mxu0 0.0
    %3260 = vmatpush1.msra.mxu0 0.0
    %3261 = vmatprep.subr.mxu0 0.0
    %3262 = vmatpush1.msra.mxu0 0.0
    %3263 = vmatprep.subr.mxu0 0.0
    %3264 = vmatpush1.msra.mxu0 0.0
    %3265 = vmatprep.subr.mxu0 0.0
    %3266 = vmatpush1.msra.mxu0 0.0
    %3267 = vmatprep.subr.mxu0 0.0
    %3268 = vmatpush1.msra.mxu0 0.0
    %3269 = vmatprep.subr.mxu0 0.0
    %3270 = vmatpush1.msra.mxu0 0.0
    %3271 = vmatprep.subr.mxu0 0.0
    %3272 = vmatpush1.msra.mxu0 0.0
    %3273 = vmatprep.subr.mxu0 0.0
    %3274 = vmatpush1.msra.mxu0 0.0
    %3275 = vmatprep.subr.mxu0 0.0
    %3276 = vmatpush1.msra.mxu0 0.0
    %3277 = vmatprep.subr.mxu0 0.0
    %3278 = vmatpush1.msra.mxu0 0.0
    %3279 = vmatprep.subr.mxu0 0.0
    %3280 = vmatpush1.msra.mxu0 0.0
    %3281 = vmatprep.subr.mxu0 0.0
    %3282 = vmatpush1.msra.mxu0 0.0
    %3283 = vmatprep.subr.mxu0 0.0
    %3284 = vmatpush1.msra.mxu0 0.0
    %3285 = vmatprep.mubr.f32.mxu0 0.0
    %3286 = vmatmul.mubr.f32.gmra.mrb[0].mxu0 %v3141
    %v3287 = vpop.f32.mrb[0].mxu0
    %v3288 = vadd.f32 %v484, %v3287
    %v3289 = vpop.f32.mrb[0].mxu0
    %3290 = vmatprep.mubr.f32.mxu0 0.0
    %3291 = vmatmul.mubr.f32.gmra.mrb[0].mxu0 %v3144
    %v3292 = vpop.f32.mrb[0].mxu0
    %v3293 = vadd.f32 %v484, %v3292
    %v3294 = vpop.f32.mrb[0].mxu0
    %3295 = vdwg.mxu0
    %3296 = vmatprep.subr.mxu0 0.0
    %3297 = vmatpush1.msra.mxu0 %v87
    %3298 = vmatprep.subr.mxu0 0.0
    %3299 = vmatpush1.msra.mxu0 %v88
    %3300 = vmatprep.subr.mxu0 0.0
    %3301 = vmatpush1.msra.mxu0 %v89
    %3302 = vmatprep.subr.mxu0 0.0
    %3303 = vmatpush1.msra.mxu0 %v90
    %3304 = vmatprep.subr.mxu0 0.0
    %3305 = vmatpush1.msra.mxu0 0.0
    %3306 = vmatprep.subr.mxu0 0.0
    %3307 = vmatpush1.msra.mxu0 0.0
    %3308 = vmatprep.subr.mxu0 0.0
    %3309 = vmatpush1.msra.mxu0 0.0
    %3310 = vmatprep.subr.mxu0 0.0
    %3311 = vmatpush1.msra.mxu0 0.0
    %3312 = vmatprep.subr.mxu0 0.0
    %3313 = vmatpush1.msra.mxu0 0.0
    %3314 = vmatprep.subr.mxu0 0.0
    %3315 = vmatpush1.msra.mxu0 0.0
    %3316 = vmatprep.subr.mxu0 0.0
    %3317 = vmatpush1.msra.mxu0 0.0
    %3318 = vmatprep.subr.mxu0 0.0
    %3319 = vmatpush1.msra.mxu0 0.0
    %3320 = vmatprep.subr.mxu0 0.0
    %3321 = vmatpush1.msra.mxu0 0.0
    %3322 = vmatprep.subr.mxu0 0.0
    %3323 = vmatpush1.msra.mxu0 0.0
    %3324 = vmatprep.subr.mxu0 0.0
    %3325 = vmatpush1.msra.mxu0 0.0
    %3326 = vmatprep.subr.mxu0 0.0
    %3327 = vmatpush1.msra.mxu0 0.0
    %3328 = vmatprep.subr.mxu0 0.0
    %3329 = vmatpush1.msra.mxu0 0.0
    %3330 = vmatprep.subr.mxu0 0.0
    %3331 = vmatpush1.msra.mxu0 0.0
    %3332 = vmatprep.subr.mxu0 0.0
    %3333 = vmatpush1.msra.mxu0 0.0
    %3334 = vmatprep.subr.mxu0 0.0
    %3335 = vmatpush1.msra.mxu0 0.0
    %3336 = vmatprep.subr.mxu0 0.0
    %3337 = vmatpush1.msra.mxu0 0.0
    %3338 = vmatprep.subr.mxu0 0.0
    %3339 = vmatpush1.msra.mxu0 0.0
    %3340 = vmatprep.subr.mxu0 0.0
    %3341 = vmatpush1.msra.mxu0 0.0
    %3342 = vmatprep.subr.mxu0 0.0
    %3343 = vmatpush1.msra.mxu0 0.0
    %3344 = vmatprep.subr.mxu0 0.0
    %3345 = vmatpush1.msra.mxu0 0.0
    %3346 = vmatprep.subr.mxu0 0.0
    %3347 = vmatpush1.msra.mxu0 0.0
    %3348 = vmatprep.subr.mxu0 0.0
    %3349 = vmatpush1.msra.mxu0 0.0
    %3350 = vmatprep.subr.mxu0 0.0
    %3351 = vmatpush1.msra.mxu0 0.0
    %3352 = vmatprep.subr.mxu0 0.0
    %3353 = vmatpush1.msra.mxu0 0.0
    %3354 = vmatprep.subr.mxu0 0.0
    %3355 = vmatpush1.msra.mxu0 0.0
    %3356 = vmatprep.subr.mxu0 0.0
    %3357 = vmatpush1.msra.mxu0 0.0
    %3358 = vmatprep.subr.mxu0 0.0
    %3359 = vmatpush1.msra.mxu0 0.0
    %3360 = vmatprep.mubr.f32.mxu0 0.0
    %3361 = vmatmul.mubr.f32.gmra.mrb[0].mxu0 %v3141
    %v3362 = vpop.f32.mrb[0].mxu0
    %v3363 = vadd.f32 %v498, %v3362
    %v3364 = vpop.f32.mrb[0].mxu0
    %3365 = vmatprep.mubr.f32.mxu0 0.0
    %3366 = vmatmul.mubr.f32.gmra.mrb[0].mxu0 %v3144
    %v3367 = vpop.f32.mrb[0].mxu0
    %v3368 = vadd.f32 %v498, %v3367
    %v3369 = vpop.f32.mrb[0].mxu0
    %3370 = vdwg.mxu0
    %v3371 = vadd.f32 %v377, %v3213
    %v3372 = vadd.f32 %v378, %v3218
    %v3373 = vmul.f32 %v3371, 0.5
    %v3374 = vmul.f32 %v3372, 0.5
    %v3375 = vtanh.pop %v3373
    %v3376 = vtanh.pop %v3374
    %v3377 = vmul.f32 %v3375, 0.5
    %v3378 = vmul.f32 %v3376, 0.5
    %v3379 = vadd.f32 %v3377, 0.5
    %v3380 = vadd.f32 %v3378, 0.5
    %v3381 = vadd.f32 %v381, %v3288
    %v3382 = vadd.f32 %v382, %v3293
    %v3383 = vmul.f32 %v3381, 0.5
    %v3384 = vmul.f32 %v3382, 0.5
    %v3385 = vtanh.pop %v3383
    %v3386 = vtanh.pop %v3384
    %v3387 = vmul.f32 %v3385, 0.5
    %v3388 = vmul.f32 %v3386, 0.5
    %v3389 = vadd.f32 %v3387, 0.5
    %v3390 = vadd.f32 %v3388, 0.5
    %v3391 = vmul.f32 %v3379, %v3363
    %v3392 = vmul.f32 %v3380, %v3368
    %v3393 = vadd.f32 %v385, %v3391
    %v3394 = vadd.f32 %v386, %v3392
    %v3395 = vtanh.pop %v3393
    %v3396 = vtanh.pop %v3394
    %v3397 = vsub.f32 %v3138, %v3395
    %v3398 = vsub.f32 %v3139, %v3396
    %v3399 = vmul.f32 %v3389, %v3397
    %v3400 = vmul.f32 %v3390, %v3398
    %v3401 = vadd.f32 %v3395, %v3399
    %v3402 = vadd.f32 %v3396, %v3400
    %v3404 = vsel %vm509, %v3401, 0
    %v3407 = vsel %vm509, %v3402, 0
    %3409 = vmatprep.subr.mxu0 0.0
    %3410 = vmatpush1.msra.mxu0 %v77
    %3411 = vmatprep.subr.mxu0 0.0
    %3412 = vmatpush1.msra.mxu0 %v78
    %3413 = vmatprep.subr.mxu0 0.0
    %3414 = vmatpush1.msra.mxu0 %v79
    %3415 = vmatprep.subr.mxu0 0.0
    %3416 = vmatpush1.msra.mxu0 %v80
    %3417 = vmatprep.subr.mxu0 0.0
    %3418 = vmatpush1.msra.mxu0 0.0
    %3419 = vmatprep.subr.mxu0 0.0
    %3420 = vmatpush1.msra.mxu0 0.0
    %3421 = vmatprep.subr.mxu0 0.0
    %3422 = vmatpush1.msra.mxu0 0.0
    %3423 = vmatprep.subr.mxu0 0.0
    %3424 = vmatpush1.msra.mxu0 0.0
    %3425 = vmatprep.subr.mxu0 0.0
    %3426 = vmatpush1.msra.mxu0 0.0
    %3427 = vmatprep.subr.mxu0 0.0
    %3428 = vmatpush1.msra.mxu0 0.0
    %3429 = vmatprep.subr.mxu0 0.0
    %3430 = vmatpush1.msra.mxu0 0.0
    %3431 = vmatprep.subr.mxu0 0.0
    %3432 = vmatpush1.msra.mxu0 0.0
    %3433 = vmatprep.subr.mxu0 0.0
    %3434 = vmatpush1.msra.mxu0 0.0
    %3435 = vmatprep.subr.mxu0 0.0
    %3436 = vmatpush1.msra.mxu0 0.0
    %3437 = vmatprep.subr.mxu0 0.0
    %3438 = vmatpush1.msra.mxu0 0.0
    %3439 = vmatprep.subr.mxu0 0.0
    %3440 = vmatpush1.msra.mxu0 0.0
    %3441 = vmatprep.subr.mxu0 0.0
    %3442 = vmatpush1.msra.mxu0 0.0
    %3443 = vmatprep.subr.mxu0 0.0
    %3444 = vmatpush1.msra.mxu0 0.0
    %3445 = vmatprep.subr.mxu0 0.0
    %3446 = vmatpush1.msra.mxu0 0.0
    %3447 = vmatprep.subr.mxu0 0.0
    %3448 = vmatpush1.msra.mxu0 0.0
    %3449 = vmatprep.subr.mxu0 0.0
    %3450 = vmatpush1.msra.mxu0 0.0
    %3451 = vmatprep.subr.mxu0 0.0
    %3452 = vmatpush1.msra.mxu0 0.0
    %3453 = vmatprep.subr.mxu0 0.0
    %3454 = vmatpush1.msra.mxu0 0.0
    %3455 = vmatprep.subr.mxu0 0.0
    %3456 = vmatpush1.msra.mxu0 0.0
    %3457 = vmatprep.subr.mxu0 0.0
    %3458 = vmatpush1.msra.mxu0 0.0
    %3459 = vmatprep.subr.mxu0 0.0
    %3460 = vmatpush1.msra.mxu0 0.0
    %3461 = vmatprep.subr.mxu0 0.0
    %3462 = vmatpush1.msra.mxu0 0.0
    %3463 = vmatprep.subr.mxu0 0.0
    %3464 = vmatpush1.msra.mxu0 0.0
    %3465 = vmatprep.subr.mxu0 0.0
    %3466 = vmatpush1.msra.mxu0 0.0
    %3467 = vmatprep.subr.mxu0 0.0
    %3468 = vmatpush1.msra.mxu0 0.0
    %3469 = vmatprep.subr.mxu0 0.0
    %3470 = vmatpush1.msra.mxu0 0.0
    %3471 = vmatprep.subr.mxu0 0.0
    %3472 = vmatpush1.msra.mxu0 0.0
    %3473 = vmatprep.mubr.f32.mxu0 0.0
    %3474 = vmatmul.mubr.f32.gmra.mrb[0].mxu0 %v3404
    %v3475 = vpop.f32.mrb[0].mxu0
    %v3476 = vadd.f32 %v470, %v3475
    %v3477 = vpop.f32.mrb[0].mxu0
    %3478 = vmatprep.mubr.f32.mxu0 0.0
    %3479 = vmatmul.mubr.f32.gmra.mrb[0].mxu0 %v3407
    %v3480 = vpop.f32.mrb[0].mxu0
    %v3481 = vadd.f32 %v470, %v3480
    %v3482 = vpop.f32.mrb[0].mxu0
    %3483 = vdwg.mxu0
    %3484 = vmatprep.subr.mxu0 0.0
    %3485 = vmatpush1.msra.mxu0 %v82
    %3486 = vmatprep.subr.mxu0 0.0
    %3487 = vmatpush1.msra.mxu0 %v83
    %3488 = vmatprep.subr.mxu0 0.0
    %3489 = vmatpush1.msra.mxu0 %v84
    %3490 = vmatprep.subr.mxu0 0.0
    %3491 = vmatpush1.msra.mxu0 %v85
    %3492 = vmatprep.subr.mxu0 0.0
    %3493 = vmatpush1.msra.mxu0 0.0
    %3494 = vmatprep.subr.mxu0 0.0
    %3495 = vmatpush1.msra.mxu0 0.0
    %3496 = vmatprep.subr.mxu0 0.0
    %3497 = vmatpush1.msra.mxu0 0.0
    %3498 = vmatprep.subr.mxu0 0.0
    %3499 = vmatpush1.msra.mxu0 0.0
    %3500 = vmatprep.subr.mxu0 0.0
    %3501 = vmatpush1.msra.mxu0 0.0
    %3502 = vmatprep.subr.mxu0 0.0
    %3503 = vmatpush1.msra.mxu0 0.0
    %3504 = vmatprep.subr.mxu0 0.0
    %3505 = vmatpush1.msra.mxu0 0.0
    %3506 = vmatprep.subr.mxu0 0.0
    %3507 = vmatpush1.msra.mxu0 0.0
    %3508 = vmatprep.subr.mxu0 0.0
    %3509 = vmatpush1.msra.mxu0 0.0
    %3510 = vmatprep.subr.mxu0 0.0
    %3511 = vmatpush1.msra.mxu0 0.0
    %3512 = vmatprep.subr.mxu0 0.0
    %3513 = vmatpush1.msra.mxu0 0.0
    %3514 = vmatprep.subr.mxu0 0.0
    %3515 = vmatpush1.msra.mxu0 0.0
    %3516 = vmatprep.subr.mxu0 0.0
    %3517 = vmatpush1.msra.mxu0 0.0
    %3518 = vmatprep.subr.mxu0 0.0
    %3519 = vmatpush1.msra.mxu0 0.0
    %3520 = vmatprep.subr.mxu0 0.0
    %3521 = vmatpush1.msra.mxu0 0.0
    %3522 = vmatprep.subr.mxu0 0.0
    %3523 = vmatpush1.msra.mxu0 0.0
    %3524 = vmatprep.subr.mxu0 0.0
    %3525 = vmatpush1.msra.mxu0 0.0
    %3526 = vmatprep.subr.mxu0 0.0
    %3527 = vmatpush1.msra.mxu0 0.0
    %3528 = vmatprep.subr.mxu0 0.0
    %3529 = vmatpush1.msra.mxu0 0.0
    %3530 = vmatprep.subr.mxu0 0.0
    %3531 = vmatpush1.msra.mxu0 0.0
    %3532 = vmatprep.subr.mxu0 0.0
    %3533 = vmatpush1.msra.mxu0 0.0
    %3534 = vmatprep.subr.mxu0 0.0
    %3535 = vmatpush1.msra.mxu0 0.0
    %3536 = vmatprep.subr.mxu0 0.0
    %3537 = vmatpush1.msra.mxu0 0.0
    %3538 = vmatprep.subr.mxu0 0.0
    %3539 = vmatpush1.msra.mxu0 0.0
    %3540 = vmatprep.subr.mxu0 0.0
    %3541 = vmatpush1.msra.mxu0 0.0
    %3542 = vmatprep.subr.mxu0 0.0
    %3543 = vmatpush1.msra.mxu0 0.0
    %3544 = vmatprep.subr.mxu0 0.0
    %3545 = vmatpush1.msra.mxu0 0.0
    %3546 = vmatprep.subr.mxu0 0.0
    %3547 = vmatpush1.msra.mxu0 0.0
    %3548 = vmatprep.mubr.f32.mxu0 0.0
    %3549 = vmatmul.mubr.f32.gmra.mrb[0].mxu0 %v3404
    %v3550 = vpop.f32.mrb[0].mxu0
    %v3551 = vadd.f32 %v484, %v3550
    %v3552 = vpop.f32.mrb[0].mxu0
    %3553 = vmatprep.mubr.f32.mxu0 0.0
    %3554 = vmatmul.mubr.f32.gmra.mrb[0].mxu0 %v3407
    %v3555 = vpop.f32.mrb[0].mxu0
    %v3556 = vadd.f32 %v484, %v3555
    %v3557 = vpop.f32.mrb[0].mxu0
    %3558 = vdwg.mxu0
    %3559 = vmatprep.subr.mxu0 0.0
    %3560 = vmatpush1.msra.mxu0 %v87
    %3561 = vmatprep.subr.mxu0 0.0
    %3562 = vmatpush1.msra.mxu0 %v88
    %3563 = vmatprep.subr.mxu0 0.0
    %3564 = vmatpush1.msra.mxu0 %v89
    %3565 = vmatprep.subr.mxu0 0.0
    %3566 = vmatpush1.msra.mxu0 %v90
    %3567 = vmatprep.subr.mxu0 0.0
    %3568 = vmatpush1.msra.mxu0 0.0
    %3569 = vmatprep.subr.mxu0 0.0
    %3570 = vmatpush1.msra.mxu0 0.0
    %3571 = vmatprep.subr.mxu0 0.0
    %3572 = vmatpush1.msra.mxu0 0.0
    %3573 = vmatprep.subr.mxu0 0.0
    %3574 = vmatpush1.msra.mxu0 0.0
    %3575 = vmatprep.subr.mxu0 0.0
    %3576 = vmatpush1.msra.mxu0 0.0
    %3577 = vmatprep.subr.mxu0 0.0
    %3578 = vmatpush1.msra.mxu0 0.0
    %3579 = vmatprep.subr.mxu0 0.0
    %3580 = vmatpush1.msra.mxu0 0.0
    %3581 = vmatprep.subr.mxu0 0.0
    %3582 = vmatpush1.msra.mxu0 0.0
    %3583 = vmatprep.subr.mxu0 0.0
    %3584 = vmatpush1.msra.mxu0 0.0
    %3585 = vmatprep.subr.mxu0 0.0
    %3586 = vmatpush1.msra.mxu0 0.0
    %3587 = vmatprep.subr.mxu0 0.0
    %3588 = vmatpush1.msra.mxu0 0.0
    %3589 = vmatprep.subr.mxu0 0.0
    %3590 = vmatpush1.msra.mxu0 0.0
    %3591 = vmatprep.subr.mxu0 0.0
    %3592 = vmatpush1.msra.mxu0 0.0
    %3593 = vmatprep.subr.mxu0 0.0
    %3594 = vmatpush1.msra.mxu0 0.0
    %3595 = vmatprep.subr.mxu0 0.0
    %3596 = vmatpush1.msra.mxu0 0.0
    %3597 = vmatprep.subr.mxu0 0.0
    %3598 = vmatpush1.msra.mxu0 0.0
    %3599 = vmatprep.subr.mxu0 0.0
    %3600 = vmatpush1.msra.mxu0 0.0
    %3601 = vmatprep.subr.mxu0 0.0
    %3602 = vmatpush1.msra.mxu0 0.0
    %3603 = vmatprep.subr.mxu0 0.0
    %3604 = vmatpush1.msra.mxu0 0.0
    %3605 = vmatprep.subr.mxu0 0.0
    %3606 = vmatpush1.msra.mxu0 0.0
    %3607 = vmatprep.subr.mxu0 0.0
    %3608 = vmatpush1.msra.mxu0 0.0
    %3609 = vmatprep.subr.mxu0 0.0
    %3610 = vmatpush1.msra.mxu0 0.0
    %3611 = vmatprep.subr.mxu0 0.0
    %3612 = vmatpush1.msra.mxu0 0.0
    %3613 = vmatprep.subr.mxu0 0.0
    %3614 = vmatpush1.msra.mxu0 0.0
    %3615 = vmatprep.subr.mxu0 0.0
    %3616 = vmatpush1.msra.mxu0 0.0
    %3617 = vmatprep.subr.mxu0 0.0
    %3618 = vmatpush1.msra.mxu0 0.0
    %3619 = vmatprep.subr.mxu0 0.0
    %3620 = vmatpush1.msra.mxu0 0.0
    %3621 = vmatprep.subr.mxu0 0.0
    %3622 = vmatpush1.msra.mxu0 0.0
    %3623 = vmatprep.mubr.f32.mxu0 0.0
    %3624 = vmatmul.mubr.f32.gmra.mrb[0].mxu0 %v3404
    %v3625 = vpop.f32.mrb[0].mxu0
    %v3626 = vadd.f32 %v498, %v3625
    %v3627 = vpop.f32.mrb[0].mxu0
    %3628 = vmatprep.mubr.f32.mxu0 0.0
    %3629 = vmatmul.mubr.f32.gmra.mrb[0].mxu0 %v3407
    %v3630 = vpop.f32.mrb[0].mxu0
    %v3631 = vadd.f32 %v498, %v3630
    %v3632 = vpop.f32.mrb[0].mxu0
    %3633 = vdwg.mxu0
    %v3634 = vadd.f32 %v397, %v3476
    %v3635 = vadd.f32 %v398, %v3481
    %v3636 = vmul.f32 %v3634, 0.5
    %v3637 = vmul.f32 %v3635, 0.5
    %v3638 = vtanh.pop %v3636
    %v3639 = vtanh.pop %v3637
    %v3640 = vmul.f32 %v3638, 0.5
    %v3641 = vmul.f32 %v3639, 0.5
    %v3642 = vadd.f32 %v3640, 0.5
    %v3643 = vadd.f32 %v3641, 0.5
    %v3644 = vadd.f32 %v401, %v3551
    %v3645 = vadd.f32 %v402, %v3556
    %v3646 = vmul.f32 %v3644, 0.5
    %v3647 = vmul.f32 %v3645, 0.5
    %v3648 = vtanh.pop %v3646
    %v3649 = vtanh.pop %v3647
    %v3650 = vmul.f32 %v3648, 0.5
    %v3651 = vmul.f32 %v3649, 0.5
    %v3652 = vadd.f32 %v3650, 0.5
    %v3653 = vadd.f32 %v3651, 0.5
    %v3654 = vmul.f32 %v3642, %v3626
    %v3655 = vmul.f32 %v3643, %v3631
    %v3656 = vadd.f32 %v405, %v3654
    %v3657 = vadd.f32 %v406, %v3655
    %v3658 = vtanh.pop %v3656
    %v3659 = vtanh.pop %v3657
    %v3660 = vsub.f32 %v3401, %v3658
    %v3661 = vsub.f32 %v3402, %v3659
    %v3662 = vmul.f32 %v3652, %v3660
    %v3663 = vmul.f32 %v3653, %v3661
    %v3664 = vadd.f32 %v3658, %v3662
    %v3665 = vadd.f32 %v3659, %v3663
    %v3667 = vsel %vm509, %v3664, 0
    %v3670 = vsel %vm509, %v3665, 0
    %3672 = vmatprep.subr.mxu0 0.0
    %3673 = vmatpush1.msra.mxu0 %v77
    %3674 = vmatprep.subr.mxu0 0.0
    %3675 = vmatpush1.msra.mxu0 %v78
    %3676 = vmatprep.subr.mxu0 0.0
    %3677 = vmatpush1.msra.mxu0 %v79
    %3678 = vmatprep.subr.mxu0 0.0
    %3679 = vmatpush1.msra.mxu0 %v80
    %3680 = vmatprep.subr.mxu0 0.0
    %3681 = vmatpush1.msra.mxu0 0.0
    %3682 = vmatprep.subr.mxu0 0.0
    %3683 = vmatpush1.msra.mxu0 0.0
    %3684 = vmatprep.subr.mxu0 0.0
    %3685 = vmatpush1.msra.mxu0 0.0
    %3686 = vmatprep.subr.mxu0 0.0
    %3687 = vmatpush1.msra.mxu0 0.0
    %3688 = vmatprep.subr.mxu0 0.0
    %3689 = vmatpush1.msra.mxu0 0.0
    %3690 = vmatprep.subr.mxu0 0.0
    %3691 = vmatpush1.msra.mxu0 0.0
    %3692 = vmatprep.subr.mxu0 0.0
    %3693 = vmatpush1.msra.mxu0 0.0
    %3694 = vmatprep.subr.mxu0 0.0
    %3695 = vmatpush1.msra.mxu0 0.0
    %3696 = vmatprep.subr.mxu0 0.0
    %3697 = vmatpush1.msra.mxu0 0.0
    %3698 = vmatprep.subr.mxu0 0.0
    %3699 = vmatpush1.msra.mxu0 0.0
    %3700 = vmatprep.subr.mxu0 0.0
    %3701 = vmatpush1.msra.mxu0 0.0
    %3702 = vmatprep.subr.mxu0 0.0
    %3703 = vmatpush1.msra.mxu0 0.0
    %3704 = vmatprep.subr.mxu0 0.0
    %3705 = vmatpush1.msra.mxu0 0.0
    %3706 = vmatprep.subr.mxu0 0.0
    %3707 = vmatpush1.msra.mxu0 0.0
    %3708 = vmatprep.subr.mxu0 0.0
    %3709 = vmatpush1.msra.mxu0 0.0
    %3710 = vmatprep.subr.mxu0 0.0
    %3711 = vmatpush1.msra.mxu0 0.0
    %3712 = vmatprep.subr.mxu0 0.0
    %3713 = vmatpush1.msra.mxu0 0.0
    %3714 = vmatprep.subr.mxu0 0.0
    %3715 = vmatpush1.msra.mxu0 0.0
    %3716 = vmatprep.subr.mxu0 0.0
    %3717 = vmatpush1.msra.mxu0 0.0
    %3718 = vmatprep.subr.mxu0 0.0
    %3719 = vmatpush1.msra.mxu0 0.0
    %3720 = vmatprep.subr.mxu0 0.0
    %3721 = vmatpush1.msra.mxu0 0.0
    %3722 = vmatprep.subr.mxu0 0.0
    %3723 = vmatpush1.msra.mxu0 0.0
    %3724 = vmatprep.subr.mxu0 0.0
    %3725 = vmatpush1.msra.mxu0 0.0
    %3726 = vmatprep.subr.mxu0 0.0
    %3727 = vmatpush1.msra.mxu0 0.0
    %3728 = vmatprep.subr.mxu0 0.0
    %3729 = vmatpush1.msra.mxu0 0.0
    %3730 = vmatprep.subr.mxu0 0.0
    %3731 = vmatpush1.msra.mxu0 0.0
    %3732 = vmatprep.subr.mxu0 0.0
    %3733 = vmatpush1.msra.mxu0 0.0
    %3734 = vmatprep.subr.mxu0 0.0
    %3735 = vmatpush1.msra.mxu0 0.0
    %3736 = vmatprep.mubr.f32.mxu0 0.0
    %3737 = vmatmul.mubr.f32.gmra.mrb[0].mxu0 %v3667
    %v3738 = vpop.f32.mrb[0].mxu0
    %v3739 = vadd.f32 %v470, %v3738
    %v3740 = vpop.f32.mrb[0].mxu0
    %3741 = vmatprep.mubr.f32.mxu0 0.0
    %3742 = vmatmul.mubr.f32.gmra.mrb[0].mxu0 %v3670
    %v3743 = vpop.f32.mrb[0].mxu0
    %v3744 = vadd.f32 %v470, %v3743
    %v3745 = vpop.f32.mrb[0].mxu0
    %3746 = vdwg.mxu0
    %3747 = vmatprep.subr.mxu0 0.0
    %3748 = vmatpush1.msra.mxu0 %v82
    %3749 = vmatprep.subr.mxu0 0.0
    %3750 = vmatpush1.msra.mxu0 %v83
    %3751 = vmatprep.subr.mxu0 0.0
    %3752 = vmatpush1.msra.mxu0 %v84
    %3753 = vmatprep.subr.mxu0 0.0
    %3754 = vmatpush1.msra.mxu0 %v85
    %3755 = vmatprep.subr.mxu0 0.0
    %3756 = vmatpush1.msra.mxu0 0.0
    %3757 = vmatprep.subr.mxu0 0.0
    %3758 = vmatpush1.msra.mxu0 0.0
    %3759 = vmatprep.subr.mxu0 0.0
    %3760 = vmatpush1.msra.mxu0 0.0
    %3761 = vmatprep.subr.mxu0 0.0
    %3762 = vmatpush1.msra.mxu0 0.0
    %3763 = vmatprep.subr.mxu0 0.0
    %3764 = vmatpush1.msra.mxu0 0.0
    %3765 = vmatprep.subr.mxu0 0.0
    %3766 = vmatpush1.msra.mxu0 0.0
    %3767 = vmatprep.subr.mxu0 0.0
    %3768 = vmatpush1.msra.mxu0 0.0
    %3769 = vmatprep.subr.mxu0 0.0
    %3770 = vmatpush1.msra.mxu0 0.0
    %3771 = vmatprep.subr.mxu0 0.0
    %3772 = vmatpush1.msra.mxu0 0.0
    %3773 = vmatprep.subr.mxu0 0.0
    %3774 = vmatpush1.msra.mxu0 0.0
    %3775 = vmatprep.subr.mxu0 0.0
    %3776 = vmatpush1.msra.mxu0 0.0
    %3777 = vmatprep.subr.mxu0 0.0
    %3778 = vmatpush1.msra.mxu0 0.0
    %3779 = vmatprep.subr.mxu0 0.0
    %3780 = vmatpush1.msra.mxu0 0.0
    %3781 = vmatprep.subr.mxu0 0.0
    %3782 = vmatpush1.msra.mxu0 0.0
    %3783 = vmatprep.subr.mxu0 0.0
    %3784 = vmatpush1.msra.mxu0 0.0
    %3785 = vmatprep.subr.mxu0 0.0
    %3786 = vmatpush1.msra.mxu0 0.0
    %3787 = vmatprep.subr.mxu0 0.0
    %3788 = vmatpush1.msra.mxu0 0.0
    %3789 = vmatprep.subr.mxu0 0.0
    %3790 = vmatpush1.msra.mxu0 0.0
    %3791 = vmatprep.subr.mxu0 0.0
    %3792 = vmatpush1.msra.mxu0 0.0
    %3793 = vmatprep.subr.mxu0 0.0
    %3794 = vmatpush1.msra.mxu0 0.0
    %3795 = vmatprep.subr.mxu0 0.0
    %3796 = vmatpush1.msra.mxu0 0.0
    %3797 = vmatprep.subr.mxu0 0.0
    %3798 = vmatpush1.msra.mxu0 0.0
    %3799 = vmatprep.subr.mxu0 0.0
    %3800 = vmatpush1.msra.mxu0 0.0
    %3801 = vmatprep.subr.mxu0 0.0
    %3802 = vmatpush1.msra.mxu0 0.0
    %3803 = vmatprep.subr.mxu0 0.0
    %3804 = vmatpush1.msra.mxu0 0.0
    %3805 = vmatprep.subr.mxu0 0.0
    %3806 = vmatpush1.msra.mxu0 0.0
    %3807 = vmatprep.subr.mxu0 0.0
    %3808 = vmatpush1.msra.mxu0 0.0
    %3809 = vmatprep.subr.mxu0 0.0
    %3810 = vmatpush1.msra.mxu0 0.0
    %3811 = vmatprep.mubr.f32.mxu0 0.0
    %3812 = vmatmul.mubr.f32.gmra.mrb[0].mxu0 %v3667
    %v3813 = vpop.f32.mrb[0].mxu0
    %v3814 = vadd.f32 %v484, %v3813
    %v3815 = vpop.f32.mrb[0].mxu0
    %3816 = vmatprep.mubr.f32.mxu0 0.0
    %3817 = vmatmul.mubr.f32.gmra.mrb[0].mxu0 %v3670
    %v3818 = vpop.f32.mrb[0].mxu0
    %v3819 = vadd.f32 %v484, %v3818
    %v3820 = vpop.f32.mrb[0].mxu0
    %3821 = vdwg.mxu0
    %3822 = vmatprep.subr.mxu0 0.0
    %3823 = vmatpush1.msra.mxu0 %v87
    %3824 = vmatprep.subr.mxu0 0.0
    %3825 = vmatpush1.msra.mxu0 %v88
    %3826 = vmatprep.subr.mxu0 0.0
    %3827 = vmatpush1.msra.mxu0 %v89
    %3828 = vmatprep.subr.mxu0 0.0
    %3829 = vmatpush1.msra.mxu0 %v90
    %3830 = vmatprep.subr.mxu0 0.0
    %3831 = vmatpush1.msra.mxu0 0.0
    %3832 = vmatprep.subr.mxu0 0.0
    %3833 = vmatpush1.msra.mxu0 0.0
    %3834 = vmatprep.subr.mxu0 0.0
    %3835 = vmatpush1.msra.mxu0 0.0
    %3836 = vmatprep.subr.mxu0 0.0
    %3837 = vmatpush1.msra.mxu0 0.0
    %3838 = vmatprep.subr.mxu0 0.0
    %3839 = vmatpush1.msra.mxu0 0.0
    %3840 = vmatprep.subr.mxu0 0.0
    %3841 = vmatpush1.msra.mxu0 0.0
    %3842 = vmatprep.subr.mxu0 0.0
    %3843 = vmatpush1.msra.mxu0 0.0
    %3844 = vmatprep.subr.mxu0 0.0
    %3845 = vmatpush1.msra.mxu0 0.0
    %3846 = vmatprep.subr.mxu0 0.0
    %3847 = vmatpush1.msra.mxu0 0.0
    %3848 = vmatprep.subr.mxu0 0.0
    %3849 = vmatpush1.msra.mxu0 0.0
    %3850 = vmatprep.subr.mxu0 0.0
    %3851 = vmatpush1.msra.mxu0 0.0
    %3852 = vmatprep.subr.mxu0 0.0
    %3853 = vmatpush1.msra.mxu0 0.0
    %3854 = vmatprep.subr.mxu0 0.0
    %3855 = vmatpush1.msra.mxu0 0.0
    %3856 = vmatprep.subr.mxu0 0.0
    %3857 = vmatpush1.msra.mxu0 0.0
    %3858 = vmatprep.subr.mxu0 0.0
    %3859 = vmatpush1.msra.mxu0 0.0
    %3860 = vmatprep.subr.mxu0 0.0
    %3861 = vmatpush1.msra.mxu0 0.0
    %3862 = vmatprep.subr.mxu0 0.0
    %3863 = vmatpush1.msra.mxu0 0.0
    %3864 = vmatprep.subr.mxu0 0.0
    %3865 = vmatpush1.msra.mxu0 0.0
    %3866 = vmatprep.subr.mxu0 0.0
    %3867 = vmatpush1.msra.mxu0 0.0
    %3868 = vmatprep.subr.mxu0 0.0
    %3869 = vmatpush1.msra.mxu0 0.0
    %3870 = vmatprep.subr.mxu0 0.0
    %3871 = vmatpush1.msra.mxu0 0.0
    %3872 = vmatprep.subr.mxu0 0.0
    %3873 = vmatpush1.msra.mxu0 0.0
    %3874 = vmatprep.subr.mxu0 0.0
    %3875 = vmatpush1.msra.mxu0 0.0
    %3876 = vmatprep.subr.mxu0 0.0
    %3877 = vmatpush1.msra.mxu0 0.0
    %3878 = vmatprep.subr.mxu0 0.0
    %3879 = vmatpush1.msra.mxu0 0.0
    %3880 = vmatprep.subr.mxu0 0.0
    %3881 = vmatpush1.msra.mxu0 0.0
    %3882 = vmatprep.subr.mxu0 0.0
    %3883 = vmatpush1.msra.mxu0 0.0
    %3884 = vmatprep.subr.mxu0 0.0
    %3885 = vmatpush1.msra.mxu0 0.0
    %3886 = vmatprep.mubr.f32.mxu0 0.0
    %3887 = vmatmul.mubr.f32.gmra.mrb[0].mxu0 %v3667
    %v3888 = vpop.f32.mrb[0].mxu0
    %v3889 = vadd.f32 %v498, %v3888
    %v3890 = vpop.f32.mrb[0].mxu0
    %3891 = vmatprep.mubr.f32.mxu0 0.0
    %3892 = vmatmul.mubr.f32.gmra.mrb[0].mxu0 %v3670
    %v3893 = vpop.f32.mrb[0].mxu0
    %v3894 = vadd.f32 %v498, %v3893
    %v3895 = vpop.f32.mrb[0].mxu0
    %3896 = vdwg.mxu0
    %v3897 = vadd.f32 %v417, %v3739
    %v3898 = vadd.f32 %v418, %v3744
    %v3899 = vmul.f32 %v3897, 0.5
    %v3900 = vmul.f32 %v3898, 0.5
    %v3901 = vtanh.pop %v3899
    %v3902 = vtanh.pop %v3900
    %v3903 = vmul.f32 %v3901, 0.5
    %v3904 = vmul.f32 %v3902, 0.5
    %v3905 = vadd.f32 %v3903, 0.5
    %v3906 = vadd.f32 %v3904, 0.5
    %v3907 = vadd.f32 %v421, %v3814
    %v3908 = vadd.f32 %v422, %v3819
    %v3909 = vmul.f32 %v3907, 0.5
    %v3910 = vmul.f32 %v3908, 0.5
    %v3911 = vtanh.pop %v3909
    %v3912 = vtanh.pop %v3910
    %v3913 = vmul.f32 %v3911, 0.5
    %v3914 = vmul.f32 %v3912, 0.5
    %v3915 = vadd.f32 %v3913, 0.5
    %v3916 = vadd.f32 %v3914, 0.5
    %v3917 = vmul.f32 %v3905, %v3889
    %v3918 = vmul.f32 %v3906, %v3894
    %v3919 = vadd.f32 %v425, %v3917
    %v3920 = vadd.f32 %v426, %v3918
    %v3921 = vtanh.pop %v3919
    %v3922 = vtanh.pop %v3920
    %v3923 = vsub.f32 %v3664, %v3921
    %v3924 = vsub.f32 %v3665, %v3922
    %v3925 = vmul.f32 %v3915, %v3923
    %v3926 = vmul.f32 %v3916, %v3924
    %v3927 = vadd.f32 %v3921, %v3925
    %v3928 = vadd.f32 %v3922, %v3926
    %v3930 = vsel %vm509, %v3927, 0
    %v3933 = vsel %vm509, %v3928, 0
    %3935 = vmatprep.subr.mxu0 0.0
    %3936 = vmatpush1.msra.mxu0 %v77
    %3937 = vmatprep.subr.mxu0 0.0
    %3938 = vmatpush1.msra.mxu0 %v78
    %3939 = vmatprep.subr.mxu0 0.0
    %3940 = vmatpush1.msra.mxu0 %v79
    %3941 = vmatprep.subr.mxu0 0.0
    %3942 = vmatpush1.msra.mxu0 %v80
    %3943 = vmatprep.subr.mxu0 0.0
    %3944 = vmatpush1.msra.mxu0 0.0
    %3945 = vmatprep.subr.mxu0 0.0
    %3946 = vmatpush1.msra.mxu0 0.0
    %3947 = vmatprep.subr.mxu0 0.0
    %3948 = vmatpush1.msra.mxu0 0.0
    %3949 = vmatprep.subr.mxu0 0.0
    %3950 = vmatpush1.msra.mxu0 0.0
    %3951 = vmatprep.subr.mxu0 0.0
    %3952 = vmatpush1.msra.mxu0 0.0
    %3953 = vmatprep.subr.mxu0 0.0
    %3954 = vmatpush1.msra.mxu0 0.0
    %3955 = vmatprep.subr.mxu0 0.0
    %3956 = vmatpush1.msra.mxu0 0.0
    %3957 = vmatprep.subr.mxu0 0.0
    %3958 = vmatpush1.msra.mxu0 0.0
    %3959 = vmatprep.subr.mxu0 0.0
    %3960 = vmatpush1.msra.mxu0 0.0
    %3961 = vmatprep.subr.mxu0 0.0
    %3962 = vmatpush1.msra.mxu0 0.0
    %3963 = vmatprep.subr.mxu0 0.0
    %3964 = vmatpush1.msra.mxu0 0.0
    %3965 = vmatprep.subr.mxu0 0.0
    %3966 = vmatpush1.msra.mxu0 0.0
    %3967 = vmatprep.subr.mxu0 0.0
    %3968 = vmatpush1.msra.mxu0 0.0
    %3969 = vmatprep.subr.mxu0 0.0
    %3970 = vmatpush1.msra.mxu0 0.0
    %3971 = vmatprep.subr.mxu0 0.0
    %3972 = vmatpush1.msra.mxu0 0.0
    %3973 = vmatprep.subr.mxu0 0.0
    %3974 = vmatpush1.msra.mxu0 0.0
    %3975 = vmatprep.subr.mxu0 0.0
    %3976 = vmatpush1.msra.mxu0 0.0
    %3977 = vmatprep.subr.mxu0 0.0
    %3978 = vmatpush1.msra.mxu0 0.0
    %3979 = vmatprep.subr.mxu0 0.0
    %3980 = vmatpush1.msra.mxu0 0.0
    %3981 = vmatprep.subr.mxu0 0.0
    %3982 = vmatpush1.msra.mxu0 0.0
    %3983 = vmatprep.subr.mxu0 0.0
    %3984 = vmatpush1.msra.mxu0 0.0
    %3985 = vmatprep.subr.mxu0 0.0
    %3986 = vmatpush1.msra.mxu0 0.0
    %3987 = vmatprep.subr.mxu0 0.0
    %3988 = vmatpush1.msra.mxu0 0.0
    %3989 = vmatprep.subr.mxu0 0.0
    %3990 = vmatpush1.msra.mxu0 0.0
    %3991 = vmatprep.subr.mxu0 0.0
    %3992 = vmatpush1.msra.mxu0 0.0
    %3993 = vmatprep.subr.mxu0 0.0
    %3994 = vmatpush1.msra.mxu0 0.0
    %3995 = vmatprep.subr.mxu0 0.0
    %3996 = vmatpush1.msra.mxu0 0.0
    %3997 = vmatprep.subr.mxu0 0.0
    %3998 = vmatpush1.msra.mxu0 0.0
    %3999 = vmatprep.mubr.f32.mxu0 0.0
    %4000 = vmatmul.mubr.f32.gmra.mrb[0].mxu0 %v3930
    %v4001 = vpop.f32.mrb[0].mxu0
    %v4002 = vadd.f32 %v470, %v4001
    %v4003 = vpop.f32.mrb[0].mxu0
    %4004 = vmatprep.mubr.f32.mxu0 0.0
    %4005 = vmatmul.mubr.f32.gmra.mrb[0].mxu0 %v3933
    %v4006 = vpop.f32.mrb[0].mxu0
    %v4007 = vadd.f32 %v470, %v4006
    %v4008 = vpop.f32.mrb[0].mxu0
    %4009 = vdwg.mxu0
    %4010 = vmatprep.subr.mxu0 0.0
    %4011 = vmatpush1.msra.mxu0 %v82
    %4012 = vmatprep.subr.mxu0 0.0
    %4013 = vmatpush1.msra.mxu0 %v83
    %4014 = vmatprep.subr.mxu0 0.0
    %4015 = vmatpush1.msra.mxu0 %v84
    %4016 = vmatprep.subr.mxu0 0.0
    %4017 = vmatpush1.msra.mxu0 %v85
    %4018 = vmatprep.subr.mxu0 0.0
    %4019 = vmatpush1.msra.mxu0 0.0
    %4020 = vmatprep.subr.mxu0 0.0
    %4021 = vmatpush1.msra.mxu0 0.0
    %4022 = vmatprep.subr.mxu0 0.0
    %4023 = vmatpush1.msra.mxu0 0.0
    %4024 = vmatprep.subr.mxu0 0.0
    %4025 = vmatpush1.msra.mxu0 0.0
    %4026 = vmatprep.subr.mxu0 0.0
    %4027 = vmatpush1.msra.mxu0 0.0
    %4028 = vmatprep.subr.mxu0 0.0
    %4029 = vmatpush1.msra.mxu0 0.0
    %4030 = vmatprep.subr.mxu0 0.0
    %4031 = vmatpush1.msra.mxu0 0.0
    %4032 = vmatprep.subr.mxu0 0.0
    %4033 = vmatpush1.msra.mxu0 0.0
    %4034 = vmatprep.subr.mxu0 0.0
    %4035 = vmatpush1.msra.mxu0 0.0
    %4036 = vmatprep.subr.mxu0 0.0
    %4037 = vmatpush1.msra.mxu0 0.0
    %4038 = vmatprep.subr.mxu0 0.0
    %4039 = vmatpush1.msra.mxu0 0.0
    %4040 = vmatprep.subr.mxu0 0.0
    %4041 = vmatpush1.msra.mxu0 0.0
    %4042 = vmatprep.subr.mxu0 0.0
    %4043 = vmatpush1.msra.mxu0 0.0
    %4044 = vmatprep.subr.mxu0 0.0
    %4045 = vmatpush1.msra.mxu0 0.0
    %4046 = vmatprep.subr.mxu0 0.0
    %4047 = vmatpush1.msra.mxu0 0.0
    %4048 = vmatprep.subr.mxu0 0.0
    %4049 = vmatpush1.msra.mxu0 0.0
    %4050 = vmatprep.subr.mxu0 0.0
    %4051 = vmatpush1.msra.mxu0 0.0
    %4052 = vmatprep.subr.mxu0 0.0
    %4053 = vmatpush1.msra.mxu0 0.0
    %4054 = vmatprep.subr.mxu0 0.0
    %4055 = vmatpush1.msra.mxu0 0.0
    %4056 = vmatprep.subr.mxu0 0.0
    %4057 = vmatpush1.msra.mxu0 0.0
    %4058 = vmatprep.subr.mxu0 0.0
    %4059 = vmatpush1.msra.mxu0 0.0
    %4060 = vmatprep.subr.mxu0 0.0
    %4061 = vmatpush1.msra.mxu0 0.0
    %4062 = vmatprep.subr.mxu0 0.0
    %4063 = vmatpush1.msra.mxu0 0.0
    %4064 = vmatprep.subr.mxu0 0.0
    %4065 = vmatpush1.msra.mxu0 0.0
    %4066 = vmatprep.subr.mxu0 0.0
    %4067 = vmatpush1.msra.mxu0 0.0
    %4068 = vmatprep.subr.mxu0 0.0
    %4069 = vmatpush1.msra.mxu0 0.0
    %4070 = vmatprep.subr.mxu0 0.0
    %4071 = vmatpush1.msra.mxu0 0.0
    %4072 = vmatprep.subr.mxu0 0.0
    %4073 = vmatpush1.msra.mxu0 0.0
    %4074 = vmatprep.mubr.f32.mxu0 0.0
    %4075 = vmatmul.mubr.f32.gmra.mrb[0].mxu0 %v3930
    %v4076 = vpop.f32.mrb[0].mxu0
    %v4077 = vadd.f32 %v484, %v4076
    %v4078 = vpop.f32.mrb[0].mxu0
    %4079 = vmatprep.mubr.f32.mxu0 0.0
    %4080 = vmatmul.mubr.f32.gmra.mrb[0].mxu0 %v3933
    %v4081 = vpop.f32.mrb[0].mxu0
    %v4082 = vadd.f32 %v484, %v4081
    %v4083 = vpop.f32.mrb[0].mxu0
    %4084 = vdwg.mxu0
    %4085 = vmatprep.subr.mxu0 0.0
    %4086 = vmatpush1.msra.mxu0 %v87
    %4087 = vmatprep.subr.mxu0 0.0
    %4088 = vmatpush1.msra.mxu0 %v88
    %4089 = vmatprep.subr.mxu0 0.0
    %4090 = vmatpush1.msra.mxu0 %v89
    %4091 = vmatprep.subr.mxu0 0.0
    %4092 = vmatpush1.msra.mxu0 %v90
    %4093 = vmatprep.subr.mxu0 0.0
    %4094 = vmatpush1.msra.mxu0 0.0
    %4095 = vmatprep.subr.mxu0 0.0
    %4096 = vmatpush1.msra.mxu0 0.0
    %4097 = vmatprep.subr.mxu0 0.0
    %4098 = vmatpush1.msra.mxu0 0.0
    %4099 = vmatprep.subr.mxu0 0.0
    %4100 = vmatpush1.msra.mxu0 0.0
    %4101 = vmatprep.subr.mxu0 0.0
    %4102 = vmatpush1.msra.mxu0 0.0
    %4103 = vmatprep.subr.mxu0 0.0
    %4104 = vmatpush1.msra.mxu0 0.0
    %4105 = vmatprep.subr.mxu0 0.0
    %4106 = vmatpush1.msra.mxu0 0.0
    %4107 = vmatprep.subr.mxu0 0.0
    %4108 = vmatpush1.msra.mxu0 0.0
    %4109 = vmatprep.subr.mxu0 0.0
    %4110 = vmatpush1.msra.mxu0 0.0
    %4111 = vmatprep.subr.mxu0 0.0
    %4112 = vmatpush1.msra.mxu0 0.0
    %4113 = vmatprep.subr.mxu0 0.0
    %4114 = vmatpush1.msra.mxu0 0.0
    %4115 = vmatprep.subr.mxu0 0.0
    %4116 = vmatpush1.msra.mxu0 0.0
    %4117 = vmatprep.subr.mxu0 0.0
    %4118 = vmatpush1.msra.mxu0 0.0
    %4119 = vmatprep.subr.mxu0 0.0
    %4120 = vmatpush1.msra.mxu0 0.0
    %4121 = vmatprep.subr.mxu0 0.0
    %4122 = vmatpush1.msra.mxu0 0.0
    %4123 = vmatprep.subr.mxu0 0.0
    %4124 = vmatpush1.msra.mxu0 0.0
    %4125 = vmatprep.subr.mxu0 0.0
    %4126 = vmatpush1.msra.mxu0 0.0
    %4127 = vmatprep.subr.mxu0 0.0
    %4128 = vmatpush1.msra.mxu0 0.0
    %4129 = vmatprep.subr.mxu0 0.0
    %4130 = vmatpush1.msra.mxu0 0.0
    %4131 = vmatprep.subr.mxu0 0.0
    %4132 = vmatpush1.msra.mxu0 0.0
    %4133 = vmatprep.subr.mxu0 0.0
    %4134 = vmatpush1.msra.mxu0 0.0
    %4135 = vmatprep.subr.mxu0 0.0
    %4136 = vmatpush1.msra.mxu0 0.0
    %4137 = vmatprep.subr.mxu0 0.0
    %4138 = vmatpush1.msra.mxu0 0.0
    %4139 = vmatprep.subr.mxu0 0.0
    %4140 = vmatpush1.msra.mxu0 0.0
    %4141 = vmatprep.subr.mxu0 0.0
    %4142 = vmatpush1.msra.mxu0 0.0
    %4143 = vmatprep.subr.mxu0 0.0
    %4144 = vmatpush1.msra.mxu0 0.0
    %4145 = vmatprep.subr.mxu0 0.0
    %4146 = vmatpush1.msra.mxu0 0.0
    %4147 = vmatprep.subr.mxu0 0.0
    %4148 = vmatpush1.msra.mxu0 0.0
    %4149 = vmatprep.mubr.f32.mxu0 0.0
    %4150 = vmatmul.mubr.f32.gmra.mrb[0].mxu0 %v3930
    %v4151 = vpop.f32.mrb[0].mxu0
    %v4152 = vadd.f32 %v498, %v4151
    %v4153 = vpop.f32.mrb[0].mxu0
    %4154 = vmatprep.mubr.f32.mxu0 0.0
    %4155 = vmatmul.mubr.f32.gmra.mrb[0].mxu0 %v3933
    %v4156 = vpop.f32.mrb[0].mxu0
    %v4157 = vadd.f32 %v498, %v4156
    %v4158 = vpop.f32.mrb[0].mxu0
    %4159 = vdwg.mxu0
    %v4160 = vadd.f32 %v437, %v4002
    %v4161 = vadd.f32 %v438, %v4007
    %v4162 = vmul.f32 %v4160, 0.5
    %v4163 = vmul.f32 %v4161, 0.5
    %v4164 = vtanh.pop %v4162
    %v4165 = vtanh.pop %v4163
    %v4166 = vmul.f32 %v4164, 0.5
    %v4167 = vmul.f32 %v4165, 0.5
    %v4168 = vadd.f32 %v4166, 0.5
    %v4169 = vadd.f32 %v4167, 0.5
    %v4170 = vadd.f32 %v441, %v4077
    %v4171 = vadd.f32 %v442, %v4082
    %v4172 = vmul.f32 %v4170, 0.5
    %v4173 = vmul.f32 %v4171, 0.5
    %v4174 = vtanh.pop %v4172
    %v4175 = vtanh.pop %v4173
    %v4176 = vmul.f32 %v4174, 0.5
    %v4177 = vmul.f32 %v4175, 0.5
    %v4178 = vadd.f32 %v4176, 0.5
    %v4179 = vadd.f32 %v4177, 0.5
    %v4180 = vmul.f32 %v4168, %v4152
    %v4181 = vmul.f32 %v4169, %v4157
    %v4182 = vadd.f32 %v445, %v4180
    %v4183 = vadd.f32 %v446, %v4181
    %v4184 = vtanh.pop %v4182
    %v4185 = vtanh.pop %v4183
    %v4186 = vsub.f32 %v3927, %v4184
    %v4187 = vsub.f32 %v3928, %v4185
    %v4188 = vmul.f32 %v4178, %v4186
    %v4189 = vmul.f32 %v4179, %v4187
    %v4190 = vadd.f32 %v4184, %v4188
    %v4191 = vadd.f32 %v4185, %v4189
    %v4193 = vsel %vm509, %v4190, 0
    %v4196 = vsel %vm509, %v4191, 0
    %4198 = vmatprep.subr.mxu0 0.0
    %4199 = vmatpush1.msra.mxu0 %v77
    %4200 = vmatprep.subr.mxu0 0.0
    %4201 = vmatpush1.msra.mxu0 %v78
    %4202 = vmatprep.subr.mxu0 0.0
    %4203 = vmatpush1.msra.mxu0 %v79
    %4204 = vmatprep.subr.mxu0 0.0
    %4205 = vmatpush1.msra.mxu0 %v80
    %4206 = vmatprep.subr.mxu0 0.0
    %4207 = vmatpush1.msra.mxu0 0.0
    %4208 = vmatprep.subr.mxu0 0.0
    %4209 = vmatpush1.msra.mxu0 0.0
    %4210 = vmatprep.subr.mxu0 0.0
    %4211 = vmatpush1.msra.mxu0 0.0
    %4212 = vmatprep.subr.mxu0 0.0
    %4213 = vmatpush1.msra.mxu0 0.0
    %4214 = vmatprep.subr.mxu0 0.0
    %4215 = vmatpush1.msra.mxu0 0.0
    %4216 = vmatprep.subr.mxu0 0.0
    %4217 = vmatpush1.msra.mxu0 0.0
    %4218 = vmatprep.subr.mxu0 0.0
    %4219 = vmatpush1.msra.mxu0 0.0
    %4220 = vmatprep.subr.mxu0 0.0
    %4221 = vmatpush1.msra.mxu0 0.0
    %4222 = vmatprep.subr.mxu0 0.0
    %4223 = vmatpush1.msra.mxu0 0.0
    %4224 = vmatprep.subr.mxu0 0.0
    %4225 = vmatpush1.msra.mxu0 0.0
    %4226 = vmatprep.subr.mxu0 0.0
    %4227 = vmatpush1.msra.mxu0 0.0
    %4228 = vmatprep.subr.mxu0 0.0
    %4229 = vmatpush1.msra.mxu0 0.0
    %4230 = vmatprep.subr.mxu0 0.0
    %4231 = vmatpush1.msra.mxu0 0.0
    %4232 = vmatprep.subr.mxu0 0.0
    %4233 = vmatpush1.msra.mxu0 0.0
    %4234 = vmatprep.subr.mxu0 0.0
    %4235 = vmatpush1.msra.mxu0 0.0
    %4236 = vmatprep.subr.mxu0 0.0
    %4237 = vmatpush1.msra.mxu0 0.0
    %4238 = vmatprep.subr.mxu0 0.0
    %4239 = vmatpush1.msra.mxu0 0.0
    %4240 = vmatprep.subr.mxu0 0.0
    %4241 = vmatpush1.msra.mxu0 0.0
    %4242 = vmatprep.subr.mxu0 0.0
    %4243 = vmatpush1.msra.mxu0 0.0
    %4244 = vmatprep.subr.mxu0 0.0
    %4245 = vmatpush1.msra.mxu0 0.0
    %4246 = vmatprep.subr.mxu0 0.0
    %4247 = vmatpush1.msra.mxu0 0.0
    %4248 = vmatprep.subr.mxu0 0.0
    %4249 = vmatpush1.msra.mxu0 0.0
    %4250 = vmatprep.subr.mxu0 0.0
    %4251 = vmatpush1.msra.mxu0 0.0
    %4252 = vmatprep.subr.mxu0 0.0
    %4253 = vmatpush1.msra.mxu0 0.0
    %4254 = vmatprep.subr.mxu0 0.0
    %4255 = vmatpush1.msra.mxu0 0.0
    %4256 = vmatprep.subr.mxu0 0.0
    %4257 = vmatpush1.msra.mxu0 0.0
    %4258 = vmatprep.subr.mxu0 0.0
    %4259 = vmatpush1.msra.mxu0 0.0
    %4260 = vmatprep.subr.mxu0 0.0
    %4261 = vmatpush1.msra.mxu0 0.0
    %4262 = vmatprep.mubr.f32.mxu0 0.0
    %4263 = vmatmul.mubr.f32.gmra.mrb[0].mxu0 %v4193
    %v4264 = vpop.f32.mrb[0].mxu0
    %v4265 = vadd.f32 %v470, %v4264
    %v4266 = vpop.f32.mrb[0].mxu0
    %4267 = vmatprep.mubr.f32.mxu0 0.0
    %4268 = vmatmul.mubr.f32.gmra.mrb[0].mxu0 %v4196
    %v4269 = vpop.f32.mrb[0].mxu0
    %v4270 = vadd.f32 %v470, %v4269
    %v4271 = vpop.f32.mrb[0].mxu0
    %4272 = vdwg.mxu0
    %4273 = vmatprep.subr.mxu0 0.0
    %4274 = vmatpush1.msra.mxu0 %v82
    %4275 = vmatprep.subr.mxu0 0.0
    %4276 = vmatpush1.msra.mxu0 %v83
    %4277 = vmatprep.subr.mxu0 0.0
    %4278 = vmatpush1.msra.mxu0 %v84
    %4279 = vmatprep.subr.mxu0 0.0
    %4280 = vmatpush1.msra.mxu0 %v85
    %4281 = vmatprep.subr.mxu0 0.0
    %4282 = vmatpush1.msra.mxu0 0.0
    %4283 = vmatprep.subr.mxu0 0.0
    %4284 = vmatpush1.msra.mxu0 0.0
    %4285 = vmatprep.subr.mxu0 0.0
    %4286 = vmatpush1.msra.mxu0 0.0
    %4287 = vmatprep.subr.mxu0 0.0
    %4288 = vmatpush1.msra.mxu0 0.0
    %4289 = vmatprep.subr.mxu0 0.0
    %4290 = vmatpush1.msra.mxu0 0.0
    %4291 = vmatprep.subr.mxu0 0.0
    %4292 = vmatpush1.msra.mxu0 0.0
    %4293 = vmatprep.subr.mxu0 0.0
    %4294 = vmatpush1.msra.mxu0 0.0
    %4295 = vmatprep.subr.mxu0 0.0
    %4296 = vmatpush1.msra.mxu0 0.0
    %4297 = vmatprep.subr.mxu0 0.0
    %4298 = vmatpush1.msra.mxu0 0.0
    %4299 = vmatprep.subr.mxu0 0.0
    %4300 = vmatpush1.msra.mxu0 0.0
    %4301 = vmatprep.subr.mxu0 0.0
    %4302 = vmatpush1.msra.mxu0 0.0
    %4303 = vmatprep.subr.mxu0 0.0
    %4304 = vmatpush1.msra.mxu0 0.0
    %4305 = vmatprep.subr.mxu0 0.0
    %4306 = vmatpush1.msra.mxu0 0.0
    %4307 = vmatprep.subr.mxu0 0.0
    %4308 = vmatpush1.msra.mxu0 0.0
    %4309 = vmatprep.subr.mxu0 0.0
    %4310 = vmatpush1.msra.mxu0 0.0
    %4311 = vmatprep.subr.mxu0 0.0
    %4312 = vmatpush1.msra.mxu0 0.0
    %4313 = vmatprep.subr.mxu0 0.0
    %4314 = vmatpush1.msra.mxu0 0.0
    %4315 = vmatprep.subr.mxu0 0.0
    %4316 = vmatpush1.msra.mxu0 0.0
    %4317 = vmatprep.subr.mxu0 0.0
    %4318 = vmatpush1.msra.mxu0 0.0
    %4319 = vmatprep.subr.mxu0 0.0
    %4320 = vmatpush1.msra.mxu0 0.0
    %4321 = vmatprep.subr.mxu0 0.0
    %4322 = vmatpush1.msra.mxu0 0.0
    %4323 = vmatprep.subr.mxu0 0.0
    %4324 = vmatpush1.msra.mxu0 0.0
    %4325 = vmatprep.subr.mxu0 0.0
    %4326 = vmatpush1.msra.mxu0 0.0
    %4327 = vmatprep.subr.mxu0 0.0
    %4328 = vmatpush1.msra.mxu0 0.0
    %4329 = vmatprep.subr.mxu0 0.0
    %4330 = vmatpush1.msra.mxu0 0.0
    %4331 = vmatprep.subr.mxu0 0.0
    %4332 = vmatpush1.msra.mxu0 0.0
    %4333 = vmatprep.subr.mxu0 0.0
    %4334 = vmatpush1.msra.mxu0 0.0
    %4335 = vmatprep.subr.mxu0 0.0
    %4336 = vmatpush1.msra.mxu0 0.0
    %4337 = vmatprep.mubr.f32.mxu0 0.0
    %4338 = vmatmul.mubr.f32.gmra.mrb[0].mxu0 %v4193
    %v4339 = vpop.f32.mrb[0].mxu0
    %v4340 = vadd.f32 %v484, %v4339
    %v4341 = vpop.f32.mrb[0].mxu0
    %4342 = vmatprep.mubr.f32.mxu0 0.0
    %4343 = vmatmul.mubr.f32.gmra.mrb[0].mxu0 %v4196
    %v4344 = vpop.f32.mrb[0].mxu0
    %v4345 = vadd.f32 %v484, %v4344
    %v4346 = vpop.f32.mrb[0].mxu0
    %4347 = vdwg.mxu0
    %4348 = vmatprep.subr.mxu0 0.0
    %4349 = vmatpush1.msra.mxu0 %v87
    %4350 = vmatprep.subr.mxu0 0.0
    %4351 = vmatpush1.msra.mxu0 %v88
    %4352 = vmatprep.subr.mxu0 0.0
    %4353 = vmatpush1.msra.mxu0 %v89
    %4354 = vmatprep.subr.mxu0 0.0
    %4355 = vmatpush1.msra.mxu0 %v90
    %4356 = vmatprep.subr.mxu0 0.0
    %4357 = vmatpush1.msra.mxu0 0.0
    %4358 = vmatprep.subr.mxu0 0.0
    %4359 = vmatpush1.msra.mxu0 0.0
    %4360 = vmatprep.subr.mxu0 0.0
    %4361 = vmatpush1.msra.mxu0 0.0
    %4362 = vmatprep.subr.mxu0 0.0
    %4363 = vmatpush1.msra.mxu0 0.0
    %4364 = vmatprep.subr.mxu0 0.0
    %4365 = vmatpush1.msra.mxu0 0.0
    %4366 = vmatprep.subr.mxu0 0.0
    %4367 = vmatpush1.msra.mxu0 0.0
    %4368 = vmatprep.subr.mxu0 0.0
    %4369 = vmatpush1.msra.mxu0 0.0
    %4370 = vmatprep.subr.mxu0 0.0
    %4371 = vmatpush1.msra.mxu0 0.0
    %4372 = vmatprep.subr.mxu0 0.0
    %4373 = vmatpush1.msra.mxu0 0.0
    %4374 = vmatprep.subr.mxu0 0.0
    %4375 = vmatpush1.msra.mxu0 0.0
    %4376 = vmatprep.subr.mxu0 0.0
    %4377 = vmatpush1.msra.mxu0 0.0
    %4378 = vmatprep.subr.mxu0 0.0
    %4379 = vmatpush1.msra.mxu0 0.0
    %4380 = vmatprep.subr.mxu0 0.0
    %4381 = vmatpush1.msra.mxu0 0.0
    %4382 = vmatprep.subr.mxu0 0.0
    %4383 = vmatpush1.msra.mxu0 0.0
    %4384 = vmatprep.subr.mxu0 0.0
    %4385 = vmatpush1.msra.mxu0 0.0
    %4386 = vmatprep.subr.mxu0 0.0
    %4387 = vmatpush1.msra.mxu0 0.0
    %4388 = vmatprep.subr.mxu0 0.0
    %4389 = vmatpush1.msra.mxu0 0.0
    %4390 = vmatprep.subr.mxu0 0.0
    %4391 = vmatpush1.msra.mxu0 0.0
    %4392 = vmatprep.subr.mxu0 0.0
    %4393 = vmatpush1.msra.mxu0 0.0
    %4394 = vmatprep.subr.mxu0 0.0
    %4395 = vmatpush1.msra.mxu0 0.0
    %4396 = vmatprep.subr.mxu0 0.0
    %4397 = vmatpush1.msra.mxu0 0.0
    %4398 = vmatprep.subr.mxu0 0.0
    %4399 = vmatpush1.msra.mxu0 0.0
    %4400 = vmatprep.subr.mxu0 0.0
    %4401 = vmatpush1.msra.mxu0 0.0
    %4402 = vmatprep.subr.mxu0 0.0
    %4403 = vmatpush1.msra.mxu0 0.0
    %4404 = vmatprep.subr.mxu0 0.0
    %4405 = vmatpush1.msra.mxu0 0.0
    %4406 = vmatprep.subr.mxu0 0.0
    %4407 = vmatpush1.msra.mxu0 0.0
    %4408 = vmatprep.subr.mxu0 0.0
    %4409 = vmatpush1.msra.mxu0 0.0
    %4410 = vmatprep.subr.mxu0 0.0
    %4411 = vmatpush1.msra.mxu0 0.0
    %4412 = vmatprep.mubr.f32.mxu0 0.0
    %4413 = vmatmul.mubr.f32.gmra.mrb[0].mxu0 %v4193
    %v4414 = vpop.f32.mrb[0].mxu0
    %v4415 = vadd.f32 %v498, %v4414
    %v4416 = vpop.f32.mrb[0].mxu0
    %4417 = vmatprep.mubr.f32.mxu0 0.0
    %4418 = vmatmul.mubr.f32.gmra.mrb[0].mxu0 %v4196
    %v4419 = vpop.f32.mrb[0].mxu0
    %v4420 = vadd.f32 %v498, %v4419
    %v4421 = vpop.f32.mrb[0].mxu0
    %4422 = vdwg.mxu0
    %v4423 = vadd.f32 %v457, %v4265
    %v4424 = vadd.f32 %v458, %v4270
    %v4425 = vmul.f32 %v4423, 0.5
    %v4426 = vmul.f32 %v4424, 0.5
    %v4427 = vtanh.pop %v4425
    %v4428 = vtanh.pop %v4426
    %v4429 = vmul.f32 %v4427, 0.5
    %v4430 = vmul.f32 %v4428, 0.5
    %v4431 = vadd.f32 %v4429, 0.5
    %v4432 = vadd.f32 %v4430, 0.5
    %v4433 = vadd.f32 %v461, %v4340
    %v4434 = vadd.f32 %v462, %v4345
    %v4435 = vmul.f32 %v4433, 0.5
    %v4436 = vmul.f32 %v4434, 0.5
    %v4437 = vtanh.pop %v4435
    %v4438 = vtanh.pop %v4436
    %v4439 = vmul.f32 %v4437, 0.5
    %v4440 = vmul.f32 %v4438, 0.5
    %v4441 = vadd.f32 %v4439, 0.5
    %v4442 = vadd.f32 %v4440, 0.5
    %v4443 = vmul.f32 %v4431, %v4415
    %v4444 = vmul.f32 %v4432, %v4420
    %v4445 = vadd.f32 %v465, %v4443
    %v4446 = vadd.f32 %v466, %v4444
    %v4447 = vtanh.pop %v4445
    %v4448 = vtanh.pop %v4446
    %v4449 = vsub.f32 %v4190, %v4447
    %v4450 = vsub.f32 %v4191, %v4448
    %v4451 = vmul.f32 %v4441, %v4449
    %v4452 = vmul.f32 %v4442, %v4450
    %v4453 = vadd.f32 %v4447, %v4451
    %v4454 = vadd.f32 %v4448, %v4452
    %v4455 = vlaneseq
    %v4456 = vshrl.u32 %v4455, 7
    %v4457 = vsub.s32 1, %v4456
    %v4458 = vrot.slane %v76, %v4457
    %v4460 = vsel %vm509, %v4453, 0
    %v4463 = vsel %vm509, %v4454, 0
    %4465 = vmatprep.subr.mxu0 0.0
    %4466 = vmatpush1.msra.mxu0 %v92
    %4467 = vmatprep.subr.mxu0 0.0
    %4468 = vmatpush1.msra.mxu0 %v93
    %4469 = vmatprep.subr.mxu0 0.0
    %4470 = vmatpush1.msra.mxu0 %v94
    %4471 = vmatprep.subr.mxu0 0.0
    %4472 = vmatpush1.msra.mxu0 %v95
    %4473 = vmatprep.subr.mxu0 0.0
    %4474 = vmatpush1.msra.mxu0 0.0
    %4475 = vmatprep.subr.mxu0 0.0
    %4476 = vmatpush1.msra.mxu0 0.0
    %4477 = vmatprep.subr.mxu0 0.0
    %4478 = vmatpush1.msra.mxu0 0.0
    %4479 = vmatprep.subr.mxu0 0.0
    %4480 = vmatpush1.msra.mxu0 0.0
    %4481 = vmatprep.subr.mxu0 0.0
    %4482 = vmatpush1.msra.mxu0 0.0
    %4483 = vmatprep.subr.mxu0 0.0
    %4484 = vmatpush1.msra.mxu0 0.0
    %4485 = vmatprep.subr.mxu0 0.0
    %4486 = vmatpush1.msra.mxu0 0.0
    %4487 = vmatprep.subr.mxu0 0.0
    %4488 = vmatpush1.msra.mxu0 0.0
    %4489 = vmatprep.subr.mxu0 0.0
    %4490 = vmatpush1.msra.mxu0 0.0
    %4491 = vmatprep.subr.mxu0 0.0
    %4492 = vmatpush1.msra.mxu0 0.0
    %4493 = vmatprep.subr.mxu0 0.0
    %4494 = vmatpush1.msra.mxu0 0.0
    %4495 = vmatprep.subr.mxu0 0.0
    %4496 = vmatpush1.msra.mxu0 0.0
    %4497 = vmatprep.subr.mxu0 0.0
    %4498 = vmatpush1.msra.mxu0 0.0
    %4499 = vmatprep.subr.mxu0 0.0
    %4500 = vmatpush1.msra.mxu0 0.0
    %4501 = vmatprep.subr.mxu0 0.0
    %4502 = vmatpush1.msra.mxu0 0.0
    %4503 = vmatprep.subr.mxu0 0.0
    %4504 = vmatpush1.msra.mxu0 0.0
    %4505 = vmatprep.subr.mxu0 0.0
    %4506 = vmatpush1.msra.mxu0 0.0
    %4507 = vmatprep.subr.mxu0 0.0
    %4508 = vmatpush1.msra.mxu0 0.0
    %4509 = vmatprep.subr.mxu0 0.0
    %4510 = vmatpush1.msra.mxu0 0.0
    %4511 = vmatprep.subr.mxu0 0.0
    %4512 = vmatpush1.msra.mxu0 0.0
    %4513 = vmatprep.subr.mxu0 0.0
    %4514 = vmatpush1.msra.mxu0 0.0
    %4515 = vmatprep.subr.mxu0 0.0
    %4516 = vmatpush1.msra.mxu0 0.0
    %4517 = vmatprep.subr.mxu0 0.0
    %4518 = vmatpush1.msra.mxu0 0.0
    %4519 = vmatprep.subr.mxu0 0.0
    %4520 = vmatpush1.msra.mxu0 0.0
    %4521 = vmatprep.subr.mxu0 0.0
    %4522 = vmatpush1.msra.mxu0 0.0
    %4523 = vmatprep.subr.mxu0 0.0
    %4524 = vmatpush1.msra.mxu0 0.0
    %4525 = vmatprep.subr.mxu0 0.0
    %4526 = vmatpush1.msra.mxu0 0.0
    %4527 = vmatprep.subr.mxu0 0.0
    %4528 = vmatpush1.msra.mxu0 0.0
    %4529 = vmatprep.mubr.f32.mxu0 0.0
    %4530 = vmatmul.mubr.f32.gmra.mrb[0].mxu0 %v4460
    %v4531 = vpop.f32.mrb[0].mxu0
    %v4532 = vadd.f32 %v4458, %v4531
    %v4533 = vpop.f32.mrb[0].mxu0
    %4534 = vmatprep.mubr.f32.mxu0 0.0
    %4535 = vmatmul.mubr.f32.gmra.mrb[0].mxu0 %v4463
    %v4536 = vpop.f32.mrb[0].mxu0
    %v4537 = vadd.f32 %v4458, %v4536
    %v4538 = vpop.f32.mrb[0].mxu0
    %4539 = vdwg.mxu0
    %v4540 = vlaneseq
    %v4541 = vshrl.u32 %v4540, 7
    %v4542 = vsub.s32 2, %v4541
    %v4543 = vrot.slane %v76, %v4542
    %4544 = vmatprep.subr.mxu0 0.0
    %4545 = vmatpush1.msra.mxu0 %v97
    %4546 = vmatprep.subr.mxu0 0.0
    %4547 = vmatpush1.msra.mxu0 %v98
    %4548 = vmatprep.subr.mxu0 0.0
    %4549 = vmatpush1.msra.mxu0 %v99
    %4550 = vmatprep.subr.mxu0 0.0
    %4551 = vmatpush1.msra.mxu0 %v100
    %4552 = vmatprep.subr.mxu0 0.0
    %4553 = vmatpush1.msra.mxu0 0.0
    %4554 = vmatprep.subr.mxu0 0.0
    %4555 = vmatpush1.msra.mxu0 0.0
    %4556 = vmatprep.subr.mxu0 0.0
    %4557 = vmatpush1.msra.mxu0 0.0
    %4558 = vmatprep.subr.mxu0 0.0
    %4559 = vmatpush1.msra.mxu0 0.0
    %4560 = vmatprep.subr.mxu0 0.0
    %4561 = vmatpush1.msra.mxu0 0.0
    %4562 = vmatprep.subr.mxu0 0.0
    %4563 = vmatpush1.msra.mxu0 0.0
    %4564 = vmatprep.subr.mxu0 0.0
    %4565 = vmatpush1.msra.mxu0 0.0
    %4566 = vmatprep.subr.mxu0 0.0
    %4567 = vmatpush1.msra.mxu0 0.0
    %4568 = vmatprep.subr.mxu0 0.0
    %4569 = vmatpush1.msra.mxu0 0.0
    %4570 = vmatprep.subr.mxu0 0.0
    %4571 = vmatpush1.msra.mxu0 0.0
    %4572 = vmatprep.subr.mxu0 0.0
    %4573 = vmatpush1.msra.mxu0 0.0
    %4574 = vmatprep.subr.mxu0 0.0
    %4575 = vmatpush1.msra.mxu0 0.0
    %4576 = vmatprep.subr.mxu0 0.0
    %4577 = vmatpush1.msra.mxu0 0.0
    %4578 = vmatprep.subr.mxu0 0.0
    %4579 = vmatpush1.msra.mxu0 0.0
    %4580 = vmatprep.subr.mxu0 0.0
    %4581 = vmatpush1.msra.mxu0 0.0
    %4582 = vmatprep.subr.mxu0 0.0
    %4583 = vmatpush1.msra.mxu0 0.0
    %4584 = vmatprep.subr.mxu0 0.0
    %4585 = vmatpush1.msra.mxu0 0.0
    %4586 = vmatprep.subr.mxu0 0.0
    %4587 = vmatpush1.msra.mxu0 0.0
    %4588 = vmatprep.subr.mxu0 0.0
    %4589 = vmatpush1.msra.mxu0 0.0
    %4590 = vmatprep.subr.mxu0 0.0
    %4591 = vmatpush1.msra.mxu0 0.0
    %4592 = vmatprep.subr.mxu0 0.0
    %4593 = vmatpush1.msra.mxu0 0.0
    %4594 = vmatprep.subr.mxu0 0.0
    %4595 = vmatpush1.msra.mxu0 0.0
    %4596 = vmatprep.subr.mxu0 0.0
    %4597 = vmatpush1.msra.mxu0 0.0
    %4598 = vmatprep.subr.mxu0 0.0
    %4599 = vmatpush1.msra.mxu0 0.0
    %4600 = vmatprep.subr.mxu0 0.0
    %4601 = vmatpush1.msra.mxu0 0.0
    %4602 = vmatprep.subr.mxu0 0.0
    %4603 = vmatpush1.msra.mxu0 0.0
    %4604 = vmatprep.subr.mxu0 0.0
    %4605 = vmatpush1.msra.mxu0 0.0
    %4606 = vmatprep.subr.mxu0 0.0
    %4607 = vmatpush1.msra.mxu0 0.0
    %4608 = vmatprep.mubr.f32.mxu0 0.0
    %4609 = vmatmul.mubr.f32.gmra.mrb[0].mxu0 %v4460
    %v4610 = vpop.f32.mrb[0].mxu0
    %v4611 = vadd.f32 %v4543, %v4610
    %v4612 = vpop.f32.mrb[0].mxu0
    %4613 = vmatprep.mubr.f32.mxu0 0.0
    %4614 = vmatmul.mubr.f32.gmra.mrb[0].mxu0 %v4463
    %v4615 = vpop.f32.mrb[0].mxu0
    %v4616 = vadd.f32 %v4543, %v4615
    %v4617 = vpop.f32.mrb[0].mxu0
    %4618 = vdwg.mxu0
    %v4619 = vlaneseq
    %v4620 = vshrl.u32 %v4619, 7
    %v4621 = vsub.s32 3, %v4620
    %v4622 = vrot.slane %v76, %v4621
    %4623 = vmatprep.subr.mxu0 0.0
    %4624 = vmatpush1.msra.mxu0 %v102
    %4625 = vmatprep.subr.mxu0 0.0
    %4626 = vmatpush1.msra.mxu0 %v103
    %4627 = vmatprep.subr.mxu0 0.0
    %4628 = vmatpush1.msra.mxu0 %v104
    %4629 = vmatprep.subr.mxu0 0.0
    %4630 = vmatpush1.msra.mxu0 %v105
    %4631 = vmatprep.subr.mxu0 0.0
    %4632 = vmatpush1.msra.mxu0 0.0
    %4633 = vmatprep.subr.mxu0 0.0
    %4634 = vmatpush1.msra.mxu0 0.0
    %4635 = vmatprep.subr.mxu0 0.0
    %4636 = vmatpush1.msra.mxu0 0.0
    %4637 = vmatprep.subr.mxu0 0.0
    %4638 = vmatpush1.msra.mxu0 0.0
    %4639 = vmatprep.subr.mxu0 0.0
    %4640 = vmatpush1.msra.mxu0 0.0
    %4641 = vmatprep.subr.mxu0 0.0
    %4642 = vmatpush1.msra.mxu0 0.0
    %4643 = vmatprep.subr.mxu0 0.0
    %4644 = vmatpush1.msra.mxu0 0.0
    %4645 = vmatprep.subr.mxu0 0.0
    %4646 = vmatpush1.msra.mxu0 0.0
    %4647 = vmatprep.subr.mxu0 0.0
    %4648 = vmatpush1.msra.mxu0 0.0
    %4649 = vmatprep.subr.mxu0 0.0
    %4650 = vmatpush1.msra.mxu0 0.0
    %4651 = vmatprep.subr.mxu0 0.0
    %4652 = vmatpush1.msra.mxu0 0.0
    %4653 = vmatprep.subr.mxu0 0.0
    %4654 = vmatpush1.msra.mxu0 0.0
    %4655 = vmatprep.subr.mxu0 0.0
    %4656 = vmatpush1.msra.mxu0 0.0
    %4657 = vmatprep.subr.mxu0 0.0
    %4658 = vmatpush1.msra.mxu0 0.0
    %4659 = vmatprep.subr.mxu0 0.0
    %4660 = vmatpush1.msra.mxu0 0.0
    %4661 = vmatprep.subr.mxu0 0.0
    %4662 = vmatpush1.msra.mxu0 0.0
    %4663 = vmatprep.subr.mxu0 0.0
    %4664 = vmatpush1.msra.mxu0 0.0
    %4665 = vmatprep.subr.mxu0 0.0
    %4666 = vmatpush1.msra.mxu0 0.0
    %4667 = vmatprep.subr.mxu0 0.0
    %4668 = vmatpush1.msra.mxu0 0.0
    %4669 = vmatprep.subr.mxu0 0.0
    %4670 = vmatpush1.msra.mxu0 0.0
    %4671 = vmatprep.subr.mxu0 0.0
    %4672 = vmatpush1.msra.mxu0 0.0
    %4673 = vmatprep.subr.mxu0 0.0
    %4674 = vmatpush1.msra.mxu0 0.0
    %4675 = vmatprep.subr.mxu0 0.0
    %4676 = vmatpush1.msra.mxu0 0.0
    %4677 = vmatprep.subr.mxu0 0.0
    %4678 = vmatpush1.msra.mxu0 0.0
    %4679 = vmatprep.subr.mxu0 0.0
    %4680 = vmatpush1.msra.mxu0 0.0
    %4681 = vmatprep.subr.mxu0 0.0
    %4682 = vmatpush1.msra.mxu0 0.0
    %4683 = vmatprep.subr.mxu0 0.0
    %4684 = vmatpush1.msra.mxu0 0.0
    %4685 = vmatprep.subr.mxu0 0.0
    %4686 = vmatpush1.msra.mxu0 0.0
    %4687 = vmatprep.mubr.f32.mxu0 0.0
    %4688 = vmatmul.mubr.f32.gmra.mrb[0].mxu0 %v4460
    %v4689 = vpop.f32.mrb[0].mxu0
    %v4690 = vadd.f32 %v4622, %v4689
    %v4691 = vpop.f32.mrb[0].mxu0
    %4692 = vmatprep.mubr.f32.mxu0 0.0
    %4693 = vmatmul.mubr.f32.gmra.mrb[0].mxu0 %v4463
    %v4694 = vpop.f32.mrb[0].mxu0
    %v4695 = vadd.f32 %v4622, %v4694
    %v4696 = vpop.f32.mrb[0].mxu0
    %4697 = vdwg.mxu0
    %v4699 = vrot.slane %v76, 4
    %v4701 = vadd.f32 %v4532, %v4699
    %v4702 = vmul.f32 %v4701, 0.5
    %v4703 = vtanh.pop %v4702
    %v4704 = vmul.f32 %v4703, 0.5
    %v4705 = vadd.f32 %v4704, 0.5
    %v4706 = vrot.slane %v76, 5
    %v4708 = vadd.f32 %v4611, %v4706
    %v4709 = vmul.f32 %v4708, 0.5
    %v4710 = vtanh.pop %v4709
    %v4711 = vmul.f32 %v4710, 0.5
    %v4712 = vadd.f32 %v4711, 0.5
    %v4713 = vrot.slane %v76, 6
    %v4715 = vmul.f32 %v4705, %v4713
    %v4716 = vadd.f32 %v4690, %v4715
    %v4717 = vtanh.pop %v4716
    %v4718 = vsub.f32 1.0, %v4712
    %v4719 = vmul.f32 %v4718, %v4717
    %v4721 = vsel %vm509, %v4719, 0
    %4723 = vmatprep.subr.mxu0 0.0
    %4724 = vmatpush1.msra.mxu0 %v107
    %4725 = vmatprep.subr.mxu0 0.0
    %4726 = vmatpush1.msra.mxu0 %v108
    %4727 = vmatprep.subr.mxu0 0.0
    %4728 = vmatpush1.msra.mxu0 %v109
    %4729 = vmatprep.subr.mxu0 0.0
    %4730 = vmatpush1.msra.mxu0 %v110
    %4731 = vmatprep.subr.mxu0 0.0
    %4732 = vmatpush1.msra.mxu0 0.0
    %4733 = vmatprep.subr.mxu0 0.0
    %4734 = vmatpush1.msra.mxu0 0.0
    %4735 = vmatprep.subr.mxu0 0.0
    %4736 = vmatpush1.msra.mxu0 0.0
    %4737 = vmatprep.subr.mxu0 0.0
    %4738 = vmatpush1.msra.mxu0 0.0
    %4739 = vmatprep.subr.mxu0 0.0
    %4740 = vmatpush1.msra.mxu0 0.0
    %4741 = vmatprep.subr.mxu0 0.0
    %4742 = vmatpush1.msra.mxu0 0.0
    %4743 = vmatprep.subr.mxu0 0.0
    %4744 = vmatpush1.msra.mxu0 0.0
    %4745 = vmatprep.subr.mxu0 0.0
    %4746 = vmatpush1.msra.mxu0 0.0
    %4747 = vmatprep.subr.mxu0 0.0
    %4748 = vmatpush1.msra.mxu0 0.0
    %4749 = vmatprep.subr.mxu0 0.0
    %4750 = vmatpush1.msra.mxu0 0.0
    %4751 = vmatprep.subr.mxu0 0.0
    %4752 = vmatpush1.msra.mxu0 0.0
    %4753 = vmatprep.subr.mxu0 0.0
    %4754 = vmatpush1.msra.mxu0 0.0
    %4755 = vmatprep.subr.mxu0 0.0
    %4756 = vmatpush1.msra.mxu0 0.0
    %4757 = vmatprep.subr.mxu0 0.0
    %4758 = vmatpush1.msra.mxu0 0.0
    %4759 = vmatprep.subr.mxu0 0.0
    %4760 = vmatpush1.msra.mxu0 0.0
    %4761 = vmatprep.subr.mxu0 0.0
    %4762 = vmatpush1.msra.mxu0 0.0
    %4763 = vmatprep.subr.mxu0 0.0
    %4764 = vmatpush1.msra.mxu0 0.0
    %4765 = vmatprep.subr.mxu0 0.0
    %4766 = vmatpush1.msra.mxu0 0.0
    %4767 = vmatprep.subr.mxu0 0.0
    %4768 = vmatpush1.msra.mxu0 0.0
    %4769 = vmatprep.subr.mxu0 0.0
    %4770 = vmatpush1.msra.mxu0 0.0
    %4771 = vmatprep.subr.mxu0 0.0
    %4772 = vmatpush1.msra.mxu0 0.0
    %4773 = vmatprep.subr.mxu0 0.0
    %4774 = vmatpush1.msra.mxu0 0.0
    %4775 = vmatprep.subr.mxu0 0.0
    %4776 = vmatpush1.msra.mxu0 0.0
    %4777 = vmatprep.subr.mxu0 0.0
    %4778 = vmatpush1.msra.mxu0 0.0
    %4779 = vmatprep.subr.mxu0 0.0
    %4780 = vmatpush1.msra.mxu0 0.0
    %4781 = vmatprep.subr.mxu0 0.0
    %4782 = vmatpush1.msra.mxu0 0.0
    %4783 = vmatprep.subr.mxu0 0.0
    %4784 = vmatpush1.msra.mxu0 0.0
    %4785 = vmatprep.subr.mxu0 0.0
    %4786 = vmatpush1.msra.mxu0 0.0
    %4787 = vmatprep.mubr.f32.mxu0 0.0
    %4788 = vmatmul.mubr.f32.gmra.mrb[0].mxu0 %v4721
    %v4789 = vpop.f32.mrb[0].mxu0
    %v4790 = vadd.f32 %v4699, %v4789
    %v4791 = vpop.f32.mrb[0].mxu0
    %4792 = vdwg.mxu0
    %4793 = vmatprep.subr.mxu0 0.0
    %4794 = vmatpush1.msra.mxu0 %v112
    %4795 = vmatprep.subr.mxu0 0.0
    %4796 = vmatpush1.msra.mxu0 %v113
    %4797 = vmatprep.subr.mxu0 0.0
    %4798 = vmatpush1.msra.mxu0 %v114
    %4799 = vmatprep.subr.mxu0 0.0
    %4800 = vmatpush1.msra.mxu0 %v115
    %4801 = vmatprep.subr.mxu0 0.0
    %4802 = vmatpush1.msra.mxu0 0.0
    %4803 = vmatprep.subr.mxu0 0.0
    %4804 = vmatpush1.msra.mxu0 0.0
    %4805 = vmatprep.subr.mxu0 0.0
    %4806 = vmatpush1.msra.mxu0 0.0
    %4807 = vmatprep.subr.mxu0 0.0
    %4808 = vmatpush1.msra.mxu0 0.0
    %4809 = vmatprep.subr.mxu0 0.0
    %4810 = vmatpush1.msra.mxu0 0.0
    %4811 = vmatprep.subr.mxu0 0.0
    %4812 = vmatpush1.msra.mxu0 0.0
    %4813 = vmatprep.subr.mxu0 0.0
    %4814 = vmatpush1.msra.mxu0 0.0
    %4815 = vmatprep.subr.mxu0 0.0
    %4816 = vmatpush1.msra.mxu0 0.0
    %4817 = vmatprep.subr.mxu0 0.0
    %4818 = vmatpush1.msra.mxu0 0.0
    %4819 = vmatprep.subr.mxu0 0.0
    %4820 = vmatpush1.msra.mxu0 0.0
    %4821 = vmatprep.subr.mxu0 0.0
    %4822 = vmatpush1.msra.mxu0 0.0
    %4823 = vmatprep.subr.mxu0 0.0
    %4824 = vmatpush1.msra.mxu0 0.0
    %4825 = vmatprep.subr.mxu0 0.0
    %4826 = vmatpush1.msra.mxu0 0.0
    %4827 = vmatprep.subr.mxu0 0.0
    %4828 = vmatpush1.msra.mxu0 0.0
    %4829 = vmatprep.subr.mxu0 0.0
    %4830 = vmatpush1.msra.mxu0 0.0
    %4831 = vmatprep.subr.mxu0 0.0
    %4832 = vmatpush1.msra.mxu0 0.0
    %4833 = vmatprep.subr.mxu0 0.0
    %4834 = vmatpush1.msra.mxu0 0.0
    %4835 = vmatprep.subr.mxu0 0.0
    %4836 = vmatpush1.msra.mxu0 0.0
    %4837 = vmatprep.subr.mxu0 0.0
    %4838 = vmatpush1.msra.mxu0 0.0
    %4839 = vmatprep.subr.mxu0 0.0
    %4840 = vmatpush1.msra.mxu0 0.0
    %4841 = vmatprep.subr.mxu0 0.0
    %4842 = vmatpush1.msra.mxu0 0.0
    %4843 = vmatprep.subr.mxu0 0.0
    %4844 = vmatpush1.msra.mxu0 0.0
    %4845 = vmatprep.subr.mxu0 0.0
    %4846 = vmatpush1.msra.mxu0 0.0
    %4847 = vmatprep.subr.mxu0 0.0
    %4848 = vmatpush1.msra.mxu0 0.0
    %4849 = vmatprep.subr.mxu0 0.0
    %4850 = vmatpush1.msra.mxu0 0.0
    %4851 = vmatprep.subr.mxu0 0.0
    %4852 = vmatpush1.msra.mxu0 0.0
    %4853 = vmatprep.subr.mxu0 0.0
    %4854 = vmatpush1.msra.mxu0 0.0
    %4855 = vmatprep.subr.mxu0 0.0
    %4856 = vmatpush1.msra.mxu0 0.0
    %4857 = vmatprep.mubr.f32.mxu0 0.0
    %4858 = vmatmul.mubr.f32.gmra.mrb[0].mxu0 %v4721
    %v4859 = vpop.f32.mrb[0].mxu0
    %v4860 = vadd.f32 %v4706, %v4859
    %v4861 = vpop.f32.mrb[0].mxu0
    %4862 = vdwg.mxu0
    %4863 = vmatprep.subr.mxu0 0.0
    %4864 = vmatpush1.msra.mxu0 %v117
    %4865 = vmatprep.subr.mxu0 0.0
    %4866 = vmatpush1.msra.mxu0 %v118
    %4867 = vmatprep.subr.mxu0 0.0
    %4868 = vmatpush1.msra.mxu0 %v119
    %4869 = vmatprep.subr.mxu0 0.0
    %4870 = vmatpush1.msra.mxu0 %v120
    %4871 = vmatprep.subr.mxu0 0.0
    %4872 = vmatpush1.msra.mxu0 0.0
    %4873 = vmatprep.subr.mxu0 0.0
    %4874 = vmatpush1.msra.mxu0 0.0
    %4875 = vmatprep.subr.mxu0 0.0
    %4876 = vmatpush1.msra.mxu0 0.0
    %4877 = vmatprep.subr.mxu0 0.0
    %4878 = vmatpush1.msra.mxu0 0.0
    %4879 = vmatprep.subr.mxu0 0.0
    %4880 = vmatpush1.msra.mxu0 0.0
    %4881 = vmatprep.subr.mxu0 0.0
    %4882 = vmatpush1.msra.mxu0 0.0
    %4883 = vmatprep.subr.mxu0 0.0
    %4884 = vmatpush1.msra.mxu0 0.0
    %4885 = vmatprep.subr.mxu0 0.0
    %4886 = vmatpush1.msra.mxu0 0.0
    %4887 = vmatprep.subr.mxu0 0.0
    %4888 = vmatpush1.msra.mxu0 0.0
    %4889 = vmatprep.subr.mxu0 0.0
    %4890 = vmatpush1.msra.mxu0 0.0
    %4891 = vmatprep.subr.mxu0 0.0
    %4892 = vmatpush1.msra.mxu0 0.0
    %4893 = vmatprep.subr.mxu0 0.0
    %4894 = vmatpush1.msra.mxu0 0.0
    %4895 = vmatprep.subr.mxu0 0.0
    %4896 = vmatpush1.msra.mxu0 0.0
    %4897 = vmatprep.subr.mxu0 0.0
    %4898 = vmatpush1.msra.mxu0 0.0
    %4899 = vmatprep.subr.mxu0 0.0
    %4900 = vmatpush1.msra.mxu0 0.0
    %4901 = vmatprep.subr.mxu0 0.0
    %4902 = vmatpush1.msra.mxu0 0.0
    %4903 = vmatprep.subr.mxu0 0.0
    %4904 = vmatpush1.msra.mxu0 0.0
    %4905 = vmatprep.subr.mxu0 0.0
    %4906 = vmatpush1.msra.mxu0 0.0
    %4907 = vmatprep.subr.mxu0 0.0
    %4908 = vmatpush1.msra.mxu0 0.0
    %4909 = vmatprep.subr.mxu0 0.0
    %4910 = vmatpush1.msra.mxu0 0.0
    %4911 = vmatprep.subr.mxu0 0.0
    %4912 = vmatpush1.msra.mxu0 0.0
    %4913 = vmatprep.subr.mxu0 0.0
    %4914 = vmatpush1.msra.mxu0 0.0
    %4915 = vmatprep.subr.mxu0 0.0
    %4916 = vmatpush1.msra.mxu0 0.0
    %4917 = vmatprep.subr.mxu0 0.0
    %4918 = vmatpush1.msra.mxu0 0.0
    %4919 = vmatprep.subr.mxu0 0.0
    %4920 = vmatpush1.msra.mxu0 0.0
    %4921 = vmatprep.subr.mxu0 0.0
    %4922 = vmatpush1.msra.mxu0 0.0
    %4923 = vmatprep.subr.mxu0 0.0
    %4924 = vmatpush1.msra.mxu0 0.0
    %4925 = vmatprep.subr.mxu0 0.0
    %4926 = vmatpush1.msra.mxu0 0.0
    %4927 = vmatprep.mubr.f32.mxu0 0.0
    %4928 = vmatmul.mubr.f32.gmra.mrb[0].mxu0 %v4721
    %v4929 = vpop.f32.mrb[0].mxu0
    %v4930 = vadd.f32 %v4713, %v4929
    %v4931 = vpop.f32.mrb[0].mxu0
    %4932 = vdwg.mxu0
    %v4934 = vrot.slane %v4790, 7
    %v4936 = vadd.f32 %v4532, %v4934
    %v4937 = vmul.f32 %v4936, 0.5
    %v4938 = vtanh.pop %v4937
    %v4939 = vmul.f32 %v4938, 0.5
    %v4940 = vadd.f32 %v4939, 0.5
    %v4942 = vrot.slane %v4860, 7
    %v4944 = vadd.f32 %v4611, %v4942
    %v4945 = vmul.f32 %v4944, 0.5
    %v4946 = vtanh.pop %v4945
    %v4947 = vmul.f32 %v4946, 0.5
    %v4948 = vadd.f32 %v4947, 0.5
    %v4950 = vrot.slane %v4930, 7
    %v4952 = vmul.f32 %v4940, %v4950
    %v4953 = vadd.f32 %v4690, %v4952
    %v4954 = vtanh.pop %v4953
    %v4956 = vrot.slane %v4954, 1
    %v4958 = vsub.f32 %v4719, %v4956
    %v4960 = vrot.slane %v4958, 7
    %v4962 = vmul.f32 %v4948, %v4960
    %v4963 = vadd.f32 %v4954, %v4962
    %v4965 = vrot.slane %v4963, 1
    %v4966 = vsel %vm509, %v4965, 0
    %4968 = vmatprep.subr.mxu0 0.0
    %4969 = vmatpush1.msra.mxu0 %v107
    %4970 = vmatprep.subr.mxu0 0.0
    %4971 = vmatpush1.msra.mxu0 %v108
    %4972 = vmatprep.subr.mxu0 0.0
    %4973 = vmatpush1.msra.mxu0 %v109
    %4974 = vmatprep.subr.mxu0 0.0
    %4975 = vmatpush1.msra.mxu0 %v110
    %4976 = vmatprep.subr.mxu0 0.0
    %4977 = vmatpush1.msra.mxu0 0.0
    %4978 = vmatprep.subr.mxu0 0.0
    %4979 = vmatpush1.msra.mxu0 0.0
    %4980 = vmatprep.subr.mxu0 0.0
    %4981 = vmatpush1.msra.mxu0 0.0
    %4982 = vmatprep.subr.mxu0 0.0
    %4983 = vmatpush1.msra.mxu0 0.0
    %4984 = vmatprep.subr.mxu0 0.0
    %4985 = vmatpush1.msra.mxu0 0.0
    %4986 = vmatprep.subr.mxu0 0.0
    %4987 = vmatpush1.msra.mxu0 0.0
    %4988 = vmatprep.subr.mxu0 0.0
    %4989 = vmatpush1.msra.mxu0 0.0
    %4990 = vmatprep.subr.mxu0 0.0
    %4991 = vmatpush1.msra.mxu0 0.0
    %4992 = vmatprep.subr.mxu0 0.0
    %4993 = vmatpush1.msra.mxu0 0.0
    %4994 = vmatprep.subr.mxu0 0.0
    %4995 = vmatpush1.msra.mxu0 0.0
    %4996 = vmatprep.subr.mxu0 0.0
    %4997 = vmatpush1.msra.mxu0 0.0
    %4998 = vmatprep.subr.mxu0 0.0
    %4999 = vmatpush1.msra.mxu0 0.0
    %5000 = vmatprep.subr.mxu0 0.0
    %5001 = vmatpush1.msra.mxu0 0.0
    %5002 = vmatprep.subr.mxu0 0.0
    %5003 = vmatpush1.msra.mxu0 0.0
    %5004 = vmatprep.subr.mxu0 0.0
    %5005 = vmatpush1.msra.mxu0 0.0
    %5006 = vmatprep.subr.mxu0 0.0
    %5007 = vmatpush1.msra.mxu0 0.0
    %5008 = vmatprep.subr.mxu0 0.0
    %5009 = vmatpush1.msra.mxu0 0.0
    %5010 = vmatprep.subr.mxu0 0.0
    %5011 = vmatpush1.msra.mxu0 0.0
    %5012 = vmatprep.subr.mxu0 0.0
    %5013 = vmatpush1.msra.mxu0 0.0
    %5014 = vmatprep.subr.mxu0 0.0
    %5015 = vmatpush1.msra.mxu0 0.0
    %5016 = vmatprep.subr.mxu0 0.0
    %5017 = vmatpush1.msra.mxu0 0.0
    %5018 = vmatprep.subr.mxu0 0.0
    %5019 = vmatpush1.msra.mxu0 0.0
    %5020 = vmatprep.subr.mxu0 0.0
    %5021 = vmatpush1.msra.mxu0 0.0
    %5022 = vmatprep.subr.mxu0 0.0
    %5023 = vmatpush1.msra.mxu0 0.0
    %5024 = vmatprep.subr.mxu0 0.0
    %5025 = vmatpush1.msra.mxu0 0.0
    %5026 = vmatprep.subr.mxu0 0.0
    %5027 = vmatpush1.msra.mxu0 0.0
    %5028 = vmatprep.subr.mxu0 0.0
    %5029 = vmatpush1.msra.mxu0 0.0
    %5030 = vmatprep.subr.mxu0 0.0
    %5031 = vmatpush1.msra.mxu0 0.0
    %5032 = vmatprep.mubr.f32.mxu0 0.0
    %5033 = vmatmul.mubr.f32.gmra.mrb[0].mxu0 %v4966
    %v5034 = vpop.f32.mrb[0].mxu0
    %v5035 = vadd.f32 %v4699, %v5034
    %v5036 = vpop.f32.mrb[0].mxu0
    %5037 = vdwg.mxu0
    %5038 = vmatprep.subr.mxu0 0.0
    %5039 = vmatpush1.msra.mxu0 %v112
    %5040 = vmatprep.subr.mxu0 0.0
    %5041 = vmatpush1.msra.mxu0 %v113
    %5042 = vmatprep.subr.mxu0 0.0
    %5043 = vmatpush1.msra.mxu0 %v114
    %5044 = vmatprep.subr.mxu0 0.0
    %5045 = vmatpush1.msra.mxu0 %v115
    %5046 = vmatprep.subr.mxu0 0.0
    %5047 = vmatpush1.msra.mxu0 0.0
    %5048 = vmatprep.subr.mxu0 0.0
    %5049 = vmatpush1.msra.mxu0 0.0
    %5050 = vmatprep.subr.mxu0 0.0
    %5051 = vmatpush1.msra.mxu0 0.0
    %5052 = vmatprep.subr.mxu0 0.0
    %5053 = vmatpush1.msra.mxu0 0.0
    %5054 = vmatprep.subr.mxu0 0.0
    %5055 = vmatpush1.msra.mxu0 0.0
    %5056 = vmatprep.subr.mxu0 0.0
    %5057 = vmatpush1.msra.mxu0 0.0
    %5058 = vmatprep.subr.mxu0 0.0
    %5059 = vmatpush1.msra.mxu0 0.0
    %5060 = vmatprep.subr.mxu0 0.0
    %5061 = vmatpush1.msra.mxu0 0.0
    %5062 = vmatprep.subr.mxu0 0.0
    %5063 = vmatpush1.msra.mxu0 0.0
    %5064 = vmatprep.subr.mxu0 0.0
    %5065 = vmatpush1.msra.mxu0 0.0
    %5066 = vmatprep.subr.mxu0 0.0
    %5067 = vmatpush1.msra.mxu0 0.0
    %5068 = vmatprep.subr.mxu0 0.0
    %5069 = vmatpush1.msra.mxu0 0.0
    %5070 = vmatprep.subr.mxu0 0.0
    %5071 = vmatpush1.msra.mxu0 0.0
    %5072 = vmatprep.subr.mxu0 0.0
    %5073 = vmatpush1.msra.mxu0 0.0
    %5074 = vmatprep.subr.mxu0 0.0
    %5075 = vmatpush1.msra.mxu0 0.0
    %5076 = vmatprep.subr.mxu0 0.0
    %5077 = vmatpush1.msra.mxu0 0.0
    %5078 = vmatprep.subr.mxu0 0.0
    %5079 = vmatpush1.msra.mxu0 0.0
    %5080 = vmatprep.subr.mxu0 0.0
    %5081 = vmatpush1.msra.mxu0 0.0
    %5082 = vmatprep.subr.mxu0 0.0
    %5083 = vmatpush1.msra.mxu0 0.0
    %5084 = vmatprep.subr.mxu0 0.0
    %5085 = vmatpush1.msra.mxu0 0.0
    %5086 = vmatprep.subr.mxu0 0.0
    %5087 = vmatpush1.msra.mxu0 0.0
    %5088 = vmatprep.subr.mxu0 0.0
    %5089 = vmatpush1.msra.mxu0 0.0
    %5090 = vmatprep.subr.mxu0 0.0
    %5091 = vmatpush1.msra.mxu0 0.0
    %5092 = vmatprep.subr.mxu0 0.0
    %5093 = vmatpush1.msra.mxu0 0.0
    %5094 = vmatprep.subr.mxu0 0.0
    %5095 = vmatpush1.msra.mxu0 0.0
    %5096 = vmatprep.subr.mxu0 0.0
    %5097 = vmatpush1.msra.mxu0 0.0
    %5098 = vmatprep.subr.mxu0 0.0
    %5099 = vmatpush1.msra.mxu0 0.0
    %5100 = vmatprep.subr.mxu0 0.0
    %5101 = vmatpush1.msra.mxu0 0.0
    %5102 = vmatprep.mubr.f32.mxu0 0.0
    %5103 = vmatmul.mubr.f32.gmra.mrb[0].mxu0 %v4966
    %v5104 = vpop.f32.mrb[0].mxu0
    %v5105 = vadd.f32 %v4706, %v5104
    %v5106 = vpop.f32.mrb[0].mxu0
    %5107 = vdwg.mxu0
    %5108 = vmatprep.subr.mxu0 0.0
    %5109 = vmatpush1.msra.mxu0 %v117
    %5110 = vmatprep.subr.mxu0 0.0
    %5111 = vmatpush1.msra.mxu0 %v118
    %5112 = vmatprep.subr.mxu0 0.0
    %5113 = vmatpush1.msra.mxu0 %v119
    %5114 = vmatprep.subr.mxu0 0.0
    %5115 = vmatpush1.msra.mxu0 %v120
    %5116 = vmatprep.subr.mxu0 0.0
    %5117 = vmatpush1.msra.mxu0 0.0
    %5118 = vmatprep.subr.mxu0 0.0
    %5119 = vmatpush1.msra.mxu0 0.0
    %5120 = vmatprep.subr.mxu0 0.0
    %5121 = vmatpush1.msra.mxu0 0.0
    %5122 = vmatprep.subr.mxu0 0.0
    %5123 = vmatpush1.msra.mxu0 0.0
    %5124 = vmatprep.subr.mxu0 0.0
    %5125 = vmatpush1.msra.mxu0 0.0
    %5126 = vmatprep.subr.mxu0 0.0
    %5127 = vmatpush1.msra.mxu0 0.0
    %5128 = vmatprep.subr.mxu0 0.0
    %5129 = vmatpush1.msra.mxu0 0.0
    %5130 = vmatprep.subr.mxu0 0.0
    %5131 = vmatpush1.msra.mxu0 0.0
    %5132 = vmatprep.subr.mxu0 0.0
    %5133 = vmatpush1.msra.mxu0 0.0
    %5134 = vmatprep.subr.mxu0 0.0
    %5135 = vmatpush1.msra.mxu0 0.0
    %5136 = vmatprep.subr.mxu0 0.0
    %5137 = vmatpush1.msra.mxu0 0.0
    %5138 = vmatprep.subr.mxu0 0.0
    %5139 = vmatpush1.msra.mxu0 0.0
    %5140 = vmatprep.subr.mxu0 0.0
    %5141 = vmatpush1.msra.mxu0 0.0
    %5142 = vmatprep.subr.mxu0 0.0
    %5143 = vmatpush1.msra.mxu0 0.0
    %5144 = vmatprep.subr.mxu0 0.0
    %5145 = vmatpush1.msra.mxu0 0.0
    %5146 = vmatprep.subr.mxu0 0.0
    %5147 = vmatpush1.msra.mxu0 0.0
    %5148 = vmatprep.subr.mxu0 0.0
    %5149 = vmatpush1.msra.mxu0 0.0
    %5150 = vmatprep.subr.mxu0 0.0
    %5151 = vmatpush1.msra.mxu0 0.0
    %5152 = vmatprep.subr.mxu0 0.0
    %5153 = vmatpush1.msra.mxu0 0.0
    %5154 = vmatprep.subr.mxu0 0.0
    %5155 = vmatpush1.msra.mxu0 0.0
    %5156 = vmatprep.subr.mxu0 0.0
    %5157 = vmatpush1.msra.mxu0 0.0
    %5158 = vmatprep.subr.mxu0 0.0
    %5159 = vmatpush1.msra.mxu0 0.0
    %5160 = vmatprep.subr.mxu0 0.0
    %5161 = vmatpush1.msra.mxu0 0.0
    %5162 = vmatprep.subr.mxu0 0.0
    %5163 = vmatpush1.msra.mxu0 0.0
    %5164 = vmatprep.subr.mxu0 0.0
    %5165 = vmatpush1.msra.mxu0 0.0
    %5166 = vmatprep.subr.mxu0 0.0
    %5167 = vmatpush1.msra.mxu0 0.0
    %5168 = vmatprep.subr.mxu0 0.0
    %5169 = vmatpush1.msra.mxu0 0.0
    %5170 = vmatprep.subr.mxu0 0.0
    %5171 = vmatpush1.msra.mxu0 0.0
    %5172 = vmatprep.mubr.f32.mxu0 0.0
    %5173 = vmatmul.mubr.f32.gmra.mrb[0].mxu0 %v4966
    %v5174 = vpop.f32.mrb[0].mxu0
    %v5175 = vadd.f32 %v4713, %v5174
    %v5176 = vpop.f32.mrb[0].mxu0
    %5177 = vdwg.mxu0
    %v5179 = vrot.slane %v5035, 6
    %v5181 = vadd.f32 %v4532, %v5179
    %v5182 = vmul.f32 %v5181, 0.5
    %v5183 = vtanh.pop %v5182
    %v5184 = vmul.f32 %v5183, 0.5
    %v5185 = vadd.f32 %v5184, 0.5
    %v5187 = vrot.slane %v5105, 6
    %v5189 = vadd.f32 %v4611, %v5187
    %v5190 = vmul.f32 %v5189, 0.5
    %v5191 = vtanh.pop %v5190
    %v5192 = vmul.f32 %v5191, 0.5
    %v5193 = vadd.f32 %v5192, 0.5
    %v5195 = vrot.slane %v5175, 6
    %v5197 = vmul.f32 %v5185, %v5195
    %v5198 = vadd.f32 %v4690, %v5197
    %v5199 = vtanh.pop %v5198
    %v5201 = vrot.slane %v5199, 1
    %v5203 = vsub.f32 %v4963, %v5201
    %v5205 = vrot.slane %v5203, 7
    %v5207 = vmul.f32 %v5193, %v5205
    %v5208 = vadd.f32 %v5199, %v5207
    %v5210 = vrot.slane %v5208, 2
    %v5211 = vsel %vm509, %v5210, 0
    %5213 = vmatprep.subr.mxu0 0.0
    %5214 = vmatpush1.msra.mxu0 %v107
    %5215 = vmatprep.subr.mxu0 0.0
    %5216 = vmatpush1.msra.mxu0 %v108
    %5217 = vmatprep.subr.mxu0 0.0
    %5218 = vmatpush1.msra.mxu0 %v109
    %5219 = vmatprep.subr.mxu0 0.0
    %5220 = vmatpush1.msra.mxu0 %v110
    %5221 = vmatprep.subr.mxu0 0.0
    %5222 = vmatpush1.msra.mxu0 0.0
    %5223 = vmatprep.subr.mxu0 0.0
    %5224 = vmatpush1.msra.mxu0 0.0
    %5225 = vmatprep.subr.mxu0 0.0
    %5226 = vmatpush1.msra.mxu0 0.0
    %5227 = vmatprep.subr.mxu0 0.0
    %5228 = vmatpush1.msra.mxu0 0.0
    %5229 = vmatprep.subr.mxu0 0.0
    %5230 = vmatpush1.msra.mxu0 0.0
    %5231 = vmatprep.subr.mxu0 0.0
    %5232 = vmatpush1.msra.mxu0 0.0
    %5233 = vmatprep.subr.mxu0 0.0
    %5234 = vmatpush1.msra.mxu0 0.0
    %5235 = vmatprep.subr.mxu0 0.0
    %5236 = vmatpush1.msra.mxu0 0.0
    %5237 = vmatprep.subr.mxu0 0.0
    %5238 = vmatpush1.msra.mxu0 0.0
    %5239 = vmatprep.subr.mxu0 0.0
    %5240 = vmatpush1.msra.mxu0 0.0
    %5241 = vmatprep.subr.mxu0 0.0
    %5242 = vmatpush1.msra.mxu0 0.0
    %5243 = vmatprep.subr.mxu0 0.0
    %5244 = vmatpush1.msra.mxu0 0.0
    %5245 = vmatprep.subr.mxu0 0.0
    %5246 = vmatpush1.msra.mxu0 0.0
    %5247 = vmatprep.subr.mxu0 0.0
    %5248 = vmatpush1.msra.mxu0 0.0
    %5249 = vmatprep.subr.mxu0 0.0
    %5250 = vmatpush1.msra.mxu0 0.0
    %5251 = vmatprep.subr.mxu0 0.0
    %5252 = vmatpush1.msra.mxu0 0.0
    %5253 = vmatprep.subr.mxu0 0.0
    %5254 = vmatpush1.msra.mxu0 0.0
    %5255 = vmatprep.subr.mxu0 0.0
    %5256 = vmatpush1.msra.mxu0 0.0
    %5257 = vmatprep.subr.mxu0 0.0
    %5258 = vmatpush1.msra.mxu0 0.0
    %5259 = vmatprep.subr.mxu0 0.0
    %5260 = vmatpush1.msra.mxu0 0.0
    %5261 = vmatprep.subr.mxu0 0.0
    %5262 = vmatpush1.msra.mxu0 0.0
    %5263 = vmatprep.subr.mxu0 0.0
    %5264 = vmatpush1.msra.mxu0 0.0
    %5265 = vmatprep.subr.mxu0 0.0
    %5266 = vmatpush1.msra.mxu0 0.0
    %5267 = vmatprep.subr.mxu0 0.0
    %5268 = vmatpush1.msra.mxu0 0.0
    %5269 = vmatprep.subr.mxu0 0.0
    %5270 = vmatpush1.msra.mxu0 0.0
    %5271 = vmatprep.subr.mxu0 0.0
    %5272 = vmatpush1.msra.mxu0 0.0
    %5273 = vmatprep.subr.mxu0 0.0
    %5274 = vmatpush1.msra.mxu0 0.0
    %5275 = vmatprep.subr.mxu0 0.0
    %5276 = vmatpush1.msra.mxu0 0.0
    %5277 = vmatprep.mubr.f32.mxu0 0.0
    %5278 = vmatmul.mubr.f32.gmra.mrb[0].mxu0 %v5211
    %v5279 = vpop.f32.mrb[0].mxu0
    %v5280 = vadd.f32 %v4699, %v5279
    %v5281 = vpop.f32.mrb[0].mxu0
    %5282 = vdwg.mxu0
    %5283 = vmatprep.subr.mxu0 0.0
    %5284 = vmatpush1.msra.mxu0 %v112
    %5285 = vmatprep.subr.mxu0 0.0
    %5286 = vmatpush1.msra.mxu0 %v113
    %5287 = vmatprep.subr.mxu0 0.0
    %5288 = vmatpush1.msra.mxu0 %v114
    %5289 = vmatprep.subr.mxu0 0.0
    %5290 = vmatpush1.msra.mxu0 %v115
    %5291 = vmatprep.subr.mxu0 0.0
    %5292 = vmatpush1.msra.mxu0 0.0
    %5293 = vmatprep.subr.mxu0 0.0
    %5294 = vmatpush1.msra.mxu0 0.0
    %5295 = vmatprep.subr.mxu0 0.0
    %5296 = vmatpush1.msra.mxu0 0.0
    %5297 = vmatprep.subr.mxu0 0.0
    %5298 = vmatpush1.msra.mxu0 0.0
    %5299 = vmatprep.subr.mxu0 0.0
    %5300 = vmatpush1.msra.mxu0 0.0
    %5301 = vmatprep.subr.mxu0 0.0
    %5302 = vmatpush1.msra.mxu0 0.0
    %5303 = vmatprep.subr.mxu0 0.0
    %5304 = vmatpush1.msra.mxu0 0.0
    %5305 = vmatprep.subr.mxu0 0.0
    %5306 = vmatpush1.msra.mxu0 0.0
    %5307 = vmatprep.subr.mxu0 0.0
    %5308 = vmatpush1.msra.mxu0 0.0
    %5309 = vmatprep.subr.mxu0 0.0
    %5310 = vmatpush1.msra.mxu0 0.0
    %5311 = vmatprep.subr.mxu0 0.0
    %5312 = vmatpush1.msra.mxu0 0.0
    %5313 = vmatprep.subr.mxu0 0.0
    %5314 = vmatpush1.msra.mxu0 0.0
    %5315 = vmatprep.subr.mxu0 0.0
    %5316 = vmatpush1.msra.mxu0 0.0
    %5317 = vmatprep.subr.mxu0 0.0
    %5318 = vmatpush1.msra.mxu0 0.0
    %5319 = vmatprep.subr.mxu0 0.0
    %5320 = vmatpush1.msra.mxu0 0.0
    %5321 = vmatprep.subr.mxu0 0.0
    %5322 = vmatpush1.msra.mxu0 0.0
    %5323 = vmatprep.subr.mxu0 0.0
    %5324 = vmatpush1.msra.mxu0 0.0
    %5325 = vmatprep.subr.mxu0 0.0
    %5326 = vmatpush1.msra.mxu0 0.0
    %5327 = vmatprep.subr.mxu0 0.0
    %5328 = vmatpush1.msra.mxu0 0.0
    %5329 = vmatprep.subr.mxu0 0.0
    %5330 = vmatpush1.msra.mxu0 0.0
    %5331 = vmatprep.subr.mxu0 0.0
    %5332 = vmatpush1.msra.mxu0 0.0
    %5333 = vmatprep.subr.mxu0 0.0
    %5334 = vmatpush1.msra.mxu0 0.0
    %5335 = vmatprep.subr.mxu0 0.0
    %5336 = vmatpush1.msra.mxu0 0.0
    %5337 = vmatprep.subr.mxu0 0.0
    %5338 = vmatpush1.msra.mxu0 0.0
    %5339 = vmatprep.subr.mxu0 0.0
    %5340 = vmatpush1.msra.mxu0 0.0
    %5341 = vmatprep.subr.mxu0 0.0
    %5342 = vmatpush1.msra.mxu0 0.0
    %5343 = vmatprep.subr.mxu0 0.0
    %5344 = vmatpush1.msra.mxu0 0.0
    %5345 = vmatprep.subr.mxu0 0.0
    %5346 = vmatpush1.msra.mxu0 0.0
    %5347 = vmatprep.mubr.f32.mxu0 0.0
    %5348 = vmatmul.mubr.f32.gmra.mrb[0].mxu0 %v5211
    %v5349 = vpop.f32.mrb[0].mxu0
    %v5350 = vadd.f32 %v4706, %v5349
    %v5351 = vpop.f32.mrb[0].mxu0
    %5352 = vdwg.mxu0
    %5353 = vmatprep.subr.mxu0 0.0
    %5354 = vmatpush1.msra.mxu0 %v117
    %5355 = vmatprep.subr.mxu0 0.0
    %5356 = vmatpush1.msra.mxu0 %v118
    %5357 = vmatprep.subr.mxu0 0.0
    %5358 = vmatpush1.msra.mxu0 %v119
    %5359 = vmatprep.subr.mxu0 0.0
    %5360 = vmatpush1.msra.mxu0 %v120
    %5361 = vmatprep.subr.mxu0 0.0
    %5362 = vmatpush1.msra.mxu0 0.0
    %5363 = vmatprep.subr.mxu0 0.0
    %5364 = vmatpush1.msra.mxu0 0.0
    %5365 = vmatprep.subr.mxu0 0.0
    %5366 = vmatpush1.msra.mxu0 0.0
    %5367 = vmatprep.subr.mxu0 0.0
    %5368 = vmatpush1.msra.mxu0 0.0
    %5369 = vmatprep.subr.mxu0 0.0
    %5370 = vmatpush1.msra.mxu0 0.0
    %5371 = vmatprep.subr.mxu0 0.0
    %5372 = vmatpush1.msra.mxu0 0.0
    %5373 = vmatprep.subr.mxu0 0.0
    %5374 = vmatpush1.msra.mxu0 0.0
    %5375 = vmatprep.subr.mxu0 0.0
    %5376 = vmatpush1.msra.mxu0 0.0
    %5377 = vmatprep.subr.mxu0 0.0
    %5378 = vmatpush1.msra.mxu0 0.0
    %5379 = vmatprep.subr.mxu0 0.0
    %5380 = vmatpush1.msra.mxu0 0.0
    %5381 = vmatprep.subr.mxu0 0.0
    %5382 = vmatpush1.msra.mxu0 0.0
    %5383 = vmatprep.subr.mxu0 0.0
    %5384 = vmatpush1.msra.mxu0 0.0
    %5385 = vmatprep.subr.mxu0 0.0
    %5386 = vmatpush1.msra.mxu0 0.0
    %5387 = vmatprep.subr.mxu0 0.0
    %5388 = vmatpush1.msra.mxu0 0.0
    %5389 = vmatprep.subr.mxu0 0.0
    %5390 = vmatpush1.msra.mxu0 0.0
    %5391 = vmatprep.subr.mxu0 0.0
    %5392 = vmatpush1.msra.mxu0 0.0
    %5393 = vmatprep.subr.mxu0 0.0
    %5394 = vmatpush1.msra.mxu0 0.0
    %5395 = vmatprep.subr.mxu0 0.0
    %5396 = vmatpush1.msra.mxu0 0.0
    %5397 = vmatprep.subr.mxu0 0.0
    %5398 = vmatpush1.msra.mxu0 0.0
    %5399 = vmatprep.subr.mxu0 0.0
    %5400 = vmatpush1.msra.mxu0 0.0
    %5401 = vmatprep.subr.mxu0 0.0
    %5402 = vmatpush1.msra.mxu0 0.0
    %5403 = vmatprep.subr.mxu0 0.0
    %5404 = vmatpush1.msra.mxu0 0.0
    %5405 = vmatprep.subr.mxu0 0.0
    %5406 = vmatpush1.msra.mxu0 0.0
    %5407 = vmatprep.subr.mxu0 0.0
    %5408 = vmatpush1.msra.mxu0 0.0
    %5409 = vmatprep.subr.mxu0 0.0
    %5410 = vmatpush1.msra.mxu0 0.0
    %5411 = vmatprep.subr.mxu0 0.0
    %5412 = vmatpush1.msra.mxu0 0.0
    %5413 = vmatprep.subr.mxu0 0.0
    %5414 = vmatpush1.msra.mxu0 0.0
    %5415 = vmatprep.subr.mxu0 0.0
    %5416 = vmatpush1.msra.mxu0 0.0
    %5417 = vmatprep.mubr.f32.mxu0 0.0
    %5418 = vmatmul.mubr.f32.gmra.mrb[0].mxu0 %v5211
    %v5419 = vpop.f32.mrb[0].mxu0
    %v5420 = vadd.f32 %v4713, %v5419
    %v5421 = vpop.f32.mrb[0].mxu0
    %5422 = vdwg.mxu0
    %v5424 = vrot.slane %v5280, 5
    %v5426 = vadd.f32 %v4532, %v5424
    %v5427 = vmul.f32 %v5426, 0.5
    %v5428 = vtanh.pop %v5427
    %v5429 = vmul.f32 %v5428, 0.5
    %v5430 = vadd.f32 %v5429, 0.5
    %v5432 = vrot.slane %v5350, 5
    %v5434 = vadd.f32 %v4611, %v5432
    %v5435 = vmul.f32 %v5434, 0.5
    %v5436 = vtanh.pop %v5435
    %v5437 = vmul.f32 %v5436, 0.5
    %v5438 = vadd.f32 %v5437, 0.5
    %v5440 = vrot.slane %v5420, 5
    %v5442 = vmul.f32 %v5430, %v5440
    %v5443 = vadd.f32 %v4690, %v5442
    %v5444 = vtanh.pop %v5443
    %v5446 = vrot.slane %v5444, 1
    %v5448 = vsub.f32 %v5208, %v5446
    %v5450 = vrot.slane %v5448, 7
    %v5452 = vmul.f32 %v5438, %v5450
    %v5453 = vadd.f32 %v5444, %v5452
    %v5455 = vrot.slane %v5453, 3
    %v5456 = vsel %vm509, %v5455, 0
    %5458 = vmatprep.subr.mxu0 0.0
    %5459 = vmatpush1.msra.mxu0 %v107
    %5460 = vmatprep.subr.mxu0 0.0
    %5461 = vmatpush1.msra.mxu0 %v108
    %5462 = vmatprep.subr.mxu0 0.0
    %5463 = vmatpush1.msra.mxu0 %v109
    %5464 = vmatprep.subr.mxu0 0.0
    %5465 = vmatpush1.msra.mxu0 %v110
    %5466 = vmatprep.subr.mxu0 0.0
    %5467 = vmatpush1.msra.mxu0 0.0
    %5468 = vmatprep.subr.mxu0 0.0
    %5469 = vmatpush1.msra.mxu0 0.0
    %5470 = vmatprep.subr.mxu0 0.0
    %5471 = vmatpush1.msra.mxu0 0.0
    %5472 = vmatprep.subr.mxu0 0.0
    %5473 = vmatpush1.msra.mxu0 0.0
    %5474 = vmatprep.subr.mxu0 0.0
    %5475 = vmatpush1.msra.mxu0 0.0
    %5476 = vmatprep.subr.mxu0 0.0
    %5477 = vmatpush1.msra.mxu0 0.0
    %5478 = vmatprep.subr.mxu0 0.0
    %5479 = vmatpush1.msra.mxu0 0.0
    %5480 = vmatprep.subr.mxu0 0.0
    %5481 = vmatpush1.msra.mxu0 0.0
    %5482 = vmatprep.subr.mxu0 0.0
    %5483 = vmatpush1.msra.mxu0 0.0
    %5484 = vmatprep.subr.mxu0 0.0
    %5485 = vmatpush1.msra.mxu0 0.0
    %5486 = vmatprep.subr.mxu0 0.0
    %5487 = vmatpush1.msra.mxu0 0.0
    %5488 = vmatprep.subr.mxu0 0.0
    %5489 = vmatpush1.msra.mxu0 0.0
    %5490 = vmatprep.subr.mxu0 0.0
    %5491 = vmatpush1.msra.mxu0 0.0
    %5492 = vmatprep.subr.mxu0 0.0
    %5493 = vmatpush1.msra.mxu0 0.0
    %5494 = vmatprep.subr.mxu0 0.0
    %5495 = vmatpush1.msra.mxu0 0.0
    %5496 = vmatprep.subr.mxu0 0.0
    %5497 = vmatpush1.msra.mxu0 0.0
    %5498 = vmatprep.subr.mxu0 0.0
    %5499 = vmatpush1.msra.mxu0 0.0
    %5500 = vmatprep.subr.mxu0 0.0
    %5501 = vmatpush1.msra.mxu0 0.0
    %5502 = vmatprep.subr.mxu0 0.0
    %5503 = vmatpush1.msra.mxu0 0.0
    %5504 = vmatprep.subr.mxu0 0.0
    %5505 = vmatpush1.msra.mxu0 0.0
    %5506 = vmatprep.subr.mxu0 0.0
    %5507 = vmatpush1.msra.mxu0 0.0
    %5508 = vmatprep.subr.mxu0 0.0
    %5509 = vmatpush1.msra.mxu0 0.0
    %5510 = vmatprep.subr.mxu0 0.0
    %5511 = vmatpush1.msra.mxu0 0.0
    %5512 = vmatprep.subr.mxu0 0.0
    %5513 = vmatpush1.msra.mxu0 0.0
    %5514 = vmatprep.subr.mxu0 0.0
    %5515 = vmatpush1.msra.mxu0 0.0
    %5516 = vmatprep.subr.mxu0 0.0
    %5517 = vmatpush1.msra.mxu0 0.0
    %5518 = vmatprep.subr.mxu0 0.0
    %5519 = vmatpush1.msra.mxu0 0.0
    %5520 = vmatprep.subr.mxu0 0.0
    %5521 = vmatpush1.msra.mxu0 0.0
    %5522 = vmatprep.mubr.f32.mxu0 0.0
    %5523 = vmatmul.mubr.f32.gmra.mrb[0].mxu0 %v5456
    %v5524 = vpop.f32.mrb[0].mxu0
    %v5525 = vadd.f32 %v4699, %v5524
    %v5526 = vpop.f32.mrb[0].mxu0
    %5527 = vdwg.mxu0
    %5528 = vmatprep.subr.mxu0 0.0
    %5529 = vmatpush1.msra.mxu0 %v112
    %5530 = vmatprep.subr.mxu0 0.0
    %5531 = vmatpush1.msra.mxu0 %v113
    %5532 = vmatprep.subr.mxu0 0.0
    %5533 = vmatpush1.msra.mxu0 %v114
    %5534 = vmatprep.subr.mxu0 0.0
    %5535 = vmatpush1.msra.mxu0 %v115
    %5536 = vmatprep.subr.mxu0 0.0
    %5537 = vmatpush1.msra.mxu0 0.0
    %5538 = vmatprep.subr.mxu0 0.0
    %5539 = vmatpush1.msra.mxu0 0.0
    %5540 = vmatprep.subr.mxu0 0.0
    %5541 = vmatpush1.msra.mxu0 0.0
    %5542 = vmatprep.subr.mxu0 0.0
    %5543 = vmatpush1.msra.mxu0 0.0
    %5544 = vmatprep.subr.mxu0 0.0
    %5545 = vmatpush1.msra.mxu0 0.0
    %5546 = vmatprep.subr.mxu0 0.0
    %5547 = vmatpush1.msra.mxu0 0.0
    %5548 = vmatprep.subr.mxu0 0.0
    %5549 = vmatpush1.msra.mxu0 0.0
    %5550 = vmatprep.subr.mxu0 0.0
    %5551 = vmatpush1.msra.mxu0 0.0
    %5552 = vmatprep.subr.mxu0 0.0
    %5553 = vmatpush1.msra.mxu0 0.0
    %5554 = vmatprep.subr.mxu0 0.0
    %5555 = vmatpush1.msra.mxu0 0.0
    %5556 = vmatprep.subr.mxu0 0.0
    %5557 = vmatpush1.msra.mxu0 0.0
    %5558 = vmatprep.subr.mxu0 0.0
    %5559 = vmatpush1.msra.mxu0 0.0
    %5560 = vmatprep.subr.mxu0 0.0
    %5561 = vmatpush1.msra.mxu0 0.0
    %5562 = vmatprep.subr.mxu0 0.0
    %5563 = vmatpush1.msra.mxu0 0.0
    %5564 = vmatprep.subr.mxu0 0.0
    %5565 = vmatpush1.msra.mxu0 0.0
    %5566 = vmatprep.subr.mxu0 0.0
    %5567 = vmatpush1.msra.mxu0 0.0
    %5568 = vmatprep.subr.mxu0 0.0
    %5569 = vmatpush1.msra.mxu0 0.0
    %5570 = vmatprep.subr.mxu0 0.0
    %5571 = vmatpush1.msra.mxu0 0.0
    %5572 = vmatprep.subr.mxu0 0.0
    %5573 = vmatpush1.msra.mxu0 0.0
    %5574 = vmatprep.subr.mxu0 0.0
    %5575 = vmatpush1.msra.mxu0 0.0
    %5576 = vmatprep.subr.mxu0 0.0
    %5577 = vmatpush1.msra.mxu0 0.0
    %5578 = vmatprep.subr.mxu0 0.0
    %5579 = vmatpush1.msra.mxu0 0.0
    %5580 = vmatprep.subr.mxu0 0.0
    %5581 = vmatpush1.msra.mxu0 0.0
    %5582 = vmatprep.subr.mxu0 0.0
    %5583 = vmatpush1.msra.mxu0 0.0
    %5584 = vmatprep.subr.mxu0 0.0
    %5585 = vmatpush1.msra.mxu0 0.0
    %5586 = vmatprep.subr.mxu0 0.0
    %5587 = vmatpush1.msra.mxu0 0.0
    %5588 = vmatprep.subr.mxu0 0.0
    %5589 = vmatpush1.msra.mxu0 0.0
    %5590 = vmatprep.subr.mxu0 0.0
    %5591 = vmatpush1.msra.mxu0 0.0
    %5592 = vmatprep.mubr.f32.mxu0 0.0
    %5593 = vmatmul.mubr.f32.gmra.mrb[0].mxu0 %v5456
    %v5594 = vpop.f32.mrb[0].mxu0
    %v5595 = vadd.f32 %v4706, %v5594
    %v5596 = vpop.f32.mrb[0].mxu0
    %5597 = vdwg.mxu0
    %5598 = vmatprep.subr.mxu0 0.0
    %5599 = vmatpush1.msra.mxu0 %v117
    %5600 = vmatprep.subr.mxu0 0.0
    %5601 = vmatpush1.msra.mxu0 %v118
    %5602 = vmatprep.subr.mxu0 0.0
    %5603 = vmatpush1.msra.mxu0 %v119
    %5604 = vmatprep.subr.mxu0 0.0
    %5605 = vmatpush1.msra.mxu0 %v120
    %5606 = vmatprep.subr.mxu0 0.0
    %5607 = vmatpush1.msra.mxu0 0.0
    %5608 = vmatprep.subr.mxu0 0.0
    %5609 = vmatpush1.msra.mxu0 0.0
    %5610 = vmatprep.subr.mxu0 0.0
    %5611 = vmatpush1.msra.mxu0 0.0
    %5612 = vmatprep.subr.mxu0 0.0
    %5613 = vmatpush1.msra.mxu0 0.0
    %5614 = vmatprep.subr.mxu0 0.0
    %5615 = vmatpush1.msra.mxu0 0.0
    %5616 = vmatprep.subr.mxu0 0.0
    %5617 = vmatpush1.msra.mxu0 0.0
    %5618 = vmatprep.subr.mxu0 0.0
    %5619 = vmatpush1.msra.mxu0 0.0
    %5620 = vmatprep.subr.mxu0 0.0
    %5621 = vmatpush1.msra.mxu0 0.0
    %5622 = vmatprep.subr.mxu0 0.0
    %5623 = vmatpush1.msra.mxu0 0.0
    %5624 = vmatprep.subr.mxu0 0.0
    %5625 = vmatpush1.msra.mxu0 0.0
    %5626 = vmatprep.subr.mxu0 0.0
    %5627 = vmatpush1.msra.mxu0 0.0
    %5628 = vmatprep.subr.mxu0 0.0
    %5629 = vmatpush1.msra.mxu0 0.0
    %5630 = vmatprep.subr.mxu0 0.0
    %5631 = vmatpush1.msra.mxu0 0.0
    %5632 = vmatprep.subr.mxu0 0.0
    %5633 = vmatpush1.msra.mxu0 0.0
    %5634 = vmatprep.subr.mxu0 0.0
    %5635 = vmatpush1.msra.mxu0 0.0
    %5636 = vmatprep.subr.mxu0 0.0
    %5637 = vmatpush1.msra.mxu0 0.0
    %5638 = vmatprep.subr.mxu0 0.0
    %5639 = vmatpush1.msra.mxu0 0.0
    %5640 = vmatprep.subr.mxu0 0.0
    %5641 = vmatpush1.msra.mxu0 0.0
    %5642 = vmatprep.subr.mxu0 0.0
    %5643 = vmatpush1.msra.mxu0 0.0
    %5644 = vmatprep.subr.mxu0 0.0
    %5645 = vmatpush1.msra.mxu0 0.0
    %5646 = vmatprep.subr.mxu0 0.0
    %5647 = vmatpush1.msra.mxu0 0.0
    %5648 = vmatprep.subr.mxu0 0.0
    %5649 = vmatpush1.msra.mxu0 0.0
    %5650 = vmatprep.subr.mxu0 0.0
    %5651 = vmatpush1.msra.mxu0 0.0
    %5652 = vmatprep.subr.mxu0 0.0
    %5653 = vmatpush1.msra.mxu0 0.0
    %5654 = vmatprep.subr.mxu0 0.0
    %5655 = vmatpush1.msra.mxu0 0.0
    %5656 = vmatprep.subr.mxu0 0.0
    %5657 = vmatpush1.msra.mxu0 0.0
    %5658 = vmatprep.subr.mxu0 0.0
    %5659 = vmatpush1.msra.mxu0 0.0
    %5660 = vmatprep.subr.mxu0 0.0
    %5661 = vmatpush1.msra.mxu0 0.0
    %5662 = vmatprep.mubr.f32.mxu0 0.0
    %5663 = vmatmul.mubr.f32.gmra.mrb[0].mxu0 %v5456
    %v5664 = vpop.f32.mrb[0].mxu0
    %v5665 = vadd.f32 %v4713, %v5664
    %v5666 = vpop.f32.mrb[0].mxu0
    %5667 = vdwg.mxu0
    %v5669 = vrot.slane %v5525, 4
    %v5671 = vadd.f32 %v4532, %v5669
    %v5672 = vmul.f32 %v5671, 0.5
    %v5673 = vtanh.pop %v5672
    %v5674 = vmul.f32 %v5673, 0.5
    %v5675 = vadd.f32 %v5674, 0.5
    %v5677 = vrot.slane %v5595, 4
    %v5679 = vadd.f32 %v4611, %v5677
    %v5680 = vmul.f32 %v5679, 0.5
    %v5681 = vtanh.pop %v5680
    %v5682 = vmul.f32 %v5681, 0.5
    %v5683 = vadd.f32 %v5682, 0.5
    %v5685 = vrot.slane %v5665, 4
    %v5687 = vmul.f32 %v5675, %v5685
    %v5688 = vadd.f32 %v4690, %v5687
    %v5689 = vtanh.pop %v5688
    %v5691 = vrot.slane %v5689, 1
    %v5693 = vsub.f32 %v5453, %v5691
    %v5695 = vrot.slane %v5693, 7
    %v5697 = vmul.f32 %v5683, %v5695
    %v5698 = vadd.f32 %v5689, %v5697
    %v5700 = vrot.slane %v5698, 4
    %v5701 = vsel %vm509, %v5700, 0
    %5703 = vmatprep.subr.mxu0 0.0
    %5704 = vmatpush1.msra.mxu0 %v107
    %5705 = vmatprep.subr.mxu0 0.0
    %5706 = vmatpush1.msra.mxu0 %v108
    %5707 = vmatprep.subr.mxu0 0.0
    %5708 = vmatpush1.msra.mxu0 %v109
    %5709 = vmatprep.subr.mxu0 0.0
    %5710 = vmatpush1.msra.mxu0 %v110
    %5711 = vmatprep.subr.mxu0 0.0
    %5712 = vmatpush1.msra.mxu0 0.0
    %5713 = vmatprep.subr.mxu0 0.0
    %5714 = vmatpush1.msra.mxu0 0.0
    %5715 = vmatprep.subr.mxu0 0.0
    %5716 = vmatpush1.msra.mxu0 0.0
    %5717 = vmatprep.subr.mxu0 0.0
    %5718 = vmatpush1.msra.mxu0 0.0
    %5719 = vmatprep.subr.mxu0 0.0
    %5720 = vmatpush1.msra.mxu0 0.0
    %5721 = vmatprep.subr.mxu0 0.0
    %5722 = vmatpush1.msra.mxu0 0.0
    %5723 = vmatprep.subr.mxu0 0.0
    %5724 = vmatpush1.msra.mxu0 0.0
    %5725 = vmatprep.subr.mxu0 0.0
    %5726 = vmatpush1.msra.mxu0 0.0
    %5727 = vmatprep.subr.mxu0 0.0
    %5728 = vmatpush1.msra.mxu0 0.0
    %5729 = vmatprep.subr.mxu0 0.0
    %5730 = vmatpush1.msra.mxu0 0.0
    %5731 = vmatprep.subr.mxu0 0.0
    %5732 = vmatpush1.msra.mxu0 0.0
    %5733 = vmatprep.subr.mxu0 0.0
    %5734 = vmatpush1.msra.mxu0 0.0
    %5735 = vmatprep.subr.mxu0 0.0
    %5736 = vmatpush1.msra.mxu0 0.0
    %5737 = vmatprep.subr.mxu0 0.0
    %5738 = vmatpush1.msra.mxu0 0.0
    %5739 = vmatprep.subr.mxu0 0.0
    %5740 = vmatpush1.msra.mxu0 0.0
    %5741 = vmatprep.subr.mxu0 0.0
    %5742 = vmatpush1.msra.mxu0 0.0
    %5743 = vmatprep.subr.mxu0 0.0
    %5744 = vmatpush1.msra.mxu0 0.0
    %5745 = vmatprep.subr.mxu0 0.0
    %5746 = vmatpush1.msra.mxu0 0.0
    %5747 = vmatprep.subr.mxu0 0.0
    %5748 = vmatpush1.msra.mxu0 0.0
    %5749 = vmatprep.subr.mxu0 0.0
    %5750 = vmatpush1.msra.mxu0 0.0
    %5751 = vmatprep.subr.mxu0 0.0
    %5752 = vmatpush1.msra.mxu0 0.0
    %5753 = vmatprep.subr.mxu0 0.0
    %5754 = vmatpush1.msra.mxu0 0.0
    %5755 = vmatprep.subr.mxu0 0.0
    %5756 = vmatpush1.msra.mxu0 0.0
    %5757 = vmatprep.subr.mxu0 0.0
    %5758 = vmatpush1.msra.mxu0 0.0
    %5759 = vmatprep.subr.mxu0 0.0
    %5760 = vmatpush1.msra.mxu0 0.0
    %5761 = vmatprep.subr.mxu0 0.0
    %5762 = vmatpush1.msra.mxu0 0.0
    %5763 = vmatprep.subr.mxu0 0.0
    %5764 = vmatpush1.msra.mxu0 0.0
    %5765 = vmatprep.subr.mxu0 0.0
    %5766 = vmatpush1.msra.mxu0 0.0
    %5767 = vmatprep.mubr.f32.mxu0 0.0
    %5768 = vmatmul.mubr.f32.gmra.mrb[0].mxu0 %v5701
    %v5769 = vpop.f32.mrb[0].mxu0
    %v5770 = vadd.f32 %v4699, %v5769
    %v5771 = vpop.f32.mrb[0].mxu0
    %5772 = vdwg.mxu0
    %5773 = vmatprep.subr.mxu0 0.0
    %5774 = vmatpush1.msra.mxu0 %v112
    %5775 = vmatprep.subr.mxu0 0.0
    %5776 = vmatpush1.msra.mxu0 %v113
    %5777 = vmatprep.subr.mxu0 0.0
    %5778 = vmatpush1.msra.mxu0 %v114
    %5779 = vmatprep.subr.mxu0 0.0
    %5780 = vmatpush1.msra.mxu0 %v115
    %5781 = vmatprep.subr.mxu0 0.0
    %5782 = vmatpush1.msra.mxu0 0.0
    %5783 = vmatprep.subr.mxu0 0.0
    %5784 = vmatpush1.msra.mxu0 0.0
    %5785 = vmatprep.subr.mxu0 0.0
    %5786 = vmatpush1.msra.mxu0 0.0
    %5787 = vmatprep.subr.mxu0 0.0
    %5788 = vmatpush1.msra.mxu0 0.0
    %5789 = vmatprep.subr.mxu0 0.0
    %5790 = vmatpush1.msra.mxu0 0.0
    %5791 = vmatprep.subr.mxu0 0.0
    %5792 = vmatpush1.msra.mxu0 0.0
    %5793 = vmatprep.subr.mxu0 0.0
    %5794 = vmatpush1.msra.mxu0 0.0
    %5795 = vmatprep.subr.mxu0 0.0
    %5796 = vmatpush1.msra.mxu0 0.0
    %5797 = vmatprep.subr.mxu0 0.0
    %5798 = vmatpush1.msra.mxu0 0.0
    %5799 = vmatprep.subr.mxu0 0.0
    %5800 = vmatpush1.msra.mxu0 0.0
    %5801 = vmatprep.subr.mxu0 0.0
    %5802 = vmatpush1.msra.mxu0 0.0
    %5803 = vmatprep.subr.mxu0 0.0
    %5804 = vmatpush1.msra.mxu0 0.0
    %5805 = vmatprep.subr.mxu0 0.0
    %5806 = vmatpush1.msra.mxu0 0.0
    %5807 = vmatprep.subr.mxu0 0.0
    %5808 = vmatpush1.msra.mxu0 0.0
    %5809 = vmatprep.subr.mxu0 0.0
    %5810 = vmatpush1.msra.mxu0 0.0
    %5811 = vmatprep.subr.mxu0 0.0
    %5812 = vmatpush1.msra.mxu0 0.0
    %5813 = vmatprep.subr.mxu0 0.0
    %5814 = vmatpush1.msra.mxu0 0.0
    %5815 = vmatprep.subr.mxu0 0.0
    %5816 = vmatpush1.msra.mxu0 0.0
    %5817 = vmatprep.subr.mxu0 0.0
    %5818 = vmatpush1.msra.mxu0 0.0
    %5819 = vmatprep.subr.mxu0 0.0
    %5820 = vmatpush1.msra.mxu0 0.0
    %5821 = vmatprep.subr.mxu0 0.0
    %5822 = vmatpush1.msra.mxu0 0.0
    %5823 = vmatprep.subr.mxu0 0.0
    %5824 = vmatpush1.msra.mxu0 0.0
    %5825 = vmatprep.subr.mxu0 0.0
    %5826 = vmatpush1.msra.mxu0 0.0
    %5827 = vmatprep.subr.mxu0 0.0
    %5828 = vmatpush1.msra.mxu0 0.0
    %5829 = vmatprep.subr.mxu0 0.0
    %5830 = vmatpush1.msra.mxu0 0.0
    %5831 = vmatprep.subr.mxu0 0.0
    %5832 = vmatpush1.msra.mxu0 0.0
    %5833 = vmatprep.subr.mxu0 0.0
    %5834 = vmatpush1.msra.mxu0 0.0
    %5835 = vmatprep.subr.mxu0 0.0
    %5836 = vmatpush1.msra.mxu0 0.0
    %5837 = vmatprep.mubr.f32.mxu0 0.0
    %5838 = vmatmul.mubr.f32.gmra.mrb[0].mxu0 %v5701
    %v5839 = vpop.f32.mrb[0].mxu0
    %v5840 = vadd.f32 %v4706, %v5839
    %v5841 = vpop.f32.mrb[0].mxu0
    %5842 = vdwg.mxu0
    %5843 = vmatprep.subr.mxu0 0.0
    %5844 = vmatpush1.msra.mxu0 %v117
    %5845 = vmatprep.subr.mxu0 0.0
    %5846 = vmatpush1.msra.mxu0 %v118
    %5847 = vmatprep.subr.mxu0 0.0
    %5848 = vmatpush1.msra.mxu0 %v119
    %5849 = vmatprep.subr.mxu0 0.0
    %5850 = vmatpush1.msra.mxu0 %v120
    %5851 = vmatprep.subr.mxu0 0.0
    %5852 = vmatpush1.msra.mxu0 0.0
    %5853 = vmatprep.subr.mxu0 0.0
    %5854 = vmatpush1.msra.mxu0 0.0
    %5855 = vmatprep.subr.mxu0 0.0
    %5856 = vmatpush1.msra.mxu0 0.0
    %5857 = vmatprep.subr.mxu0 0.0
    %5858 = vmatpush1.msra.mxu0 0.0
    %5859 = vmatprep.subr.mxu0 0.0
    %5860 = vmatpush1.msra.mxu0 0.0
    %5861 = vmatprep.subr.mxu0 0.0
    %5862 = vmatpush1.msra.mxu0 0.0
    %5863 = vmatprep.subr.mxu0 0.0
    %5864 = vmatpush1.msra.mxu0 0.0
    %5865 = vmatprep.subr.mxu0 0.0
    %5866 = vmatpush1.msra.mxu0 0.0
    %5867 = vmatprep.subr.mxu0 0.0
    %5868 = vmatpush1.msra.mxu0 0.0
    %5869 = vmatprep.subr.mxu0 0.0
    %5870 = vmatpush1.msra.mxu0 0.0
    %5871 = vmatprep.subr.mxu0 0.0
    %5872 = vmatpush1.msra.mxu0 0.0
    %5873 = vmatprep.subr.mxu0 0.0
    %5874 = vmatpush1.msra.mxu0 0.0
    %5875 = vmatprep.subr.mxu0 0.0
    %5876 = vmatpush1.msra.mxu0 0.0
    %5877 = vmatprep.subr.mxu0 0.0
    %5878 = vmatpush1.msra.mxu0 0.0
    %5879 = vmatprep.subr.mxu0 0.0
    %5880 = vmatpush1.msra.mxu0 0.0
    %5881 = vmatprep.subr.mxu0 0.0
    %5882 = vmatpush1.msra.mxu0 0.0
    %5883 = vmatprep.subr.mxu0 0.0
    %5884 = vmatpush1.msra.mxu0 0.0
    %5885 = vmatprep.subr.mxu0 0.0
    %5886 = vmatpush1.msra.mxu0 0.0
    %5887 = vmatprep.subr.mxu0 0.0
    %5888 = vmatpush1.msra.mxu0 0.0
    %5889 = vmatprep.subr.mxu0 0.0
    %5890 = vmatpush1.msra.mxu0 0.0
    %5891 = vmatprep.subr.mxu0 0.0
    %5892 = vmatpush1.msra.mxu0 0.0
    %5893 = vmatprep.subr.mxu0 0.0
    %5894 = vmatpush1.msra.mxu0 0.0
    %5895 = vmatprep.subr.mxu0 0.0
    %5896 = vmatpush1.msra.mxu0 0.0
    %5897 = vmatprep.subr.mxu0 0.0
    %5898 = vmatpush1.msra.mxu0 0.0
    %5899 = vmatprep.subr.mxu0 0.0
    %5900 = vmatpush1.msra.mxu0 0.0
    %5901 = vmatprep.subr.mxu0 0.0
    %5902 = vmatpush1.msra.mxu0 0.0
    %5903 = vmatprep.subr.mxu0 0.0
    %5904 = vmatpush1.msra.mxu0 0.0
    %5905 = vmatprep.subr.mxu0 0.0
    %5906 = vmatpush1.msra.mxu0 0.0
    %5907 = vmatprep.mubr.f32.mxu0 0.0
    %5908 = vmatmul.mubr.f32.gmra.mrb[0].mxu0 %v5701
    %v5909 = vpop.f32.mrb[0].mxu0
    %v5910 = vadd.f32 %v4713, %v5909
    %v5911 = vpop.f32.mrb[0].mxu0
    %5912 = vdwg.mxu0
    %v5914 = vrot.slane %v5770, 3
    %v5916 = vadd.f32 %v4532, %v5914
    %v5917 = vmul.f32 %v5916, 0.5
    %v5918 = vtanh.pop %v5917
    %v5919 = vmul.f32 %v5918, 0.5
    %v5920 = vadd.f32 %v5919, 0.5
    %v5922 = vrot.slane %v5840, 3
    %v5924 = vadd.f32 %v4611, %v5922
    %v5925 = vmul.f32 %v5924, 0.5
    %v5926 = vtanh.pop %v5925
    %v5927 = vmul.f32 %v5926, 0.5
    %v5928 = vadd.f32 %v5927, 0.5
    %v5930 = vrot.slane %v5910, 3
    %v5932 = vmul.f32 %v5920, %v5930
    %v5933 = vadd.f32 %v4690, %v5932
    %v5934 = vtanh.pop %v5933
    %v5936 = vrot.slane %v5934, 1
    %v5938 = vsub.f32 %v5698, %v5936
    %v5940 = vrot.slane %v5938, 7
    %v5942 = vmul.f32 %v5928, %v5940
    %v5943 = vadd.f32 %v5934, %v5942
    %v5945 = vrot.slane %v5943, 5
    %v5946 = vsel %vm509, %v5945, 0
    %5948 = vmatprep.subr.mxu0 0.0
    %5949 = vmatpush1.msra.mxu0 %v107
    %5950 = vmatprep.subr.mxu0 0.0
    %5951 = vmatpush1.msra.mxu0 %v108
    %5952 = vmatprep.subr.mxu0 0.0
    %5953 = vmatpush1.msra.mxu0 %v109
    %5954 = vmatprep.subr.mxu0 0.0
    %5955 = vmatpush1.msra.mxu0 %v110
    %5956 = vmatprep.subr.mxu0 0.0
    %5957 = vmatpush1.msra.mxu0 0.0
    %5958 = vmatprep.subr.mxu0 0.0
    %5959 = vmatpush1.msra.mxu0 0.0
    %5960 = vmatprep.subr.mxu0 0.0
    %5961 = vmatpush1.msra.mxu0 0.0
    %5962 = vmatprep.subr.mxu0 0.0
    %5963 = vmatpush1.msra.mxu0 0.0
    %5964 = vmatprep.subr.mxu0 0.0
    %5965 = vmatpush1.msra.mxu0 0.0
    %5966 = vmatprep.subr.mxu0 0.0
    %5967 = vmatpush1.msra.mxu0 0.0
    %5968 = vmatprep.subr.mxu0 0.0
    %5969 = vmatpush1.msra.mxu0 0.0
    %5970 = vmatprep.subr.mxu0 0.0
    %5971 = vmatpush1.msra.mxu0 0.0
    %5972 = vmatprep.subr.mxu0 0.0
    %5973 = vmatpush1.msra.mxu0 0.0
    %5974 = vmatprep.subr.mxu0 0.0
    %5975 = vmatpush1.msra.mxu0 0.0
    %5976 = vmatprep.subr.mxu0 0.0
    %5977 = vmatpush1.msra.mxu0 0.0
    %5978 = vmatprep.subr.mxu0 0.0
    %5979 = vmatpush1.msra.mxu0 0.0
    %5980 = vmatprep.subr.mxu0 0.0
    %5981 = vmatpush1.msra.mxu0 0.0
    %5982 = vmatprep.subr.mxu0 0.0
    %5983 = vmatpush1.msra.mxu0 0.0
    %5984 = vmatprep.subr.mxu0 0.0
    %5985 = vmatpush1.msra.mxu0 0.0
    %5986 = vmatprep.subr.mxu0 0.0
    %5987 = vmatpush1.msra.mxu0 0.0
    %5988 = vmatprep.subr.mxu0 0.0
    %5989 = vmatpush1.msra.mxu0 0.0
    %5990 = vmatprep.subr.mxu0 0.0
    %5991 = vmatpush1.msra.mxu0 0.0
    %5992 = vmatprep.subr.mxu0 0.0
    %5993 = vmatpush1.msra.mxu0 0.0
    %5994 = vmatprep.subr.mxu0 0.0
    %5995 = vmatpush1.msra.mxu0 0.0
    %5996 = vmatprep.subr.mxu0 0.0
    %5997 = vmatpush1.msra.mxu0 0.0
    %5998 = vmatprep.subr.mxu0 0.0
    %5999 = vmatpush1.msra.mxu0 0.0
    %6000 = vmatprep.subr.mxu0 0.0
    %6001 = vmatpush1.msra.mxu0 0.0
    %6002 = vmatprep.subr.mxu0 0.0
    %6003 = vmatpush1.msra.mxu0 0.0
    %6004 = vmatprep.subr.mxu0 0.0
    %6005 = vmatpush1.msra.mxu0 0.0
    %6006 = vmatprep.subr.mxu0 0.0
    %6007 = vmatpush1.msra.mxu0 0.0
    %6008 = vmatprep.subr.mxu0 0.0
    %6009 = vmatpush1.msra.mxu0 0.0
    %6010 = vmatprep.subr.mxu0 0.0
    %6011 = vmatpush1.msra.mxu0 0.0
    %6012 = vmatprep.mubr.f32.mxu0 0.0
    %6013 = vmatmul.mubr.f32.gmra.mrb[0].mxu0 %v5946
    %v6014 = vpop.f32.mrb[0].mxu0
    %v6015 = vadd.f32 %v4699, %v6014
    %v6016 = vpop.f32.mrb[0].mxu0
    %6017 = vdwg.mxu0
    %6018 = vmatprep.subr.mxu0 0.0
    %6019 = vmatpush1.msra.mxu0 %v112
    %6020 = vmatprep.subr.mxu0 0.0
    %6021 = vmatpush1.msra.mxu0 %v113
    %6022 = vmatprep.subr.mxu0 0.0
    %6023 = vmatpush1.msra.mxu0 %v114
    %6024 = vmatprep.subr.mxu0 0.0
    %6025 = vmatpush1.msra.mxu0 %v115
    %6026 = vmatprep.subr.mxu0 0.0
    %6027 = vmatpush1.msra.mxu0 0.0
    %6028 = vmatprep.subr.mxu0 0.0
    %6029 = vmatpush1.msra.mxu0 0.0
    %6030 = vmatprep.subr.mxu0 0.0
    %6031 = vmatpush1.msra.mxu0 0.0
    %6032 = vmatprep.subr.mxu0 0.0
    %6033 = vmatpush1.msra.mxu0 0.0
    %6034 = vmatprep.subr.mxu0 0.0
    %6035 = vmatpush1.msra.mxu0 0.0
    %6036 = vmatprep.subr.mxu0 0.0
    %6037 = vmatpush1.msra.mxu0 0.0
    %6038 = vmatprep.subr.mxu0 0.0
    %6039 = vmatpush1.msra.mxu0 0.0
    %6040 = vmatprep.subr.mxu0 0.0
    %6041 = vmatpush1.msra.mxu0 0.0
    %6042 = vmatprep.subr.mxu0 0.0
    %6043 = vmatpush1.msra.mxu0 0.0
    %6044 = vmatprep.subr.mxu0 0.0
    %6045 = vmatpush1.msra.mxu0 0.0
    %6046 = vmatprep.subr.mxu0 0.0
    %6047 = vmatpush1.msra.mxu0 0.0
    %6048 = vmatprep.subr.mxu0 0.0
    %6049 = vmatpush1.msra.mxu0 0.0
    %6050 = vmatprep.subr.mxu0 0.0
    %6051 = vmatpush1.msra.mxu0 0.0
    %6052 = vmatprep.subr.mxu0 0.0
    %6053 = vmatpush1.msra.mxu0 0.0
    %6054 = vmatprep.subr.mxu0 0.0
    %6055 = vmatpush1.msra.mxu0 0.0
    %6056 = vmatprep.subr.mxu0 0.0
    %6057 = vmatpush1.msra.mxu0 0.0
    %6058 = vmatprep.subr.mxu0 0.0
    %6059 = vmatpush1.msra.mxu0 0.0
    %6060 = vmatprep.subr.mxu0 0.0
    %6061 = vmatpush1.msra.mxu0 0.0
    %6062 = vmatprep.subr.mxu0 0.0
    %6063 = vmatpush1.msra.mxu0 0.0
    %6064 = vmatprep.subr.mxu0 0.0
    %6065 = vmatpush1.msra.mxu0 0.0
    %6066 = vmatprep.subr.mxu0 0.0
    %6067 = vmatpush1.msra.mxu0 0.0
    %6068 = vmatprep.subr.mxu0 0.0
    %6069 = vmatpush1.msra.mxu0 0.0
    %6070 = vmatprep.subr.mxu0 0.0
    %6071 = vmatpush1.msra.mxu0 0.0
    %6072 = vmatprep.subr.mxu0 0.0
    %6073 = vmatpush1.msra.mxu0 0.0
    %6074 = vmatprep.subr.mxu0 0.0
    %6075 = vmatpush1.msra.mxu0 0.0
    %6076 = vmatprep.subr.mxu0 0.0
    %6077 = vmatpush1.msra.mxu0 0.0
    %6078 = vmatprep.subr.mxu0 0.0
    %6079 = vmatpush1.msra.mxu0 0.0
    %6080 = vmatprep.subr.mxu0 0.0
    %6081 = vmatpush1.msra.mxu0 0.0
    %6082 = vmatprep.mubr.f32.mxu0 0.0
    %6083 = vmatmul.mubr.f32.gmra.mrb[0].mxu0 %v5946
    %v6084 = vpop.f32.mrb[0].mxu0
    %v6085 = vadd.f32 %v4706, %v6084
    %v6086 = vpop.f32.mrb[0].mxu0
    %6087 = vdwg.mxu0
    %6088 = vmatprep.subr.mxu0 0.0
    %6089 = vmatpush1.msra.mxu0 %v117
    %6090 = vmatprep.subr.mxu0 0.0
    %6091 = vmatpush1.msra.mxu0 %v118
    %6092 = vmatprep.subr.mxu0 0.0
    %6093 = vmatpush1.msra.mxu0 %v119
    %6094 = vmatprep.subr.mxu0 0.0
    %6095 = vmatpush1.msra.mxu0 %v120
    %6096 = vmatprep.subr.mxu0 0.0
    %6097 = vmatpush1.msra.mxu0 0.0
    %6098 = vmatprep.subr.mxu0 0.0
    %6099 = vmatpush1.msra.mxu0 0.0
    %6100 = vmatprep.subr.mxu0 0.0
    %6101 = vmatpush1.msra.mxu0 0.0
    %6102 = vmatprep.subr.mxu0 0.0
    %6103 = vmatpush1.msra.mxu0 0.0
    %6104 = vmatprep.subr.mxu0 0.0
    %6105 = vmatpush1.msra.mxu0 0.0
    %6106 = vmatprep.subr.mxu0 0.0
    %6107 = vmatpush1.msra.mxu0 0.0
    %6108 = vmatprep.subr.mxu0 0.0
    %6109 = vmatpush1.msra.mxu0 0.0
    %6110 = vmatprep.subr.mxu0 0.0
    %6111 = vmatpush1.msra.mxu0 0.0
    %6112 = vmatprep.subr.mxu0 0.0
    %6113 = vmatpush1.msra.mxu0 0.0
    %6114 = vmatprep.subr.mxu0 0.0
    %6115 = vmatpush1.msra.mxu0 0.0
    %6116 = vmatprep.subr.mxu0 0.0
    %6117 = vmatpush1.msra.mxu0 0.0
    %6118 = vmatprep.subr.mxu0 0.0
    %6119 = vmatpush1.msra.mxu0 0.0
    %6120 = vmatprep.subr.mxu0 0.0
    %6121 = vmatpush1.msra.mxu0 0.0
    %6122 = vmatprep.subr.mxu0 0.0
    %6123 = vmatpush1.msra.mxu0 0.0
    %6124 = vmatprep.subr.mxu0 0.0
    %6125 = vmatpush1.msra.mxu0 0.0
    %6126 = vmatprep.subr.mxu0 0.0
    %6127 = vmatpush1.msra.mxu0 0.0
    %6128 = vmatprep.subr.mxu0 0.0
    %6129 = vmatpush1.msra.mxu0 0.0
    %6130 = vmatprep.subr.mxu0 0.0
    %6131 = vmatpush1.msra.mxu0 0.0
    %6132 = vmatprep.subr.mxu0 0.0
    %6133 = vmatpush1.msra.mxu0 0.0
    %6134 = vmatprep.subr.mxu0 0.0
    %6135 = vmatpush1.msra.mxu0 0.0
    %6136 = vmatprep.subr.mxu0 0.0
    %6137 = vmatpush1.msra.mxu0 0.0
    %6138 = vmatprep.subr.mxu0 0.0
    %6139 = vmatpush1.msra.mxu0 0.0
    %6140 = vmatprep.subr.mxu0 0.0
    %6141 = vmatpush1.msra.mxu0 0.0
    %6142 = vmatprep.subr.mxu0 0.0
    %6143 = vmatpush1.msra.mxu0 0.0
    %6144 = vmatprep.subr.mxu0 0.0
    %6145 = vmatpush1.msra.mxu0 0.0
    %6146 = vmatprep.subr.mxu0 0.0
    %6147 = vmatpush1.msra.mxu0 0.0
    %6148 = vmatprep.subr.mxu0 0.0
    %6149 = vmatpush1.msra.mxu0 0.0
    %6150 = vmatprep.subr.mxu0 0.0
    %6151 = vmatpush1.msra.mxu0 0.0
    %6152 = vmatprep.mubr.f32.mxu0 0.0
    %6153 = vmatmul.mubr.f32.gmra.mrb[0].mxu0 %v5946
    %v6154 = vpop.f32.mrb[0].mxu0
    %v6155 = vadd.f32 %v4713, %v6154
    %v6156 = vpop.f32.mrb[0].mxu0
    %6157 = vdwg.mxu0
    %v6159 = vrot.slane %v6015, 2
    %v6161 = vadd.f32 %v4532, %v6159
    %v6162 = vmul.f32 %v6161, 0.5
    %v6163 = vtanh.pop %v6162
    %v6164 = vmul.f32 %v6163, 0.5
    %v6165 = vadd.f32 %v6164, 0.5
    %v6167 = vrot.slane %v6085, 2
    %v6169 = vadd.f32 %v4611, %v6167
    %v6170 = vmul.f32 %v6169, 0.5
    %v6171 = vtanh.pop %v6170
    %v6172 = vmul.f32 %v6171, 0.5
    %v6173 = vadd.f32 %v6172, 0.5
    %v6175 = vrot.slane %v6155, 2
    %v6177 = vmul.f32 %v6165, %v6175
    %v6178 = vadd.f32 %v4690, %v6177
    %v6179 = vtanh.pop %v6178
    %v6181 = vrot.slane %v6179, 1
    %v6183 = vsub.f32 %v5943, %v6181
    %v6185 = vrot.slane %v6183, 7
    %v6187 = vmul.f32 %v6173, %v6185
    %v6188 = vadd.f32 %v6179, %v6187
    %v6190 = vrot.slane %v6188, 6
    %v6191 = vsel %vm509, %v6190, 0
    %6193 = vmatprep.subr.mxu0 0.0
    %6194 = vmatpush1.msra.mxu0 %v107
    %6195 = vmatprep.subr.mxu0 0.0
    %6196 = vmatpush1.msra.mxu0 %v108
    %6197 = vmatprep.subr.mxu0 0.0
    %6198 = vmatpush1.msra.mxu0 %v109
    %6199 = vmatprep.subr.mxu0 0.0
    %6200 = vmatpush1.msra.mxu0 %v110
    %6201 = vmatprep.subr.mxu0 0.0
    %6202 = vmatpush1.msra.mxu0 0.0
    %6203 = vmatprep.subr.mxu0 0.0
    %6204 = vmatpush1.msra.mxu0 0.0
    %6205 = vmatprep.subr.mxu0 0.0
    %6206 = vmatpush1.msra.mxu0 0.0
    %6207 = vmatprep.subr.mxu0 0.0
    %6208 = vmatpush1.msra.mxu0 0.0
    %6209 = vmatprep.subr.mxu0 0.0
    %6210 = vmatpush1.msra.mxu0 0.0
    %6211 = vmatprep.subr.mxu0 0.0
    %6212 = vmatpush1.msra.mxu0 0.0
    %6213 = vmatprep.subr.mxu0 0.0
    %6214 = vmatpush1.msra.mxu0 0.0
    %6215 = vmatprep.subr.mxu0 0.0
    %6216 = vmatpush1.msra.mxu0 0.0
    %6217 = vmatprep.subr.mxu0 0.0
    %6218 = vmatpush1.msra.mxu0 0.0
    %6219 = vmatprep.subr.mxu0 0.0
    %6220 = vmatpush1.msra.mxu0 0.0
    %6221 = vmatprep.subr.mxu0 0.0
    %6222 = vmatpush1.msra.mxu0 0.0
    %6223 = vmatprep.subr.mxu0 0.0
    %6224 = vmatpush1.msra.mxu0 0.0
    %6225 = vmatprep.subr.mxu0 0.0
    %6226 = vmatpush1.msra.mxu0 0.0
    %6227 = vmatprep.subr.mxu0 0.0
    %6228 = vmatpush1.msra.mxu0 0.0
    %6229 = vmatprep.subr.mxu0 0.0
    %6230 = vmatpush1.msra.mxu0 0.0
    %6231 = vmatprep.subr.mxu0 0.0
    %6232 = vmatpush1.msra.mxu0 0.0
    %6233 = vmatprep.subr.mxu0 0.0
    %6234 = vmatpush1.msra.mxu0 0.0
    %6235 = vmatprep.subr.mxu0 0.0
    %6236 = vmatpush1.msra.mxu0 0.0
    %6237 = vmatprep.subr.mxu0 0.0
    %6238 = vmatpush1.msra.mxu0 0.0
    %6239 = vmatprep.subr.mxu0 0.0
    %6240 = vmatpush1.msra.mxu0 0.0
    %6241 = vmatprep.subr.mxu0 0.0
    %6242 = vmatpush1.msra.mxu0 0.0
    %6243 = vmatprep.subr.mxu0 0.0
    %6244 = vmatpush1.msra.mxu0 0.0
    %6245 = vmatprep.subr.mxu0 0.0
    %6246 = vmatpush1.msra.mxu0 0.0
    %6247 = vmatprep.subr.mxu0 0.0
    %6248 = vmatpush1.msra.mxu0 0.0
    %6249 = vmatprep.subr.mxu0 0.0
    %6250 = vmatpush1.msra.mxu0 0.0
    %6251 = vmatprep.subr.mxu0 0.0
    %6252 = vmatpush1.msra.mxu0 0.0
    %6253 = vmatprep.subr.mxu0 0.0
    %6254 = vmatpush1.msra.mxu0 0.0
    %6255 = vmatprep.subr.mxu0 0.0
    %6256 = vmatpush1.msra.mxu0 0.0
    %6257 = vmatprep.mubr.f32.mxu0 0.0
    %6258 = vmatmul.mubr.f32.gmra.mrb[0].mxu0 %v6191
    %v6259 = vpop.f32.mrb[0].mxu0
    %v6260 = vadd.f32 %v4699, %v6259
    %v6261 = vpop.f32.mrb[0].mxu0
    %6262 = vdwg.mxu0
    %6263 = vmatprep.subr.mxu0 0.0
    %6264 = vmatpush1.msra.mxu0 %v112
    %6265 = vmatprep.subr.mxu0 0.0
    %6266 = vmatpush1.msra.mxu0 %v113
    %6267 = vmatprep.subr.mxu0 0.0
    %6268 = vmatpush1.msra.mxu0 %v114
    %6269 = vmatprep.subr.mxu0 0.0
    %6270 = vmatpush1.msra.mxu0 %v115
    %6271 = vmatprep.subr.mxu0 0.0
    %6272 = vmatpush1.msra.mxu0 0.0
    %6273 = vmatprep.subr.mxu0 0.0
    %6274 = vmatpush1.msra.mxu0 0.0
    %6275 = vmatprep.subr.mxu0 0.0
    %6276 = vmatpush1.msra.mxu0 0.0
    %6277 = vmatprep.subr.mxu0 0.0
    %6278 = vmatpush1.msra.mxu0 0.0
    %6279 = vmatprep.subr.mxu0 0.0
    %6280 = vmatpush1.msra.mxu0 0.0
    %6281 = vmatprep.subr.mxu0 0.0
    %6282 = vmatpush1.msra.mxu0 0.0
    %6283 = vmatprep.subr.mxu0 0.0
    %6284 = vmatpush1.msra.mxu0 0.0
    %6285 = vmatprep.subr.mxu0 0.0
    %6286 = vmatpush1.msra.mxu0 0.0
    %6287 = vmatprep.subr.mxu0 0.0
    %6288 = vmatpush1.msra.mxu0 0.0
    %6289 = vmatprep.subr.mxu0 0.0
    %6290 = vmatpush1.msra.mxu0 0.0
    %6291 = vmatprep.subr.mxu0 0.0
    %6292 = vmatpush1.msra.mxu0 0.0
    %6293 = vmatprep.subr.mxu0 0.0
    %6294 = vmatpush1.msra.mxu0 0.0
    %6295 = vmatprep.subr.mxu0 0.0
    %6296 = vmatpush1.msra.mxu0 0.0
    %6297 = vmatprep.subr.mxu0 0.0
    %6298 = vmatpush1.msra.mxu0 0.0
    %6299 = vmatprep.subr.mxu0 0.0
    %6300 = vmatpush1.msra.mxu0 0.0
    %6301 = vmatprep.subr.mxu0 0.0
    %6302 = vmatpush1.msra.mxu0 0.0
    %6303 = vmatprep.subr.mxu0 0.0
    %6304 = vmatpush1.msra.mxu0 0.0
    %6305 = vmatprep.subr.mxu0 0.0
    %6306 = vmatpush1.msra.mxu0 0.0
    %6307 = vmatprep.subr.mxu0 0.0
    %6308 = vmatpush1.msra.mxu0 0.0
    %6309 = vmatprep.subr.mxu0 0.0
    %6310 = vmatpush1.msra.mxu0 0.0
    %6311 = vmatprep.subr.mxu0 0.0
    %6312 = vmatpush1.msra.mxu0 0.0
    %6313 = vmatprep.subr.mxu0 0.0
    %6314 = vmatpush1.msra.mxu0 0.0
    %6315 = vmatprep.subr.mxu0 0.0
    %6316 = vmatpush1.msra.mxu0 0.0
    %6317 = vmatprep.subr.mxu0 0.0
    %6318 = vmatpush1.msra.mxu0 0.0
    %6319 = vmatprep.subr.mxu0 0.0
    %6320 = vmatpush1.msra.mxu0 0.0
    %6321 = vmatprep.subr.mxu0 0.0
    %6322 = vmatpush1.msra.mxu0 0.0
    %6323 = vmatprep.subr.mxu0 0.0
    %6324 = vmatpush1.msra.mxu0 0.0
    %6325 = vmatprep.subr.mxu0 0.0
    %6326 = vmatpush1.msra.mxu0 0.0
    %6327 = vmatprep.mubr.f32.mxu0 0.0
    %6328 = vmatmul.mubr.f32.gmra.mrb[0].mxu0 %v6191
    %v6329 = vpop.f32.mrb[0].mxu0
    %v6330 = vadd.f32 %v4706, %v6329
    %v6331 = vpop.f32.mrb[0].mxu0
    %6332 = vdwg.mxu0
    %6333 = vmatprep.subr.mxu0 0.0
    %6334 = vmatpush1.msra.mxu0 %v117
    %6335 = vmatprep.subr.mxu0 0.0
    %6336 = vmatpush1.msra.mxu0 %v118
    %6337 = vmatprep.subr.mxu0 0.0
    %6338 = vmatpush1.msra.mxu0 %v119
    %6339 = vmatprep.subr.mxu0 0.0
    %6340 = vmatpush1.msra.mxu0 %v120
    %6341 = vmatprep.subr.mxu0 0.0
    %6342 = vmatpush1.msra.mxu0 0.0
    %6343 = vmatprep.subr.mxu0 0.0
    %6344 = vmatpush1.msra.mxu0 0.0
    %6345 = vmatprep.subr.mxu0 0.0
    %6346 = vmatpush1.msra.mxu0 0.0
    %6347 = vmatprep.subr.mxu0 0.0
    %6348 = vmatpush1.msra.mxu0 0.0
    %6349 = vmatprep.subr.mxu0 0.0
    %6350 = vmatpush1.msra.mxu0 0.0
    %6351 = vmatprep.subr.mxu0 0.0
    %6352 = vmatpush1.msra.mxu0 0.0
    %6353 = vmatprep.subr.mxu0 0.0
    %6354 = vmatpush1.msra.mxu0 0.0
    %6355 = vmatprep.subr.mxu0 0.0
    %6356 = vmatpush1.msra.mxu0 0.0
    %6357 = vmatprep.subr.mxu0 0.0
    %6358 = vmatpush1.msra.mxu0 0.0
    %6359 = vmatprep.subr.mxu0 0.0
    %6360 = vmatpush1.msra.mxu0 0.0
    %6361 = vmatprep.subr.mxu0 0.0
    %6362 = vmatpush1.msra.mxu0 0.0
    %6363 = vmatprep.subr.mxu0 0.0
    %6364 = vmatpush1.msra.mxu0 0.0
    %6365 = vmatprep.subr.mxu0 0.0
    %6366 = vmatpush1.msra.mxu0 0.0
    %6367 = vmatprep.subr.mxu0 0.0
    %6368 = vmatpush1.msra.mxu0 0.0
    %6369 = vmatprep.subr.mxu0 0.0
    %6370 = vmatpush1.msra.mxu0 0.0
    %6371 = vmatprep.subr.mxu0 0.0
    %6372 = vmatpush1.msra.mxu0 0.0
    %6373 = vmatprep.subr.mxu0 0.0
    %6374 = vmatpush1.msra.mxu0 0.0
    %6375 = vmatprep.subr.mxu0 0.0
    %6376 = vmatpush1.msra.mxu0 0.0
    %6377 = vmatprep.subr.mxu0 0.0
    %6378 = vmatpush1.msra.mxu0 0.0
    %6379 = vmatprep.subr.mxu0 0.0
    %6380 = vmatpush1.msra.mxu0 0.0
    %6381 = vmatprep.subr.mxu0 0.0
    %6382 = vmatpush1.msra.mxu0 0.0
    %6383 = vmatprep.subr.mxu0 0.0
    %6384 = vmatpush1.msra.mxu0 0.0
    %6385 = vmatprep.subr.mxu0 0.0
    %6386 = vmatpush1.msra.mxu0 0.0
    %6387 = vmatprep.subr.mxu0 0.0
    %6388 = vmatpush1.msra.mxu0 0.0
    %6389 = vmatprep.subr.mxu0 0.0
    %6390 = vmatpush1.msra.mxu0 0.0
    %6391 = vmatprep.subr.mxu0 0.0
    %6392 = vmatpush1.msra.mxu0 0.0
    %6393 = vmatprep.subr.mxu0 0.0
    %6394 = vmatpush1.msra.mxu0 0.0
    %6395 = vmatprep.subr.mxu0 0.0
    %6396 = vmatpush1.msra.mxu0 0.0
    %6397 = vmatprep.mubr.f32.mxu0 0.0
    %6398 = vmatmul.mubr.f32.gmra.mrb[0].mxu0 %v6191
    %v6399 = vpop.f32.mrb[0].mxu0
    %v6400 = vadd.f32 %v4713, %v6399
    %v6401 = vpop.f32.mrb[0].mxu0
    %6402 = vdwg.mxu0
    %v6404 = vrot.slane %v6260, 1
    %v6406 = vadd.f32 %v4532, %v6404
    %v6407 = vmul.f32 %v6406, 0.5
    %v6408 = vtanh.pop %v6407
    %v6409 = vmul.f32 %v6408, 0.5
    %v6410 = vadd.f32 %v6409, 0.5
    %v6412 = vrot.slane %v6330, 1
    %v6414 = vadd.f32 %v4611, %v6412
    %v6415 = vmul.f32 %v6414, 0.5
    %v6416 = vtanh.pop %v6415
    %v6417 = vmul.f32 %v6416, 0.5
    %v6418 = vadd.f32 %v6417, 0.5
    %v6420 = vrot.slane %v6400, 1
    %v6422 = vmul.f32 %v6410, %v6420
    %v6423 = vadd.f32 %v4690, %v6422
    %v6424 = vtanh.pop %v6423
    %v6426 = vrot.slane %v6424, 1
    %v6428 = vsub.f32 %v6188, %v6426
    %v6430 = vrot.slane %v6428, 7
    %v6432 = vmul.f32 %v6418, %v6430
    %v6433 = vadd.f32 %v6424, %v6432
    %v6435 = vrot.slane %v6433, 7
    %v6436 = vsel %vm509, %v6435, 0
    %6438 = vmatprep.subr.mxu0 0.0
    %6439 = vmatpush1.msra.mxu0 %v107
    %6440 = vmatprep.subr.mxu0 0.0
    %6441 = vmatpush1.msra.mxu0 %v108
    %6442 = vmatprep.subr.mxu0 0.0
    %6443 = vmatpush1.msra.mxu0 %v109
    %6444 = vmatprep.subr.mxu0 0.0
    %6445 = vmatpush1.msra.mxu0 %v110
    %6446 = vmatprep.subr.mxu0 0.0
    %6447 = vmatpush1.msra.mxu0 0.0
    %6448 = vmatprep.subr.mxu0 0.0
    %6449 = vmatpush1.msra.mxu0 0.0
    %6450 = vmatprep.subr.mxu0 0.0
    %6451 = vmatpush1.msra.mxu0 0.0
    %6452 = vmatprep.subr.mxu0 0.0
    %6453 = vmatpush1.msra.mxu0 0.0
    %6454 = vmatprep.subr.mxu0 0.0
    %6455 = vmatpush1.msra.mxu0 0.0
    %6456 = vmatprep.subr.mxu0 0.0
    %6457 = vmatpush1.msra.mxu0 0.0
    %6458 = vmatprep.subr.mxu0 0.0
    %6459 = vmatpush1.msra.mxu0 0.0
    %6460 = vmatprep.subr.mxu0 0.0
    %6461 = vmatpush1.msra.mxu0 0.0
    %6462 = vmatprep.subr.mxu0 0.0
    %6463 = vmatpush1.msra.mxu0 0.0
    %6464 = vmatprep.subr.mxu0 0.0
    %6465 = vmatpush1.msra.mxu0 0.0
    %6466 = vmatprep.subr.mxu0 0.0
    %6467 = vmatpush1.msra.mxu0 0.0
    %6468 = vmatprep.subr.mxu0 0.0
    %6469 = vmatpush1.msra.mxu0 0.0
    %6470 = vmatprep.subr.mxu0 0.0
    %6471 = vmatpush1.msra.mxu0 0.0
    %6472 = vmatprep.subr.mxu0 0.0
    %6473 = vmatpush1.msra.mxu0 0.0
    %6474 = vmatprep.subr.mxu0 0.0
    %6475 = vmatpush1.msra.mxu0 0.0
    %6476 = vmatprep.subr.mxu0 0.0
    %6477 = vmatpush1.msra.mxu0 0.0
    %6478 = vmatprep.subr.mxu0 0.0
    %6479 = vmatpush1.msra.mxu0 0.0
    %6480 = vmatprep.subr.mxu0 0.0
    %6481 = vmatpush1.msra.mxu0 0.0
    %6482 = vmatprep.subr.mxu0 0.0
    %6483 = vmatpush1.msra.mxu0 0.0
    %6484 = vmatprep.subr.mxu0 0.0
    %6485 = vmatpush1.msra.mxu0 0.0
    %6486 = vmatprep.subr.mxu0 0.0
    %6487 = vmatpush1.msra.mxu0 0.0
    %6488 = vmatprep.subr.mxu0 0.0
    %6489 = vmatpush1.msra.mxu0 0.0
    %6490 = vmatprep.subr.mxu0 0.0
    %6491 = vmatpush1.msra.mxu0 0.0
    %6492 = vmatprep.subr.mxu0 0.0
    %6493 = vmatpush1.msra.mxu0 0.0
    %6494 = vmatprep.subr.mxu0 0.0
    %6495 = vmatpush1.msra.mxu0 0.0
    %6496 = vmatprep.subr.mxu0 0.0
    %6497 = vmatpush1.msra.mxu0 0.0
    %6498 = vmatprep.subr.mxu0 0.0
    %6499 = vmatpush1.msra.mxu0 0.0
    %6500 = vmatprep.subr.mxu0 0.0
    %6501 = vmatpush1.msra.mxu0 0.0
    %6502 = vmatprep.mubr.f32.mxu0 0.0
    %6503 = vmatmul.mubr.f32.gmra.mrb[0].mxu0 %v6436
    %v6504 = vpop.f32.mrb[0].mxu0
    %v6505 = vadd.f32 %v4699, %v6504
    %v6506 = vpop.f32.mrb[0].mxu0
    %6507 = vdwg.mxu0
    %6508 = vmatprep.subr.mxu0 0.0
    %6509 = vmatpush1.msra.mxu0 %v112
    %6510 = vmatprep.subr.mxu0 0.0
    %6511 = vmatpush1.msra.mxu0 %v113
    %6512 = vmatprep.subr.mxu0 0.0
    %6513 = vmatpush1.msra.mxu0 %v114
    %6514 = vmatprep.subr.mxu0 0.0
    %6515 = vmatpush1.msra.mxu0 %v115
    %6516 = vmatprep.subr.mxu0 0.0
    %6517 = vmatpush1.msra.mxu0 0.0
    %6518 = vmatprep.subr.mxu0 0.0
    %6519 = vmatpush1.msra.mxu0 0.0
    %6520 = vmatprep.subr.mxu0 0.0
    %6521 = vmatpush1.msra.mxu0 0.0
    %6522 = vmatprep.subr.mxu0 0.0
    %6523 = vmatpush1.msra.mxu0 0.0
    %6524 = vmatprep.subr.mxu0 0.0
    %6525 = vmatpush1.msra.mxu0 0.0
    %6526 = vmatprep.subr.mxu0 0.0
    %6527 = vmatpush1.msra.mxu0 0.0
    %6528 = vmatprep.subr.mxu0 0.0
    %6529 = vmatpush1.msra.mxu0 0.0
    %6530 = vmatprep.subr.mxu0 0.0
    %6531 = vmatpush1.msra.mxu0 0.0
    %6532 = vmatprep.subr.mxu0 0.0
    %6533 = vmatpush1.msra.mxu0 0.0
    %6534 = vmatprep.subr.mxu0 0.0
    %6535 = vmatpush1.msra.mxu0 0.0
    %6536 = vmatprep.subr.mxu0 0.0
    %6537 = vmatpush1.msra.mxu0 0.0
    %6538 = vmatprep.subr.mxu0 0.0
    %6539 = vmatpush1.msra.mxu0 0.0
    %6540 = vmatprep.subr.mxu0 0.0
    %6541 = vmatpush1.msra.mxu0 0.0
    %6542 = vmatprep.subr.mxu0 0.0
    %6543 = vmatpush1.msra.mxu0 0.0
    %6544 = vmatprep.subr.mxu0 0.0
    %6545 = vmatpush1.msra.mxu0 0.0
    %6546 = vmatprep.subr.mxu0 0.0
    %6547 = vmatpush1.msra.mxu0 0.0
    %6548 = vmatprep.subr.mxu0 0.0
    %6549 = vmatpush1.msra.mxu0 0.0
    %6550 = vmatprep.subr.mxu0 0.0
    %6551 = vmatpush1.msra.mxu0 0.0
    %6552 = vmatprep.subr.mxu0 0.0
    %6553 = vmatpush1.msra.mxu0 0.0
    %6554 = vmatprep.subr.mxu0 0.0
    %6555 = vmatpush1.msra.mxu0 0.0
    %6556 = vmatprep.subr.mxu0 0.0
    %6557 = vmatpush1.msra.mxu0 0.0
    %6558 = vmatprep.subr.mxu0 0.0
    %6559 = vmatpush1.msra.mxu0 0.0
    %6560 = vmatprep.subr.mxu0 0.0
    %6561 = vmatpush1.msra.mxu0 0.0
    %6562 = vmatprep.subr.mxu0 0.0
    %6563 = vmatpush1.msra.mxu0 0.0
    %6564 = vmatprep.subr.mxu0 0.0
    %6565 = vmatpush1.msra.mxu0 0.0
    %6566 = vmatprep.subr.mxu0 0.0
    %6567 = vmatpush1.msra.mxu0 0.0
    %6568 = vmatprep.subr.mxu0 0.0
    %6569 = vmatpush1.msra.mxu0 0.0
    %6570 = vmatprep.subr.mxu0 0.0
    %6571 = vmatpush1.msra.mxu0 0.0
    %6572 = vmatprep.mubr.f32.mxu0 0.0
    %6573 = vmatmul.mubr.f32.gmra.mrb[0].mxu0 %v6436
    %v6574 = vpop.f32.mrb[0].mxu0
    %v6575 = vadd.f32 %v4706, %v6574
    %v6576 = vpop.f32.mrb[0].mxu0
    %6577 = vdwg.mxu0
    %6578 = vmatprep.subr.mxu0 0.0
    %6579 = vmatpush1.msra.mxu0 %v117
    %6580 = vmatprep.subr.mxu0 0.0
    %6581 = vmatpush1.msra.mxu0 %v118
    %6582 = vmatprep.subr.mxu0 0.0
    %6583 = vmatpush1.msra.mxu0 %v119
    %6584 = vmatprep.subr.mxu0 0.0
    %6585 = vmatpush1.msra.mxu0 %v120
    %6586 = vmatprep.subr.mxu0 0.0
    %6587 = vmatpush1.msra.mxu0 0.0
    %6588 = vmatprep.subr.mxu0 0.0
    %6589 = vmatpush1.msra.mxu0 0.0
    %6590 = vmatprep.subr.mxu0 0.0
    %6591 = vmatpush1.msra.mxu0 0.0
    %6592 = vmatprep.subr.mxu0 0.0
    %6593 = vmatpush1.msra.mxu0 0.0
    %6594 = vmatprep.subr.mxu0 0.0
    %6595 = vmatpush1.msra.mxu0 0.0
    %6596 = vmatprep.subr.mxu0 0.0
    %6597 = vmatpush1.msra.mxu0 0.0
    %6598 = vmatprep.subr.mxu0 0.0
    %6599 = vmatpush1.msra.mxu0 0.0
    %6600 = vmatprep.subr.mxu0 0.0
    %6601 = vmatpush1.msra.mxu0 0.0
    %6602 = vmatprep.subr.mxu0 0.0
    %6603 = vmatpush1.msra.mxu0 0.0
    %6604 = vmatprep.subr.mxu0 0.0
    %6605 = vmatpush1.msra.mxu0 0.0
    %6606 = vmatprep.subr.mxu0 0.0
    %6607 = vmatpush1.msra.mxu0 0.0
    %6608 = vmatprep.subr.mxu0 0.0
    %6609 = vmatpush1.msra.mxu0 0.0
    %6610 = vmatprep.subr.mxu0 0.0
    %6611 = vmatpush1.msra.mxu0 0.0
    %6612 = vmatprep.subr.mxu0 0.0
    %6613 = vmatpush1.msra.mxu0 0.0
    %6614 = vmatprep.subr.mxu0 0.0
    %6615 = vmatpush1.msra.mxu0 0.0
    %6616 = vmatprep.subr.mxu0 0.0
    %6617 = vmatpush1.msra.mxu0 0.0
    %6618 = vmatprep.subr.mxu0 0.0
    %6619 = vmatpush1.msra.mxu0 0.0
    %6620 = vmatprep.subr.mxu0 0.0
    %6621 = vmatpush1.msra.mxu0 0.0
    %6622 = vmatprep.subr.mxu0 0.0
    %6623 = vmatpush1.msra.mxu0 0.0
    %6624 = vmatprep.subr.mxu0 0.0
    %6625 = vmatpush1.msra.mxu0 0.0
    %6626 = vmatprep.subr.mxu0 0.0
    %6627 = vmatpush1.msra.mxu0 0.0
    %6628 = vmatprep.subr.mxu0 0.0
    %6629 = vmatpush1.msra.mxu0 0.0
    %6630 = vmatprep.subr.mxu0 0.0
    %6631 = vmatpush1.msra.mxu0 0.0
    %6632 = vmatprep.subr.mxu0 0.0
    %6633 = vmatpush1.msra.mxu0 0.0
    %6634 = vmatprep.subr.mxu0 0.0
    %6635 = vmatpush1.msra.mxu0 0.0
    %6636 = vmatprep.subr.mxu0 0.0
    %6637 = vmatpush1.msra.mxu0 0.0
    %6638 = vmatprep.subr.mxu0 0.0
    %6639 = vmatpush1.msra.mxu0 0.0
    %6640 = vmatprep.subr.mxu0 0.0
    %6641 = vmatpush1.msra.mxu0 0.0
    %6642 = vmatprep.mubr.f32.mxu0 0.0
    %6643 = vmatmul.mubr.f32.gmra.mrb[0].mxu0 %v6436
    %v6644 = vpop.f32.mrb[0].mxu0
    %v6645 = vadd.f32 %v4713, %v6644
    %v6646 = vpop.f32.mrb[0].mxu0
    %6647 = vdwg.mxu0
    %v6648 = vadd.f32 %v4537, %v6505
    %v6649 = vmul.f32 %v6648, 0.5
    %v6650 = vtanh.pop %v6649
    %v6651 = vmul.f32 %v6650, 0.5
    %v6652 = vadd.f32 %v6651, 0.5
    %v6653 = vadd.f32 %v4616, %v6575
    %v6654 = vmul.f32 %v6653, 0.5
    %v6655 = vtanh.pop %v6654
    %v6656 = vmul.f32 %v6655, 0.5
    %v6657 = vadd.f32 %v6656, 0.5
    %v6658 = vmul.f32 %v6652, %v6645
    %v6659 = vadd.f32 %v4695, %v6658
    %v6660 = vtanh.pop %v6659
    %v6662 = vrot.slane %v6660, 1
    %v6664 = vsub.f32 %v6433, %v6662
    %v6666 = vrot.slane %v6664, 7
    %v6668 = vmul.f32 %v6657, %v6666
    %v6669 = vadd.f32 %v6660, %v6668
    %v6671 = vsel %vm509, %v6669, 0
    %6673 = vmatprep.subr.mxu0 0.0
    %6674 = vmatpush1.msra.mxu0 %v107
    %6675 = vmatprep.subr.mxu0 0.0
    %6676 = vmatpush1.msra.mxu0 %v108
    %6677 = vmatprep.subr.mxu0 0.0
    %6678 = vmatpush1.msra.mxu0 %v109
    %6679 = vmatprep.subr.mxu0 0.0
    %6680 = vmatpush1.msra.mxu0 %v110
    %6681 = vmatprep.subr.mxu0 0.0
    %6682 = vmatpush1.msra.mxu0 0.0
    %6683 = vmatprep.subr.mxu0 0.0
    %6684 = vmatpush1.msra.mxu0 0.0
    %6685 = vmatprep.subr.mxu0 0.0
    %6686 = vmatpush1.msra.mxu0 0.0
    %6687 = vmatprep.subr.mxu0 0.0
    %6688 = vmatpush1.msra.mxu0 0.0
    %6689 = vmatprep.subr.mxu0 0.0
    %6690 = vmatpush1.msra.mxu0 0.0
    %6691 = vmatprep.subr.mxu0 0.0
    %6692 = vmatpush1.msra.mxu0 0.0
    %6693 = vmatprep.subr.mxu0 0.0
    %6694 = vmatpush1.msra.mxu0 0.0
    %6695 = vmatprep.subr.mxu0 0.0
    %6696 = vmatpush1.msra.mxu0 0.0
    %6697 = vmatprep.subr.mxu0 0.0
    %6698 = vmatpush1.msra.mxu0 0.0
    %6699 = vmatprep.subr.mxu0 0.0
    %6700 = vmatpush1.msra.mxu0 0.0
    %6701 = vmatprep.subr.mxu0 0.0
    %6702 = vmatpush1.msra.mxu0 0.0
    %6703 = vmatprep.subr.mxu0 0.0
    %6704 = vmatpush1.msra.mxu0 0.0
    %6705 = vmatprep.subr.mxu0 0.0
    %6706 = vmatpush1.msra.mxu0 0.0
    %6707 = vmatprep.subr.mxu0 0.0
    %6708 = vmatpush1.msra.mxu0 0.0
    %6709 = vmatprep.subr.mxu0 0.0
    %6710 = vmatpush1.msra.mxu0 0.0
    %6711 = vmatprep.subr.mxu0 0.0
    %6712 = vmatpush1.msra.mxu0 0.0
    %6713 = vmatprep.subr.mxu0 0.0
    %6714 = vmatpush1.msra.mxu0 0.0
    %6715 = vmatprep.subr.mxu0 0.0
    %6716 = vmatpush1.msra.mxu0 0.0
    %6717 = vmatprep.subr.mxu0 0.0
    %6718 = vmatpush1.msra.mxu0 0.0
    %6719 = vmatprep.subr.mxu0 0.0
    %6720 = vmatpush1.msra.mxu0 0.0
    %6721 = vmatprep.subr.mxu0 0.0
    %6722 = vmatpush1.msra.mxu0 0.0
    %6723 = vmatprep.subr.mxu0 0.0
    %6724 = vmatpush1.msra.mxu0 0.0
    %6725 = vmatprep.subr.mxu0 0.0
    %6726 = vmatpush1.msra.mxu0 0.0
    %6727 = vmatprep.subr.mxu0 0.0
    %6728 = vmatpush1.msra.mxu0 0.0
    %6729 = vmatprep.subr.mxu0 0.0
    %6730 = vmatpush1.msra.mxu0 0.0
    %6731 = vmatprep.subr.mxu0 0.0
    %6732 = vmatpush1.msra.mxu0 0.0
    %6733 = vmatprep.subr.mxu0 0.0
    %6734 = vmatpush1.msra.mxu0 0.0
    %6735 = vmatprep.subr.mxu0 0.0
    %6736 = vmatpush1.msra.mxu0 0.0
    %6737 = vmatprep.mubr.f32.mxu0 0.0
    %6738 = vmatmul.mubr.f32.gmra.mrb[0].mxu0 %v6671
    %v6739 = vpop.f32.mrb[0].mxu0
    %v6740 = vadd.f32 %v4699, %v6739
    %v6741 = vpop.f32.mrb[0].mxu0
    %6742 = vdwg.mxu0
    %6743 = vmatprep.subr.mxu0 0.0
    %6744 = vmatpush1.msra.mxu0 %v112
    %6745 = vmatprep.subr.mxu0 0.0
    %6746 = vmatpush1.msra.mxu0 %v113
    %6747 = vmatprep.subr.mxu0 0.0
    %6748 = vmatpush1.msra.mxu0 %v114
    %6749 = vmatprep.subr.mxu0 0.0
    %6750 = vmatpush1.msra.mxu0 %v115
    %6751 = vmatprep.subr.mxu0 0.0
    %6752 = vmatpush1.msra.mxu0 0.0
    %6753 = vmatprep.subr.mxu0 0.0
    %6754 = vmatpush1.msra.mxu0 0.0
    %6755 = vmatprep.subr.mxu0 0.0
    %6756 = vmatpush1.msra.mxu0 0.0
    %6757 = vmatprep.subr.mxu0 0.0
    %6758 = vmatpush1.msra.mxu0 0.0
    %6759 = vmatprep.subr.mxu0 0.0
    %6760 = vmatpush1.msra.mxu0 0.0
    %6761 = vmatprep.subr.mxu0 0.0
    %6762 = vmatpush1.msra.mxu0 0.0
    %6763 = vmatprep.subr.mxu0 0.0
    %6764 = vmatpush1.msra.mxu0 0.0
    %6765 = vmatprep.subr.mxu0 0.0
    %6766 = vmatpush1.msra.mxu0 0.0
    %6767 = vmatprep.subr.mxu0 0.0
    %6768 = vmatpush1.msra.mxu0 0.0
    %6769 = vmatprep.subr.mxu0 0.0
    %6770 = vmatpush1.msra.mxu0 0.0
    %6771 = vmatprep.subr.mxu0 0.0
    %6772 = vmatpush1.msra.mxu0 0.0
    %6773 = vmatprep.subr.mxu0 0.0
    %6774 = vmatpush1.msra.mxu0 0.0
    %6775 = vmatprep.subr.mxu0 0.0
    %6776 = vmatpush1.msra.mxu0 0.0
    %6777 = vmatprep.subr.mxu0 0.0
    %6778 = vmatpush1.msra.mxu0 0.0
    %6779 = vmatprep.subr.mxu0 0.0
    %6780 = vmatpush1.msra.mxu0 0.0
    %6781 = vmatprep.subr.mxu0 0.0
    %6782 = vmatpush1.msra.mxu0 0.0
    %6783 = vmatprep.subr.mxu0 0.0
    %6784 = vmatpush1.msra.mxu0 0.0
    %6785 = vmatprep.subr.mxu0 0.0
    %6786 = vmatpush1.msra.mxu0 0.0
    %6787 = vmatprep.subr.mxu0 0.0
    %6788 = vmatpush1.msra.mxu0 0.0
    %6789 = vmatprep.subr.mxu0 0.0
    %6790 = vmatpush1.msra.mxu0 0.0
    %6791 = vmatprep.subr.mxu0 0.0
    %6792 = vmatpush1.msra.mxu0 0.0
    %6793 = vmatprep.subr.mxu0 0.0
    %6794 = vmatpush1.msra.mxu0 0.0
    %6795 = vmatprep.subr.mxu0 0.0
    %6796 = vmatpush1.msra.mxu0 0.0
    %6797 = vmatprep.subr.mxu0 0.0
    %6798 = vmatpush1.msra.mxu0 0.0
    %6799 = vmatprep.subr.mxu0 0.0
    %6800 = vmatpush1.msra.mxu0 0.0
    %6801 = vmatprep.subr.mxu0 0.0
    %6802 = vmatpush1.msra.mxu0 0.0
    %6803 = vmatprep.subr.mxu0 0.0
    %6804 = vmatpush1.msra.mxu0 0.0
    %6805 = vmatprep.subr.mxu0 0.0
    %6806 = vmatpush1.msra.mxu0 0.0
    %6807 = vmatprep.mubr.f32.mxu0 0.0
    %6808 = vmatmul.mubr.f32.gmra.mrb[0].mxu0 %v6671
    %v6809 = vpop.f32.mrb[0].mxu0
    %v6810 = vadd.f32 %v4706, %v6809
    %v6811 = vpop.f32.mrb[0].mxu0
    %6812 = vdwg.mxu0
    %6813 = vmatprep.subr.mxu0 0.0
    %6814 = vmatpush1.msra.mxu0 %v117
    %6815 = vmatprep.subr.mxu0 0.0
    %6816 = vmatpush1.msra.mxu0 %v118
    %6817 = vmatprep.subr.mxu0 0.0
    %6818 = vmatpush1.msra.mxu0 %v119
    %6819 = vmatprep.subr.mxu0 0.0
    %6820 = vmatpush1.msra.mxu0 %v120
    %6821 = vmatprep.subr.mxu0 0.0
    %6822 = vmatpush1.msra.mxu0 0.0
    %6823 = vmatprep.subr.mxu0 0.0
    %6824 = vmatpush1.msra.mxu0 0.0
    %6825 = vmatprep.subr.mxu0 0.0
    %6826 = vmatpush1.msra.mxu0 0.0
    %6827 = vmatprep.subr.mxu0 0.0
    %6828 = vmatpush1.msra.mxu0 0.0
    %6829 = vmatprep.subr.mxu0 0.0
    %6830 = vmatpush1.msra.mxu0 0.0
    %6831 = vmatprep.subr.mxu0 0.0
    %6832 = vmatpush1.msra.mxu0 0.0
    %6833 = vmatprep.subr.mxu0 0.0
    %6834 = vmatpush1.msra.mxu0 0.0
    %6835 = vmatprep.subr.mxu0 0.0
    %6836 = vmatpush1.msra.mxu0 0.0
    %6837 = vmatprep.subr.mxu0 0.0
    %6838 = vmatpush1.msra.mxu0 0.0
    %6839 = vmatprep.subr.mxu0 0.0
    %6840 = vmatpush1.msra.mxu0 0.0
    %6841 = vmatprep.subr.mxu0 0.0
    %6842 = vmatpush1.msra.mxu0 0.0
    %6843 = vmatprep.subr.mxu0 0.0
    %6844 = vmatpush1.msra.mxu0 0.0
    %6845 = vmatprep.subr.mxu0 0.0
    %6846 = vmatpush1.msra.mxu0 0.0
    %6847 = vmatprep.subr.mxu0 0.0
    %6848 = vmatpush1.msra.mxu0 0.0
    %6849 = vmatprep.subr.mxu0 0.0
    %6850 = vmatpush1.msra.mxu0 0.0
    %6851 = vmatprep.subr.mxu0 0.0
    %6852 = vmatpush1.msra.mxu0 0.0
    %6853 = vmatprep.subr.mxu0 0.0
    %6854 = vmatpush1.msra.mxu0 0.0
    %6855 = vmatprep.subr.mxu0 0.0
    %6856 = vmatpush1.msra.mxu0 0.0
    %6857 = vmatprep.subr.mxu0 0.0
    %6858 = vmatpush1.msra.mxu0 0.0
    %6859 = vmatprep.subr.mxu0 0.0
    %6860 = vmatpush1.msra.mxu0 0.0
    %6861 = vmatprep.subr.mxu0 0.0
    %6862 = vmatpush1.msra.mxu0 0.0
    %6863 = vmatprep.subr.mxu0 0.0
    %6864 = vmatpush1.msra.mxu0 0.0
    %6865 = vmatprep.subr.mxu0 0.0
    %6866 = vmatpush1.msra.mxu0 0.0
    %6867 = vmatprep.subr.mxu0 0.0
    %6868 = vmatpush1.msra.mxu0 0.0
    %6869 = vmatprep.subr.mxu0 0.0
    %6870 = vmatpush1.msra.mxu0 0.0
    %6871 = vmatprep.subr.mxu0 0.0
    %6872 = vmatpush1.msra.mxu0 0.0
    %6873 = vmatprep.subr.mxu0 0.0
    %6874 = vmatpush1.msra.mxu0 0.0
    %6875 = vmatprep.subr.mxu0 0.0
    %6876 = vmatpush1.msra.mxu0 0.0
    %6877 = vmatprep.mubr.f32.mxu0 0.0
    %6878 = vmatmul.mubr.f32.gmra.mrb[0].mxu0 %v6671
    %v6879 = vpop.f32.mrb[0].mxu0
    %v6880 = vadd.f32 %v4713, %v6879
    %v6881 = vpop.f32.mrb[0].mxu0
    %6882 = vdwg.mxu0
    %v6884 = vrot.slane %v6740, 7
    %v6886 = vadd.f32 %v4537, %v6884
    %v6887 = vmul.f32 %v6886, 0.5
    %v6888 = vtanh.pop %v6887
    %v6889 = vmul.f32 %v6888, 0.5
    %v6890 = vadd.f32 %v6889, 0.5
    %v6892 = vrot.slane %v6810, 7
    %v6894 = vadd.f32 %v4616, %v6892
    %v6895 = vmul.f32 %v6894, 0.5
    %v6896 = vtanh.pop %v6895
    %v6897 = vmul.f32 %v6896, 0.5
    %v6898 = vadd.f32 %v6897, 0.5
    %v6900 = vrot.slane %v6880, 7
    %v6902 = vmul.f32 %v6890, %v6900
    %v6903 = vadd.f32 %v4695, %v6902
    %v6904 = vtanh.pop %v6903
    %v6906 = vrot.slane %v6904, 1
    %v6908 = vsub.f32 %v6669, %v6906
    %v6910 = vrot.slane %v6908, 7
    %v6912 = vmul.f32 %v6898, %v6910
    %v6913 = vadd.f32 %v6904, %v6912
    %v6915 = vrot.slane %v6913, 1
    %v6916 = vsel %vm509, %v6915, 0
    %6918 = vmatprep.subr.mxu0 0.0
    %6919 = vmatpush1.msra.mxu0 %v107
    %6920 = vmatprep.subr.mxu0 0.0
    %6921 = vmatpush1.msra.mxu0 %v108
    %6922 = vmatprep.subr.mxu0 0.0
    %6923 = vmatpush1.msra.mxu0 %v109
    %6924 = vmatprep.subr.mxu0 0.0
    %6925 = vmatpush1.msra.mxu0 %v110
    %6926 = vmatprep.subr.mxu0 0.0
    %6927 = vmatpush1.msra.mxu0 0.0
    %6928 = vmatprep.subr.mxu0 0.0
    %6929 = vmatpush1.msra.mxu0 0.0
    %6930 = vmatprep.subr.mxu0 0.0
    %6931 = vmatpush1.msra.mxu0 0.0
    %6932 = vmatprep.subr.mxu0 0.0
    %6933 = vmatpush1.msra.mxu0 0.0
    %6934 = vmatprep.subr.mxu0 0.0
    %6935 = vmatpush1.msra.mxu0 0.0
    %6936 = vmatprep.subr.mxu0 0.0
    %6937 = vmatpush1.msra.mxu0 0.0
    %6938 = vmatprep.subr.mxu0 0.0
    %6939 = vmatpush1.msra.mxu0 0.0
    %6940 = vmatprep.subr.mxu0 0.0
    %6941 = vmatpush1.msra.mxu0 0.0
    %6942 = vmatprep.subr.mxu0 0.0
    %6943 = vmatpush1.msra.mxu0 0.0
    %6944 = vmatprep.subr.mxu0 0.0
    %6945 = vmatpush1.msra.mxu0 0.0
    %6946 = vmatprep.subr.mxu0 0.0
    %6947 = vmatpush1.msra.mxu0 0.0
    %6948 = vmatprep.subr.mxu0 0.0
    %6949 = vmatpush1.msra.mxu0 0.0
    %6950 = vmatprep.subr.mxu0 0.0
    %6951 = vmatpush1.msra.mxu0 0.0
    %6952 = vmatprep.subr.mxu0 0.0
    %6953 = vmatpush1.msra.mxu0 0.0
    %6954 = vmatprep.subr.mxu0 0.0
    %6955 = vmatpush1.msra.mxu0 0.0
    %6956 = vmatprep.subr.mxu0 0.0
    %6957 = vmatpush1.msra.mxu0 0.0
    %6958 = vmatprep.subr.mxu0 0.0
    %6959 = vmatpush1.msra.mxu0 0.0
    %6960 = vmatprep.subr.mxu0 0.0
    %6961 = vmatpush1.msra.mxu0 0.0
    %6962 = vmatprep.subr.mxu0 0.0
    %6963 = vmatpush1.msra.mxu0 0.0
    %6964 = vmatprep.subr.mxu0 0.0
    %6965 = vmatpush1.msra.mxu0 0.0
    %6966 = vmatprep.subr.mxu0 0.0
    %6967 = vmatpush1.msra.mxu0 0.0
    %6968 = vmatprep.subr.mxu0 0.0
    %6969 = vmatpush1.msra.mxu0 0.0
    %6970 = vmatprep.subr.mxu0 0.0
    %6971 = vmatpush1.msra.mxu0 0.0
    %6972 = vmatprep.subr.mxu0 0.0
    %6973 = vmatpush1.msra.mxu0 0.0
    %6974 = vmatprep.subr.mxu0 0.0
    %6975 = vmatpush1.msra.mxu0 0.0
    %6976 = vmatprep.subr.mxu0 0.0
    %6977 = vmatpush1.msra.mxu0 0.0
    %6978 = vmatprep.subr.mxu0 0.0
    %6979 = vmatpush1.msra.mxu0 0.0
    %6980 = vmatprep.subr.mxu0 0.0
    %6981 = vmatpush1.msra.mxu0 0.0
    %6982 = vmatprep.mubr.f32.mxu0 0.0
    %6983 = vmatmul.mubr.f32.gmra.mrb[0].mxu0 %v6916
    %v6984 = vpop.f32.mrb[0].mxu0
    %v6985 = vadd.f32 %v4699, %v6984
    %v6986 = vpop.f32.mrb[0].mxu0
    %6987 = vdwg.mxu0
    %6988 = vmatprep.subr.mxu0 0.0
    %6989 = vmatpush1.msra.mxu0 %v112
    %6990 = vmatprep.subr.mxu0 0.0
    %6991 = vmatpush1.msra.mxu0 %v113
    %6992 = vmatprep.subr.mxu0 0.0
    %6993 = vmatpush1.msra.mxu0 %v114
    %6994 = vmatprep.subr.mxu0 0.0
    %6995 = vmatpush1.msra.mxu0 %v115
    %6996 = vmatprep.subr.mxu0 0.0
    %6997 = vmatpush1.msra.mxu0 0.0
    %6998 = vmatprep.subr.mxu0 0.0
    %6999 = vmatpush1.msra.mxu0 0.0
    %7000 = vmatprep.subr.mxu0 0.0
    %7001 = vmatpush1.msra.mxu0 0.0
    %7002 = vmatprep.subr.mxu0 0.0
    %7003 = vmatpush1.msra.mxu0 0.0
    %7004 = vmatprep.subr.mxu0 0.0
    %7005 = vmatpush1.msra.mxu0 0.0
    %7006 = vmatprep.subr.mxu0 0.0
    %7007 = vmatpush1.msra.mxu0 0.0
    %7008 = vmatprep.subr.mxu0 0.0
    %7009 = vmatpush1.msra.mxu0 0.0
    %7010 = vmatprep.subr.mxu0 0.0
    %7011 = vmatpush1.msra.mxu0 0.0
    %7012 = vmatprep.subr.mxu0 0.0
    %7013 = vmatpush1.msra.mxu0 0.0
    %7014 = vmatprep.subr.mxu0 0.0
    %7015 = vmatpush1.msra.mxu0 0.0
    %7016 = vmatprep.subr.mxu0 0.0
    %7017 = vmatpush1.msra.mxu0 0.0
    %7018 = vmatprep.subr.mxu0 0.0
    %7019 = vmatpush1.msra.mxu0 0.0
    %7020 = vmatprep.subr.mxu0 0.0
    %7021 = vmatpush1.msra.mxu0 0.0
    %7022 = vmatprep.subr.mxu0 0.0
    %7023 = vmatpush1.msra.mxu0 0.0
    %7024 = vmatprep.subr.mxu0 0.0
    %7025 = vmatpush1.msra.mxu0 0.0
    %7026 = vmatprep.subr.mxu0 0.0
    %7027 = vmatpush1.msra.mxu0 0.0
    %7028 = vmatprep.subr.mxu0 0.0
    %7029 = vmatpush1.msra.mxu0 0.0
    %7030 = vmatprep.subr.mxu0 0.0
    %7031 = vmatpush1.msra.mxu0 0.0
    %7032 = vmatprep.subr.mxu0 0.0
    %7033 = vmatpush1.msra.mxu0 0.0
    %7034 = vmatprep.subr.mxu0 0.0
    %7035 = vmatpush1.msra.mxu0 0.0
    %7036 = vmatprep.subr.mxu0 0.0
    %7037 = vmatpush1.msra.mxu0 0.0
    %7038 = vmatprep.subr.mxu0 0.0
    %7039 = vmatpush1.msra.mxu0 0.0
    %7040 = vmatprep.subr.mxu0 0.0
    %7041 = vmatpush1.msra.mxu0 0.0
    %7042 = vmatprep.subr.mxu0 0.0
    %7043 = vmatpush1.msra.mxu0 0.0
    %7044 = vmatprep.subr.mxu0 0.0
    %7045 = vmatpush1.msra.mxu0 0.0
    %7046 = vmatprep.subr.mxu0 0.0
    %7047 = vmatpush1.msra.mxu0 0.0
    %7048 = vmatprep.subr.mxu0 0.0
    %7049 = vmatpush1.msra.mxu0 0.0
    %7050 = vmatprep.subr.mxu0 0.0
    %7051 = vmatpush1.msra.mxu0 0.0
    %7052 = vmatprep.mubr.f32.mxu0 0.0
    %7053 = vmatmul.mubr.f32.gmra.mrb[0].mxu0 %v6916
    %v7054 = vpop.f32.mrb[0].mxu0
    %v7055 = vadd.f32 %v4706, %v7054
    %v7056 = vpop.f32.mrb[0].mxu0
    %7057 = vdwg.mxu0
    %7058 = vmatprep.subr.mxu0 0.0
    %7059 = vmatpush1.msra.mxu0 %v117
    %7060 = vmatprep.subr.mxu0 0.0
    %7061 = vmatpush1.msra.mxu0 %v118
    %7062 = vmatprep.subr.mxu0 0.0
    %7063 = vmatpush1.msra.mxu0 %v119
    %7064 = vmatprep.subr.mxu0 0.0
    %7065 = vmatpush1.msra.mxu0 %v120
    %7066 = vmatprep.subr.mxu0 0.0
    %7067 = vmatpush1.msra.mxu0 0.0
    %7068 = vmatprep.subr.mxu0 0.0
    %7069 = vmatpush1.msra.mxu0 0.0
    %7070 = vmatprep.subr.mxu0 0.0
    %7071 = vmatpush1.msra.mxu0 0.0
    %7072 = vmatprep.subr.mxu0 0.0
    %7073 = vmatpush1.msra.mxu0 0.0
    %7074 = vmatprep.subr.mxu0 0.0
    %7075 = vmatpush1.msra.mxu0 0.0
    %7076 = vmatprep.subr.mxu0 0.0
    %7077 = vmatpush1.msra.mxu0 0.0
    %7078 = vmatprep.subr.mxu0 0.0
    %7079 = vmatpush1.msra.mxu0 0.0
    %7080 = vmatprep.subr.mxu0 0.0
    %7081 = vmatpush1.msra.mxu0 0.0
    %7082 = vmatprep.subr.mxu0 0.0
    %7083 = vmatpush1.msra.mxu0 0.0
    %7084 = vmatprep.subr.mxu0 0.0
    %7085 = vmatpush1.msra.mxu0 0.0
    %7086 = vmatprep.subr.mxu0 0.0
    %7087 = vmatpush1.msra.mxu0 0.0
    %7088 = vmatprep.subr.mxu0 0.0
    %7089 = vmatpush1.msra.mxu0 0.0
    %7090 = vmatprep.subr.mxu0 0.0
    %7091 = vmatpush1.msra.mxu0 0.0
    %7092 = vmatprep.subr.mxu0 0.0
    %7093 = vmatpush1.msra.mxu0 0.0
    %7094 = vmatprep.subr.mxu0 0.0
    %7095 = vmatpush1.msra.mxu0 0.0
    %7096 = vmatprep.subr.mxu0 0.0
    %7097 = vmatpush1.msra.mxu0 0.0
    %7098 = vmatprep.subr.mxu0 0.0
    %7099 = vmatpush1.msra.mxu0 0.0
    %7100 = vmatprep.subr.mxu0 0.0
    %7101 = vmatpush1.msra.mxu0 0.0
    %7102 = vmatprep.subr.mxu0 0.0
    %7103 = vmatpush1.msra.mxu0 0.0
    %7104 = vmatprep.subr.mxu0 0.0
    %7105 = vmatpush1.msra.mxu0 0.0
    %7106 = vmatprep.subr.mxu0 0.0
    %7107 = vmatpush1.msra.mxu0 0.0
    %7108 = vmatprep.subr.mxu0 0.0
    %7109 = vmatpush1.msra.mxu0 0.0
    %7110 = vmatprep.subr.mxu0 0.0
    %7111 = vmatpush1.msra.mxu0 0.0
    %7112 = vmatprep.subr.mxu0 0.0
    %7113 = vmatpush1.msra.mxu0 0.0
    %7114 = vmatprep.subr.mxu0 0.0
    %7115 = vmatpush1.msra.mxu0 0.0
    %7116 = vmatprep.subr.mxu0 0.0
    %7117 = vmatpush1.msra.mxu0 0.0
    %7118 = vmatprep.subr.mxu0 0.0
    %7119 = vmatpush1.msra.mxu0 0.0
    %7120 = vmatprep.subr.mxu0 0.0
    %7121 = vmatpush1.msra.mxu0 0.0
    %7122 = vmatprep.mubr.f32.mxu0 0.0
    %7123 = vmatmul.mubr.f32.gmra.mrb[0].mxu0 %v6916
    %v7124 = vpop.f32.mrb[0].mxu0
    %v7125 = vadd.f32 %v4713, %v7124
    %v7126 = vpop.f32.mrb[0].mxu0
    %7127 = vdwg.mxu0
    %v7129 = vrot.slane %v6985, 6
    %v7131 = vadd.f32 %v4537, %v7129
    %v7132 = vmul.f32 %v7131, 0.5
    %v7133 = vtanh.pop %v7132
    %v7134 = vmul.f32 %v7133, 0.5
    %v7135 = vadd.f32 %v7134, 0.5
    %v7137 = vrot.slane %v7055, 6
    %v7139 = vadd.f32 %v4616, %v7137
    %v7140 = vmul.f32 %v7139, 0.5
    %v7141 = vtanh.pop %v7140
    %v7142 = vmul.f32 %v7141, 0.5
    %v7143 = vadd.f32 %v7142, 0.5
    %v7145 = vrot.slane %v7125, 6
    %v7147 = vmul.f32 %v7135, %v7145
    %v7148 = vadd.f32 %v4695, %v7147
    %v7149 = vtanh.pop %v7148
    %v7151 = vrot.slane %v7149, 1
    %v7153 = vsub.f32 %v6913, %v7151
    %v7155 = vrot.slane %v7153, 7
    %v7157 = vmul.f32 %v7143, %v7155
    %v7158 = vadd.f32 %v7149, %v7157
    %v7160 = vrot.slane %v7158, 2
    %v7161 = vsel %vm509, %v7160, 0
    %7163 = vmatprep.subr.mxu0 0.0
    %7164 = vmatpush1.msra.mxu0 %v107
    %7165 = vmatprep.subr.mxu0 0.0
    %7166 = vmatpush1.msra.mxu0 %v108
    %7167 = vmatprep.subr.mxu0 0.0
    %7168 = vmatpush1.msra.mxu0 %v109
    %7169 = vmatprep.subr.mxu0 0.0
    %7170 = vmatpush1.msra.mxu0 %v110
    %7171 = vmatprep.subr.mxu0 0.0
    %7172 = vmatpush1.msra.mxu0 0.0
    %7173 = vmatprep.subr.mxu0 0.0
    %7174 = vmatpush1.msra.mxu0 0.0
    %7175 = vmatprep.subr.mxu0 0.0
    %7176 = vmatpush1.msra.mxu0 0.0
    %7177 = vmatprep.subr.mxu0 0.0
    %7178 = vmatpush1.msra.mxu0 0.0
    %7179 = vmatprep.subr.mxu0 0.0
    %7180 = vmatpush1.msra.mxu0 0.0
    %7181 = vmatprep.subr.mxu0 0.0
    %7182 = vmatpush1.msra.mxu0 0.0
    %7183 = vmatprep.subr.mxu0 0.0
    %7184 = vmatpush1.msra.mxu0 0.0
    %7185 = vmatprep.subr.mxu0 0.0
    %7186 = vmatpush1.msra.mxu0 0.0
    %7187 = vmatprep.subr.mxu0 0.0
    %7188 = vmatpush1.msra.mxu0 0.0
    %7189 = vmatprep.subr.mxu0 0.0
    %7190 = vmatpush1.msra.mxu0 0.0
    %7191 = vmatprep.subr.mxu0 0.0
    %7192 = vmatpush1.msra.mxu0 0.0
    %7193 = vmatprep.subr.mxu0 0.0
    %7194 = vmatpush1.msra.mxu0 0.0
    %7195 = vmatprep.subr.mxu0 0.0
    %7196 = vmatpush1.msra.mxu0 0.0
    %7197 = vmatprep.subr.mxu0 0.0
    %7198 = vmatpush1.msra.mxu0 0.0
    %7199 = vmatprep.subr.mxu0 0.0
    %7200 = vmatpush1.msra.mxu0 0.0
    %7201 = vmatprep.subr.mxu0 0.0
    %7202 = vmatpush1.msra.mxu0 0.0
    %7203 = vmatprep.subr.mxu0 0.0
    %7204 = vmatpush1.msra.mxu0 0.0
    %7205 = vmatprep.subr.mxu0 0.0
    %7206 = vmatpush1.msra.mxu0 0.0
    %7207 = vmatprep.subr.mxu0 0.0
    %7208 = vmatpush1.msra.mxu0 0.0
    %7209 = vmatprep.subr.mxu0 0.0
    %7210 = vmatpush1.msra.mxu0 0.0
    %7211 = vmatprep.subr.mxu0 0.0
    %7212 = vmatpush1.msra.mxu0 0.0
    %7213 = vmatprep.subr.mxu0 0.0
    %7214 = vmatpush1.msra.mxu0 0.0
    %7215 = vmatprep.subr.mxu0 0.0
    %7216 = vmatpush1.msra.mxu0 0.0
    %7217 = vmatprep.subr.mxu0 0.0
    %7218 = vmatpush1.msra.mxu0 0.0
    %7219 = vmatprep.subr.mxu0 0.0
    %7220 = vmatpush1.msra.mxu0 0.0
    %7221 = vmatprep.subr.mxu0 0.0
    %7222 = vmatpush1.msra.mxu0 0.0
    %7223 = vmatprep.subr.mxu0 0.0
    %7224 = vmatpush1.msra.mxu0 0.0
    %7225 = vmatprep.subr.mxu0 0.0
    %7226 = vmatpush1.msra.mxu0 0.0
    %7227 = vmatprep.mubr.f32.mxu0 0.0
    %7228 = vmatmul.mubr.f32.gmra.mrb[0].mxu0 %v7161
    %v7229 = vpop.f32.mrb[0].mxu0
    %v7230 = vadd.f32 %v4699, %v7229
    %v7231 = vpop.f32.mrb[0].mxu0
    %7232 = vdwg.mxu0
    %7233 = vmatprep.subr.mxu0 0.0
    %7234 = vmatpush1.msra.mxu0 %v112
    %7235 = vmatprep.subr.mxu0 0.0
    %7236 = vmatpush1.msra.mxu0 %v113
    %7237 = vmatprep.subr.mxu0 0.0
    %7238 = vmatpush1.msra.mxu0 %v114
    %7239 = vmatprep.subr.mxu0 0.0
    %7240 = vmatpush1.msra.mxu0 %v115
    %7241 = vmatprep.subr.mxu0 0.0
    %7242 = vmatpush1.msra.mxu0 0.0
    %7243 = vmatprep.subr.mxu0 0.0
    %7244 = vmatpush1.msra.mxu0 0.0
    %7245 = vmatprep.subr.mxu0 0.0
    %7246 = vmatpush1.msra.mxu0 0.0
    %7247 = vmatprep.subr.mxu0 0.0
    %7248 = vmatpush1.msra.mxu0 0.0
    %7249 = vmatprep.subr.mxu0 0.0
    %7250 = vmatpush1.msra.mxu0 0.0
    %7251 = vmatprep.subr.mxu0 0.0
    %7252 = vmatpush1.msra.mxu0 0.0
    %7253 = vmatprep.subr.mxu0 0.0
    %7254 = vmatpush1.msra.mxu0 0.0
    %7255 = vmatprep.subr.mxu0 0.0
    %7256 = vmatpush1.msra.mxu0 0.0
    %7257 = vmatprep.subr.mxu0 0.0
    %7258 = vmatpush1.msra.mxu0 0.0
    %7259 = vmatprep.subr.mxu0 0.0
    %7260 = vmatpush1.msra.mxu0 0.0
    %7261 = vmatprep.subr.mxu0 0.0
    %7262 = vmatpush1.msra.mxu0 0.0
    %7263 = vmatprep.subr.mxu0 0.0
    %7264 = vmatpush1.msra.mxu0 0.0
    %7265 = vmatprep.subr.mxu0 0.0
    %7266 = vmatpush1.msra.mxu0 0.0
    %7267 = vmatprep.subr.mxu0 0.0
    %7268 = vmatpush1.msra.mxu0 0.0
    %7269 = vmatprep.subr.mxu0 0.0
    %7270 = vmatpush1.msra.mxu0 0.0
    %7271 = vmatprep.subr.mxu0 0.0
    %7272 = vmatpush1.msra.mxu0 0.0
    %7273 = vmatprep.subr.mxu0 0.0
    %7274 = vmatpush1.msra.mxu0 0.0
    %7275 = vmatprep.subr.mxu0 0.0
    %7276 = vmatpush1.msra.mxu0 0.0
    %7277 = vmatprep.subr.mxu0 0.0
    %7278 = vmatpush1.msra.mxu0 0.0
    %7279 = vmatprep.subr.mxu0 0.0
    %7280 = vmatpush1.msra.mxu0 0.0
    %7281 = vmatprep.subr.mxu0 0.0
    %7282 = vmatpush1.msra.mxu0 0.0
    %7283 = vmatprep.subr.mxu0 0.0
    %7284 = vmatpush1.msra.mxu0 0.0
    %7285 = vmatprep.subr.mxu0 0.0
    %7286 = vmatpush1.msra.mxu0 0.0
    %7287 = vmatprep.subr.mxu0 0.0
    %7288 = vmatpush1.msra.mxu0 0.0
    %7289 = vmatprep.subr.mxu0 0.0
    %7290 = vmatpush1.msra.mxu0 0.0
    %7291 = vmatprep.subr.mxu0 0.0
    %7292 = vmatpush1.msra.mxu0 0.0
    %7293 = vmatprep.subr.mxu0 0.0
    %7294 = vmatpush1.msra.mxu0 0.0
    %7295 = vmatprep.subr.mxu0 0.0
    %7296 = vmatpush1.msra.mxu0 0.0
    %7297 = vmatprep.mubr.f32.mxu0 0.0
    %7298 = vmatmul.mubr.f32.gmra.mrb[0].mxu0 %v7161
    %v7299 = vpop.f32.mrb[0].mxu0
    %v7300 = vadd.f32 %v4706, %v7299
    %v7301 = vpop.f32.mrb[0].mxu0
    %7302 = vdwg.mxu0
    %7303 = vmatprep.subr.mxu0 0.0
    %7304 = vmatpush1.msra.mxu0 %v117
    %7305 = vmatprep.subr.mxu0 0.0
    %7306 = vmatpush1.msra.mxu0 %v118
    %7307 = vmatprep.subr.mxu0 0.0
    %7308 = vmatpush1.msra.mxu0 %v119
    %7309 = vmatprep.subr.mxu0 0.0
    %7310 = vmatpush1.msra.mxu0 %v120
    %7311 = vmatprep.subr.mxu0 0.0
    %7312 = vmatpush1.msra.mxu0 0.0
    %7313 = vmatprep.subr.mxu0 0.0
    %7314 = vmatpush1.msra.mxu0 0.0
    %7315 = vmatprep.subr.mxu0 0.0
    %7316 = vmatpush1.msra.mxu0 0.0
    %7317 = vmatprep.subr.mxu0 0.0
    %7318 = vmatpush1.msra.mxu0 0.0
    %7319 = vmatprep.subr.mxu0 0.0
    %7320 = vmatpush1.msra.mxu0 0.0
    %7321 = vmatprep.subr.mxu0 0.0
    %7322 = vmatpush1.msra.mxu0 0.0
    %7323 = vmatprep.subr.mxu0 0.0
    %7324 = vmatpush1.msra.mxu0 0.0
    %7325 = vmatprep.subr.mxu0 0.0
    %7326 = vmatpush1.msra.mxu0 0.0
    %7327 = vmatprep.subr.mxu0 0.0
    %7328 = vmatpush1.msra.mxu0 0.0
    %7329 = vmatprep.subr.mxu0 0.0
    %7330 = vmatpush1.msra.mxu0 0.0
    %7331 = vmatprep.subr.mxu0 0.0
    %7332 = vmatpush1.msra.mxu0 0.0
    %7333 = vmatprep.subr.mxu0 0.0
    %7334 = vmatpush1.msra.mxu0 0.0
    %7335 = vmatprep.subr.mxu0 0.0
    %7336 = vmatpush1.msra.mxu0 0.0
    %7337 = vmatprep.subr.mxu0 0.0
    %7338 = vmatpush1.msra.mxu0 0.0
    %7339 = vmatprep.subr.mxu0 0.0
    %7340 = vmatpush1.msra.mxu0 0.0
    %7341 = vmatprep.subr.mxu0 0.0
    %7342 = vmatpush1.msra.mxu0 0.0
    %7343 = vmatprep.subr.mxu0 0.0
    %7344 = vmatpush1.msra.mxu0 0.0
    %7345 = vmatprep.subr.mxu0 0.0
    %7346 = vmatpush1.msra.mxu0 0.0
    %7347 = vmatprep.subr.mxu0 0.0
    %7348 = vmatpush1.msra.mxu0 0.0
    %7349 = vmatprep.subr.mxu0 0.0
    %7350 = vmatpush1.msra.mxu0 0.0
    %7351 = vmatprep.subr.mxu0 0.0
    %7352 = vmatpush1.msra.mxu0 0.0
    %7353 = vmatprep.subr.mxu0 0.0
    %7354 = vmatpush1.msra.mxu0 0.0
    %7355 = vmatprep.subr.mxu0 0.0
    %7356 = vmatpush1.msra.mxu0 0.0
    %7357 = vmatprep.subr.mxu0 0.0
    %7358 = vmatpush1.msra.mxu0 0.0
    %7359 = vmatprep.subr.mxu0 0.0
    %7360 = vmatpush1.msra.mxu0 0.0
    %7361 = vmatprep.subr.mxu0 0.0
    %7362 = vmatpush1.msra.mxu0 0.0
    %7363 = vmatprep.subr.mxu0 0.0
    %7364 = vmatpush1.msra.mxu0 0.0
    %7365 = vmatprep.subr.mxu0 0.0
    %7366 = vmatpush1.msra.mxu0 0.0
    %7367 = vmatprep.mubr.f32.mxu0 0.0
    %7368 = vmatmul.mubr.f32.gmra.mrb[0].mxu0 %v7161
    %v7369 = vpop.f32.mrb[0].mxu0
    %v7370 = vadd.f32 %v4713, %v7369
    %v7371 = vpop.f32.mrb[0].mxu0
    %7372 = vdwg.mxu0
    %v7374 = vrot.slane %v7230, 5
    %v7376 = vadd.f32 %v4537, %v7374
    %v7377 = vmul.f32 %v7376, 0.5
    %v7378 = vtanh.pop %v7377
    %v7379 = vmul.f32 %v7378, 0.5
    %v7380 = vadd.f32 %v7379, 0.5
    %v7382 = vrot.slane %v7300, 5
    %v7384 = vadd.f32 %v4616, %v7382
    %v7385 = vmul.f32 %v7384, 0.5
    %v7386 = vtanh.pop %v7385
    %v7387 = vmul.f32 %v7386, 0.5
    %v7388 = vadd.f32 %v7387, 0.5
    %v7390 = vrot.slane %v7370, 5
    %v7392 = vmul.f32 %v7380, %v7390
    %v7393 = vadd.f32 %v4695, %v7392
    %v7394 = vtanh.pop %v7393
    %v7396 = vrot.slane %v7394, 1
    %v7398 = vsub.f32 %v7158, %v7396
    %v7400 = vrot.slane %v7398, 7
    %v7402 = vmul.f32 %v7388, %v7400
    %v7403 = vadd.f32 %v7394, %v7402
    %v7405 = vrot.slane %v7403, 3
    %v7406 = vsel %vm509, %v7405, 0
    %7408 = vmatprep.subr.mxu0 0.0
    %7409 = vmatpush1.msra.mxu0 %v107
    %7410 = vmatprep.subr.mxu0 0.0
    %7411 = vmatpush1.msra.mxu0 %v108
    %7412 = vmatprep.subr.mxu0 0.0
    %7413 = vmatpush1.msra.mxu0 %v109
    %7414 = vmatprep.subr.mxu0 0.0
    %7415 = vmatpush1.msra.mxu0 %v110
    %7416 = vmatprep.subr.mxu0 0.0
    %7417 = vmatpush1.msra.mxu0 0.0
    %7418 = vmatprep.subr.mxu0 0.0
    %7419 = vmatpush1.msra.mxu0 0.0
    %7420 = vmatprep.subr.mxu0 0.0
    %7421 = vmatpush1.msra.mxu0 0.0
    %7422 = vmatprep.subr.mxu0 0.0
    %7423 = vmatpush1.msra.mxu0 0.0
    %7424 = vmatprep.subr.mxu0 0.0
    %7425 = vmatpush1.msra.mxu0 0.0
    %7426 = vmatprep.subr.mxu0 0.0
    %7427 = vmatpush1.msra.mxu0 0.0
    %7428 = vmatprep.subr.mxu0 0.0
    %7429 = vmatpush1.msra.mxu0 0.0
    %7430 = vmatprep.subr.mxu0 0.0
    %7431 = vmatpush1.msra.mxu0 0.0
    %7432 = vmatprep.subr.mxu0 0.0
    %7433 = vmatpush1.msra.mxu0 0.0
    %7434 = vmatprep.subr.mxu0 0.0
    %7435 = vmatpush1.msra.mxu0 0.0
    %7436 = vmatprep.subr.mxu0 0.0
    %7437 = vmatpush1.msra.mxu0 0.0
    %7438 = vmatprep.subr.mxu0 0.0
    %7439 = vmatpush1.msra.mxu0 0.0
    %7440 = vmatprep.subr.mxu0 0.0
    %7441 = vmatpush1.msra.mxu0 0.0
    %7442 = vmatprep.subr.mxu0 0.0
    %7443 = vmatpush1.msra.mxu0 0.0
    %7444 = vmatprep.subr.mxu0 0.0
    %7445 = vmatpush1.msra.mxu0 0.0
    %7446 = vmatprep.subr.mxu0 0.0
    %7447 = vmatpush1.msra.mxu0 0.0
    %7448 = vmatprep.subr.mxu0 0.0
    %7449 = vmatpush1.msra.mxu0 0.0
    %7450 = vmatprep.subr.mxu0 0.0
    %7451 = vmatpush1.msra.mxu0 0.0
    %7452 = vmatprep.subr.mxu0 0.0
    %7453 = vmatpush1.msra.mxu0 0.0
    %7454 = vmatprep.subr.mxu0 0.0
    %7455 = vmatpush1.msra.mxu0 0.0
    %7456 = vmatprep.subr.mxu0 0.0
    %7457 = vmatpush1.msra.mxu0 0.0
    %7458 = vmatprep.subr.mxu0 0.0
    %7459 = vmatpush1.msra.mxu0 0.0
    %7460 = vmatprep.subr.mxu0 0.0
    %7461 = vmatpush1.msra.mxu0 0.0
    %7462 = vmatprep.subr.mxu0 0.0
    %7463 = vmatpush1.msra.mxu0 0.0
    %7464 = vmatprep.subr.mxu0 0.0
    %7465 = vmatpush1.msra.mxu0 0.0
    %7466 = vmatprep.subr.mxu0 0.0
    %7467 = vmatpush1.msra.mxu0 0.0
    %7468 = vmatprep.subr.mxu0 0.0
    %7469 = vmatpush1.msra.mxu0 0.0
    %7470 = vmatprep.subr.mxu0 0.0
    %7471 = vmatpush1.msra.mxu0 0.0
    %7472 = vmatprep.mubr.f32.mxu0 0.0
    %7473 = vmatmul.mubr.f32.gmra.mrb[0].mxu0 %v7406
    %v7474 = vpop.f32.mrb[0].mxu0
    %v7475 = vadd.f32 %v4699, %v7474
    %v7476 = vpop.f32.mrb[0].mxu0
    %7477 = vdwg.mxu0
    %7478 = vmatprep.subr.mxu0 0.0
    %7479 = vmatpush1.msra.mxu0 %v112
    %7480 = vmatprep.subr.mxu0 0.0
    %7481 = vmatpush1.msra.mxu0 %v113
    %7482 = vmatprep.subr.mxu0 0.0
    %7483 = vmatpush1.msra.mxu0 %v114
    %7484 = vmatprep.subr.mxu0 0.0
    %7485 = vmatpush1.msra.mxu0 %v115
    %7486 = vmatprep.subr.mxu0 0.0
    %7487 = vmatpush1.msra.mxu0 0.0
    %7488 = vmatprep.subr.mxu0 0.0
    %7489 = vmatpush1.msra.mxu0 0.0
    %7490 = vmatprep.subr.mxu0 0.0
    %7491 = vmatpush1.msra.mxu0 0.0
    %7492 = vmatprep.subr.mxu0 0.0
    %7493 = vmatpush1.msra.mxu0 0.0
    %7494 = vmatprep.subr.mxu0 0.0
    %7495 = vmatpush1.msra.mxu0 0.0
    %7496 = vmatprep.subr.mxu0 0.0
    %7497 = vmatpush1.msra.mxu0 0.0
    %7498 = vmatprep.subr.mxu0 0.0
    %7499 = vmatpush1.msra.mxu0 0.0
    %7500 = vmatprep.subr.mxu0 0.0
    %7501 = vmatpush1.msra.mxu0 0.0
    %7502 = vmatprep.subr.mxu0 0.0
    %7503 = vmatpush1.msra.mxu0 0.0
    %7504 = vmatprep.subr.mxu0 0.0
    %7505 = vmatpush1.msra.mxu0 0.0
    %7506 = vmatprep.subr.mxu0 0.0
    %7507 = vmatpush1.msra.mxu0 0.0
    %7508 = vmatprep.subr.mxu0 0.0
    %7509 = vmatpush1.msra.mxu0 0.0
    %7510 = vmatprep.subr.mxu0 0.0
    %7511 = vmatpush1.msra.mxu0 0.0
    %7512 = vmatprep.subr.mxu0 0.0
    %7513 = vmatpush1.msra.mxu0 0.0
    %7514 = vmatprep.subr.mxu0 0.0
    %7515 = vmatpush1.msra.mxu0 0.0
    %7516 = vmatprep.subr.mxu0 0.0
    %7517 = vmatpush1.msra.mxu0 0.0
    %7518 = vmatprep.subr.mxu0 0.0
    %7519 = vmatpush1.msra.mxu0 0.0
    %7520 = vmatprep.subr.mxu0 0.0
    %7521 = vmatpush1.msra.mxu0 0.0
    %7522 = vmatprep.subr.mxu0 0.0
    %7523 = vmatpush1.msra.mxu0 0.0
    %7524 = vmatprep.subr.mxu0 0.0
    %7525 = vmatpush1.msra.mxu0 0.0
    %7526 = vmatprep.subr.mxu0 0.0
    %7527 = vmatpush1.msra.mxu0 0.0
    %7528 = vmatprep.subr.mxu0 0.0
    %7529 = vmatpush1.msra.mxu0 0.0
    %7530 = vmatprep.subr.mxu0 0.0
    %7531 = vmatpush1.msra.mxu0 0.0
    %7532 = vmatprep.subr.mxu0 0.0
    %7533 = vmatpush1.msra.mxu0 0.0
    %7534 = vmatprep.subr.mxu0 0.0
    %7535 = vmatpush1.msra.mxu0 0.0
    %7536 = vmatprep.subr.mxu0 0.0
    %7537 = vmatpush1.msra.mxu0 0.0
    %7538 = vmatprep.subr.mxu0 0.0
    %7539 = vmatpush1.msra.mxu0 0.0
    %7540 = vmatprep.subr.mxu0 0.0
    %7541 = vmatpush1.msra.mxu0 0.0
    %7542 = vmatprep.mubr.f32.mxu0 0.0
    %7543 = vmatmul.mubr.f32.gmra.mrb[0].mxu0 %v7406
    %v7544 = vpop.f32.mrb[0].mxu0
    %v7545 = vadd.f32 %v4706, %v7544
    %v7546 = vpop.f32.mrb[0].mxu0
    %7547 = vdwg.mxu0
    %7548 = vmatprep.subr.mxu0 0.0
    %7549 = vmatpush1.msra.mxu0 %v117
    %7550 = vmatprep.subr.mxu0 0.0
    %7551 = vmatpush1.msra.mxu0 %v118
    %7552 = vmatprep.subr.mxu0 0.0
    %7553 = vmatpush1.msra.mxu0 %v119
    %7554 = vmatprep.subr.mxu0 0.0
    %7555 = vmatpush1.msra.mxu0 %v120
    %7556 = vmatprep.subr.mxu0 0.0
    %7557 = vmatpush1.msra.mxu0 0.0
    %7558 = vmatprep.subr.mxu0 0.0
    %7559 = vmatpush1.msra.mxu0 0.0
    %7560 = vmatprep.subr.mxu0 0.0
    %7561 = vmatpush1.msra.mxu0 0.0
    %7562 = vmatprep.subr.mxu0 0.0
    %7563 = vmatpush1.msra.mxu0 0.0
    %7564 = vmatprep.subr.mxu0 0.0
    %7565 = vmatpush1.msra.mxu0 0.0
    %7566 = vmatprep.subr.mxu0 0.0
    %7567 = vmatpush1.msra.mxu0 0.0
    %7568 = vmatprep.subr.mxu0 0.0
    %7569 = vmatpush1.msra.mxu0 0.0
    %7570 = vmatprep.subr.mxu0 0.0
    %7571 = vmatpush1.msra.mxu0 0.0
    %7572 = vmatprep.subr.mxu0 0.0
    %7573 = vmatpush1.msra.mxu0 0.0
    %7574 = vmatprep.subr.mxu0 0.0
    %7575 = vmatpush1.msra.mxu0 0.0
    %7576 = vmatprep.subr.mxu0 0.0
    %7577 = vmatpush1.msra.mxu0 0.0
    %7578 = vmatprep.subr.mxu0 0.0
    %7579 = vmatpush1.msra.mxu0 0.0
    %7580 = vmatprep.subr.mxu0 0.0
    %7581 = vmatpush1.msra.mxu0 0.0
    %7582 = vmatprep.subr.mxu0 0.0
    %7583 = vmatpush1.msra.mxu0 0.0
    %7584 = vmatprep.subr.mxu0 0.0
    %7585 = vmatpush1.msra.mxu0 0.0
    %7586 = vmatprep.subr.mxu0 0.0
    %7587 = vmatpush1.msra.mxu0 0.0
    %7588 = vmatprep.subr.mxu0 0.0
    %7589 = vmatpush1.msra.mxu0 0.0
    %7590 = vmatprep.subr.mxu0 0.0
    %7591 = vmatpush1.msra.mxu0 0.0
    %7592 = vmatprep.subr.mxu0 0.0
    %7593 = vmatpush1.msra.mxu0 0.0
    %7594 = vmatprep.subr.mxu0 0.0
    %7595 = vmatpush1.msra.mxu0 0.0
    %7596 = vmatprep.subr.mxu0 0.0
    %7597 = vmatpush1.msra.mxu0 0.0
    %7598 = vmatprep.subr.mxu0 0.0
    %7599 = vmatpush1.msra.mxu0 0.0
    %7600 = vmatprep.subr.mxu0 0.0
    %7601 = vmatpush1.msra.mxu0 0.0
    %7602 = vmatprep.subr.mxu0 0.0
    %7603 = vmatpush1.msra.mxu0 0.0
    %7604 = vmatprep.subr.mxu0 0.0
    %7605 = vmatpush1.msra.mxu0 0.0
    %7606 = vmatprep.subr.mxu0 0.0
    %7607 = vmatpush1.msra.mxu0 0.0
    %7608 = vmatprep.subr.mxu0 0.0
    %7609 = vmatpush1.msra.mxu0 0.0
    %7610 = vmatprep.subr.mxu0 0.0
    %7611 = vmatpush1.msra.mxu0 0.0
    %7612 = vmatprep.mubr.f32.mxu0 0.0
    %7613 = vmatmul.mubr.f32.gmra.mrb[0].mxu0 %v7406
    %v7614 = vpop.f32.mrb[0].mxu0
    %v7615 = vadd.f32 %v4713, %v7614
    %v7616 = vpop.f32.mrb[0].mxu0
    %7617 = vdwg.mxu0
    %v7619 = vrot.slane %v7475, 4
    %v7621 = vadd.f32 %v4537, %v7619
    %v7622 = vmul.f32 %v7621, 0.5
    %v7623 = vtanh.pop %v7622
    %v7624 = vmul.f32 %v7623, 0.5
    %v7625 = vadd.f32 %v7624, 0.5
    %v7627 = vrot.slane %v7545, 4
    %v7629 = vadd.f32 %v4616, %v7627
    %v7630 = vmul.f32 %v7629, 0.5
    %v7631 = vtanh.pop %v7630
    %v7632 = vmul.f32 %v7631, 0.5
    %v7633 = vadd.f32 %v7632, 0.5
    %v7635 = vrot.slane %v7615, 4
    %v7637 = vmul.f32 %v7625, %v7635
    %v7638 = vadd.f32 %v4695, %v7637
    %v7639 = vtanh.pop %v7638
    %v7641 = vrot.slane %v7639, 1
    %v7643 = vsub.f32 %v7403, %v7641
    %v7645 = vrot.slane %v7643, 7
    %v7647 = vmul.f32 %v7633, %v7645
    %v7648 = vadd.f32 %v7639, %v7647
    %v7650 = vrot.slane %v7648, 4
    %v7651 = vsel %vm509, %v7650, 0
    %7653 = vmatprep.subr.mxu0 0.0
    %7654 = vmatpush1.msra.mxu0 %v107
    %7655 = vmatprep.subr.mxu0 0.0
    %7656 = vmatpush1.msra.mxu0 %v108
    %7657 = vmatprep.subr.mxu0 0.0
    %7658 = vmatpush1.msra.mxu0 %v109
    %7659 = vmatprep.subr.mxu0 0.0
    %7660 = vmatpush1.msra.mxu0 %v110
    %7661 = vmatprep.subr.mxu0 0.0
    %7662 = vmatpush1.msra.mxu0 0.0
    %7663 = vmatprep.subr.mxu0 0.0
    %7664 = vmatpush1.msra.mxu0 0.0
    %7665 = vmatprep.subr.mxu0 0.0
    %7666 = vmatpush1.msra.mxu0 0.0
    %7667 = vmatprep.subr.mxu0 0.0
    %7668 = vmatpush1.msra.mxu0 0.0
    %7669 = vmatprep.subr.mxu0 0.0
    %7670 = vmatpush1.msra.mxu0 0.0
    %7671 = vmatprep.subr.mxu0 0.0
    %7672 = vmatpush1.msra.mxu0 0.0
    %7673 = vmatprep.subr.mxu0 0.0
    %7674 = vmatpush1.msra.mxu0 0.0
    %7675 = vmatprep.subr.mxu0 0.0
    %7676 = vmatpush1.msra.mxu0 0.0
    %7677 = vmatprep.subr.mxu0 0.0
    %7678 = vmatpush1.msra.mxu0 0.0
    %7679 = vmatprep.subr.mxu0 0.0
    %7680 = vmatpush1.msra.mxu0 0.0
    %7681 = vmatprep.subr.mxu0 0.0
    %7682 = vmatpush1.msra.mxu0 0.0
    %7683 = vmatprep.subr.mxu0 0.0
    %7684 = vmatpush1.msra.mxu0 0.0
    %7685 = vmatprep.subr.mxu0 0.0
    %7686 = vmatpush1.msra.mxu0 0.0
    %7687 = vmatprep.subr.mxu0 0.0
    %7688 = vmatpush1.msra.mxu0 0.0
    %7689 = vmatprep.subr.mxu0 0.0
    %7690 = vmatpush1.msra.mxu0 0.0
    %7691 = vmatprep.subr.mxu0 0.0
    %7692 = vmatpush1.msra.mxu0 0.0
    %7693 = vmatprep.subr.mxu0 0.0
    %7694 = vmatpush1.msra.mxu0 0.0
    %7695 = vmatprep.subr.mxu0 0.0
    %7696 = vmatpush1.msra.mxu0 0.0
    %7697 = vmatprep.subr.mxu0 0.0
    %7698 = vmatpush1.msra.mxu0 0.0
    %7699 = vmatprep.subr.mxu0 0.0
    %7700 = vmatpush1.msra.mxu0 0.0
    %7701 = vmatprep.subr.mxu0 0.0
    %7702 = vmatpush1.msra.mxu0 0.0
    %7703 = vmatprep.subr.mxu0 0.0
    %7704 = vmatpush1.msra.mxu0 0.0
    %7705 = vmatprep.subr.mxu0 0.0
    %7706 = vmatpush1.msra.mxu0 0.0
    %7707 = vmatprep.subr.mxu0 0.0
    %7708 = vmatpush1.msra.mxu0 0.0
    %7709 = vmatprep.subr.mxu0 0.0
    %7710 = vmatpush1.msra.mxu0 0.0
    %7711 = vmatprep.subr.mxu0 0.0
    %7712 = vmatpush1.msra.mxu0 0.0
    %7713 = vmatprep.subr.mxu0 0.0
    %7714 = vmatpush1.msra.mxu0 0.0
    %7715 = vmatprep.subr.mxu0 0.0
    %7716 = vmatpush1.msra.mxu0 0.0
    %7717 = vmatprep.mubr.f32.mxu0 0.0
    %7718 = vmatmul.mubr.f32.gmra.mrb[0].mxu0 %v7651
    %v7719 = vpop.f32.mrb[0].mxu0
    %v7720 = vadd.f32 %v4699, %v7719
    %v7721 = vpop.f32.mrb[0].mxu0
    %7722 = vdwg.mxu0
    %7723 = vmatprep.subr.mxu0 0.0
    %7724 = vmatpush1.msra.mxu0 %v112
    %7725 = vmatprep.subr.mxu0 0.0
    %7726 = vmatpush1.msra.mxu0 %v113
    %7727 = vmatprep.subr.mxu0 0.0
    %7728 = vmatpush1.msra.mxu0 %v114
    %7729 = vmatprep.subr.mxu0 0.0
    %7730 = vmatpush1.msra.mxu0 %v115
    %7731 = vmatprep.subr.mxu0 0.0
    %7732 = vmatpush1.msra.mxu0 0.0
    %7733 = vmatprep.subr.mxu0 0.0
    %7734 = vmatpush1.msra.mxu0 0.0
    %7735 = vmatprep.subr.mxu0 0.0
    %7736 = vmatpush1.msra.mxu0 0.0
    %7737 = vmatprep.subr.mxu0 0.0
    %7738 = vmatpush1.msra.mxu0 0.0
    %7739 = vmatprep.subr.mxu0 0.0
    %7740 = vmatpush1.msra.mxu0 0.0
    %7741 = vmatprep.subr.mxu0 0.0
    %7742 = vmatpush1.msra.mxu0 0.0
    %7743 = vmatprep.subr.mxu0 0.0
    %7744 = vmatpush1.msra.mxu0 0.0
    %7745 = vmatprep.subr.mxu0 0.0
    %7746 = vmatpush1.msra.mxu0 0.0
    %7747 = vmatprep.subr.mxu0 0.0
    %7748 = vmatpush1.msra.mxu0 0.0
    %7749 = vmatprep.subr.mxu0 0.0
    %7750 = vmatpush1.msra.mxu0 0.0
    %7751 = vmatprep.subr.mxu0 0.0
    %7752 = vmatpush1.msra.mxu0 0.0
    %7753 = vmatprep.subr.mxu0 0.0
    %7754 = vmatpush1.msra.mxu0 0.0
    %7755 = vmatprep.subr.mxu0 0.0
    %7756 = vmatpush1.msra.mxu0 0.0
    %7757 = vmatprep.subr.mxu0 0.0
    %7758 = vmatpush1.msra.mxu0 0.0
    %7759 = vmatprep.subr.mxu0 0.0
    %7760 = vmatpush1.msra.mxu0 0.0
    %7761 = vmatprep.subr.mxu0 0.0
    %7762 = vmatpush1.msra.mxu0 0.0
    %7763 = vmatprep.subr.mxu0 0.0
    %7764 = vmatpush1.msra.mxu0 0.0
    %7765 = vmatprep.subr.mxu0 0.0
    %7766 = vmatpush1.msra.mxu0 0.0
    %7767 = vmatprep.subr.mxu0 0.0
    %7768 = vmatpush1.msra.mxu0 0.0
    %7769 = vmatprep.subr.mxu0 0.0
    %7770 = vmatpush1.msra.mxu0 0.0
    %7771 = vmatprep.subr.mxu0 0.0
    %7772 = vmatpush1.msra.mxu0 0.0
    %7773 = vmatprep.subr.mxu0 0.0
    %7774 = vmatpush1.msra.mxu0 0.0
    %7775 = vmatprep.subr.mxu0 0.0
    %7776 = vmatpush1.msra.mxu0 0.0
    %7777 = vmatprep.subr.mxu0 0.0
    %7778 = vmatpush1.msra.mxu0 0.0
    %7779 = vmatprep.subr.mxu0 0.0
    %7780 = vmatpush1.msra.mxu0 0.0
    %7781 = vmatprep.subr.mxu0 0.0
    %7782 = vmatpush1.msra.mxu0 0.0
    %7783 = vmatprep.subr.mxu0 0.0
    %7784 = vmatpush1.msra.mxu0 0.0
    %7785 = vmatprep.subr.mxu0 0.0
    %7786 = vmatpush1.msra.mxu0 0.0
    %7787 = vmatprep.mubr.f32.mxu0 0.0
    %7788 = vmatmul.mubr.f32.gmra.mrb[0].mxu0 %v7651
    %v7789 = vpop.f32.mrb[0].mxu0
    %v7790 = vadd.f32 %v4706, %v7789
    %v7791 = vpop.f32.mrb[0].mxu0
    %7792 = vdwg.mxu0
    %7793 = vmatprep.subr.mxu0 0.0
    %7794 = vmatpush1.msra.mxu0 %v117
    %7795 = vmatprep.subr.mxu0 0.0
    %7796 = vmatpush1.msra.mxu0 %v118
    %7797 = vmatprep.subr.mxu0 0.0
    %7798 = vmatpush1.msra.mxu0 %v119
    %7799 = vmatprep.subr.mxu0 0.0
    %7800 = vmatpush1.msra.mxu0 %v120
    %7801 = vmatprep.subr.mxu0 0.0
    %7802 = vmatpush1.msra.mxu0 0.0
    %7803 = vmatprep.subr.mxu0 0.0
    %7804 = vmatpush1.msra.mxu0 0.0
    %7805 = vmatprep.subr.mxu0 0.0
    %7806 = vmatpush1.msra.mxu0 0.0
    %7807 = vmatprep.subr.mxu0 0.0
    %7808 = vmatpush1.msra.mxu0 0.0
    %7809 = vmatprep.subr.mxu0 0.0
    %7810 = vmatpush1.msra.mxu0 0.0
    %7811 = vmatprep.subr.mxu0 0.0
    %7812 = vmatpush1.msra.mxu0 0.0
    %7813 = vmatprep.subr.mxu0 0.0
    %7814 = vmatpush1.msra.mxu0 0.0
    %7815 = vmatprep.subr.mxu0 0.0
    %7816 = vmatpush1.msra.mxu0 0.0
    %7817 = vmatprep.subr.mxu0 0.0
    %7818 = vmatpush1.msra.mxu0 0.0
    %7819 = vmatprep.subr.mxu0 0.0
    %7820 = vmatpush1.msra.mxu0 0.0
    %7821 = vmatprep.subr.mxu0 0.0
    %7822 = vmatpush1.msra.mxu0 0.0
    %7823 = vmatprep.subr.mxu0 0.0
    %7824 = vmatpush1.msra.mxu0 0.0
    %7825 = vmatprep.subr.mxu0 0.0
    %7826 = vmatpush1.msra.mxu0 0.0
    %7827 = vmatprep.subr.mxu0 0.0
    %7828 = vmatpush1.msra.mxu0 0.0
    %7829 = vmatprep.subr.mxu0 0.0
    %7830 = vmatpush1.msra.mxu0 0.0
    %7831 = vmatprep.subr.mxu0 0.0
    %7832 = vmatpush1.msra.mxu0 0.0
    %7833 = vmatprep.subr.mxu0 0.0
    %7834 = vmatpush1.msra.mxu0 0.0
    %7835 = vmatprep.subr.mxu0 0.0
    %7836 = vmatpush1.msra.mxu0 0.0
    %7837 = vmatprep.subr.mxu0 0.0
    %7838 = vmatpush1.msra.mxu0 0.0
    %7839 = vmatprep.subr.mxu0 0.0
    %7840 = vmatpush1.msra.mxu0 0.0
    %7841 = vmatprep.subr.mxu0 0.0
    %7842 = vmatpush1.msra.mxu0 0.0
    %7843 = vmatprep.subr.mxu0 0.0
    %7844 = vmatpush1.msra.mxu0 0.0
    %7845 = vmatprep.subr.mxu0 0.0
    %7846 = vmatpush1.msra.mxu0 0.0
    %7847 = vmatprep.subr.mxu0 0.0
    %7848 = vmatpush1.msra.mxu0 0.0
    %7849 = vmatprep.subr.mxu0 0.0
    %7850 = vmatpush1.msra.mxu0 0.0
    %7851 = vmatprep.subr.mxu0 0.0
    %7852 = vmatpush1.msra.mxu0 0.0
    %7853 = vmatprep.subr.mxu0 0.0
    %7854 = vmatpush1.msra.mxu0 0.0
    %7855 = vmatprep.subr.mxu0 0.0
    %7856 = vmatpush1.msra.mxu0 0.0
    %7857 = vmatprep.mubr.f32.mxu0 0.0
    %7858 = vmatmul.mubr.f32.gmra.mrb[0].mxu0 %v7651
    %v7859 = vpop.f32.mrb[0].mxu0
    %v7860 = vadd.f32 %v4713, %v7859
    %v7861 = vpop.f32.mrb[0].mxu0
    %7862 = vdwg.mxu0
    %v7864 = vrot.slane %v7720, 3
    %v7866 = vadd.f32 %v4537, %v7864
    %v7867 = vmul.f32 %v7866, 0.5
    %v7868 = vtanh.pop %v7867
    %v7869 = vmul.f32 %v7868, 0.5
    %v7870 = vadd.f32 %v7869, 0.5
    %v7872 = vrot.slane %v7790, 3
    %v7874 = vadd.f32 %v4616, %v7872
    %v7875 = vmul.f32 %v7874, 0.5
    %v7876 = vtanh.pop %v7875
    %v7877 = vmul.f32 %v7876, 0.5
    %v7878 = vadd.f32 %v7877, 0.5
    %v7880 = vrot.slane %v7860, 3
    %v7882 = vmul.f32 %v7870, %v7880
    %v7883 = vadd.f32 %v4695, %v7882
    %v7884 = vtanh.pop %v7883
    %v7886 = vrot.slane %v7884, 1
    %v7888 = vsub.f32 %v7648, %v7886
    %v7890 = vrot.slane %v7888, 7
    %v7892 = vmul.f32 %v7878, %v7890
    %v7893 = vadd.f32 %v7884, %v7892
    %v7895 = vrot.slane %v7893, 5
    %v7896 = vsel %vm509, %v7895, 0
    %7898 = vmatprep.subr.mxu0 0.0
    %7899 = vmatpush1.msra.mxu0 %v107
    %7900 = vmatprep.subr.mxu0 0.0
    %7901 = vmatpush1.msra.mxu0 %v108
    %7902 = vmatprep.subr.mxu0 0.0
    %7903 = vmatpush1.msra.mxu0 %v109
    %7904 = vmatprep.subr.mxu0 0.0
    %7905 = vmatpush1.msra.mxu0 %v110
    %7906 = vmatprep.subr.mxu0 0.0
    %7907 = vmatpush1.msra.mxu0 0.0
    %7908 = vmatprep.subr.mxu0 0.0
    %7909 = vmatpush1.msra.mxu0 0.0
    %7910 = vmatprep.subr.mxu0 0.0
    %7911 = vmatpush1.msra.mxu0 0.0
    %7912 = vmatprep.subr.mxu0 0.0
    %7913 = vmatpush1.msra.mxu0 0.0
    %7914 = vmatprep.subr.mxu0 0.0
    %7915 = vmatpush1.msra.mxu0 0.0
    %7916 = vmatprep.subr.mxu0 0.0
    %7917 = vmatpush1.msra.mxu0 0.0
    %7918 = vmatprep.subr.mxu0 0.0
    %7919 = vmatpush1.msra.mxu0 0.0
    %7920 = vmatprep.subr.mxu0 0.0
    %7921 = vmatpush1.msra.mxu0 0.0
    %7922 = vmatprep.subr.mxu0 0.0
    %7923 = vmatpush1.msra.mxu0 0.0
    %7924 = vmatprep.subr.mxu0 0.0
    %7925 = vmatpush1.msra.mxu0 0.0
    %7926 = vmatprep.subr.mxu0 0.0
    %7927 = vmatpush1.msra.mxu0 0.0
    %7928 = vmatprep.subr.mxu0 0.0
    %7929 = vmatpush1.msra.mxu0 0.0
    %7930 = vmatprep.subr.mxu0 0.0
    %7931 = vmatpush1.msra.mxu0 0.0
    %7932 = vmatprep.subr.mxu0 0.0
    %7933 = vmatpush1.msra.mxu0 0.0
    %7934 = vmatprep.subr.mxu0 0.0
    %7935 = vmatpush1.msra.mxu0 0.0
    %7936 = vmatprep.subr.mxu0 0.0
    %7937 = vmatpush1.msra.mxu0 0.0
    %7938 = vmatprep.subr.mxu0 0.0
    %7939 = vmatpush1.msra.mxu0 0.0
    %7940 = vmatprep.subr.mxu0 0.0
    %7941 = vmatpush1.msra.mxu0 0.0
    %7942 = vmatprep.subr.mxu0 0.0
    %7943 = vmatpush1.msra.mxu0 0.0
    %7944 = vmatprep.subr.mxu0 0.0
    %7945 = vmatpush1.msra.mxu0 0.0
    %7946 = vmatprep.subr.mxu0 0.0
    %7947 = vmatpush1.msra.mxu0 0.0
    %7948 = vmatprep.subr.mxu0 0.0
    %7949 = vmatpush1.msra.mxu0 0.0
    %7950 = vmatprep.subr.mxu0 0.0
    %7951 = vmatpush1.msra.mxu0 0.0
    %7952 = vmatprep.subr.mxu0 0.0
    %7953 = vmatpush1.msra.mxu0 0.0
    %7954 = vmatprep.subr.mxu0 0.0
    %7955 = vmatpush1.msra.mxu0 0.0
    %7956 = vmatprep.subr.mxu0 0.0
    %7957 = vmatpush1.msra.mxu0 0.0
    %7958 = vmatprep.subr.mxu0 0.0
    %7959 = vmatpush1.msra.mxu0 0.0
    %7960 = vmatprep.subr.mxu0 0.0
    %7961 = vmatpush1.msra.mxu0 0.0
    %7962 = vmatprep.mubr.f32.mxu0 0.0
    %7963 = vmatmul.mubr.f32.gmra.mrb[0].mxu0 %v7896
    %v7964 = vpop.f32.mrb[0].mxu0
    %v7965 = vadd.f32 %v4699, %v7964
    %v7966 = vpop.f32.mrb[0].mxu0
    %7967 = vdwg.mxu0
    %7968 = vmatprep.subr.mxu0 0.0
    %7969 = vmatpush1.msra.mxu0 %v112
    %7970 = vmatprep.subr.mxu0 0.0
    %7971 = vmatpush1.msra.mxu0 %v113
    %7972 = vmatprep.subr.mxu0 0.0
    %7973 = vmatpush1.msra.mxu0 %v114
    %7974 = vmatprep.subr.mxu0 0.0
    %7975 = vmatpush1.msra.mxu0 %v115
    %7976 = vmatprep.subr.mxu0 0.0
    %7977 = vmatpush1.msra.mxu0 0.0
    %7978 = vmatprep.subr.mxu0 0.0
    %7979 = vmatpush1.msra.mxu0 0.0
    %7980 = vmatprep.subr.mxu0 0.0
    %7981 = vmatpush1.msra.mxu0 0.0
    %7982 = vmatprep.subr.mxu0 0.0
    %7983 = vmatpush1.msra.mxu0 0.0
    %7984 = vmatprep.subr.mxu0 0.0
    %7985 = vmatpush1.msra.mxu0 0.0
    %7986 = vmatprep.subr.mxu0 0.0
    %7987 = vmatpush1.msra.mxu0 0.0
    %7988 = vmatprep.subr.mxu0 0.0
    %7989 = vmatpush1.msra.mxu0 0.0
    %7990 = vmatprep.subr.mxu0 0.0
    %7991 = vmatpush1.msra.mxu0 0.0
    %7992 = vmatprep.subr.mxu0 0.0
    %7993 = vmatpush1.msra.mxu0 0.0
    %7994 = vmatprep.subr.mxu0 0.0
    %7995 = vmatpush1.msra.mxu0 0.0
    %7996 = vmatprep.subr.mxu0 0.0
    %7997 = vmatpush1.msra.mxu0 0.0
    %7998 = vmatprep.subr.mxu0 0.0
    %7999 = vmatpush1.msra.mxu0 0.0
    %8000 = vmatprep.subr.mxu0 0.0
    %8001 = vmatpush1.msra.mxu0 0.0
    %8002 = vmatprep.subr.mxu0 0.0
    %8003 = vmatpush1.msra.mxu0 0.0
    %8004 = vmatprep.subr.mxu0 0.0
    %8005 = vmatpush1.msra.mxu0 0.0
    %8006 = vmatprep.subr.mxu0 0.0
    %8007 = vmatpush1.msra.mxu0 0.0
    %8008 = vmatprep.subr.mxu0 0.0
    %8009 = vmatpush1.msra.mxu0 0.0
    %8010 = vmatprep.subr.mxu0 0.0
    %8011 = vmatpush1.msra.mxu0 0.0
    %8012 = vmatprep.subr.mxu0 0.0
    %8013 = vmatpush1.msra.mxu0 0.0
    %8014 = vmatprep.subr.mxu0 0.0
    %8015 = vmatpush1.msra.mxu0 0.0
    %8016 = vmatprep.subr.mxu0 0.0
    %8017 = vmatpush1.msra.mxu0 0.0
    %8018 = vmatprep.subr.mxu0 0.0
    %8019 = vmatpush1.msra.mxu0 0.0
    %8020 = vmatprep.subr.mxu0 0.0
    %8021 = vmatpush1.msra.mxu0 0.0
    %8022 = vmatprep.subr.mxu0 0.0
    %8023 = vmatpush1.msra.mxu0 0.0
    %8024 = vmatprep.subr.mxu0 0.0
    %8025 = vmatpush1.msra.mxu0 0.0
    %8026 = vmatprep.subr.mxu0 0.0
    %8027 = vmatpush1.msra.mxu0 0.0
    %8028 = vmatprep.subr.mxu0 0.0
    %8029 = vmatpush1.msra.mxu0 0.0
    %8030 = vmatprep.subr.mxu0 0.0
    %8031 = vmatpush1.msra.mxu0 0.0
    %8032 = vmatprep.mubr.f32.mxu0 0.0
    %8033 = vmatmul.mubr.f32.gmra.mrb[0].mxu0 %v7896
    %v8034 = vpop.f32.mrb[0].mxu0
    %v8035 = vadd.f32 %v4706, %v8034
    %v8036 = vpop.f32.mrb[0].mxu0
    %8037 = vdwg.mxu0
    %8038 = vmatprep.subr.mxu0 0.0
    %8039 = vmatpush1.msra.mxu0 %v117
    %8040 = vmatprep.subr.mxu0 0.0
    %8041 = vmatpush1.msra.mxu0 %v118
    %8042 = vmatprep.subr.mxu0 0.0
    %8043 = vmatpush1.msra.mxu0 %v119
    %8044 = vmatprep.subr.mxu0 0.0
    %8045 = vmatpush1.msra.mxu0 %v120
    %8046 = vmatprep.subr.mxu0 0.0
    %8047 = vmatpush1.msra.mxu0 0.0
    %8048 = vmatprep.subr.mxu0 0.0
    %8049 = vmatpush1.msra.mxu0 0.0
    %8050 = vmatprep.subr.mxu0 0.0
    %8051 = vmatpush1.msra.mxu0 0.0
    %8052 = vmatprep.subr.mxu0 0.0
    %8053 = vmatpush1.msra.mxu0 0.0
    %8054 = vmatprep.subr.mxu0 0.0
    %8055 = vmatpush1.msra.mxu0 0.0
    %8056 = vmatprep.subr.mxu0 0.0
    %8057 = vmatpush1.msra.mxu0 0.0
    %8058 = vmatprep.subr.mxu0 0.0
    %8059 = vmatpush1.msra.mxu0 0.0
    %8060 = vmatprep.subr.mxu0 0.0
    %8061 = vmatpush1.msra.mxu0 0.0
    %8062 = vmatprep.subr.mxu0 0.0
    %8063 = vmatpush1.msra.mxu0 0.0
    %8064 = vmatprep.subr.mxu0 0.0
    %8065 = vmatpush1.msra.mxu0 0.0
    %8066 = vmatprep.subr.mxu0 0.0
    %8067 = vmatpush1.msra.mxu0 0.0
    %8068 = vmatprep.subr.mxu0 0.0
    %8069 = vmatpush1.msra.mxu0 0.0
    %8070 = vmatprep.subr.mxu0 0.0
    %8071 = vmatpush1.msra.mxu0 0.0
    %8072 = vmatprep.subr.mxu0 0.0
    %8073 = vmatpush1.msra.mxu0 0.0
    %8074 = vmatprep.subr.mxu0 0.0
    %8075 = vmatpush1.msra.mxu0 0.0
    %8076 = vmatprep.subr.mxu0 0.0
    %8077 = vmatpush1.msra.mxu0 0.0
    %8078 = vmatprep.subr.mxu0 0.0
    %8079 = vmatpush1.msra.mxu0 0.0
    %8080 = vmatprep.subr.mxu0 0.0
    %8081 = vmatpush1.msra.mxu0 0.0
    %8082 = vmatprep.subr.mxu0 0.0
    %8083 = vmatpush1.msra.mxu0 0.0
    %8084 = vmatprep.subr.mxu0 0.0
    %8085 = vmatpush1.msra.mxu0 0.0
    %8086 = vmatprep.subr.mxu0 0.0
    %8087 = vmatpush1.msra.mxu0 0.0
    %8088 = vmatprep.subr.mxu0 0.0
    %8089 = vmatpush1.msra.mxu0 0.0
    %8090 = vmatprep.subr.mxu0 0.0
    %8091 = vmatpush1.msra.mxu0 0.0
    %8092 = vmatprep.subr.mxu0 0.0
    %8093 = vmatpush1.msra.mxu0 0.0
    %8094 = vmatprep.subr.mxu0 0.0
    %8095 = vmatpush1.msra.mxu0 0.0
    %8096 = vmatprep.subr.mxu0 0.0
    %8097 = vmatpush1.msra.mxu0 0.0
    %8098 = vmatprep.subr.mxu0 0.0
    %8099 = vmatpush1.msra.mxu0 0.0
    %8100 = vmatprep.subr.mxu0 0.0
    %8101 = vmatpush1.msra.mxu0 0.0
    %8102 = vmatprep.mubr.f32.mxu0 0.0
    %8103 = vmatmul.mubr.f32.gmra.mrb[0].mxu0 %v7896
    %v8104 = vpop.f32.mrb[0].mxu0
    %v8105 = vadd.f32 %v4713, %v8104
    %v8106 = vpop.f32.mrb[0].mxu0
    %8107 = vdwg.mxu0
    %v8109 = vrot.slane %v7965, 2
    %v8111 = vadd.f32 %v4537, %v8109
    %v8112 = vmul.f32 %v8111, 0.5
    %v8113 = vtanh.pop %v8112
    %v8114 = vmul.f32 %v8113, 0.5
    %v8115 = vadd.f32 %v8114, 0.5
    %v8117 = vrot.slane %v8035, 2
    %v8119 = vadd.f32 %v4616, %v8117
    %v8120 = vmul.f32 %v8119, 0.5
    %v8121 = vtanh.pop %v8120
    %v8122 = vmul.f32 %v8121, 0.5
    %v8123 = vadd.f32 %v8122, 0.5
    %v8125 = vrot.slane %v8105, 2
    %v8127 = vmul.f32 %v8115, %v8125
    %v8128 = vadd.f32 %v4695, %v8127
    %v8129 = vtanh.pop %v8128
    %v8131 = vrot.slane %v8129, 1
    %v8133 = vsub.f32 %v7893, %v8131
    %v8135 = vrot.slane %v8133, 7
    %v8137 = vmul.f32 %v8123, %v8135
    %v8138 = vadd.f32 %v8129, %v8137
    %v8140 = vrot.slane %v8138, 6
    %v8141 = vsel %vm509, %v8140, 0
    %8143 = vmatprep.subr.mxu0 0.0
    %8144 = vmatpush1.msra.mxu0 %v107
    %8145 = vmatprep.subr.mxu0 0.0
    %8146 = vmatpush1.msra.mxu0 %v108
    %8147 = vmatprep.subr.mxu0 0.0
    %8148 = vmatpush1.msra.mxu0 %v109
    %8149 = vmatprep.subr.mxu0 0.0
    %8150 = vmatpush1.msra.mxu0 %v110
    %8151 = vmatprep.subr.mxu0 0.0
    %8152 = vmatpush1.msra.mxu0 0.0
    %8153 = vmatprep.subr.mxu0 0.0
    %8154 = vmatpush1.msra.mxu0 0.0
    %8155 = vmatprep.subr.mxu0 0.0
    %8156 = vmatpush1.msra.mxu0 0.0
    %8157 = vmatprep.subr.mxu0 0.0
    %8158 = vmatpush1.msra.mxu0 0.0
    %8159 = vmatprep.subr.mxu0 0.0
    %8160 = vmatpush1.msra.mxu0 0.0
    %8161 = vmatprep.subr.mxu0 0.0
    %8162 = vmatpush1.msra.mxu0 0.0
    %8163 = vmatprep.subr.mxu0 0.0
    %8164 = vmatpush1.msra.mxu0 0.0
    %8165 = vmatprep.subr.mxu0 0.0
    %8166 = vmatpush1.msra.mxu0 0.0
    %8167 = vmatprep.subr.mxu0 0.0
    %8168 = vmatpush1.msra.mxu0 0.0
    %8169 = vmatprep.subr.mxu0 0.0
    %8170 = vmatpush1.msra.mxu0 0.0
    %8171 = vmatprep.subr.mxu0 0.0
    %8172 = vmatpush1.msra.mxu0 0.0
    %8173 = vmatprep.subr.mxu0 0.0
    %8174 = vmatpush1.msra.mxu0 0.0
    %8175 = vmatprep.subr.mxu0 0.0
    %8176 = vmatpush1.msra.mxu0 0.0
    %8177 = vmatprep.subr.mxu0 0.0
    %8178 = vmatpush1.msra.mxu0 0.0
    %8179 = vmatprep.subr.mxu0 0.0
    %8180 = vmatpush1.msra.mxu0 0.0
    %8181 = vmatprep.subr.mxu0 0.0
    %8182 = vmatpush1.msra.mxu0 0.0
    %8183 = vmatprep.subr.mxu0 0.0
    %8184 = vmatpush1.msra.mxu0 0.0
    %8185 = vmatprep.subr.mxu0 0.0
    %8186 = vmatpush1.msra.mxu0 0.0
    %8187 = vmatprep.subr.mxu0 0.0
    %8188 = vmatpush1.msra.mxu0 0.0
    %8189 = vmatprep.subr.mxu0 0.0
    %8190 = vmatpush1.msra.mxu0 0.0
    %8191 = vmatprep.subr.mxu0 0.0
    %8192 = vmatpush1.msra.mxu0 0.0
    %8193 = vmatprep.subr.mxu0 0.0
    %8194 = vmatpush1.msra.mxu0 0.0
    %8195 = vmatprep.subr.mxu0 0.0
    %8196 = vmatpush1.msra.mxu0 0.0
    %8197 = vmatprep.subr.mxu0 0.0
    %8198 = vmatpush1.msra.mxu0 0.0
    %8199 = vmatprep.subr.mxu0 0.0
    %8200 = vmatpush1.msra.mxu0 0.0
    %8201 = vmatprep.subr.mxu0 0.0
    %8202 = vmatpush1.msra.mxu0 0.0
    %8203 = vmatprep.subr.mxu0 0.0
    %8204 = vmatpush1.msra.mxu0 0.0
    %8205 = vmatprep.subr.mxu0 0.0
    %8206 = vmatpush1.msra.mxu0 0.0
    %8207 = vmatprep.mubr.f32.mxu0 0.0
    %8208 = vmatmul.mubr.f32.gmra.mrb[0].mxu0 %v8141
    %v8209 = vpop.f32.mrb[0].mxu0
    %v8210 = vadd.f32 %v4699, %v8209
    %v8211 = vpop.f32.mrb[0].mxu0
    %8212 = vdwg.mxu0
    %8213 = vmatprep.subr.mxu0 0.0
    %8214 = vmatpush1.msra.mxu0 %v112
    %8215 = vmatprep.subr.mxu0 0.0
    %8216 = vmatpush1.msra.mxu0 %v113
    %8217 = vmatprep.subr.mxu0 0.0
    %8218 = vmatpush1.msra.mxu0 %v114
    %8219 = vmatprep.subr.mxu0 0.0
    %8220 = vmatpush1.msra.mxu0 %v115
    %8221 = vmatprep.subr.mxu0 0.0
    %8222 = vmatpush1.msra.mxu0 0.0
    %8223 = vmatprep.subr.mxu0 0.0
    %8224 = vmatpush1.msra.mxu0 0.0
    %8225 = vmatprep.subr.mxu0 0.0
    %8226 = vmatpush1.msra.mxu0 0.0
    %8227 = vmatprep.subr.mxu0 0.0
    %8228 = vmatpush1.msra.mxu0 0.0
    %8229 = vmatprep.subr.mxu0 0.0
    %8230 = vmatpush1.msra.mxu0 0.0
    %8231 = vmatprep.subr.mxu0 0.0
    %8232 = vmatpush1.msra.mxu0 0.0
    %8233 = vmatprep.subr.mxu0 0.0
    %8234 = vmatpush1.msra.mxu0 0.0
    %8235 = vmatprep.subr.mxu0 0.0
    %8236 = vmatpush1.msra.mxu0 0.0
    %8237 = vmatprep.subr.mxu0 0.0
    %8238 = vmatpush1.msra.mxu0 0.0
    %8239 = vmatprep.subr.mxu0 0.0
    %8240 = vmatpush1.msra.mxu0 0.0
    %8241 = vmatprep.subr.mxu0 0.0
    %8242 = vmatpush1.msra.mxu0 0.0
    %8243 = vmatprep.subr.mxu0 0.0
    %8244 = vmatpush1.msra.mxu0 0.0
    %8245 = vmatprep.subr.mxu0 0.0
    %8246 = vmatpush1.msra.mxu0 0.0
    %8247 = vmatprep.subr.mxu0 0.0
    %8248 = vmatpush1.msra.mxu0 0.0
    %8249 = vmatprep.subr.mxu0 0.0
    %8250 = vmatpush1.msra.mxu0 0.0
    %8251 = vmatprep.subr.mxu0 0.0
    %8252 = vmatpush1.msra.mxu0 0.0
    %8253 = vmatprep.subr.mxu0 0.0
    %8254 = vmatpush1.msra.mxu0 0.0
    %8255 = vmatprep.subr.mxu0 0.0
    %8256 = vmatpush1.msra.mxu0 0.0
    %8257 = vmatprep.subr.mxu0 0.0
    %8258 = vmatpush1.msra.mxu0 0.0
    %8259 = vmatprep.subr.mxu0 0.0
    %8260 = vmatpush1.msra.mxu0 0.0
    %8261 = vmatprep.subr.mxu0 0.0
    %8262 = vmatpush1.msra.mxu0 0.0
    %8263 = vmatprep.subr.mxu0 0.0
    %8264 = vmatpush1.msra.mxu0 0.0
    %8265 = vmatprep.subr.mxu0 0.0
    %8266 = vmatpush1.msra.mxu0 0.0
    %8267 = vmatprep.subr.mxu0 0.0
    %8268 = vmatpush1.msra.mxu0 0.0
    %8269 = vmatprep.subr.mxu0 0.0
    %8270 = vmatpush1.msra.mxu0 0.0
    %8271 = vmatprep.subr.mxu0 0.0
    %8272 = vmatpush1.msra.mxu0 0.0
    %8273 = vmatprep.subr.mxu0 0.0
    %8274 = vmatpush1.msra.mxu0 0.0
    %8275 = vmatprep.subr.mxu0 0.0
    %8276 = vmatpush1.msra.mxu0 0.0
    %8277 = vmatprep.mubr.f32.mxu0 0.0
    %8278 = vmatmul.mubr.f32.gmra.mrb[0].mxu0 %v8141
    %v8279 = vpop.f32.mrb[0].mxu0
    %v8280 = vadd.f32 %v4706, %v8279
    %v8281 = vpop.f32.mrb[0].mxu0
    %8282 = vdwg.mxu0
    %8283 = vmatprep.subr.mxu0 0.0
    %8284 = vmatpush1.msra.mxu0 %v117
    %8285 = vmatprep.subr.mxu0 0.0
    %8286 = vmatpush1.msra.mxu0 %v118
    %8287 = vmatprep.subr.mxu0 0.0
    %8288 = vmatpush1.msra.mxu0 %v119
    %8289 = vmatprep.subr.mxu0 0.0
    %8290 = vmatpush1.msra.mxu0 %v120
    %8291 = vmatprep.subr.mxu0 0.0
    %8292 = vmatpush1.msra.mxu0 0.0
    %8293 = vmatprep.subr.mxu0 0.0
    %8294 = vmatpush1.msra.mxu0 0.0
    %8295 = vmatprep.subr.mxu0 0.0
    %8296 = vmatpush1.msra.mxu0 0.0
    %8297 = vmatprep.subr.mxu0 0.0
    %8298 = vmatpush1.msra.mxu0 0.0
    %8299 = vmatprep.subr.mxu0 0.0
    %8300 = vmatpush1.msra.mxu0 0.0
    %8301 = vmatprep.subr.mxu0 0.0
    %8302 = vmatpush1.msra.mxu0 0.0
    %8303 = vmatprep.subr.mxu0 0.0
    %8304 = vmatpush1.msra.mxu0 0.0
    %8305 = vmatprep.subr.mxu0 0.0
    %8306 = vmatpush1.msra.mxu0 0.0
    %8307 = vmatprep.subr.mxu0 0.0
    %8308 = vmatpush1.msra.mxu0 0.0
    %8309 = vmatprep.subr.mxu0 0.0
    %8310 = vmatpush1.msra.mxu0 0.0
    %8311 = vmatprep.subr.mxu0 0.0
    %8312 = vmatpush1.msra.mxu0 0.0
    %8313 = vmatprep.subr.mxu0 0.0
    %8314 = vmatpush1.msra.mxu0 0.0
    %8315 = vmatprep.subr.mxu0 0.0
    %8316 = vmatpush1.msra.mxu0 0.0
    %8317 = vmatprep.subr.mxu0 0.0
    %8318 = vmatpush1.msra.mxu0 0.0
    %8319 = vmatprep.subr.mxu0 0.0
    %8320 = vmatpush1.msra.mxu0 0.0
    %8321 = vmatprep.subr.mxu0 0.0
    %8322 = vmatpush1.msra.mxu0 0.0
    %8323 = vmatprep.subr.mxu0 0.0
    %8324 = vmatpush1.msra.mxu0 0.0
    %8325 = vmatprep.subr.mxu0 0.0
    %8326 = vmatpush1.msra.mxu0 0.0
    %8327 = vmatprep.subr.mxu0 0.0
    %8328 = vmatpush1.msra.mxu0 0.0
    %8329 = vmatprep.subr.mxu0 0.0
    %8330 = vmatpush1.msra.mxu0 0.0
    %8331 = vmatprep.subr.mxu0 0.0
    %8332 = vmatpush1.msra.mxu0 0.0
    %8333 = vmatprep.subr.mxu0 0.0
    %8334 = vmatpush1.msra.mxu0 0.0
    %8335 = vmatprep.subr.mxu0 0.0
    %8336 = vmatpush1.msra.mxu0 0.0
    %8337 = vmatprep.subr.mxu0 0.0
    %8338 = vmatpush1.msra.mxu0 0.0
    %8339 = vmatprep.subr.mxu0 0.0
    %8340 = vmatpush1.msra.mxu0 0.0
    %8341 = vmatprep.subr.mxu0 0.0
    %8342 = vmatpush1.msra.mxu0 0.0
    %8343 = vmatprep.subr.mxu0 0.0
    %8344 = vmatpush1.msra.mxu0 0.0
    %8345 = vmatprep.subr.mxu0 0.0
    %8346 = vmatpush1.msra.mxu0 0.0
    %8347 = vmatprep.mubr.f32.mxu0 0.0
    %8348 = vmatmul.mubr.f32.gmra.mrb[0].mxu0 %v8141
    %v8349 = vpop.f32.mrb[0].mxu0
    %v8350 = vadd.f32 %v4713, %v8349
    %v8351 = vpop.f32.mrb[0].mxu0
    %8352 = vdwg.mxu0
    %v8354 = vrot.slane %v8210, 1
    %v8356 = vadd.f32 %v4537, %v8354
    %v8357 = vmul.f32 %v8356, 0.5
    %v8358 = vtanh.pop %v8357
    %v8359 = vmul.f32 %v8358, 0.5
    %v8360 = vadd.f32 %v8359, 0.5
    %v8362 = vrot.slane %v8280, 1
    %v8364 = vadd.f32 %v4616, %v8362
    %v8365 = vmul.f32 %v8364, 0.5
    %v8366 = vtanh.pop %v8365
    %v8367 = vmul.f32 %v8366, 0.5
    %v8368 = vadd.f32 %v8367, 0.5
    %v8370 = vrot.slane %v8350, 1
    %v8372 = vmul.f32 %v8360, %v8370
    %v8373 = vadd.f32 %v4695, %v8372
    %v8374 = vtanh.pop %v8373
    %v8376 = vrot.slane %v8374, 1
    %v8378 = vsub.f32 %v8138, %v8376
    %v8380 = vrot.slane %v8378, 7
    %v8382 = vmul.f32 %v8368, %v8380
    %v8383 = vadd.f32 %v8374, %v8382
    %v8384 = vld [vmem:[#allocation8] sm:$0xff]
    %v8385 = vld [vmem:[#allocation8 + $0x8] sm:$0xff]
    %v8386 = vld [vmem:[#allocation8 + $0x10] sm:$0xff]
    %v8387 = vld [vmem:[#allocation8 + $0x18] sm:$0xff]
    %v8388 = vld [vmem:[#allocation8 + $0x20] sm:$0xff]
    %v8389 = vld [vmem:[#allocation8 + $0x28] sm:$0xff]
    %v8390 = vld [vmem:[#allocation8 + $0x30] sm:$0xff]
    %v8391 = vld [vmem:[#allocation8 + $0x38] sm:$0xff]
    %v8392 = vld [vmem:[#allocation8 + $0x40] sm:$0xff]
    %v8393 = vld [vmem:[#allocation8 + $0x48] sm:$0xff]
    %v8394 = vld [vmem:[#allocation8 + $0x50] sm:$0xff]
    %v8395 = vld [vmem:[#allocation8 + $0x58] sm:$0xff]
    %v8396 = vld [vmem:[#allocation8 + $0x60] sm:$0xff]
    %v8397 = vld [vmem:[#allocation8 + $0x68] sm:$0xff]
    %v8398 = vld [vmem:[#allocation8 + $0x70] sm:$0xff]
    %v8399 = vld [vmem:[#allocation8 + $0x78] sm:$0xff]
    %v8400 = vld [vmem:[#allocation8 + $0x80] sm:$0x1]
    %v8401 = vld [vmem:[#allocation8 + $0x81] sm:$0x1]
    %v8402 = vld [vmem:[#allocation8 + $0x82] sm:$0x1]
    %v8404 = vrot.slane %v8383, 7
    %v8405 = vsel %vm509, %v8404, 0
    %8407 = vmatprep.subr.mxu0 0.0
    %8408 = vmatpush1.msra.mxu0 %v8388
    %8409 = vmatprep.subr.mxu0 0.0
    %8410 = vmatpush1.msra.mxu0 %v8389
    %8411 = vmatprep.subr.mxu0 0.0
    %8412 = vmatpush1.msra.mxu0 %v8390
    %8413 = vmatprep.subr.mxu0 0.0
    %8414 = vmatpush1.msra.mxu0 %v8391
    %8415 = vmatprep.subr.mxu0 0.0
    %8416 = vmatpush1.msra.mxu0 0.0
    %8417 = vmatprep.subr.mxu0 0.0
    %8418 = vmatpush1.msra.mxu0 0.0
    %8419 = vmatprep.subr.mxu0 0.0
    %8420 = vmatpush1.msra.mxu0 0.0
    %8421 = vmatprep.subr.mxu0 0.0
    %8422 = vmatpush1.msra.mxu0 0.0
    %8423 = vmatprep.subr.mxu0 0.0
    %8424 = vmatpush1.msra.mxu0 0.0
    %8425 = vmatprep.subr.mxu0 0.0
    %8426 = vmatpush1.msra.mxu0 0.0
    %8427 = vmatprep.subr.mxu0 0.0
    %8428 = vmatpush1.msra.mxu0 0.0
    %8429 = vmatprep.subr.mxu0 0.0
    %8430 = vmatpush1.msra.mxu0 0.0
    %8431 = vmatprep.subr.mxu0 0.0
    %8432 = vmatpush1.msra.mxu0 0.0
    %8433 = vmatprep.subr.mxu0 0.0
    %8434 = vmatpush1.msra.mxu0 0.0
    %8435 = vmatprep.subr.mxu0 0.0
    %8436 = vmatpush1.msra.mxu0 0.0
    %8437 = vmatprep.subr.mxu0 0.0
    %8438 = vmatpush1.msra.mxu0 0.0
    %8439 = vmatprep.subr.mxu0 0.0
    %8440 = vmatpush1.msra.mxu0 0.0
    %8441 = vmatprep.subr.mxu0 0.0
    %8442 = vmatpush1.msra.mxu0 0.0
    %8443 = vmatprep.subr.mxu0 0.0
    %8444 = vmatpush1.msra.mxu0 0.0
    %8445 = vmatprep.subr.mxu0 0.0
    %8446 = vmatpush1.msra.mxu0 0.0
    %8447 = vmatprep.subr.mxu0 0.0
    %8448 = vmatpush1.msra.mxu0 0.0
    %8449 = vmatprep.subr.mxu0 0.0
    %8450 = vmatpush1.msra.mxu0 0.0
    %8451 = vmatprep.subr.mxu0 0.0
    %8452 = vmatpush1.msra.mxu0 0.0
    %8453 = vmatprep.subr.mxu0 0.0
    %8454 = vmatpush1.msra.mxu0 0.0
    %8455 = vmatprep.subr.mxu0 0.0
    %8456 = vmatpush1.msra.mxu0 0.0
    %8457 = vmatprep.subr.mxu0 0.0
    %8458 = vmatpush1.msra.mxu0 0.0
    %8459 = vmatprep.subr.mxu0 0.0
    %8460 = vmatpush1.msra.mxu0 0.0
    %8461 = vmatprep.subr.mxu0 0.0
    %8462 = vmatpush1.msra.mxu0 0.0
    %8463 = vmatprep.subr.mxu0 0.0
    %8464 = vmatpush1.msra.mxu0 0.0
    %8465 = vmatprep.subr.mxu0 0.0
    %8466 = vmatpush1.msra.mxu0 0.0
    %8467 = vmatprep.subr.mxu0 0.0
    %8468 = vmatpush1.msra.mxu0 0.0
    %8469 = vmatprep.subr.mxu0 0.0
    %8470 = vmatpush1.msra.mxu0 0.0
    %8471 = vmatprep.mubr.f32.mxu0 0.0
    %8472 = vmatmul.mubr.f32.gmra.mrb[0].mxu0 %v8405
    %v8473 = vpop.f32.mrb[0].mxu0
    %v8474 = vadd.f32 0.0, %v8473
    %v8475 = vpop.f32.mrb[0].mxu0
    %8476 = vdwg.mxu0
    %v8477 = vlaneseq
    %v8478 = vshrl.u32 %v8477, 7
    %v8479 = vsub.s32 0, %v8478
    %v8480 = vrot.slane %v8474, %v8479
    %8481 = vmatprep.subr.mxu0 0.0
    %8482 = vmatpush1.msra.mxu0 %v8384
    %8483 = vmatprep.subr.mxu0 0.0
    %8484 = vmatpush1.msra.mxu0 %v8385
    %8485 = vmatprep.subr.mxu0 0.0
    %8486 = vmatpush1.msra.mxu0 %v8386
    %8487 = vmatprep.subr.mxu0 0.0
    %8488 = vmatpush1.msra.mxu0 %v8387
    %8489 = vmatprep.subr.mxu0 0.0
    %8490 = vmatpush1.msra.mxu0 0.0
    %8491 = vmatprep.subr.mxu0 0.0
    %8492 = vmatpush1.msra.mxu0 0.0
    %8493 = vmatprep.subr.mxu0 0.0
    %8494 = vmatpush1.msra.mxu0 0.0
    %8495 = vmatprep.subr.mxu0 0.0
    %8496 = vmatpush1.msra.mxu0 0.0
    %8497 = vmatprep.subr.mxu0 0.0
    %8498 = vmatpush1.msra.mxu0 0.0
    %8499 = vmatprep.subr.mxu0 0.0
    %8500 = vmatpush1.msra.mxu0 0.0
    %8501 = vmatprep.subr.mxu0 0.0
    %8502 = vmatpush1.msra.mxu0 0.0
    %8503 = vmatprep.subr.mxu0 0.0
    %8504 = vmatpush1.msra.mxu0 0.0
    %8505 = vmatprep.subr.mxu0 0.0
    %8506 = vmatpush1.msra.mxu0 0.0
    %8507 = vmatprep.subr.mxu0 0.0
    %8508 = vmatpush1.msra.mxu0 0.0
    %8509 = vmatprep.subr.mxu0 0.0
    %8510 = vmatpush1.msra.mxu0 0.0
    %8511 = vmatprep.subr.mxu0 0.0
    %8512 = vmatpush1.msra.mxu0 0.0
    %8513 = vmatprep.subr.mxu0 0.0
    %8514 = vmatpush1.msra.mxu0 0.0
    %8515 = vmatprep.subr.mxu0 0.0
    %8516 = vmatpush1.msra.mxu0 0.0
    %8517 = vmatprep.subr.mxu0 0.0
    %8518 = vmatpush1.msra.mxu0 0.0
    %8519 = vmatprep.subr.mxu0 0.0
    %8520 = vmatpush1.msra.mxu0 0.0
    %8521 = vmatprep.subr.mxu0 0.0
    %8522 = vmatpush1.msra.mxu0 0.0
    %8523 = vmatprep.subr.mxu0 0.0
    %8524 = vmatpush1.msra.mxu0 0.0
    %8525 = vmatprep.subr.mxu0 0.0
    %8526 = vmatpush1.msra.mxu0 0.0
    %8527 = vmatprep.subr.mxu0 0.0
    %8528 = vmatpush1.msra.mxu0 0.0
    %8529 = vmatprep.subr.mxu0 0.0
    %8530 = vmatpush1.msra.mxu0 0.0
    %8531 = vmatprep.subr.mxu0 0.0
    %8532 = vmatpush1.msra.mxu0 0.0
    %8533 = vmatprep.subr.mxu0 0.0
    %8534 = vmatpush1.msra.mxu0 0.0
    %8535 = vmatprep.subr.mxu0 0.0
    %8536 = vmatpush1.msra.mxu0 0.0
    %8537 = vmatprep.subr.mxu0 0.0
    %8538 = vmatpush1.msra.mxu0 0.0
    %8539 = vmatprep.subr.mxu0 0.0
    %8540 = vmatpush1.msra.mxu0 0.0
    %8541 = vmatprep.subr.mxu0 0.0
    %8542 = vmatpush1.msra.mxu0 0.0
    %8543 = vmatprep.subr.mxu0 0.0
    %8544 = vmatpush1.msra.mxu0 0.0
    %8545 = vmatprep.mubr.f32.mxu0 0.0
    %8546 = vmatmul.mubr.f32.gmra.mrb[0].mxu0 %v4460
    %v8547 = vpop.f32.mrb[0].mxu0
    %v8548 = vadd.f32 %v8480, %v8547
    %v8549 = vpop.f32.mrb[0].mxu0
    %8550 = vmatprep.mubr.f32.mxu0 0.0
    %8551 = vmatmul.mubr.f32.gmra.mrb[0].mxu0 %v4463
    %v8552 = vpop.f32.mrb[0].mxu0
    %v8553 = vadd.f32 %v8480, %v8552
    %v8554 = vpop.f32.mrb[0].mxu0
    %8555 = vdwg.mxu0
    %v8556 = vlaneseq
    %v8557 = vshrl.u32 %v8556, 7
    %v8558 = vsub.s32 0, %v8557
    %v8559 = vrot.slane %v8400, %v8558
    %v8560 = vadd.f32 %v8548, %v8559
    %v8561 = vadd.f32 %v8553, %v8559
    %v8562 = vmax.f32 %v8560, 0.0
    %v8563 = vmax.f32 %v8561, 0.0
    %v8564 = vlaneseq
    %v8565 = vshrl.u32 %v8564, 7
    %v8566 = vsub.s32 0, %v8565
    %v8567 = vrot.slane %v8401, %v8566
    %vm8568 = vcmask 523264
    %v8570 = vsel %vm8568, %v8562, 0
    %v8573 = vsel %vm8568, %v8563, 0
    %8575 = vmatprep.subr.mxu0 0.0
    %8576 = vmatpush1.msra.mxu0 %v8392
    %8577 = vmatprep.subr.mxu0 0.0
    %8578 = vmatpush1.msra.mxu0 %v8393
    %8579 = vmatprep.subr.mxu0 0.0
    %8580 = vmatpush1.msra.mxu0 %v8394
    %8581 = vmatprep.subr.mxu0 0.0
    %8582 = vmatpush1.msra.mxu0 %v8395
    %8583 = vmatprep.subr.mxu0 0.0
    %8584 = vmatpush1.msra.mxu0 %v8396
    %8585 = vmatprep.subr.mxu0 0.0
    %8586 = vmatpush1.msra.mxu0 %v8397
    %8587 = vmatprep.subr.mxu0 0.0
    %8588 = vmatpush1.msra.mxu0 %v8398
    %8589 = vmatprep.subr.mxu0 0.0
    %8590 = vmatpush1.msra.mxu0 %v8399
    %8591 = vmatprep.subr.mxu0 0.0
    %8592 = vmatpush1.msra.mxu0 0.0
    %8593 = vmatprep.subr.mxu0 0.0
    %8594 = vmatpush1.msra.mxu0 0.0
    %8595 = vmatprep.subr.mxu0 0.0
    %8596 = vmatpush1.msra.mxu0 0.0
    %8597 = vmatprep.subr.mxu0 0.0
    %8598 = vmatpush1.msra.mxu0 0.0
    %8599 = vmatprep.subr.mxu0 0.0
    %8600 = vmatpush1.msra.mxu0 0.0
    %8601 = vmatprep.subr.mxu0 0.0
    %8602 = vmatpush1.msra.mxu0 0.0
    %8603 = vmatprep.subr.mxu0 0.0
    %8604 = vmatpush1.msra.mxu0 0.0
    %8605 = vmatprep.subr.mxu0 0.0
    %8606 = vmatpush1.msra.mxu0 0.0
    %8607 = vmatprep.subr.mxu0 0.0
    %8608 = vmatpush1.msra.mxu0 0.0
    %8609 = vmatprep.subr.mxu0 0.0
    %8610 = vmatpush1.msra.mxu0 0.0
    %8611 = vmatprep.subr.mxu0 0.0
    %8612 = vmatpush1.msra.mxu0 0.0
    %8613 = vmatprep.subr.mxu0 0.0
    %8614 = vmatpush1.msra.mxu0 0.0
    %8615 = vmatprep.subr.mxu0 0.0
    %8616 = vmatpush1.msra.mxu0 0.0
    %8617 = vmatprep.subr.mxu0 0.0
    %8618 = vmatpush1.msra.mxu0 0.0
    %8619 = vmatprep.subr.mxu0 0.0
    %8620 = vmatpush1.msra.mxu0 0.0
    %8621 = vmatprep.subr.mxu0 0.0
    %8622 = vmatpush1.msra.mxu0 0.0
    %8623 = vmatprep.subr.mxu0 0.0
    %8624 = vmatpush1.msra.mxu0 0.0
    %8625 = vmatprep.subr.mxu0 0.0
    %8626 = vmatpush1.msra.mxu0 0.0
    %8627 = vmatprep.subr.mxu0 0.0
    %8628 = vmatpush1.msra.mxu0 0.0
    %8629 = vmatprep.subr.mxu0 0.0
    %8630 = vmatpush1.msra.mxu0 0.0
    %8631 = vmatprep.subr.mxu0 0.0
    %8632 = vmatpush1.msra.mxu0 0.0
    %8633 = vmatprep.subr.mxu0 0.0
    %8634 = vmatpush1.msra.mxu0 0.0
    %8635 = vmatprep.subr.mxu0 0.0
    %8636 = vmatpush1.msra.mxu0 0.0
    %8637 = vmatprep.subr.mxu0 0.0
    %8638 = vmatpush1.msra.mxu0 0.0
    %8639 = vmatprep.mubr.f32.mxu0 0.0
    %8640 = vmatmul.mubr.f32.gmra.mrb[0].mxu0 %v8570
    %v8641 = vpop.f32.mrb[0].mxu0
    %v8642 = vadd.f32 %v8567, %v8641
    %v8643 = vpop.f32.mrb[0].mxu0
    %8644 = vmatprep.mubr.f32.mxu0 0.0
    %8645 = vmatmul.mubr.f32.gmra.mrb[0].mxu0 %v8573
    %v8646 = vpop.f32.mrb[0].mxu0
    %v8647 = vadd.f32 %v8567, %v8646
    %v8648 = vpop.f32.mrb[0].mxu0
    %8649 = vdwg.mxu0
    %v8650 = vmax.f32 %v8642, 0.0
    %v8651 = vmax.f32 %v8647, 0.0
    %v8653 = vsel %vm8568, %v8402, 0
    %v8656 = vsel %vm8568, %v8650, 0
    %v8659 = vsel %vm8568, %v8651, 0
    %8661 = vmatprep.subr.mxu0 0.0
    %8662 = vmatpush1.xpose.msra.mxu0 %v8656
    %8663 = vmatprep.subr.mxu0 0.0
    %8664 = vmatpush1.xpose.msra.mxu0 %v8659
    %8665 = vmatprep.subr.mxu0 0.0
    %8666 = vmatpush1.xpose.msra.mxu0 0.0
    %8667 = vmatprep.subr.mxu0 0.0
    %8668 = vmatpush1.xpose.msra.mxu0 0.0
    %8669 = vmatprep.subr.mxu0 0.0
    %8670 = vmatpush1.xpose.msra.mxu0 0.0
    %8671 = vmatprep.subr.mxu0 0.0
    %8672 = vmatpush1.xpose.msra.mxu0 0.0
    %8673 = vmatprep.subr.mxu0 0.0
    %8674 = vmatpush1.xpose.msra.mxu0 0.0
    %8675 = vmatprep.subr.mxu0 0.0
    %8676 = vmatpush1.xpose.msra.mxu0 0.0
    %8677 = vmatprep.subr.mxu0 0.0
    %8678 = vmatpush1.xpose.msra.mxu0 0.0
    %8679 = vmatprep.subr.mxu0 0.0
    %8680 = vmatpush1.xpose.msra.mxu0 0.0
    %8681 = vmatprep.subr.mxu0 0.0
    %8682 = vmatpush1.xpose.msra.mxu0 0.0
    %8683 = vmatprep.subr.mxu0 0.0
    %8684 = vmatpush1.xpose.msra.mxu0 0.0
    %8685 = vmatprep.subr.mxu0 0.0
    %8686 = vmatpush1.xpose.msra.mxu0 0.0
    %8687 = vmatprep.subr.mxu0 0.0
    %8688 = vmatpush1.xpose.msra.mxu0 0.0
    %8689 = vmatprep.subr.mxu0 0.0
    %8690 = vmatpush1.xpose.msra.mxu0 0.0
    %8691 = vmatprep.subr.mxu0 0.0
    %8692 = vmatpush1.xpose.msra.mxu0 0.0
    %8693 = vmatprep.subr.mxu0 0.0
    %8694 = vmatpush1.xpose.msra.mxu0 0.0
    %8695 = vmatprep.subr.mxu0 0.0
    %8696 = vmatpush1.xpose.msra.mxu0 0.0
    %8697 = vmatprep.subr.mxu0 0.0
    %8698 = vmatpush1.xpose.msra.mxu0 0.0
    %8699 = vmatprep.subr.mxu0 0.0
    %8700 = vmatpush1.xpose.msra.mxu0 0.0
    %8701 = vmatprep.subr.mxu0 0.0
    %8702 = vmatpush1.xpose.msra.mxu0 0.0
    %8703 = vmatprep.subr.mxu0 0.0
    %8704 = vmatpush1.xpose.msra.mxu0 0.0
    %8705 = vmatprep.subr.mxu0 0.0
    %8706 = vmatpush1.xpose.msra.mxu0 0.0
    %8707 = vmatprep.subr.mxu0 0.0
    %8708 = vmatpush1.xpose.msra.mxu0 0.0
    %8709 = vmatprep.subr.mxu0 0.0
    %8710 = vmatpush1.xpose.msra.mxu0 0.0
    %8711 = vmatprep.subr.mxu0 0.0
    %8712 = vmatpush1.xpose.msra.mxu0 0.0
    %8713 = vmatprep.subr.mxu0 0.0
    %8714 = vmatpush1.xpose.msra.mxu0 0.0
    %8715 = vmatprep.subr.mxu0 0.0
    %8716 = vmatpush1.xpose.msra.mxu0 0.0
    %8717 = vmatprep.subr.mxu0 0.0
    %8718 = vmatpush1.xpose.msra.mxu0 0.0
    %8719 = vmatprep.subr.mxu0 0.0
    %8720 = vmatpush1.xpose.msra.mxu0 0.0
    %8721 = vmatprep.subr.mxu0 0.0
    %8722 = vmatpush1.xpose.msra.mxu0 0.0
    %8723 = vmatprep.subr.mxu0 0.0
    %8724 = vmatpush1.xpose.msra.mxu0 0.0
    %8725 = vmatprep.mubr.f32.mxu0 0.0
    %8726 = vmatmul.mubr.f32.gmra.mrb[0].mxu0 %v8653
    %v8727 = vpop.f32.mrb[0].mxu0
    %v8728 = vadd.f32 0.0, %v8727
    %v8729 = vpop.f32.mrb[0].mxu0
    %8730 = vdwg.mxu0
    %vm8731 = vcmask 122880
    %v8732 = vsel %vm8731, %v8728, -inf
    %8733 = vmax.xlane.f32.xlu0 %v8732
    %v8734 = vpop.xlane.xlu0 %8733
    %v8735 = vsub.f32 %v8728, %v8734
    %v8736 = vmul.f32 %v8735, 1.442695
    %v8737 = vpow.pop %v8736
    %v8738 = vsel %vm8731, %v8737, 0.0
    %8739 = vadd.xlane.f32.xlu0 %v8738
    %v8740 = vpop.xlane.xlu0 %8739
    %v8741 = vrcp.pop %v8740
    %v8742 = vmul.f32 %v8737, %v8741
    %8743 = vst.msk [vmem:[#allocation10] sm:$0x1] %vm8731, %v8742
    // Predicated region
    $region34: #{_lambda_.1} parent=1 // pred_check
      _
    $region35: #{_lambda_.1} parent=1 // pred_check_branch
      %8745 = sbr.rel (0) target = $region37
    $region36: #{_lambda_.1} parent=1 // pred_region
      %s8747 = ssub.s32 16, 16
      %8748 = vsyncadd [#allocation4], %s8747
      %s8750 = sshll.u32 [#allocation10], 4
      %s8751 = int_to_ptr.vmem [resolvable:$true] %s8750
      %8753 = dma.vmem_to_hbm [thread:$0]  %s8751, 16, %s4, [#allocation4]
    $region37: #{_lambda_.1} parent=1 // pred_fallthru
      _
    // Predicated region
    $region38: #{_lambda_.1} parent=1 // pred_check
      _
    $region39: #{_lambda_.1} parent=1 // pred_check_branch
      %8755 = sbr.rel (0) target = $region41
    $region40: #{_lambda_.1} parent=1 // pred_region
      %8756 = dma.done [#allocation4], 16
    $region41: #{_lambda_.1} parent=1 // pred_fallthru
      _
    %8757 = vsyncpa [#allocation3], 1
    %8758 = vsyncpa [#allocation6], 1
    %8759 = vsyncpa [#allocation9], 1
    %8760 = vsyncpa [#allocation4], 1

</llo_original>
